<compile_context>
chip_gen: v7x
topology: tpu7x:2x2x1
jax: 0.10.0
libtpu: 0.0.40
codegen_flags: <defaults>
</compile_context>

<pallas_src>
import jax
import jax.numpy as jnp
from jax import lax
from jax.experimental import pallas as pl
from jax.experimental.pallas import tpu as pltpu

NEG = 0.2  # LeakyReLU negative slope


def _pick_tb(bsz):
    """Batch tile: 64 for real workloads, smaller for tiny demo batches."""
    if bsz >= 128:
        return 64
    if bsz >= 48:
        return 32
    return 16


# ----------------------------------------------------------------------------
# Fused kernel: conv1 -> conv2 -> linear for one batch tile of TB images
# ----------------------------------------------------------------------------
def _make_kernel(TB):
    def kernel(p1_ref, w1_ref, b1_ref, w2_ref, b2_ref, w3_ref, b3_ref,
               o_ref, sr_ref):
        """Per grid step shapes:
          p1_ref : (7, 14, TB, 64) bf16  conv1 patches, K-packed per conv2 super-row:
                                         p1[i, s, b, di*16+k] = patch of conv1 row 2i+di-1,
                                         column s (parity-split order), tap k (zeros for pad rows)
          w1_ref : (64, 256) bf16        block-diag(w1,w1,w1,w1), w1: (16 taps, 64 cout)
          b1_ref : (7, 256)  f32         conv1 bias tiled x4, zeroed on padded-row segments
          w2_ref : (4, 256, 128) bf16    conv2 weight per column tap dj: (di*64+cin, cout)
          b2_ref : (1, 128)  f32
          w3_ref : (7, 7, 128) f32       linear weight as (out_row i, out_col j, cout)
          b3_ref : (1, 1)    f32
          o_ref  : (TB, 1)   f32         critic scores
          sr_ref : (7, 16, TB, 256) bf16 scratch: SR[i, col, b, di*64+cin] = conv1 act at
                                         padded row 2i+di, padded col (parity-split index col)
        """
        # Zero only the padding border columns (split indices 0 and 15) each step.
        zcol = jnp.zeros((TB, 256), jnp.bfloat16)
        for i in range(7):
            sr_ref[i, 0, :, :] = zcol
            sr_ref[i, 15, :, :] = zcol

        # ---- conv1: one (14*TB,64) x (64,256) bf16 MXU matmul per super-row i.
        # The block-diagonal RHS makes the output lanes directly equal the
        # K-packed scratch layout -> single contiguous full-lane store.
        for i in range(7):
            lhs = p1_ref[i].reshape(14 * TB, 64)
            c1 = jnp.dot(lhs, w1_ref[...], preferred_element_type=jnp.float32)
            c1 = (c1 + b1_ref[i:i + 1, :]).astype(jnp.bfloat16)
            c1 = jnp.maximum(c1, NEG * c1)                       # LeakyReLU
            sr_ref[i, 1:15, :, :] = c1.reshape(14, TB, 256)

        # ---- conv2 (4 x K=256 matmuls per output row) + fused 6272->1 Linear.
        lin = jnp.zeros((TB, 128), jnp.float32)                  # persistent accumulator
        for i in range(7):                                       # conv2 output row
            acc = None
            for dj, q0 in enumerate((0, 8, 1, 9)):               # parity-split column tap start
                lhs2 = sr_ref[i, q0:q0 + 7, :, :].reshape(7 * TB, 256)
                prod = jnp.dot(lhs2, w2_ref[dj],
                               preferred_element_type=jnp.float32)
                acc = prod if acc is None else acc + prod
            acc = acc + b2_ref[...]
            acc = jnp.maximum(acc, NEG * acc)                    # (7*TB, 128) f32
            for j in range(7):                                   # conv2 output col
                lin = lin + acc[j * TB:(j + 1) * TB, :] * w3_ref[i, j:j + 1, :]

        o_ref[...] = jnp.sum(lin, axis=1, keepdims=True) + b3_ref[...]

    return kernel


# ----------------------------------------------------------------------------
# Wrapper-side glue: lane-dense packed conv1 patches + one-time weight relayouts
# ----------------------------------------------------------------------------
def _build_p1(x, b_pad):
    """Packed conv1 im2col: (7, 14, b_pad, 64) bf16.

    p1[i, s, b, di*16 + k] = x_padded[b, 2*(2i+di-1)+ki, 2*col(s)+kj], k=ki*4+kj,
    with col(s) enumerating conv1 output columns in conv2's parity-split order
    [1,3,...,13, 0,2,...,12]; rows outside [0,13] are zero.
    """
    bsz = x.shape[0]
    img = jnp.pad(x[:, 0].astype(jnp.bfloat16),
                  ((0, b_pad - bsz), (1, 1), (1, 1)))            # (b_pad, 30, 30)
    taps = [img[:, ki:ki + 27:2, kj:kj + 27:2]                   # (b_pad, 14, 14)
            for ki in range(4) for kj in range(4)]
    patch = jnp.stack(taps, axis=-1)                             # (b_pad, 14r, 14c, 16)
    # conv1 output columns reordered to conv2's parity-split order.
    patch = jnp.concatenate([patch[:, :, 1::2], patch[:, :, 0::2]], axis=2)
    # one zero row of padding on each side: dim1 index = padded row p = r+1 in [0,15]
    patch = jnp.pad(patch, ((0, 0), (1, 1), (0, 0), (0, 0)))     # (b_pad, 16, 14, 16)
    # pack the 4 conv2 row-taps (padded rows 2i+di) along the last dim.
    p1 = jnp.concatenate([patch[:, di:di + 13:2] for di in range(4)],
                         axis=-1)                                # (b_pad, 7, 14, 64)
    return jnp.transpose(p1, (1, 2, 0, 3))                       # (7, 14, b_pad, 64)


def critic_forward(params, x):
    bsz = x.shape[0]
    TB = _pick_tb(bsz)
    b_pad = ((bsz + TB - 1) // TB) * TB
    grid = (b_pad // TB,)

    p1 = _build_p1(x.astype(jnp.float32), b_pad)

    # conv1 weight as block-diagonal (64, 256): 4 copies of (16 taps, 64 cout).
    w1k = params["w1"].reshape(64, 16).T.astype(jnp.float32)              # (16, 64)
    w1blk = jnp.zeros((64, 256), jnp.float32)
    for di in range(4):
        w1blk = w1blk.at[di * 16:(di + 1) * 16, di * 64:(di + 1) * 64].set(w1k)
    w1blk = w1blk.astype(jnp.bfloat16)

    # conv1 bias tiled x4; zeroed on the two padded-row segments so conv2's
    # row padding comes out exactly zero from the conv1 store.
    b1p = jnp.broadcast_to(jnp.tile(params["b1"].astype(jnp.float32), 4), (7, 256))
    b1p = b1p.at[0, 0:64].set(0.0).at[6, 192:256].set(0.0)

    # conv2 weight per column tap dj: (dj, di*64+cin, cout).
    w2p = jnp.transpose(params["w2"], (3, 2, 1, 0)).reshape(4, 256, 128)
    w2p = w2p.astype(jnp.bfloat16)
    b2 = params["b2"].reshape(1, 128).astype(jnp.float32)

    # linear weight reordered to (out_row i, out_col j, cout), dense (7,7,128).
    w3p = jnp.transpose(params["w3"].reshape(128, 7, 7), (1, 2, 0)).astype(jnp.float32)
    b3 = params["b3"].reshape(1, 1).astype(jnp.float32)

    flops = b_pad * (2 * 98 * 64 * 256 + 2 * 49 * 256 * 128 * 4 + 2 * 6272)
    bytes_accessed = (p1.size * 2 + w1blk.size * 2 + b1p.size * 4 + w2p.size * 2
                      + b2.size * 4 + w3p.size * 4 + b3.size * 4 + b_pad * 4)
    vmem_limit = (12 + TB // 8) * 1024 * 1024   # ~2x measured need, well under 64 MiB

    out = pl.pallas_call(
        _make_kernel(TB),
        out_shape=jax.ShapeDtypeStruct((b_pad, 1), jnp.float32),
        grid_spec=pltpu.PrefetchScalarGridSpec(
            num_scalar_prefetch=0,
            grid=grid,
            in_specs=[
                pl.BlockSpec((7, 14, TB, 64), lambda t: (0, 0, t, 0)),   # packed conv1 patches
                pl.BlockSpec((64, 256), lambda t: (0, 0)),               # w1 block-diag
                pl.BlockSpec((7, 256), lambda t: (0, 0)),                # b1 packed
                pl.BlockSpec((4, 256, 128), lambda t: (0, 0, 0)),        # w2 packed (K=256)
                pl.BlockSpec((1, 128), lambda t: (0, 0)),                # b2
                pl.BlockSpec((7, 7, 128), lambda t: (0, 0, 0)),          # w3
                pl.BlockSpec((1, 1), lambda t: (0, 0)),                  # b3
            ],
            out_specs=pl.BlockSpec((TB, 1), lambda t: (t, 0)),
            scratch_shapes=[pltpu.VMEM((7, 16, TB, 256), jnp.bfloat16)],
        ),
        compiler_params=pltpu.CompilerParams(
            dimension_semantics=("parallel",),
            vmem_limit_bytes=vmem_limit,
        ),
        cost_estimate=pl.CostEstimate(
            flops=flops, transcendentals=0, bytes_accessed=bytes_accessed),
    )(p1, w1blk, b1p, w2p, b2, w3p, b3)

    return out[:bsz]


# ----------------------------------------------------------------------------
# Plain-XLA f32 reference (sanity check only) and deterministic init
# ----------------------------------------------------------------------------
def critic_reference(params, x):
    def conv(h, w, b):
        y = lax.conv_general_dilated(
            h, w, window_strides=(2, 2), padding=[(1, 1), (1, 1)],
            dimension_numbers=("NCHW", "OIHW", "NCHW"),
            precision=lax.Precision.HIGHEST)
        return y + b[None, :, None, None]

    h = conv(x, params["w1"], params["b1"])
    h = jnp.where(h > 0, h, NEG * h)
    h = conv(h, params["w2"], params["b2"])
    h = jnp.where(h > 0, h, NEG * h)
    hf = h.reshape(x.shape[0], -1)
    return jnp.dot(hf, params["w3"].T, precision=lax.Precision.HIGHEST) + params["b3"]


def init_params(key):
    """Deterministic init mimicking PyTorch's default uniform(-1/sqrt(fan_in), +)."""
    k = jax.random.split(key, 6)

    def u(kk, shape, fan_in):
        bound = 1.0 / jnp.sqrt(fan_in)
        return jax.random.uniform(kk, shape, jnp.float32, -bound, bound)

    return {
        "w1": u(k[0], (64, 1, 4, 4), 1 * 4 * 4),
        "b1": u(k[1], (64,), 1 * 4 * 4),
        "w2": u(k[2], (128, 64, 4, 4), 64 * 4 * 4),
        "b2": u(k[3], (128,), 64 * 4 * 4),
        "w3": u(k[4], (1, 128 * 7 * 7), 128 * 7 * 7),
        "b3": u(k[5], (1,), 128 * 7 * 7),
    }


if __name__ == "__main__":
    key = jax.random.PRNGKey(0)
    pkey, xkey = jax.random.split(key)
    params = init_params(pkey)

    # Linear(128*7*7, 1) forces 28x28 spatial input (MNIST-like); batch kept small.
    x = jax.random.normal(xkey, (2, 1, 28, 28), dtype=jnp.float32)

    out = jax.block_until_ready(jax.jit(critic_forward)(params, x))
    assert out.shape == (2, 1), out.shape

    # Numerical sanity check against a plain-XLA f32 reference (bf16-tolerant).
    ref = jax.block_until_ready(jax.jit(critic_reference)(params, x))
    err = float(jnp.max(jnp.abs(out - ref)))
    assert err < 3e-2, f"max abs err {err}"

    print("KERNEL_OK")
</pallas_src>

<mosaic_0001>
module attributes {stable_mosaic.version = 11 : i64} {
  func.func @kernel(%arg0: i32, %arg1: memref<7x14x16x64xbf16, #tpu.memory_space<vmem>>, %arg2: memref<64x256xbf16, #tpu.memory_space<vmem>>, %arg3: memref<7x256xf32, #tpu.memory_space<vmem>>, %arg4: memref<4x256x128xbf16, #tpu.memory_space<vmem>>, %arg5: memref<1x128xf32, #tpu.memory_space<vmem>>, %arg6: memref<7x7x128xf32, #tpu.memory_space<vmem>>, %arg7: memref<1x1xf32, #tpu.memory_space<vmem>>, %arg8: memref<16x1xf32, #tpu.memory_space<vmem>>, %arg9: memref<7x16x16x256xbf16, #tpu.memory_space<vmem>>) attributes {dimension_semantics = [#tpu.dimension_semantics<parallel>], iteration_bounds = array<i64: 1>, scalar_prefetch = 0 : i64, scratch_operands = 1 : i64, tpu.core_type = #tpu.core_type<tc>, window_params = [{transform_indices = @transform_0, window_bounds = array<i64: 7, 14, 16, 64>}, {pipeline_mode = #tpu.pipeline_mode<synchronous>, transform_indices = @transform_1, window_bounds = array<i64: 64, 256>}, {pipeline_mode = #tpu.pipeline_mode<synchronous>, transform_indices = @transform_2, window_bounds = array<i64: 7, 256>}, {pipeline_mode = #tpu.pipeline_mode<synchronous>, transform_indices = @transform_3, window_bounds = array<i64: 4, 256, 128>}, {pipeline_mode = #tpu.pipeline_mode<synchronous>, transform_indices = @transform_4, window_bounds = array<i64: 1, 128>}, {pipeline_mode = #tpu.pipeline_mode<synchronous>, transform_indices = @transform_5, window_bounds = array<i64: 7, 7, 128>}, {pipeline_mode = #tpu.pipeline_mode<synchronous>, transform_indices = @transform_6, window_bounds = array<i64: 1, 1>}, {transform_indices = @transform_7, window_bounds = array<i64: 16, 1>}]} {
    %cst = arith.constant 0.000000e+00 : bf16
    %0 = vector.broadcast %cst : bf16 to vector<16x256xbf16>
    %c0 = arith.constant 0 : index
    %c0_0 = arith.constant 0 : index
    %c0_1 = arith.constant 0 : index
    %c0_2 = arith.constant 0 : index
    %1 = vector.load %arg9[%c0, %c0_0, %c0_1, %c0_2] : memref<7x16x16x256xbf16, #tpu.memory_space<vmem>>, vector<1x1x16x256xbf16>
    %2 = vector.shape_cast %1 : vector<1x1x16x256xbf16> to vector<16x256xbf16>
    %3 = vector.shape_cast %0 : vector<16x256xbf16> to vector<1x1x16x256xbf16>
    tpu.vector_store %arg9[%c0, %c0_0, %c0_1, %c0_2], %3 {strides = array<i32>} : memref<7x16x16x256xbf16, #tpu.memory_space<vmem>>, vector<1x1x16x256xbf16>,
    %c0_3 = arith.constant 0 : index
    %c15 = arith.constant 15 : index
    %c0_4 = arith.constant 0 : index
    %c0_5 = arith.constant 0 : index
    %4 = vector.load %arg9[%c0_3, %c15, %c0_4, %c0_5] : memref<7x16x16x256xbf16, #tpu.memory_space<vmem>>, vector<1x1x16x256xbf16>
    %5 = vector.shape_cast %4 : vector<1x1x16x256xbf16> to vector<16x256xbf16>
    %6 = vector.shape_cast %0 : vector<16x256xbf16> to vector<1x1x16x256xbf16>
    tpu.vector_store %arg9[%c0_3, %c15, %c0_4, %c0_5], %6 {strides = array<i32>} : memref<7x16x16x256xbf16, #tpu.memory_space<vmem>>, vector<1x1x16x256xbf16>,
    %c1 = arith.constant 1 : index
    %c0_6 = arith.constant 0 : index
    %c0_7 = arith.constant 0 : index
    %c0_8 = arith.constant 0 : index
    %7 = vector.load %arg9[%c1, %c0_6, %c0_7, %c0_8] : memref<7x16x16x256xbf16, #tpu.memory_space<vmem>>, vector<1x1x16x256xbf16>
    %8 = vector.shape_cast %7 : vector<1x1x16x256xbf16> to vector<16x256xbf16>
    %9 = vector.shape_cast %0 : vector<16x256xbf16> to vector<1x1x16x256xbf16>
    tpu.vector_store %arg9[%c1, %c0_6, %c0_7, %c0_8], %9 {strides = array<i32>} : memref<7x16x16x256xbf16, #tpu.memory_space<vmem>>, vector<1x1x16x256xbf16>,
    %c1_9 = arith.constant 1 : index
    %c15_10 = arith.constant 15 : index
    %c0_11 = arith.constant 0 : index
    %c0_12 = arith.constant 0 : index
    %10 = vector.load %arg9[%c1_9, %c15_10, %c0_11, %c0_12] : memref<7x16x16x256xbf16, #tpu.memory_space<vmem>>, vector<1x1x16x256xbf16>
    %11 = vector.shape_cast %10 : vector<1x1x16x256xbf16> to vector<16x256xbf16>
    %12 = vector.shape_cast %0 : vector<16x256xbf16> to vector<1x1x16x256xbf16>
    tpu.vector_store %arg9[%c1_9, %c15_10, %c0_11, %c0_12], %12 {strides = array<i32>} : memref<7x16x16x256xbf16, #tpu.memory_space<vmem>>, vector<1x1x16x256xbf16>,
    %c2 = arith.constant 2 : index
    %c0_13 = arith.constant 0 : index
    %c0_14 = arith.constant 0 : index
    %c0_15 = arith.constant 0 : index
    %13 = vector.load %arg9[%c2, %c0_13, %c0_14, %c0_15] : memref<7x16x16x256xbf16, #tpu.memory_space<vmem>>, vector<1x1x16x256xbf16>
    %14 = vector.shape_cast %13 : vector<1x1x16x256xbf16> to vector<16x256xbf16>
    %15 = vector.shape_cast %0 : vector<16x256xbf16> to vector<1x1x16x256xbf16>
    tpu.vector_store %arg9[%c2, %c0_13, %c0_14, %c0_15], %15 {strides = array<i32>} : memref<7x16x16x256xbf16, #tpu.memory_space<vmem>>, vector<1x1x16x256xbf16>,
    %c2_16 = arith.constant 2 : index
    %c15_17 = arith.constant 15 : index
    %c0_18 = arith.constant 0 : index
    %c0_19 = arith.constant 0 : index
    %16 = vector.load %arg9[%c2_16, %c15_17, %c0_18, %c0_19] : memref<7x16x16x256xbf16, #tpu.memory_space<vmem>>, vector<1x1x16x256xbf16>
    %17 = vector.shape_cast %16 : vector<1x1x16x256xbf16> to vector<16x256xbf16>
    %18 = vector.shape_cast %0 : vector<16x256xbf16> to vector<1x1x16x256xbf16>
    tpu.vector_store %arg9[%c2_16, %c15_17, %c0_18, %c0_19], %18 {strides = array<i32>} : memref<7x16x16x256xbf16, #tpu.memory_space<vmem>>, vector<1x1x16x256xbf16>,
    %c3 = arith.constant 3 : index
    %c0_20 = arith.constant 0 : index
    %c0_21 = arith.constant 0 : index
    %c0_22 = arith.constant 0 : index
    %19 = vector.load %arg9[%c3, %c0_20, %c0_21, %c0_22] : memref<7x16x16x256xbf16, #tpu.memory_space<vmem>>, vector<1x1x16x256xbf16>
    %20 = vector.shape_cast %19 : vector<1x1x16x256xbf16> to vector<16x256xbf16>
    %21 = vector.shape_cast %0 : vector<16x256xbf16> to vector<1x1x16x256xbf16>
    tpu.vector_store %arg9[%c3, %c0_20, %c0_21, %c0_22], %21 {strides = array<i32>} : memref<7x16x16x256xbf16, #tpu.memory_space<vmem>>, vector<1x1x16x256xbf16>,
    %c3_23 = arith.constant 3 : index
    %c15_24 = arith.constant 15 : index
    %c0_25 = arith.constant 0 : index
    %c0_26 = arith.constant 0 : index
    %22 = vector.load %arg9[%c3_23, %c15_24, %c0_25, %c0_26] : memref<7x16x16x256xbf16, #tpu.memory_space<vmem>>, vector<1x1x16x256xbf16>
    %23 = vector.shape_cast %22 : vector<1x1x16x256xbf16> to vector<16x256xbf16>
    %24 = vector.shape_cast %0 : vector<16x256xbf16> to vector<1x1x16x256xbf16>
    tpu.vector_store %arg9[%c3_23, %c15_24, %c0_25, %c0_26], %24 {strides = array<i32>} : memref<7x16x16x256xbf16, #tpu.memory_space<vmem>>, vector<1x1x16x256xbf16>,
    %c4 = arith.constant 4 : index
    %c0_27 = arith.constant 0 : index
    %c0_28 = arith.constant 0 : index
    %c0_29 = arith.constant 0 : index
    %25 = vector.load %arg9[%c4, %c0_27, %c0_28, %c0_29] : memref<7x16x16x256xbf16, #tpu.memory_space<vmem>>, vector<1x1x16x256xbf16>
    %26 = vector.shape_cast %25 : vector<1x1x16x256xbf16> to vector<16x256xbf16>
    %27 = vector.shape_cast %0 : vector<16x256xbf16> to vector<1x1x16x256xbf16>
    tpu.vector_store %arg9[%c4, %c0_27, %c0_28, %c0_29], %27 {strides = array<i32>} : memref<7x16x16x256xbf16, #tpu.memory_space<vmem>>, vector<1x1x16x256xbf16>,
    %c4_30 = arith.constant 4 : index
    %c15_31 = arith.constant 15 : index
    %c0_32 = arith.constant 0 : index
    %c0_33 = arith.constant 0 : index
    %28 = vector.load %arg9[%c4_30, %c15_31, %c0_32, %c0_33] : memref<7x16x16x256xbf16, #tpu.memory_space<vmem>>, vector<1x1x16x256xbf16>
    %29 = vector.shape_cast %28 : vector<1x1x16x256xbf16> to vector<16x256xbf16>
    %30 = vector.shape_cast %0 : vector<16x256xbf16> to vector<1x1x16x256xbf16>
    tpu.vector_store %arg9[%c4_30, %c15_31, %c0_32, %c0_33], %30 {strides = array<i32>} : memref<7x16x16x256xbf16, #tpu.memory_space<vmem>>, vector<1x1x16x256xbf16>,
    %c5 = arith.constant 5 : index
    %c0_34 = arith.constant 0 : index
    %c0_35 = arith.constant 0 : index
    %c0_36 = arith.constant 0 : index
    %31 = vector.load %arg9[%c5, %c0_34, %c0_35, %c0_36] : memref<7x16x16x256xbf16, #tpu.memory_space<vmem>>, vector<1x1x16x256xbf16>
    %32 = vector.shape_cast %31 : vector<1x1x16x256xbf16> to vector<16x256xbf16>
    %33 = vector.shape_cast %0 : vector<16x256xbf16> to vector<1x1x16x256xbf16>
    tpu.vector_store %arg9[%c5, %c0_34, %c0_35, %c0_36], %33 {strides = array<i32>} : memref<7x16x16x256xbf16, #tpu.memory_space<vmem>>, vector<1x1x16x256xbf16>,
    %c5_37 = arith.constant 5 : index
    %c15_38 = arith.constant 15 : index
    %c0_39 = arith.constant 0 : index
    %c0_40 = arith.constant 0 : index
    %34 = vector.load %arg9[%c5_37, %c15_38, %c0_39, %c0_40] : memref<7x16x16x256xbf16, #tpu.memory_space<vmem>>, vector<1x1x16x256xbf16>
    %35 = vector.shape_cast %34 : vector<1x1x16x256xbf16> to vector<16x256xbf16>
    %36 = vector.shape_cast %0 : vector<16x256xbf16> to vector<1x1x16x256xbf16>
    tpu.vector_store %arg9[%c5_37, %c15_38, %c0_39, %c0_40], %36 {strides = array<i32>} : memref<7x16x16x256xbf16, #tpu.memory_space<vmem>>, vector<1x1x16x256xbf16>,
    %c6 = arith.constant 6 : index
    %c0_41 = arith.constant 0 : index
    %c0_42 = arith.constant 0 : index
    %c0_43 = arith.constant 0 : index
    %37 = vector.load %arg9[%c6, %c0_41, %c0_42, %c0_43] : memref<7x16x16x256xbf16, #tpu.memory_space<vmem>>, vector<1x1x16x256xbf16>
    %38 = vector.shape_cast %37 : vector<1x1x16x256xbf16> to vector<16x256xbf16>
    %39 = vector.shape_cast %0 : vector<16x256xbf16> to vector<1x1x16x256xbf16>
    tpu.vector_store %arg9[%c6, %c0_41, %c0_42, %c0_43], %39 {strides = array<i32>} : memref<7x16x16x256xbf16, #tpu.memory_space<vmem>>, vector<1x1x16x256xbf16>,
    %c6_44 = arith.constant 6 : index
    %c15_45 = arith.constant 15 : index
    %c0_46 = arith.constant 0 : index
    %c0_47 = arith.constant 0 : index
    %40 = vector.load %arg9[%c6_44, %c15_45, %c0_46, %c0_47] : memref<7x16x16x256xbf16, #tpu.memory_space<vmem>>, vector<1x1x16x256xbf16>
    %41 = vector.shape_cast %40 : vector<1x1x16x256xbf16> to vector<16x256xbf16>
    %42 = vector.shape_cast %0 : vector<16x256xbf16> to vector<1x1x16x256xbf16>
    tpu.vector_store %arg9[%c6_44, %c15_45, %c0_46, %c0_47], %42 {strides = array<i32>} : memref<7x16x16x256xbf16, #tpu.memory_space<vmem>>, vector<1x1x16x256xbf16>,
    %c0_48 = arith.constant 0 : index
    %c0_49 = arith.constant 0 : index
    %c0_50 = arith.constant 0 : index
    %c0_51 = arith.constant 0 : index
    %43 = vector.load %arg1[%c0_48, %c0_49, %c0_50, %c0_51] : memref<7x14x16x64xbf16, #tpu.memory_space<vmem>>, vector<1x14x16x64xbf16>
    %44 = vector.shape_cast %43 : vector<1x14x16x64xbf16> to vector<14x16x64xbf16>
    %45 = vector.shape_cast %44 : vector<14x16x64xbf16> to vector<224x64xbf16>
    %c0_52 = arith.constant 0 : index
    %c0_53 = arith.constant 0 : index
    %46 = vector.load %arg2[%c0_52, %c0_53] : memref<64x256xbf16, #tpu.memory_space<vmem>>, vector<64x256xbf16>
    %cst_54 = arith.constant dense<0.000000e+00> : vector<224x256xf32>
    %47 = tpu.matmul %45, %46, %cst_54 {dimension_numbers = #tpu.dot_dimension_numbers<[1], [0], [0], [1], [0, 0, 1, 1], [], []>} : vector<224x64xbf16>, vector<64x256xbf16>, vector<224x256xf32> -> vector<224x256xf32>
    %c0_55 = arith.constant 0 : index
    %c0_56 = arith.constant 0 : index
    %48 = vector.load %arg3[%c0_55, %c0_56] : memref<7x256xf32, #tpu.memory_space<vmem>>, vector<1x256xf32>
    %49 = vector.broadcast %48 : vector<1x256xf32> to vector<224x256xf32>
    %50 = arith.addf %47, %49 : vector<224x256xf32>
    %51 = arith.truncf %50 : vector<224x256xf32> to vector<224x256xbf16>
    %cst_57 = arith.constant 2.001950e-01 : bf16
    %52 = vector.broadcast %cst_57 : bf16 to vector<224x256xbf16>
    %53 = arith.mulf %52, %51 : vector<224x256xbf16>
    %54 = arith.maximumf %51, %53 : vector<224x256xbf16>
    %55 = vector.shape_cast %54 : vector<224x256xbf16> to vector<14x16x256xbf16>
    %c0_58 = arith.constant 0 : index
    %c1_59 = arith.constant 1 : index
    %c0_60 = arith.constant 0 : index
    %c0_61 = arith.constant 0 : index
    %56 = vector.load %arg9[%c0_58, %c1_59, %c0_60, %c0_61] : memref<7x16x16x256xbf16, #tpu.memory_space<vmem>>, vector<1x14x16x256xbf16>
    %57 = vector.shape_cast %56 : vector<1x14x16x256xbf16> to vector<14x16x256xbf16>
    %58 = vector.shape_cast %55 : vector<14x16x256xbf16> to vector<1x14x16x256xbf16>
    tpu.vector_store %arg9[%c0_58, %c1_59, %c0_60, %c0_61], %58 {strides = array<i32>} : memref<7x16x16x256xbf16, #tpu.memory_space<vmem>>, vector<1x14x16x256xbf16>,
    %c1_62 = arith.constant 1 : index
    %c0_63 = arith.constant 0 : index
    %c0_64 = arith.constant 0 : index
    %c0_65 = arith.constant 0 : index
    %59 = vector.load %arg1[%c1_62, %c0_63, %c0_64, %c0_65] : memref<7x14x16x64xbf16, #tpu.memory_space<vmem>>, vector<1x14x16x64xbf16>
    %60 = vector.shape_cast %59 : vector<1x14x16x64xbf16> to vector<14x16x64xbf16>
    %61 = vector.shape_cast %60 : vector<14x16x64xbf16> to vector<224x64xbf16>
    %c0_66 = arith.constant 0 : index
    %c0_67 = arith.constant 0 : index
    %62 = vector.load %arg2[%c0_66, %c0_67] : memref<64x256xbf16, #tpu.memory_space<vmem>>, vector<64x256xbf16>
    %cst_68 = arith.constant dense<0.000000e+00> : vector<224x256xf32>
    %63 = tpu.matmul %61, %62, %cst_68 {dimension_numbers = #tpu.dot_dimension_numbers<[1], [0], [0], [1], [0, 0, 1, 1], [], []>} : vector<224x64xbf16>, vector<64x256xbf16>, vector<224x256xf32> -> vector<224x256xf32>
    %c1_69 = arith.constant 1 : index
    %c0_70 = arith.constant 0 : index
    %64 = vector.load %arg3[%c1_69, %c0_70] : memref<7x256xf32, #tpu.memory_space<vmem>>, vector<1x256xf32>
    %65 = vector.broadcast %64 : vector<1x256xf32> to vector<224x256xf32>
    %66 = arith.addf %63, %65 : vector<224x256xf32>
    %67 = arith.truncf %66 : vector<224x256xf32> to vector<224x256xbf16>
    %cst_71 = arith.constant 2.001950e-01 : bf16
    %68 = vector.broadcast %cst_71 : bf16 to vector<224x256xbf16>
    %69 = arith.mulf %68, %67 : vector<224x256xbf16>
    %70 = arith.maximumf %67, %69 : vector<224x256xbf16>
    %71 = vector.shape_cast %70 : vector<224x256xbf16> to vector<14x16x256xbf16>
    %c1_72 = arith.constant 1 : index
    %c1_73 = arith.constant 1 : index
    %c0_74 = arith.constant 0 : index
    %c0_75 = arith.constant 0 : index
    %72 = vector.load %arg9[%c1_72, %c1_73, %c0_74, %c0_75] : memref<7x16x16x256xbf16, #tpu.memory_space<vmem>>, vector<1x14x16x256xbf16>
    %73 = vector.shape_cast %72 : vector<1x14x16x256xbf16> to vector<14x16x256xbf16>
    %74 = vector.shape_cast %71 : vector<14x16x256xbf16> to vector<1x14x16x256xbf16>
    tpu.vector_store %arg9[%c1_72, %c1_73, %c0_74, %c0_75], %74 {strides = array<i32>} : memref<7x16x16x256xbf16, #tpu.memory_space<vmem>>, vector<1x14x16x256xbf16>,
    %c2_76 = arith.constant 2 : index
    %c0_77 = arith.constant 0 : index
    %c0_78 = arith.constant 0 : index
    %c0_79 = arith.constant 0 : index
    %75 = vector.load %arg1[%c2_76, %c0_77, %c0_78, %c0_79] : memref<7x14x16x64xbf16, #tpu.memory_space<vmem>>, vector<1x14x16x64xbf16>
    %76 = vector.shape_cast %75 : vector<1x14x16x64xbf16> to vector<14x16x64xbf16>
    %77 = vector.shape_cast %76 : vector<14x16x64xbf16> to vector<224x64xbf16>
    %c0_80 = arith.constant 0 : index
    %c0_81 = arith.constant 0 : index
    %78 = vector.load %arg2[%c0_80, %c0_81] : memref<64x256xbf16, #tpu.memory_space<vmem>>, vector<64x256xbf16>
    %cst_82 = arith.constant dense<0.000000e+00> : vector<224x256xf32>
    %79 = tpu.matmul %77, %78, %cst_82 {dimension_numbers = #tpu.dot_dimension_numbers<[1], [0], [0], [1], [0, 0, 1, 1], [], []>} : vector<224x64xbf16>, vector<64x256xbf16>, vector<224x256xf32> -> vector<224x256xf32>
    %c2_83 = arith.constant 2 : index
    %c0_84 = arith.constant 0 : index
    %80 = vector.load %arg3[%c2_83, %c0_84] : memref<7x256xf32, #tpu.memory_space<vmem>>, vector<1x256xf32>
    %81 = vector.broadcast %80 : vector<1x256xf32> to vector<224x256xf32>
    %82 = arith.addf %79, %81 : vector<224x256xf32>
    %83 = arith.truncf %82 : vector<224x256xf32> to vector<224x256xbf16>
    %cst_85 = arith.constant 2.001950e-01 : bf16
    %84 = vector.broadcast %cst_85 : bf16 to vector<224x256xbf16>
    %85 = arith.mulf %84, %83 : vector<224x256xbf16>
    %86 = arith.maximumf %83, %85 : vector<224x256xbf16>
    %87 = vector.shape_cast %86 : vector<224x256xbf16> to vector<14x16x256xbf16>
    %c2_86 = arith.constant 2 : index
    %c1_87 = arith.constant 1 : index
    %c0_88 = arith.constant 0 : index
    %c0_89 = arith.constant 0 : index
    %88 = vector.load %arg9[%c2_86, %c1_87, %c0_88, %c0_89] : memref<7x16x16x256xbf16, #tpu.memory_space<vmem>>, vector<1x14x16x256xbf16>
    %89 = vector.shape_cast %88 : vector<1x14x16x256xbf16> to vector<14x16x256xbf16>
    %90 = vector.shape_cast %87 : vector<14x16x256xbf16> to vector<1x14x16x256xbf16>
    tpu.vector_store %arg9[%c2_86, %c1_87, %c0_88, %c0_89], %90 {strides = array<i32>} : memref<7x16x16x256xbf16, #tpu.memory_space<vmem>>, vector<1x14x16x256xbf16>,
    %c3_90 = arith.constant 3 : index
    %c0_91 = arith.constant 0 : index
    %c0_92 = arith.constant 0 : index
    %c0_93 = arith.constant 0 : index
    %91 = vector.load %arg1[%c3_90, %c0_91, %c0_92, %c0_93] : memref<7x14x16x64xbf16, #tpu.memory_space<vmem>>, vector<1x14x16x64xbf16>
    %92 = vector.shape_cast %91 : vector<1x14x16x64xbf16> to vector<14x16x64xbf16>
    %93 = vector.shape_cast %92 : vector<14x16x64xbf16> to vector<224x64xbf16>
    %c0_94 = arith.constant 0 : index
    %c0_95 = arith.constant 0 : index
    %94 = vector.load %arg2[%c0_94, %c0_95] : memref<64x256xbf16, #tpu.memory_space<vmem>>, vector<64x256xbf16>
    %cst_96 = arith.constant dense<0.000000e+00> : vector<224x256xf32>
    %95 = tpu.matmul %93, %94, %cst_96 {dimension_numbers = #tpu.dot_dimension_numbers<[1], [0], [0], [1], [0, 0, 1, 1], [], []>} : vector<224x64xbf16>, vector<64x256xbf16>, vector<224x256xf32> -> vector<224x256xf32>
    %c3_97 = arith.constant 3 : index
    %c0_98 = arith.constant 0 : index
    %96 = vector.load %arg3[%c3_97, %c0_98] : memref<7x256xf32, #tpu.memory_space<vmem>>, vector<1x256xf32>
    %97 = vector.broadcast %96 : vector<1x256xf32> to vector<224x256xf32>
    %98 = arith.addf %95, %97 : vector<224x256xf32>
    %99 = arith.truncf %98 : vector<224x256xf32> to vector<224x256xbf16>
    %cst_99 = arith.constant 2.001950e-01 : bf16
    %100 = vector.broadcast %cst_99 : bf16 to vector<224x256xbf16>
    %101 = arith.mulf %100, %99 : vector<224x256xbf16>
    %102 = arith.maximumf %99, %101 : vector<224x256xbf16>
    %103 = vector.shape_cast %102 : vector<224x256xbf16> to vector<14x16x256xbf16>
    %c3_100 = arith.constant 3 : index
    %c1_101 = arith.constant 1 : index
    %c0_102 = arith.constant 0 : index
    %c0_103 = arith.constant 0 : index
    %104 = vector.load %arg9[%c3_100, %c1_101, %c0_102, %c0_103] : memref<7x16x16x256xbf16, #tpu.memory_space<vmem>>, vector<1x14x16x256xbf16>
    %105 = vector.shape_cast %104 : vector<1x14x16x256xbf16> to vector<14x16x256xbf16>
    %106 = vector.shape_cast %103 : vector<14x16x256xbf16> to vector<1x14x16x256xbf16>
    tpu.vector_store %arg9[%c3_100, %c1_101, %c0_102, %c0_103], %106 {strides = array<i32>} : memref<7x16x16x256xbf16, #tpu.memory_space<vmem>>, vector<1x14x16x256xbf16>,
    %c4_104 = arith.constant 4 : index
    %c0_105 = arith.constant 0 : index
    %c0_106 = arith.constant 0 : index
    %c0_107 = arith.constant 0 : index
    %107 = vector.load %arg1[%c4_104, %c0_105, %c0_106, %c0_107] : memref<7x14x16x64xbf16, #tpu.memory_space<vmem>>, vector<1x14x16x64xbf16>
    %108 = vector.shape_cast %107 : vector<1x14x16x64xbf16> to vector<14x16x64xbf16>
    %109 = vector.shape_cast %108 : vector<14x16x64xbf16> to vector<224x64xbf16>
    %c0_108 = arith.constant 0 : index
    %c0_109 = arith.constant 0 : index
    %110 = vector.load %arg2[%c0_108, %c0_109] : memref<64x256xbf16, #tpu.memory_space<vmem>>, vector<64x256xbf16>
    %cst_110 = arith.constant dense<0.000000e+00> : vector<224x256xf32>
    %111 = tpu.matmul %109, %110, %cst_110 {dimension_numbers = #tpu.dot_dimension_numbers<[1], [0], [0], [1], [0, 0, 1, 1], [], []>} : vector<224x64xbf16>, vector<64x256xbf16>, vector<224x256xf32> -> vector<224x256xf32>
    %c4_111 = arith.constant 4 : index
    %c0_112 = arith.constant 0 : index
    %112 = vector.load %arg3[%c4_111, %c0_112] : memref<7x256xf32, #tpu.memory_space<vmem>>, vector<1x256xf32>
    %113 = vector.broadcast %112 : vector<1x256xf32> to vector<224x256xf32>
    %114 = arith.addf %111, %113 : vector<224x256xf32>
    %115 = arith.truncf %114 : vector<224x256xf32> to vector<224x256xbf16>
    %cst_113 = arith.constant 2.001950e-01 : bf16
    %116 = vector.broadcast %cst_113 : bf16 to vector<224x256xbf16>
    %117 = arith.mulf %116, %115 : vector<224x256xbf16>
    %118 = arith.maximumf %115, %117 : vector<224x256xbf16>
    %119 = vector.shape_cast %118 : vector<224x256xbf16> to vector<14x16x256xbf16>
    %c4_114 = arith.constant 4 : index
    %c1_115 = arith.constant 1 : index
    %c0_116 = arith.constant 0 : index
    %c0_117 = arith.constant 0 : index
    %120 = vector.load %arg9[%c4_114, %c1_115, %c0_116, %c0_117] : memref<7x16x16x256xbf16, #tpu.memory_space<vmem>>, vector<1x14x16x256xbf16>
    %121 = vector.shape_cast %120 : vector<1x14x16x256xbf16> to vector<14x16x256xbf16>
    %122 = vector.shape_cast %119 : vector<14x16x256xbf16> to vector<1x14x16x256xbf16>
    tpu.vector_store %arg9[%c4_114, %c1_115, %c0_116, %c0_117], %122 {strides = array<i32>} : memref<7x16x16x256xbf16, #tpu.memory_space<vmem>>, vector<1x14x16x256xbf16>,
    %c5_118 = arith.constant 5 : index
    %c0_119 = arith.constant 0 : index
    %c0_120 = arith.constant 0 : index
    %c0_121 = arith.constant 0 : index
    %123 = vector.load %arg1[%c5_118, %c0_119, %c0_120, %c0_121] : memref<7x14x16x64xbf16, #tpu.memory_space<vmem>>, vector<1x14x16x64xbf16>
    %124 = vector.shape_cast %123 : vector<1x14x16x64xbf16> to vector<14x16x64xbf16>
    %125 = vector.shape_cast %124 : vector<14x16x64xbf16> to vector<224x64xbf16>
    %c0_122 = arith.constant 0 : index
    %c0_123 = arith.constant 0 : index
    %126 = vector.load %arg2[%c0_122, %c0_123] : memref<64x256xbf16, #tpu.memory_space<vmem>>, vector<64x256xbf16>
    %cst_124 = arith.constant dense<0.000000e+00> : vector<224x256xf32>
    %127 = tpu.matmul %125, %126, %cst_124 {dimension_numbers = #tpu.dot_dimension_numbers<[1], [0], [0], [1], [0, 0, 1, 1], [], []>} : vector<224x64xbf16>, vector<64x256xbf16>, vector<224x256xf32> -> vector<224x256xf32>
    %c5_125 = arith.constant 5 : index
    %c0_126 = arith.constant 0 : index
    %128 = vector.load %arg3[%c5_125, %c0_126] : memref<7x256xf32, #tpu.memory_space<vmem>>, vector<1x256xf32>
    %129 = vector.broadcast %128 : vector<1x256xf32> to vector<224x256xf32>
    %130 = arith.addf %127, %129 : vector<224x256xf32>
    %131 = arith.truncf %130 : vector<224x256xf32> to vector<224x256xbf16>
    %cst_127 = arith.constant 2.001950e-01 : bf16
    %132 = vector.broadcast %cst_127 : bf16 to vector<224x256xbf16>
    %133 = arith.mulf %132, %131 : vector<224x256xbf16>
    %134 = arith.maximumf %131, %133 : vector<224x256xbf16>
    %135 = vector.shape_cast %134 : vector<224x256xbf16> to vector<14x16x256xbf16>
    %c5_128 = arith.constant 5 : index
    %c1_129 = arith.constant 1 : index
    %c0_130 = arith.constant 0 : index
    %c0_131 = arith.constant 0 : index
    %136 = vector.load %arg9[%c5_128, %c1_129, %c0_130, %c0_131] : memref<7x16x16x256xbf16, #tpu.memory_space<vmem>>, vector<1x14x16x256xbf16>
    %137 = vector.shape_cast %136 : vector<1x14x16x256xbf16> to vector<14x16x256xbf16>
    %138 = vector.shape_cast %135 : vector<14x16x256xbf16> to vector<1x14x16x256xbf16>
    tpu.vector_store %arg9[%c5_128, %c1_129, %c0_130, %c0_131], %138 {strides = array<i32>} : memref<7x16x16x256xbf16, #tpu.memory_space<vmem>>, vector<1x14x16x256xbf16>,
    %c6_132 = arith.constant 6 : index
    %c0_133 = arith.constant 0 : index
    %c0_134 = arith.constant 0 : index
    %c0_135 = arith.constant 0 : index
    %139 = vector.load %arg1[%c6_132, %c0_133, %c0_134, %c0_135] : memref<7x14x16x64xbf16, #tpu.memory_space<vmem>>, vector<1x14x16x64xbf16>
    %140 = vector.shape_cast %139 : vector<1x14x16x64xbf16> to vector<14x16x64xbf16>
    %141 = vector.shape_cast %140 : vector<14x16x64xbf16> to vector<224x64xbf16>
    %c0_136 = arith.constant 0 : index
    %c0_137 = arith.constant 0 : index
    %142 = vector.load %arg2[%c0_136, %c0_137] : memref<64x256xbf16, #tpu.memory_space<vmem>>, vector<64x256xbf16>
    %cst_138 = arith.constant dense<0.000000e+00> : vector<224x256xf32>
    %143 = tpu.matmul %141, %142, %cst_138 {dimension_numbers = #tpu.dot_dimension_numbers<[1], [0], [0], [1], [0, 0, 1, 1], [], []>} : vector<224x64xbf16>, vector<64x256xbf16>, vector<224x256xf32> -> vector<224x256xf32>
    %c6_139 = arith.constant 6 : index
    %c0_140 = arith.constant 0 : index
    %144 = vector.load %arg3[%c6_139, %c0_140] : memref<7x256xf32, #tpu.memory_space<vmem>>, vector<1x256xf32>
    %145 = vector.broadcast %144 : vector<1x256xf32> to vector<224x256xf32>
    %146 = arith.addf %143, %145 : vector<224x256xf32>
    %147 = arith.truncf %146 : vector<224x256xf32> to vector<224x256xbf16>
    %cst_141 = arith.constant 2.001950e-01 : bf16
    %148 = vector.broadcast %cst_141 : bf16 to vector<224x256xbf16>
    %149 = arith.mulf %148, %147 : vector<224x256xbf16>
    %150 = arith.maximumf %147, %149 : vector<224x256xbf16>
    %151 = vector.shape_cast %150 : vector<224x256xbf16> to vector<14x16x256xbf16>
    %c6_142 = arith.constant 6 : index
    %c1_143 = arith.constant 1 : index
    %c0_144 = arith.constant 0 : index
    %c0_145 = arith.constant 0 : index
    %152 = vector.load %arg9[%c6_142, %c1_143, %c0_144, %c0_145] : memref<7x16x16x256xbf16, #tpu.memory_space<vmem>>, vector<1x14x16x256xbf16>
    %153 = vector.shape_cast %152 : vector<1x14x16x256xbf16> to vector<14x16x256xbf16>
    %154 = vector.shape_cast %151 : vector<14x16x256xbf16> to vector<1x14x16x256xbf16>
    tpu.vector_store %arg9[%c6_142, %c1_143, %c0_144, %c0_145], %154 {strides = array<i32>} : memref<7x16x16x256xbf16, #tpu.memory_space<vmem>>, vector<1x14x16x256xbf16>,
    %cst_146 = arith.constant 0.000000e+00 : f32
    %155 = vector.broadcast %cst_146 : f32 to vector<16x128xf32>
    %c0_147 = arith.constant 0 : index
    %c0_148 = arith.constant 0 : index
    %c0_149 = arith.constant 0 : index
    %c0_150 = arith.constant 0 : index
    %156 = vector.load %arg9[%c0_147, %c0_148, %c0_149, %c0_150] : memref<7x16x16x256xbf16, #tpu.memory_space<vmem>>, vector<1x7x16x256xbf16>
    %157 = vector.shape_cast %156 : vector<1x7x16x256xbf16> to vector<7x16x256xbf16>
    %158 = vector.shape_cast %157 : vector<7x16x256xbf16> to vector<112x256xbf16>
    %c0_151 = arith.constant 0 : index
    %c0_152 = arith.constant 0 : index
    %c0_153 = arith.constant 0 : index
    %159 = vector.load %arg4[%c0_151, %c0_152, %c0_153] : memref<4x256x128xbf16, #tpu.memory_space<vmem>>, vector<1x256x128xbf16>
    %160 = vector.shape_cast %159 : vector<1x256x128xbf16> to vector<256x128xbf16>
    %cst_154 = arith.constant dense<0.000000e+00> : vector<112x128xf32>
    %161 = tpu.matmul %158, %160, %cst_154 {dimension_numbers = #tpu.dot_dimension_numbers<[1], [0], [0], [1], [0, 0, 1, 1], [], []>} : vector<112x256xbf16>, vector<256x128xbf16>, vector<112x128xf32> -> vector<112x128xf32>
    %c0_155 = arith.constant 0 : index
    %c8 = arith.constant 8 : index
    %c0_156 = arith.constant 0 : index
    %c0_157 = arith.constant 0 : index
    %162 = vector.load %arg9[%c0_155, %c8, %c0_156, %c0_157] : memref<7x16x16x256xbf16, #tpu.memory_space<vmem>>, vector<1x7x16x256xbf16>
    %163 = vector.shape_cast %162 : vector<1x7x16x256xbf16> to vector<7x16x256xbf16>
    %164 = vector.shape_cast %163 : vector<7x16x256xbf16> to vector<112x256xbf16>
    %c1_158 = arith.constant 1 : index
    %c0_159 = arith.constant 0 : index
    %c0_160 = arith.constant 0 : index
    %165 = vector.load %arg4[%c1_158, %c0_159, %c0_160] : memref<4x256x128xbf16, #tpu.memory_space<vmem>>, vector<1x256x128xbf16>
    %166 = vector.shape_cast %165 : vector<1x256x128xbf16> to vector<256x128xbf16>
    %cst_161 = arith.constant dense<0.000000e+00> : vector<112x128xf32>
    %167 = tpu.matmul %164, %166, %cst_161 {dimension_numbers = #tpu.dot_dimension_numbers<[1], [0], [0], [1], [0, 0, 1, 1], [], []>} : vector<112x256xbf16>, vector<256x128xbf16>, vector<112x128xf32> -> vector<112x128xf32>
    %168 = arith.addf %161, %167 : vector<112x128xf32>
    %c0_162 = arith.constant 0 : index
    %c1_163 = arith.constant 1 : index
    %c0_164 = arith.constant 0 : index
    %c0_165 = arith.constant 0 : index
    %169 = vector.load %arg9[%c0_162, %c1_163, %c0_164, %c0_165] : memref<7x16x16x256xbf16, #tpu.memory_space<vmem>>, vector<1x7x16x256xbf16>
    %170 = vector.shape_cast %169 : vector<1x7x16x256xbf16> to vector<7x16x256xbf16>
    %171 = vector.shape_cast %170 : vector<7x16x256xbf16> to vector<112x256xbf16>
    %c2_166 = arith.constant 2 : index
    %c0_167 = arith.constant 0 : index
    %c0_168 = arith.constant 0 : index
    %172 = vector.load %arg4[%c2_166, %c0_167, %c0_168] : memref<4x256x128xbf16, #tpu.memory_space<vmem>>, vector<1x256x128xbf16>
    %173 = vector.shape_cast %172 : vector<1x256x128xbf16> to vector<256x128xbf16>
    %cst_169 = arith.constant dense<0.000000e+00> : vector<112x128xf32>
    %174 = tpu.matmul %171, %173, %cst_169 {dimension_numbers = #tpu.dot_dimension_numbers<[1], [0], [0], [1], [0, 0, 1, 1], [], []>} : vector<112x256xbf16>, vector<256x128xbf16>, vector<112x128xf32> -> vector<112x128xf32>
    %175 = arith.addf %168, %174 : vector<112x128xf32>
    %c0_170 = arith.constant 0 : index
    %c9 = arith.constant 9 : index
    %c0_171 = arith.constant 0 : index
    %c0_172 = arith.constant 0 : index
    %176 = vector.load %arg9[%c0_170, %c9, %c0_171, %c0_172] : memref<7x16x16x256xbf16, #tpu.memory_space<vmem>>, vector<1x7x16x256xbf16>
    %177 = vector.shape_cast %176 : vector<1x7x16x256xbf16> to vector<7x16x256xbf16>
    %178 = vector.shape_cast %177 : vector<7x16x256xbf16> to vector<112x256xbf16>
    %c3_173 = arith.constant 3 : index
    %c0_174 = arith.constant 0 : index
    %c0_175 = arith.constant 0 : index
    %179 = vector.load %arg4[%c3_173, %c0_174, %c0_175] : memref<4x256x128xbf16, #tpu.memory_space<vmem>>, vector<1x256x128xbf16>
    %180 = vector.shape_cast %179 : vector<1x256x128xbf16> to vector<256x128xbf16>
    %cst_176 = arith.constant dense<0.000000e+00> : vector<112x128xf32>
    %181 = tpu.matmul %178, %180, %cst_176 {dimension_numbers = #tpu.dot_dimension_numbers<[1], [0], [0], [1], [0, 0, 1, 1], [], []>} : vector<112x256xbf16>, vector<256x128xbf16>, vector<112x128xf32> -> vector<112x128xf32>
    %182 = arith.addf %175, %181 : vector<112x128xf32>
    %c0_177 = arith.constant 0 : index
    %c0_178 = arith.constant 0 : index
    %183 = vector.load %arg5[%c0_177, %c0_178] : memref<1x128xf32, #tpu.memory_space<vmem>>, vector<1x128xf32>
    %184 = vector.broadcast %183 : vector<1x128xf32> to vector<112x128xf32>
    %185 = arith.addf %182, %184 : vector<112x128xf32>
    %cst_179 = arith.constant 2.000000e-01 : f32
    %186 = vector.broadcast %cst_179 : f32 to vector<112x128xf32>
    %187 = arith.mulf %186, %185 : vector<112x128xf32>
    %188 = arith.maximumf %185, %187 : vector<112x128xf32>
    %189 = vector.extract_strided_slice %188 {offsets = [0, 0], sizes = [16, 128], strides = [1, 1]} : vector<112x128xf32> to vector<16x128xf32>
    %c0_180 = arith.constant 0 : index
    %c0_181 = arith.constant 0 : index
    %c0_182 = arith.constant 0 : index
    %190 = vector.load %arg6[%c0_180, %c0_181, %c0_182] : memref<7x7x128xf32, #tpu.memory_space<vmem>>, vector<1x1x128xf32>
    %191 = vector.shape_cast %190 : vector<1x1x128xf32> to vector<1x128xf32>
    %192 = vector.broadcast %191 : vector<1x128xf32> to vector<16x128xf32>
    %193 = arith.mulf %189, %192 : vector<16x128xf32>
    %194 = arith.addf %155, %193 : vector<16x128xf32>
    %195 = vector.extract_strided_slice %188 {offsets = [16, 0], sizes = [16, 128], strides = [1, 1]} : vector<112x128xf32> to vector<16x128xf32>
    %c0_183 = arith.constant 0 : index
    %c1_184 = arith.constant 1 : index
    %c0_185 = arith.constant 0 : index
    %196 = vector.load %arg6[%c0_183, %c1_184, %c0_185] : memref<7x7x128xf32, #tpu.memory_space<vmem>>, vector<1x1x128xf32>
    %197 = vector.shape_cast %196 : vector<1x1x128xf32> to vector<1x128xf32>
    %198 = vector.broadcast %197 : vector<1x128xf32> to vector<16x128xf32>
    %199 = arith.mulf %195, %198 : vector<16x128xf32>
    %200 = arith.addf %194, %199 : vector<16x128xf32>
    %201 = vector.extract_strided_slice %188 {offsets = [32, 0], sizes = [16, 128], strides = [1, 1]} : vector<112x128xf32> to vector<16x128xf32>
    %c0_186 = arith.constant 0 : index
    %c2_187 = arith.constant 2 : index
    %c0_188 = arith.constant 0 : index
    %202 = vector.load %arg6[%c0_186, %c2_187, %c0_188] : memref<7x7x128xf32, #tpu.memory_space<vmem>>, vector<1x1x128xf32>
    %203 = vector.shape_cast %202 : vector<1x1x128xf32> to vector<1x128xf32>
    %204 = vector.broadcast %203 : vector<1x128xf32> to vector<16x128xf32>
    %205 = arith.mulf %201, %204 : vector<16x128xf32>
    %206 = arith.addf %200, %205 : vector<16x128xf32>
    %207 = vector.extract_strided_slice %188 {offsets = [48, 0], sizes = [16, 128], strides = [1, 1]} : vector<112x128xf32> to vector<16x128xf32>
    %c0_189 = arith.constant 0 : index
    %c3_190 = arith.constant 3 : index
    %c0_191 = arith.constant 0 : index
    %208 = vector.load %arg6[%c0_189, %c3_190, %c0_191] : memref<7x7x128xf32, #tpu.memory_space<vmem>>, vector<1x1x128xf32>
    %209 = vector.shape_cast %208 : vector<1x1x128xf32> to vector<1x128xf32>
    %210 = vector.broadcast %209 : vector<1x128xf32> to vector<16x128xf32>
    %211 = arith.mulf %207, %210 : vector<16x128xf32>
    %212 = arith.addf %206, %211 : vector<16x128xf32>
    %213 = vector.extract_strided_slice %188 {offsets = [64, 0], sizes = [16, 128], strides = [1, 1]} : vector<112x128xf32> to vector<16x128xf32>
    %c0_192 = arith.constant 0 : index
    %c4_193 = arith.constant 4 : index
    %c0_194 = arith.constant 0 : index
    %214 = vector.load %arg6[%c0_192, %c4_193, %c0_194] : memref<7x7x128xf32, #tpu.memory_space<vmem>>, vector<1x1x128xf32>
    %215 = vector.shape_cast %214 : vector<1x1x128xf32> to vector<1x128xf32>
    %216 = vector.broadcast %215 : vector<1x128xf32> to vector<16x128xf32>
    %217 = arith.mulf %213, %216 : vector<16x128xf32>
    %218 = arith.addf %212, %217 : vector<16x128xf32>
    %219 = vector.extract_strided_slice %188 {offsets = [80, 0], sizes = [16, 128], strides = [1, 1]} : vector<112x128xf32> to vector<16x128xf32>
    %c0_195 = arith.constant 0 : index
    %c5_196 = arith.constant 5 : index
    %c0_197 = arith.constant 0 : index
    %220 = vector.load %arg6[%c0_195, %c5_196, %c0_197] : memref<7x7x128xf32, #tpu.memory_space<vmem>>, vector<1x1x128xf32>
    %221 = vector.shape_cast %220 : vector<1x1x128xf32> to vector<1x128xf32>
    %222 = vector.broadcast %221 : vector<1x128xf32> to vector<16x128xf32>
    %223 = arith.mulf %219, %222 : vector<16x128xf32>
    %224 = arith.addf %218, %223 : vector<16x128xf32>
    %225 = vector.extract_strided_slice %188 {offsets = [96, 0], sizes = [16, 128], strides = [1, 1]} : vector<112x128xf32> to vector<16x128xf32>
    %c0_198 = arith.constant 0 : index
    %c6_199 = arith.constant 6 : index
    %c0_200 = arith.constant 0 : index
    %226 = vector.load %arg6[%c0_198, %c6_199, %c0_200] : memref<7x7x128xf32, #tpu.memory_space<vmem>>, vector<1x1x128xf32>
    %227 = vector.shape_cast %226 : vector<1x1x128xf32> to vector<1x128xf32>
    %228 = vector.broadcast %227 : vector<1x128xf32> to vector<16x128xf32>
    %229 = arith.mulf %225, %228 : vector<16x128xf32>
    %230 = arith.addf %224, %229 : vector<16x128xf32>
    %c1_201 = arith.constant 1 : index
    %c0_202 = arith.constant 0 : index
    %c0_203 = arith.constant 0 : index
    %c0_204 = arith.constant 0 : index
    %231 = vector.load %arg9[%c1_201, %c0_202, %c0_203, %c0_204] : memref<7x16x16x256xbf16, #tpu.memory_space<vmem>>, vector<1x7x16x256xbf16>
    %232 = vector.shape_cast %231 : vector<1x7x16x256xbf16> to vector<7x16x256xbf16>
    %233 = vector.shape_cast %232 : vector<7x16x256xbf16> to vector<112x256xbf16>
    %c0_205 = arith.constant 0 : index
    %c0_206 = arith.constant 0 : index
    %c0_207 = arith.constant 0 : index
    %234 = vector.load %arg4[%c0_205, %c0_206, %c0_207] : memref<4x256x128xbf16, #tpu.memory_space<vmem>>, vector<1x256x128xbf16>
    %235 = vector.shape_cast %234 : vector<1x256x128xbf16> to vector<256x128xbf16>
    %cst_208 = arith.constant dense<0.000000e+00> : vector<112x128xf32>
    %236 = tpu.matmul %233, %235, %cst_208 {dimension_numbers = #tpu.dot_dimension_numbers<[1], [0], [0], [1], [0, 0, 1, 1], [], []>} : vector<112x256xbf16>, vector<256x128xbf16>, vector<112x128xf32> -> vector<112x128xf32>
    %c1_209 = arith.constant 1 : index
    %c8_210 = arith.constant 8 : index
    %c0_211 = arith.constant 0 : index
    %c0_212 = arith.constant 0 : index
    %237 = vector.load %arg9[%c1_209, %c8_210, %c0_211, %c0_212] : memref<7x16x16x256xbf16, #tpu.memory_space<vmem>>, vector<1x7x16x256xbf16>
    %238 = vector.shape_cast %237 : vector<1x7x16x256xbf16> to vector<7x16x256xbf16>
    %239 = vector.shape_cast %238 : vector<7x16x256xbf16> to vector<112x256xbf16>
    %c1_213 = arith.constant 1 : index
    %c0_214 = arith.constant 0 : index
    %c0_215 = arith.constant 0 : index
    %240 = vector.load %arg4[%c1_213, %c0_214, %c0_215] : memref<4x256x128xbf16, #tpu.memory_space<vmem>>, vector<1x256x128xbf16>
    %241 = vector.shape_cast %240 : vector<1x256x128xbf16> to vector<256x128xbf16>
    %cst_216 = arith.constant dense<0.000000e+00> : vector<112x128xf32>
    %242 = tpu.matmul %239, %241, %cst_216 {dimension_numbers = #tpu.dot_dimension_numbers<[1], [0], [0], [1], [0, 0, 1, 1], [], []>} : vector<112x256xbf16>, vector<256x128xbf16>, vector<112x128xf32> -> vector<112x128xf32>
    %243 = arith.addf %236, %242 : vector<112x128xf32>
    %c1_217 = arith.constant 1 : index
    %c1_218 = arith.constant 1 : index
    %c0_219 = arith.constant 0 : index
    %c0_220 = arith.constant 0 : index
    %244 = vector.load %arg9[%c1_217, %c1_218, %c0_219, %c0_220] : memref<7x16x16x256xbf16, #tpu.memory_space<vmem>>, vector<1x7x16x256xbf16>
    %245 = vector.shape_cast %244 : vector<1x7x16x256xbf16> to vector<7x16x256xbf16>
    %246 = vector.shape_cast %245 : vector<7x16x256xbf16> to vector<112x256xbf16>
    %c2_221 = arith.constant 2 : index
    %c0_222 = arith.constant 0 : index
    %c0_223 = arith.constant 0 : index
    %247 = vector.load %arg4[%c2_221, %c0_222, %c0_223] : memref<4x256x128xbf16, #tpu.memory_space<vmem>>, vector<1x256x128xbf16>
    %248 = vector.shape_cast %247 : vector<1x256x128xbf16> to vector<256x128xbf16>
    %cst_224 = arith.constant dense<0.000000e+00> : vector<112x128xf32>
    %249 = tpu.matmul %246, %248, %cst_224 {dimension_numbers = #tpu.dot_dimension_numbers<[1], [0], [0], [1], [0, 0, 1, 1], [], []>} : vector<112x256xbf16>, vector<256x128xbf16>, vector<112x128xf32> -> vector<112x128xf32>
    %250 = arith.addf %243, %249 : vector<112x128xf32>
    %c1_225 = arith.constant 1 : index
    %c9_226 = arith.constant 9 : index
    %c0_227 = arith.constant 0 : index
    %c0_228 = arith.constant 0 : index
    %251 = vector.load %arg9[%c1_225, %c9_226, %c0_227, %c0_228] : memref<7x16x16x256xbf16, #tpu.memory_space<vmem>>, vector<1x7x16x256xbf16>
    %252 = vector.shape_cast %251 : vector<1x7x16x256xbf16> to vector<7x16x256xbf16>
    %253 = vector.shape_cast %252 : vector<7x16x256xbf16> to vector<112x256xbf16>
    %c3_229 = arith.constant 3 : index
    %c0_230 = arith.constant 0 : index
    %c0_231 = arith.constant 0 : index
    %254 = vector.load %arg4[%c3_229, %c0_230, %c0_231] : memref<4x256x128xbf16, #tpu.memory_space<vmem>>, vector<1x256x128xbf16>
    %255 = vector.shape_cast %254 : vector<1x256x128xbf16> to vector<256x128xbf16>
    %cst_232 = arith.constant dense<0.000000e+00> : vector<112x128xf32>
    %256 = tpu.matmul %253, %255, %cst_232 {dimension_numbers = #tpu.dot_dimension_numbers<[1], [0], [0], [1], [0, 0, 1, 1], [], []>} : vector<112x256xbf16>, vector<256x128xbf16>, vector<112x128xf32> -> vector<112x128xf32>
    %257 = arith.addf %250, %256 : vector<112x128xf32>
    %c0_233 = arith.constant 0 : index
    %c0_234 = arith.constant 0 : index
    %258 = vector.load %arg5[%c0_233, %c0_234] : memref<1x128xf32, #tpu.memory_space<vmem>>, vector<1x128xf32>
    %259 = vector.broadcast %258 : vector<1x128xf32> to vector<112x128xf32>
    %260 = arith.addf %257, %259 : vector<112x128xf32>
    %cst_235 = arith.constant 2.000000e-01 : f32
    %261 = vector.broadcast %cst_235 : f32 to vector<112x128xf32>
    %262 = arith.mulf %261, %260 : vector<112x128xf32>
    %263 = arith.maximumf %260, %262 : vector<112x128xf32>
    %264 = vector.extract_strided_slice %263 {offsets = [0, 0], sizes = [16, 128], strides = [1, 1]} : vector<112x128xf32> to vector<16x128xf32>
    %c1_236 = arith.constant 1 : index
    %c0_237 = arith.constant 0 : index
    %c0_238 = arith.constant 0 : index
    %265 = vector.load %arg6[%c1_236, %c0_237, %c0_238] : memref<7x7x128xf32, #tpu.memory_space<vmem>>, vector<1x1x128xf32>
    %266 = vector.shape_cast %265 : vector<1x1x128xf32> to vector<1x128xf32>
    %267 = vector.broadcast %266 : vector<1x128xf32> to vector<16x128xf32>
    %268 = arith.mulf %264, %267 : vector<16x128xf32>
    %269 = arith.addf %230, %268 : vector<16x128xf32>
    %270 = vector.extract_strided_slice %263 {offsets = [16, 0], sizes = [16, 128], strides = [1, 1]} : vector<112x128xf32> to vector<16x128xf32>
    %c1_239 = arith.constant 1 : index
    %c1_240 = arith.constant 1 : index
    %c0_241 = arith.constant 0 : index
    %271 = vector.load %arg6[%c1_239, %c1_240, %c0_241] : memref<7x7x128xf32, #tpu.memory_space<vmem>>, vector<1x1x128xf32>
    %272 = vector.shape_cast %271 : vector<1x1x128xf32> to vector<1x128xf32>
    %273 = vector.broadcast %272 : vector<1x128xf32> to vector<16x128xf32>
    %274 = arith.mulf %270, %273 : vector<16x128xf32>
    %275 = arith.addf %269, %274 : vector<16x128xf32>
    %276 = vector.extract_strided_slice %263 {offsets = [32, 0], sizes = [16, 128], strides = [1, 1]} : vector<112x128xf32> to vector<16x128xf32>
    %c1_242 = arith.constant 1 : index
    %c2_243 = arith.constant 2 : index
    %c0_244 = arith.constant 0 : index
    %277 = vector.load %arg6[%c1_242, %c2_243, %c0_244] : memref<7x7x128xf32, #tpu.memory_space<vmem>>, vector<1x1x128xf32>
    %278 = vector.shape_cast %277 : vector<1x1x128xf32> to vector<1x128xf32>
    %279 = vector.broadcast %278 : vector<1x128xf32> to vector<16x128xf32>
    %280 = arith.mulf %276, %279 : vector<16x128xf32>
    %281 = arith.addf %275, %280 : vector<16x128xf32>
    %282 = vector.extract_strided_slice %263 {offsets = [48, 0], sizes = [16, 128], strides = [1, 1]} : vector<112x128xf32> to vector<16x128xf32>
    %c1_245 = arith.constant 1 : index
    %c3_246 = arith.constant 3 : index
    %c0_247 = arith.constant 0 : index
    %283 = vector.load %arg6[%c1_245, %c3_246, %c0_247] : memref<7x7x128xf32, #tpu.memory_space<vmem>>, vector<1x1x128xf32>
    %284 = vector.shape_cast %283 : vector<1x1x128xf32> to vector<1x128xf32>
    %285 = vector.broadcast %284 : vector<1x128xf32> to vector<16x128xf32>
    %286 = arith.mulf %282, %285 : vector<16x128xf32>
    %287 = arith.addf %281, %286 : vector<16x128xf32>
    %288 = vector.extract_strided_slice %263 {offsets = [64, 0], sizes = [16, 128], strides = [1, 1]} : vector<112x128xf32> to vector<16x128xf32>
    %c1_248 = arith.constant 1 : index
    %c4_249 = arith.constant 4 : index
    %c0_250 = arith.constant 0 : index
    %289 = vector.load %arg6[%c1_248, %c4_249, %c0_250] : memref<7x7x128xf32, #tpu.memory_space<vmem>>, vector<1x1x128xf32>
    %290 = vector.shape_cast %289 : vector<1x1x128xf32> to vector<1x128xf32>
    %291 = vector.broadcast %290 : vector<1x128xf32> to vector<16x128xf32>
    %292 = arith.mulf %288, %291 : vector<16x128xf32>
    %293 = arith.addf %287, %292 : vector<16x128xf32>
    %294 = vector.extract_strided_slice %263 {offsets = [80, 0], sizes = [16, 128], strides = [1, 1]} : vector<112x128xf32> to vector<16x128xf32>
    %c1_251 = arith.constant 1 : index
    %c5_252 = arith.constant 5 : index
    %c0_253 = arith.constant 0 : index
    %295 = vector.load %arg6[%c1_251, %c5_252, %c0_253] : memref<7x7x128xf32, #tpu.memory_space<vmem>>, vector<1x1x128xf32>
    %296 = vector.shape_cast %295 : vector<1x1x128xf32> to vector<1x128xf32>
    %297 = vector.broadcast %296 : vector<1x128xf32> to vector<16x128xf32>
    %298 = arith.mulf %294, %297 : vector<16x128xf32>
    %299 = arith.addf %293, %298 : vector<16x128xf32>
    %300 = vector.extract_strided_slice %263 {offsets = [96, 0], sizes = [16, 128], strides = [1, 1]} : vector<112x128xf32> to vector<16x128xf32>
    %c1_254 = arith.constant 1 : index
    %c6_255 = arith.constant 6 : index
    %c0_256 = arith.constant 0 : index
    %301 = vector.load %arg6[%c1_254, %c6_255, %c0_256] : memref<7x7x128xf32, #tpu.memory_space<vmem>>, vector<1x1x128xf32>
    %302 = vector.shape_cast %301 : vector<1x1x128xf32> to vector<1x128xf32>
    %303 = vector.broadcast %302 : vector<1x128xf32> to vector<16x128xf32>
    %304 = arith.mulf %300, %303 : vector<16x128xf32>
    %305 = arith.addf %299, %304 : vector<16x128xf32>
    %c2_257 = arith.constant 2 : index
    %c0_258 = arith.constant 0 : index
    %c0_259 = arith.constant 0 : index
    %c0_260 = arith.constant 0 : index
    %306 = vector.load %arg9[%c2_257, %c0_258, %c0_259, %c0_260] : memref<7x16x16x256xbf16, #tpu.memory_space<vmem>>, vector<1x7x16x256xbf16>
    %307 = vector.shape_cast %306 : vector<1x7x16x256xbf16> to vector<7x16x256xbf16>
    %308 = vector.shape_cast %307 : vector<7x16x256xbf16> to vector<112x256xbf16>
    %c0_261 = arith.constant 0 : index
    %c0_262 = arith.constant 0 : index
    %c0_263 = arith.constant 0 : index
    %309 = vector.load %arg4[%c0_261, %c0_262, %c0_263] : memref<4x256x128xbf16, #tpu.memory_space<vmem>>, vector<1x256x128xbf16>
    %310 = vector.shape_cast %309 : vector<1x256x128xbf16> to vector<256x128xbf16>
    %cst_264 = arith.constant dense<0.000000e+00> : vector<112x128xf32>
    %311 = tpu.matmul %308, %310, %cst_264 {dimension_numbers = #tpu.dot_dimension_numbers<[1], [0], [0], [1], [0, 0, 1, 1], [], []>} : vector<112x256xbf16>, vector<256x128xbf16>, vector<112x128xf32> -> vector<112x128xf32>
    %c2_265 = arith.constant 2 : index
    %c8_266 = arith.constant 8 : index
    %c0_267 = arith.constant 0 : index
    %c0_268 = arith.constant 0 : index
    %312 = vector.load %arg9[%c2_265, %c8_266, %c0_267, %c0_268] : memref<7x16x16x256xbf16, #tpu.memory_space<vmem>>, vector<1x7x16x256xbf16>
    %313 = vector.shape_cast %312 : vector<1x7x16x256xbf16> to vector<7x16x256xbf16>
    %314 = vector.shape_cast %313 : vector<7x16x256xbf16> to vector<112x256xbf16>
    %c1_269 = arith.constant 1 : index
    %c0_270 = arith.constant 0 : index
    %c0_271 = arith.constant 0 : index
    %315 = vector.load %arg4[%c1_269, %c0_270, %c0_271] : memref<4x256x128xbf16, #tpu.memory_space<vmem>>, vector<1x256x128xbf16>
    %316 = vector.shape_cast %315 : vector<1x256x128xbf16> to vector<256x128xbf16>
    %cst_272 = arith.constant dense<0.000000e+00> : vector<112x128xf32>
    %317 = tpu.matmul %314, %316, %cst_272 {dimension_numbers = #tpu.dot_dimension_numbers<[1], [0], [0], [1], [0, 0, 1, 1], [], []>} : vector<112x256xbf16>, vector<256x128xbf16>, vector<112x128xf32> -> vector<112x128xf32>
    %318 = arith.addf %311, %317 : vector<112x128xf32>
    %c2_273 = arith.constant 2 : index
    %c1_274 = arith.constant 1 : index
    %c0_275 = arith.constant 0 : index
    %c0_276 = arith.constant 0 : index
    %319 = vector.load %arg9[%c2_273, %c1_274, %c0_275, %c0_276] : memref<7x16x16x256xbf16, #tpu.memory_space<vmem>>, vector<1x7x16x256xbf16>
    %320 = vector.shape_cast %319 : vector<1x7x16x256xbf16> to vector<7x16x256xbf16>
    %321 = vector.shape_cast %320 : vector<7x16x256xbf16> to vector<112x256xbf16>
    %c2_277 = arith.constant 2 : index
    %c0_278 = arith.constant 0 : index
    %c0_279 = arith.constant 0 : index
    %322 = vector.load %arg4[%c2_277, %c0_278, %c0_279] : memref<4x256x128xbf16, #tpu.memory_space<vmem>>, vector<1x256x128xbf16>
    %323 = vector.shape_cast %322 : vector<1x256x128xbf16> to vector<256x128xbf16>
    %cst_280 = arith.constant dense<0.000000e+00> : vector<112x128xf32>
    %324 = tpu.matmul %321, %323, %cst_280 {dimension_numbers = #tpu.dot_dimension_numbers<[1], [0], [0], [1], [0, 0, 1, 1], [], []>} : vector<112x256xbf16>, vector<256x128xbf16>, vector<112x128xf32> -> vector<112x128xf32>
    %325 = arith.addf %318, %324 : vector<112x128xf32>
    %c2_281 = arith.constant 2 : index
    %c9_282 = arith.constant 9 : index
    %c0_283 = arith.constant 0 : index
    %c0_284 = arith.constant 0 : index
    %326 = vector.load %arg9[%c2_281, %c9_282, %c0_283, %c0_284] : memref<7x16x16x256xbf16, #tpu.memory_space<vmem>>, vector<1x7x16x256xbf16>
    %327 = vector.shape_cast %326 : vector<1x7x16x256xbf16> to vector<7x16x256xbf16>
    %328 = vector.shape_cast %327 : vector<7x16x256xbf16> to vector<112x256xbf16>
    %c3_285 = arith.constant 3 : index
    %c0_286 = arith.constant 0 : index
    %c0_287 = arith.constant 0 : index
    %329 = vector.load %arg4[%c3_285, %c0_286, %c0_287] : memref<4x256x128xbf16, #tpu.memory_space<vmem>>, vector<1x256x128xbf16>
    %330 = vector.shape_cast %329 : vector<1x256x128xbf16> to vector<256x128xbf16>
    %cst_288 = arith.constant dense<0.000000e+00> : vector<112x128xf32>
    %331 = tpu.matmul %328, %330, %cst_288 {dimension_numbers = #tpu.dot_dimension_numbers<[1], [0], [0], [1], [0, 0, 1, 1], [], []>} : vector<112x256xbf16>, vector<256x128xbf16>, vector<112x128xf32> -> vector<112x128xf32>
    %332 = arith.addf %325, %331 : vector<112x128xf32>
    %c0_289 = arith.constant 0 : index
    %c0_290 = arith.constant 0 : index
    %333 = vector.load %arg5[%c0_289, %c0_290] : memref<1x128xf32, #tpu.memory_space<vmem>>, vector<1x128xf32>
    %334 = vector.broadcast %333 : vector<1x128xf32> to vector<112x128xf32>
    %335 = arith.addf %332, %334 : vector<112x128xf32>
    %cst_291 = arith.constant 2.000000e-01 : f32
    %336 = vector.broadcast %cst_291 : f32 to vector<112x128xf32>
    %337 = arith.mulf %336, %335 : vector<112x128xf32>
    %338 = arith.maximumf %335, %337 : vector<112x128xf32>
    %339 = vector.extract_strided_slice %338 {offsets = [0, 0], sizes = [16, 128], strides = [1, 1]} : vector<112x128xf32> to vector<16x128xf32>
    %c2_292 = arith.constant 2 : index
    %c0_293 = arith.constant 0 : index
    %c0_294 = arith.constant 0 : index
    %340 = vector.load %arg6[%c2_292, %c0_293, %c0_294] : memref<7x7x128xf32, #tpu.memory_space<vmem>>, vector<1x1x128xf32>
    %341 = vector.shape_cast %340 : vector<1x1x128xf32> to vector<1x128xf32>
    %342 = vector.broadcast %341 : vector<1x128xf32> to vector<16x128xf32>
    %343 = arith.mulf %339, %342 : vector<16x128xf32>
    %344 = arith.addf %305, %343 : vector<16x128xf32>
    %345 = vector.extract_strided_slice %338 {offsets = [16, 0], sizes = [16, 128], strides = [1, 1]} : vector<112x128xf32> to vector<16x128xf32>
    %c2_295 = arith.constant 2 : index
    %c1_296 = arith.constant 1 : index
    %c0_297 = arith.constant 0 : index
    %346 = vector.load %arg6[%c2_295, %c1_296, %c0_297] : memref<7x7x128xf32, #tpu.memory_space<vmem>>, vector<1x1x128xf32>
    %347 = vector.shape_cast %346 : vector<1x1x128xf32> to vector<1x128xf32>
    %348 = vector.broadcast %347 : vector<1x128xf32> to vector<16x128xf32>
    %349 = arith.mulf %345, %348 : vector<16x128xf32>
    %350 = arith.addf %344, %349 : vector<16x128xf32>
    %351 = vector.extract_strided_slice %338 {offsets = [32, 0], sizes = [16, 128], strides = [1, 1]} : vector<112x128xf32> to vector<16x128xf32>
    %c2_298 = arith.constant 2 : index
    %c2_299 = arith.constant 2 : index
    %c0_300 = arith.constant 0 : index
    %352 = vector.load %arg6[%c2_298, %c2_299, %c0_300] : memref<7x7x128xf32, #tpu.memory_space<vmem>>, vector<1x1x128xf32>
    %353 = vector.shape_cast %352 : vector<1x1x128xf32> to vector<1x128xf32>
    %354 = vector.broadcast %353 : vector<1x128xf32> to vector<16x128xf32>
    %355 = arith.mulf %351, %354 : vector<16x128xf32>
    %356 = arith.addf %350, %355 : vector<16x128xf32>
    %357 = vector.extract_strided_slice %338 {offsets = [48, 0], sizes = [16, 128], strides = [1, 1]} : vector<112x128xf32> to vector<16x128xf32>
    %c2_301 = arith.constant 2 : index
    %c3_302 = arith.constant 3 : index
    %c0_303 = arith.constant 0 : index
    %358 = vector.load %arg6[%c2_301, %c3_302, %c0_303] : memref<7x7x128xf32, #tpu.memory_space<vmem>>, vector<1x1x128xf32>
    %359 = vector.shape_cast %358 : vector<1x1x128xf32> to vector<1x128xf32>
    %360 = vector.broadcast %359 : vector<1x128xf32> to vector<16x128xf32>
    %361 = arith.mulf %357, %360 : vector<16x128xf32>
    %362 = arith.addf %356, %361 : vector<16x128xf32>
    %363 = vector.extract_strided_slice %338 {offsets = [64, 0], sizes = [16, 128], strides = [1, 1]} : vector<112x128xf32> to vector<16x128xf32>
    %c2_304 = arith.constant 2 : index
    %c4_305 = arith.constant 4 : index
    %c0_306 = arith.constant 0 : index
    %364 = vector.load %arg6[%c2_304, %c4_305, %c0_306] : memref<7x7x128xf32, #tpu.memory_space<vmem>>, vector<1x1x128xf32>
    %365 = vector.shape_cast %364 : vector<1x1x128xf32> to vector<1x128xf32>
    %366 = vector.broadcast %365 : vector<1x128xf32> to vector<16x128xf32>
    %367 = arith.mulf %363, %366 : vector<16x128xf32>
    %368 = arith.addf %362, %367 : vector<16x128xf32>
    %369 = vector.extract_strided_slice %338 {offsets = [80, 0], sizes = [16, 128], strides = [1, 1]} : vector<112x128xf32> to vector<16x128xf32>
    %c2_307 = arith.constant 2 : index
    %c5_308 = arith.constant 5 : index
    %c0_309 = arith.constant 0 : index
    %370 = vector.load %arg6[%c2_307, %c5_308, %c0_309] : memref<7x7x128xf32, #tpu.memory_space<vmem>>, vector<1x1x128xf32>
    %371 = vector.shape_cast %370 : vector<1x1x128xf32> to vector<1x128xf32>
    %372 = vector.broadcast %371 : vector<1x128xf32> to vector<16x128xf32>
    %373 = arith.mulf %369, %372 : vector<16x128xf32>
    %374 = arith.addf %368, %373 : vector<16x128xf32>
    %375 = vector.extract_strided_slice %338 {offsets = [96, 0], sizes = [16, 128], strides = [1, 1]} : vector<112x128xf32> to vector<16x128xf32>
    %c2_310 = arith.constant 2 : index
    %c6_311 = arith.constant 6 : index
    %c0_312 = arith.constant 0 : index
    %376 = vector.load %arg6[%c2_310, %c6_311, %c0_312] : memref<7x7x128xf32, #tpu.memory_space<vmem>>, vector<1x1x128xf32>
    %377 = vector.shape_cast %376 : vector<1x1x128xf32> to vector<1x128xf32>
    %378 = vector.broadcast %377 : vector<1x128xf32> to vector<16x128xf32>
    %379 = arith.mulf %375, %378 : vector<16x128xf32>
    %380 = arith.addf %374, %379 : vector<16x128xf32>
    %c3_313 = arith.constant 3 : index
    %c0_314 = arith.constant 0 : index
    %c0_315 = arith.constant 0 : index
    %c0_316 = arith.constant 0 : index
    %381 = vector.load %arg9[%c3_313, %c0_314, %c0_315, %c0_316] : memref<7x16x16x256xbf16, #tpu.memory_space<vmem>>, vector<1x7x16x256xbf16>
    %382 = vector.shape_cast %381 : vector<1x7x16x256xbf16> to vector<7x16x256xbf16>
    %383 = vector.shape_cast %382 : vector<7x16x256xbf16> to vector<112x256xbf16>
    %c0_317 = arith.constant 0 : index
    %c0_318 = arith.constant 0 : index
    %c0_319 = arith.constant 0 : index
    %384 = vector.load %arg4[%c0_317, %c0_318, %c0_319] : memref<4x256x128xbf16, #tpu.memory_space<vmem>>, vector<1x256x128xbf16>
    %385 = vector.shape_cast %384 : vector<1x256x128xbf16> to vector<256x128xbf16>
    %cst_320 = arith.constant dense<0.000000e+00> : vector<112x128xf32>
    %386 = tpu.matmul %383, %385, %cst_320 {dimension_numbers = #tpu.dot_dimension_numbers<[1], [0], [0], [1], [0, 0, 1, 1], [], []>} : vector<112x256xbf16>, vector<256x128xbf16>, vector<112x128xf32> -> vector<112x128xf32>
    %c3_321 = arith.constant 3 : index
    %c8_322 = arith.constant 8 : index
    %c0_323 = arith.constant 0 : index
    %c0_324 = arith.constant 0 : index
    %387 = vector.load %arg9[%c3_321, %c8_322, %c0_323, %c0_324] : memref<7x16x16x256xbf16, #tpu.memory_space<vmem>>, vector<1x7x16x256xbf16>
    %388 = vector.shape_cast %387 : vector<1x7x16x256xbf16> to vector<7x16x256xbf16>
    %389 = vector.shape_cast %388 : vector<7x16x256xbf16> to vector<112x256xbf16>
    %c1_325 = arith.constant 1 : index
    %c0_326 = arith.constant 0 : index
    %c0_327 = arith.constant 0 : index
    %390 = vector.load %arg4[%c1_325, %c0_326, %c0_327] : memref<4x256x128xbf16, #tpu.memory_space<vmem>>, vector<1x256x128xbf16>
    %391 = vector.shape_cast %390 : vector<1x256x128xbf16> to vector<256x128xbf16>
    %cst_328 = arith.constant dense<0.000000e+00> : vector<112x128xf32>
    %392 = tpu.matmul %389, %391, %cst_328 {dimension_numbers = #tpu.dot_dimension_numbers<[1], [0], [0], [1], [0, 0, 1, 1], [], []>} : vector<112x256xbf16>, vector<256x128xbf16>, vector<112x128xf32> -> vector<112x128xf32>
    %393 = arith.addf %386, %392 : vector<112x128xf32>
    %c3_329 = arith.constant 3 : index
    %c1_330 = arith.constant 1 : index
    %c0_331 = arith.constant 0 : index
    %c0_332 = arith.constant 0 : index
    %394 = vector.load %arg9[%c3_329, %c1_330, %c0_331, %c0_332] : memref<7x16x16x256xbf16, #tpu.memory_space<vmem>>, vector<1x7x16x256xbf16>
    %395 = vector.shape_cast %394 : vector<1x7x16x256xbf16> to vector<7x16x256xbf16>
    %396 = vector.shape_cast %395 : vector<7x16x256xbf16> to vector<112x256xbf16>
    %c2_333 = arith.constant 2 : index
    %c0_334 = arith.constant 0 : index
    %c0_335 = arith.constant 0 : index
    %397 = vector.load %arg4[%c2_333, %c0_334, %c0_335] : memref<4x256x128xbf16, #tpu.memory_space<vmem>>, vector<1x256x128xbf16>
    %398 = vector.shape_cast %397 : vector<1x256x128xbf16> to vector<256x128xbf16>
    %cst_336 = arith.constant dense<0.000000e+00> : vector<112x128xf32>
    %399 = tpu.matmul %396, %398, %cst_336 {dimension_numbers = #tpu.dot_dimension_numbers<[1], [0], [0], [1], [0, 0, 1, 1], [], []>} : vector<112x256xbf16>, vector<256x128xbf16>, vector<112x128xf32> -> vector<112x128xf32>
    %400 = arith.addf %393, %399 : vector<112x128xf32>
    %c3_337 = arith.constant 3 : index
    %c9_338 = arith.constant 9 : index
    %c0_339 = arith.constant 0 : index
    %c0_340 = arith.constant 0 : index
    %401 = vector.load %arg9[%c3_337, %c9_338, %c0_339, %c0_340] : memref<7x16x16x256xbf16, #tpu.memory_space<vmem>>, vector<1x7x16x256xbf16>
    %402 = vector.shape_cast %401 : vector<1x7x16x256xbf16> to vector<7x16x256xbf16>
    %403 = vector.shape_cast %402 : vector<7x16x256xbf16> to vector<112x256xbf16>
    %c3_341 = arith.constant 3 : index
    %c0_342 = arith.constant 0 : index
    %c0_343 = arith.constant 0 : index
    %404 = vector.load %arg4[%c3_341, %c0_342, %c0_343] : memref<4x256x128xbf16, #tpu.memory_space<vmem>>, vector<1x256x128xbf16>
    %405 = vector.shape_cast %404 : vector<1x256x128xbf16> to vector<256x128xbf16>
    %cst_344 = arith.constant dense<0.000000e+00> : vector<112x128xf32>
    %406 = tpu.matmul %403, %405, %cst_344 {dimension_numbers = #tpu.dot_dimension_numbers<[1], [0], [0], [1], [0, 0, 1, 1], [], []>} : vector<112x256xbf16>, vector<256x128xbf16>, vector<112x128xf32> -> vector<112x128xf32>
    %407 = arith.addf %400, %406 : vector<112x128xf32>
    %c0_345 = arith.constant 0 : index
    %c0_346 = arith.constant 0 : index
    %408 = vector.load %arg5[%c0_345, %c0_346] : memref<1x128xf32, #tpu.memory_space<vmem>>, vector<1x128xf32>
    %409 = vector.broadcast %408 : vector<1x128xf32> to vector<112x128xf32>
    %410 = arith.addf %407, %409 : vector<112x128xf32>
    %cst_347 = arith.constant 2.000000e-01 : f32
    %411 = vector.broadcast %cst_347 : f32 to vector<112x128xf32>
    %412 = arith.mulf %411, %410 : vector<112x128xf32>
    %413 = arith.maximumf %410, %412 : vector<112x128xf32>
    %414 = vector.extract_strided_slice %413 {offsets = [0, 0], sizes = [16, 128], strides = [1, 1]} : vector<112x128xf32> to vector<16x128xf32>
    %c3_348 = arith.constant 3 : index
    %c0_349 = arith.constant 0 : index
    %c0_350 = arith.constant 0 : index
    %415 = vector.load %arg6[%c3_348, %c0_349, %c0_350] : memref<7x7x128xf32, #tpu.memory_space<vmem>>, vector<1x1x128xf32>
    %416 = vector.shape_cast %415 : vector<1x1x128xf32> to vector<1x128xf32>
    %417 = vector.broadcast %416 : vector<1x128xf32> to vector<16x128xf32>
    %418 = arith.mulf %414, %417 : vector<16x128xf32>
    %419 = arith.addf %380, %418 : vector<16x128xf32>
    %420 = vector.extract_strided_slice %413 {offsets = [16, 0], sizes = [16, 128], strides = [1, 1]} : vector<112x128xf32> to vector<16x128xf32>
    %c3_351 = arith.constant 3 : index
    %c1_352 = arith.constant 1 : index
    %c0_353 = arith.constant 0 : index
    %421 = vector.load %arg6[%c3_351, %c1_352, %c0_353] : memref<7x7x128xf32, #tpu.memory_space<vmem>>, vector<1x1x128xf32>
    %422 = vector.shape_cast %421 : vector<1x1x128xf32> to vector<1x128xf32>
    %423 = vector.broadcast %422 : vector<1x128xf32> to vector<16x128xf32>
    %424 = arith.mulf %420, %423 : vector<16x128xf32>
    %425 = arith.addf %419, %424 : vector<16x128xf32>
    %426 = vector.extract_strided_slice %413 {offsets = [32, 0], sizes = [16, 128], strides = [1, 1]} : vector<112x128xf32> to vector<16x128xf32>
    %c3_354 = arith.constant 3 : index
    %c2_355 = arith.constant 2 : index
    %c0_356 = arith.constant 0 : index
    %427 = vector.load %arg6[%c3_354, %c2_355, %c0_356] : memref<7x7x128xf32, #tpu.memory_space<vmem>>, vector<1x1x128xf32>
    %428 = vector.shape_cast %427 : vector<1x1x128xf32> to vector<1x128xf32>
    %429 = vector.broadcast %428 : vector<1x128xf32> to vector<16x128xf32>
    %430 = arith.mulf %426, %429 : vector<16x128xf32>
    %431 = arith.addf %425, %430 : vector<16x128xf32>
    %432 = vector.extract_strided_slice %413 {offsets = [48, 0], sizes = [16, 128], strides = [1, 1]} : vector<112x128xf32> to vector<16x128xf32>
    %c3_357 = arith.constant 3 : index
    %c3_358 = arith.constant 3 : index
    %c0_359 = arith.constant 0 : index
    %433 = vector.load %arg6[%c3_357, %c3_358, %c0_359] : memref<7x7x128xf32, #tpu.memory_space<vmem>>, vector<1x1x128xf32>
    %434 = vector.shape_cast %433 : vector<1x1x128xf32> to vector<1x128xf32>
    %435 = vector.broadcast %434 : vector<1x128xf32> to vector<16x128xf32>
    %436 = arith.mulf %432, %435 : vector<16x128xf32>
    %437 = arith.addf %431, %436 : vector<16x128xf32>
    %438 = vector.extract_strided_slice %413 {offsets = [64, 0], sizes = [16, 128], strides = [1, 1]} : vector<112x128xf32> to vector<16x128xf32>
    %c3_360 = arith.constant 3 : index
    %c4_361 = arith.constant 4 : index
    %c0_362 = arith.constant 0 : index
    %439 = vector.load %arg6[%c3_360, %c4_361, %c0_362] : memref<7x7x128xf32, #tpu.memory_space<vmem>>, vector<1x1x128xf32>
    %440 = vector.shape_cast %439 : vector<1x1x128xf32> to vector<1x128xf32>
    %441 = vector.broadcast %440 : vector<1x128xf32> to vector<16x128xf32>
    %442 = arith.mulf %438, %441 : vector<16x128xf32>
    %443 = arith.addf %437, %442 : vector<16x128xf32>
    %444 = vector.extract_strided_slice %413 {offsets = [80, 0], sizes = [16, 128], strides = [1, 1]} : vector<112x128xf32> to vector<16x128xf32>
    %c3_363 = arith.constant 3 : index
    %c5_364 = arith.constant 5 : index
    %c0_365 = arith.constant 0 : index
    %445 = vector.load %arg6[%c3_363, %c5_364, %c0_365] : memref<7x7x128xf32, #tpu.memory_space<vmem>>, vector<1x1x128xf32>
    %446 = vector.shape_cast %445 : vector<1x1x128xf32> to vector<1x128xf32>
    %447 = vector.broadcast %446 : vector<1x128xf32> to vector<16x128xf32>
    %448 = arith.mulf %444, %447 : vector<16x128xf32>
    %449 = arith.addf %443, %448 : vector<16x128xf32>
    %450 = vector.extract_strided_slice %413 {offsets = [96, 0], sizes = [16, 128], strides = [1, 1]} : vector<112x128xf32> to vector<16x128xf32>
    %c3_366 = arith.constant 3 : index
    %c6_367 = arith.constant 6 : index
    %c0_368 = arith.constant 0 : index
    %451 = vector.load %arg6[%c3_366, %c6_367, %c0_368] : memref<7x7x128xf32, #tpu.memory_space<vmem>>, vector<1x1x128xf32>
    %452 = vector.shape_cast %451 : vector<1x1x128xf32> to vector<1x128xf32>
    %453 = vector.broadcast %452 : vector<1x128xf32> to vector<16x128xf32>
    %454 = arith.mulf %450, %453 : vector<16x128xf32>
    %455 = arith.addf %449, %454 : vector<16x128xf32>
    %c4_369 = arith.constant 4 : index
    %c0_370 = arith.constant 0 : index
    %c0_371 = arith.constant 0 : index
    %c0_372 = arith.constant 0 : index
    %456 = vector.load %arg9[%c4_369, %c0_370, %c0_371, %c0_372] : memref<7x16x16x256xbf16, #tpu.memory_space<vmem>>, vector<1x7x16x256xbf16>
    %457 = vector.shape_cast %456 : vector<1x7x16x256xbf16> to vector<7x16x256xbf16>
    %458 = vector.shape_cast %457 : vector<7x16x256xbf16> to vector<112x256xbf16>
    %c0_373 = arith.constant 0 : index
    %c0_374 = arith.constant 0 : index
    %c0_375 = arith.constant 0 : index
    %459 = vector.load %arg4[%c0_373, %c0_374, %c0_375] : memref<4x256x128xbf16, #tpu.memory_space<vmem>>, vector<1x256x128xbf16>
    %460 = vector.shape_cast %459 : vector<1x256x128xbf16> to vector<256x128xbf16>
    %cst_376 = arith.constant dense<0.000000e+00> : vector<112x128xf32>
    %461 = tpu.matmul %458, %460, %cst_376 {dimension_numbers = #tpu.dot_dimension_numbers<[1], [0], [0], [1], [0, 0, 1, 1], [], []>} : vector<112x256xbf16>, vector<256x128xbf16>, vector<112x128xf32> -> vector<112x128xf32>
    %c4_377 = arith.constant 4 : index
    %c8_378 = arith.constant 8 : index
    %c0_379 = arith.constant 0 : index
    %c0_380 = arith.constant 0 : index
    %462 = vector.load %arg9[%c4_377, %c8_378, %c0_379, %c0_380] : memref<7x16x16x256xbf16, #tpu.memory_space<vmem>>, vector<1x7x16x256xbf16>
    %463 = vector.shape_cast %462 : vector<1x7x16x256xbf16> to vector<7x16x256xbf16>
    %464 = vector.shape_cast %463 : vector<7x16x256xbf16> to vector<112x256xbf16>
    %c1_381 = arith.constant 1 : index
    %c0_382 = arith.constant 0 : index
    %c0_383 = arith.constant 0 : index
    %465 = vector.load %arg4[%c1_381, %c0_382, %c0_383] : memref<4x256x128xbf16, #tpu.memory_space<vmem>>, vector<1x256x128xbf16>
    %466 = vector.shape_cast %465 : vector<1x256x128xbf16> to vector<256x128xbf16>
    %cst_384 = arith.constant dense<0.000000e+00> : vector<112x128xf32>
    %467 = tpu.matmul %464, %466, %cst_384 {dimension_numbers = #tpu.dot_dimension_numbers<[1], [0], [0], [1], [0, 0, 1, 1], [], []>} : vector<112x256xbf16>, vector<256x128xbf16>, vector<112x128xf32> -> vector<112x128xf32>
    %468 = arith.addf %461, %467 : vector<112x128xf32>
    %c4_385 = arith.constant 4 : index
    %c1_386 = arith.constant 1 : index
    %c0_387 = arith.constant 0 : index
    %c0_388 = arith.constant 0 : index
    %469 = vector.load %arg9[%c4_385, %c1_386, %c0_387, %c0_388] : memref<7x16x16x256xbf16, #tpu.memory_space<vmem>>, vector<1x7x16x256xbf16>
    %470 = vector.shape_cast %469 : vector<1x7x16x256xbf16> to vector<7x16x256xbf16>
    %471 = vector.shape_cast %470 : vector<7x16x256xbf16> to vector<112x256xbf16>
    %c2_389 = arith.constant 2 : index
    %c0_390 = arith.constant 0 : index
    %c0_391 = arith.constant 0 : index
    %472 = vector.load %arg4[%c2_389, %c0_390, %c0_391] : memref<4x256x128xbf16, #tpu.memory_space<vmem>>, vector<1x256x128xbf16>
    %473 = vector.shape_cast %472 : vector<1x256x128xbf16> to vector<256x128xbf16>
    %cst_392 = arith.constant dense<0.000000e+00> : vector<112x128xf32>
    %474 = tpu.matmul %471, %473, %cst_392 {dimension_numbers = #tpu.dot_dimension_numbers<[1], [0], [0], [1], [0, 0, 1, 1], [], []>} : vector<112x256xbf16>, vector<256x128xbf16>, vector<112x128xf32> -> vector<112x128xf32>
    %475 = arith.addf %468, %474 : vector<112x128xf32>
    %c4_393 = arith.constant 4 : index
    %c9_394 = arith.constant 9 : index
    %c0_395 = arith.constant 0 : index
    %c0_396 = arith.constant 0 : index
    %476 = vector.load %arg9[%c4_393, %c9_394, %c0_395, %c0_396] : memref<7x16x16x256xbf16, #tpu.memory_space<vmem>>, vector<1x7x16x256xbf16>
    %477 = vector.shape_cast %476 : vector<1x7x16x256xbf16> to vector<7x16x256xbf16>
    %478 = vector.shape_cast %477 : vector<7x16x256xbf16> to vector<112x256xbf16>
    %c3_397 = arith.constant 3 : index
    %c0_398 = arith.constant 0 : index
    %c0_399 = arith.constant 0 : index
    %479 = vector.load %arg4[%c3_397, %c0_398, %c0_399] : memref<4x256x128xbf16, #tpu.memory_space<vmem>>, vector<1x256x128xbf16>
    %480 = vector.shape_cast %479 : vector<1x256x128xbf16> to vector<256x128xbf16>
    %cst_400 = arith.constant dense<0.000000e+00> : vector<112x128xf32>
    %481 = tpu.matmul %478, %480, %cst_400 {dimension_numbers = #tpu.dot_dimension_numbers<[1], [0], [0], [1], [0, 0, 1, 1], [], []>} : vector<112x256xbf16>, vector<256x128xbf16>, vector<112x128xf32> -> vector<112x128xf32>
    %482 = arith.addf %475, %481 : vector<112x128xf32>
    %c0_401 = arith.constant 0 : index
    %c0_402 = arith.constant 0 : index
    %483 = vector.load %arg5[%c0_401, %c0_402] : memref<1x128xf32, #tpu.memory_space<vmem>>, vector<1x128xf32>
    %484 = vector.broadcast %483 : vector<1x128xf32> to vector<112x128xf32>
    %485 = arith.addf %482, %484 : vector<112x128xf32>
    %cst_403 = arith.constant 2.000000e-01 : f32
    %486 = vector.broadcast %cst_403 : f32 to vector<112x128xf32>
    %487 = arith.mulf %486, %485 : vector<112x128xf32>
    %488 = arith.maximumf %485, %487 : vector<112x128xf32>
    %489 = vector.extract_strided_slice %488 {offsets = [0, 0], sizes = [16, 128], strides = [1, 1]} : vector<112x128xf32> to vector<16x128xf32>
    %c4_404 = arith.constant 4 : index
    %c0_405 = arith.constant 0 : index
    %c0_406 = arith.constant 0 : index
    %490 = vector.load %arg6[%c4_404, %c0_405, %c0_406] : memref<7x7x128xf32, #tpu.memory_space<vmem>>, vector<1x1x128xf32>
    %491 = vector.shape_cast %490 : vector<1x1x128xf32> to vector<1x128xf32>
    %492 = vector.broadcast %491 : vector<1x128xf32> to vector<16x128xf32>
    %493 = arith.mulf %489, %492 : vector<16x128xf32>
    %494 = arith.addf %455, %493 : vector<16x128xf32>
    %495 = vector.extract_strided_slice %488 {offsets = [16, 0], sizes = [16, 128], strides = [1, 1]} : vector<112x128xf32> to vector<16x128xf32>
    %c4_407 = arith.constant 4 : index
    %c1_408 = arith.constant 1 : index
    %c0_409 = arith.constant 0 : index
    %496 = vector.load %arg6[%c4_407, %c1_408, %c0_409] : memref<7x7x128xf32, #tpu.memory_space<vmem>>, vector<1x1x128xf32>
    %497 = vector.shape_cast %496 : vector<1x1x128xf32> to vector<1x128xf32>
    %498 = vector.broadcast %497 : vector<1x128xf32> to vector<16x128xf32>
    %499 = arith.mulf %495, %498 : vector<16x128xf32>
    %500 = arith.addf %494, %499 : vector<16x128xf32>
    %501 = vector.extract_strided_slice %488 {offsets = [32, 0], sizes = [16, 128], strides = [1, 1]} : vector<112x128xf32> to vector<16x128xf32>
    %c4_410 = arith.constant 4 : index
    %c2_411 = arith.constant 2 : index
    %c0_412 = arith.constant 0 : index
    %502 = vector.load %arg6[%c4_410, %c2_411, %c0_412] : memref<7x7x128xf32, #tpu.memory_space<vmem>>, vector<1x1x128xf32>
    %503 = vector.shape_cast %502 : vector<1x1x128xf32> to vector<1x128xf32>
    %504 = vector.broadcast %503 : vector<1x128xf32> to vector<16x128xf32>
    %505 = arith.mulf %501, %504 : vector<16x128xf32>
    %506 = arith.addf %500, %505 : vector<16x128xf32>
    %507 = vector.extract_strided_slice %488 {offsets = [48, 0], sizes = [16, 128], strides = [1, 1]} : vector<112x128xf32> to vector<16x128xf32>
    %c4_413 = arith.constant 4 : index
    %c3_414 = arith.constant 3 : index
    %c0_415 = arith.constant 0 : index
    %508 = vector.load %arg6[%c4_413, %c3_414, %c0_415] : memref<7x7x128xf32, #tpu.memory_space<vmem>>, vector<1x1x128xf32>
    %509 = vector.shape_cast %508 : vector<1x1x128xf32> to vector<1x128xf32>
    %510 = vector.broadcast %509 : vector<1x128xf32> to vector<16x128xf32>
    %511 = arith.mulf %507, %510 : vector<16x128xf32>
    %512 = arith.addf %506, %511 : vector<16x128xf32>
    %513 = vector.extract_strided_slice %488 {offsets = [64, 0], sizes = [16, 128], strides = [1, 1]} : vector<112x128xf32> to vector<16x128xf32>
    %c4_416 = arith.constant 4 : index
    %c4_417 = arith.constant 4 : index
    %c0_418 = arith.constant 0 : index
    %514 = vector.load %arg6[%c4_416, %c4_417, %c0_418] : memref<7x7x128xf32, #tpu.memory_space<vmem>>, vector<1x1x128xf32>
    %515 = vector.shape_cast %514 : vector<1x1x128xf32> to vector<1x128xf32>
    %516 = vector.broadcast %515 : vector<1x128xf32> to vector<16x128xf32>
    %517 = arith.mulf %513, %516 : vector<16x128xf32>
    %518 = arith.addf %512, %517 : vector<16x128xf32>
    %519 = vector.extract_strided_slice %488 {offsets = [80, 0], sizes = [16, 128], strides = [1, 1]} : vector<112x128xf32> to vector<16x128xf32>
    %c4_419 = arith.constant 4 : index
    %c5_420 = arith.constant 5 : index
    %c0_421 = arith.constant 0 : index
    %520 = vector.load %arg6[%c4_419, %c5_420, %c0_421] : memref<7x7x128xf32, #tpu.memory_space<vmem>>, vector<1x1x128xf32>
    %521 = vector.shape_cast %520 : vector<1x1x128xf32> to vector<1x128xf32>
    %522 = vector.broadcast %521 : vector<1x128xf32> to vector<16x128xf32>
    %523 = arith.mulf %519, %522 : vector<16x128xf32>
    %524 = arith.addf %518, %523 : vector<16x128xf32>
    %525 = vector.extract_strided_slice %488 {offsets = [96, 0], sizes = [16, 128], strides = [1, 1]} : vector<112x128xf32> to vector<16x128xf32>
    %c4_422 = arith.constant 4 : index
    %c6_423 = arith.constant 6 : index
    %c0_424 = arith.constant 0 : index
    %526 = vector.load %arg6[%c4_422, %c6_423, %c0_424] : memref<7x7x128xf32, #tpu.memory_space<vmem>>, vector<1x1x128xf32>
    %527 = vector.shape_cast %526 : vector<1x1x128xf32> to vector<1x128xf32>
    %528 = vector.broadcast %527 : vector<1x128xf32> to vector<16x128xf32>
    %529 = arith.mulf %525, %528 : vector<16x128xf32>
    %530 = arith.addf %524, %529 : vector<16x128xf32>
    %c5_425 = arith.constant 5 : index
    %c0_426 = arith.constant 0 : index
    %c0_427 = arith.constant 0 : index
    %c0_428 = arith.constant 0 : index
    %531 = vector.load %arg9[%c5_425, %c0_426, %c0_427, %c0_428] : memref<7x16x16x256xbf16, #tpu.memory_space<vmem>>, vector<1x7x16x256xbf16>
    %532 = vector.shape_cast %531 : vector<1x7x16x256xbf16> to vector<7x16x256xbf16>
    %533 = vector.shape_cast %532 : vector<7x16x256xbf16> to vector<112x256xbf16>
    %c0_429 = arith.constant 0 : index
    %c0_430 = arith.constant 0 : index
    %c0_431 = arith.constant 0 : index
    %534 = vector.load %arg4[%c0_429, %c0_430, %c0_431] : memref<4x256x128xbf16, #tpu.memory_space<vmem>>, vector<1x256x128xbf16>
    %535 = vector.shape_cast %534 : vector<1x256x128xbf16> to vector<256x128xbf16>
    %cst_432 = arith.constant dense<0.000000e+00> : vector<112x128xf32>
    %536 = tpu.matmul %533, %535, %cst_432 {dimension_numbers = #tpu.dot_dimension_numbers<[1], [0], [0], [1], [0, 0, 1, 1], [], []>} : vector<112x256xbf16>, vector<256x128xbf16>, vector<112x128xf32> -> vector<112x128xf32>
    %c5_433 = arith.constant 5 : index
    %c8_434 = arith.constant 8 : index
    %c0_435 = arith.constant 0 : index
    %c0_436 = arith.constant 0 : index
    %537 = vector.load %arg9[%c5_433, %c8_434, %c0_435, %c0_436] : memref<7x16x16x256xbf16, #tpu.memory_space<vmem>>, vector<1x7x16x256xbf16>
    %538 = vector.shape_cast %537 : vector<1x7x16x256xbf16> to vector<7x16x256xbf16>
    %539 = vector.shape_cast %538 : vector<7x16x256xbf16> to vector<112x256xbf16>
    %c1_437 = arith.constant 1 : index
    %c0_438 = arith.constant 0 : index
    %c0_439 = arith.constant 0 : index
    %540 = vector.load %arg4[%c1_437, %c0_438, %c0_439] : memref<4x256x128xbf16, #tpu.memory_space<vmem>>, vector<1x256x128xbf16>
    %541 = vector.shape_cast %540 : vector<1x256x128xbf16> to vector<256x128xbf16>
    %cst_440 = arith.constant dense<0.000000e+00> : vector<112x128xf32>
    %542 = tpu.matmul %539, %541, %cst_440 {dimension_numbers = #tpu.dot_dimension_numbers<[1], [0], [0], [1], [0, 0, 1, 1], [], []>} : vector<112x256xbf16>, vector<256x128xbf16>, vector<112x128xf32> -> vector<112x128xf32>
    %543 = arith.addf %536, %542 : vector<112x128xf32>
    %c5_441 = arith.constant 5 : index
    %c1_442 = arith.constant 1 : index
    %c0_443 = arith.constant 0 : index
    %c0_444 = arith.constant 0 : index
    %544 = vector.load %arg9[%c5_441, %c1_442, %c0_443, %c0_444] : memref<7x16x16x256xbf16, #tpu.memory_space<vmem>>, vector<1x7x16x256xbf16>
    %545 = vector.shape_cast %544 : vector<1x7x16x256xbf16> to vector<7x16x256xbf16>
    %546 = vector.shape_cast %545 : vector<7x16x256xbf16> to vector<112x256xbf16>
    %c2_445 = arith.constant 2 : index
    %c0_446 = arith.constant 0 : index
    %c0_447 = arith.constant 0 : index
    %547 = vector.load %arg4[%c2_445, %c0_446, %c0_447] : memref<4x256x128xbf16, #tpu.memory_space<vmem>>, vector<1x256x128xbf16>
    %548 = vector.shape_cast %547 : vector<1x256x128xbf16> to vector<256x128xbf16>
    %cst_448 = arith.constant dense<0.000000e+00> : vector<112x128xf32>
    %549 = tpu.matmul %546, %548, %cst_448 {dimension_numbers = #tpu.dot_dimension_numbers<[1], [0], [0], [1], [0, 0, 1, 1], [], []>} : vector<112x256xbf16>, vector<256x128xbf16>, vector<112x128xf32> -> vector<112x128xf32>
    %550 = arith.addf %543, %549 : vector<112x128xf32>
    %c5_449 = arith.constant 5 : index
    %c9_450 = arith.constant 9 : index
    %c0_451 = arith.constant 0 : index
    %c0_452 = arith.constant 0 : index
    %551 = vector.load %arg9[%c5_449, %c9_450, %c0_451, %c0_452] : memref<7x16x16x256xbf16, #tpu.memory_space<vmem>>, vector<1x7x16x256xbf16>
    %552 = vector.shape_cast %551 : vector<1x7x16x256xbf16> to vector<7x16x256xbf16>
    %553 = vector.shape_cast %552 : vector<7x16x256xbf16> to vector<112x256xbf16>
    %c3_453 = arith.constant 3 : index
    %c0_454 = arith.constant 0 : index
    %c0_455 = arith.constant 0 : index
    %554 = vector.load %arg4[%c3_453, %c0_454, %c0_455] : memref<4x256x128xbf16, #tpu.memory_space<vmem>>, vector<1x256x128xbf16>
    %555 = vector.shape_cast %554 : vector<1x256x128xbf16> to vector<256x128xbf16>
    %cst_456 = arith.constant dense<0.000000e+00> : vector<112x128xf32>
    %556 = tpu.matmul %553, %555, %cst_456 {dimension_numbers = #tpu.dot_dimension_numbers<[1], [0], [0], [1], [0, 0, 1, 1], [], []>} : vector<112x256xbf16>, vector<256x128xbf16>, vector<112x128xf32> -> vector<112x128xf32>
    %557 = arith.addf %550, %556 : vector<112x128xf32>
    %c0_457 = arith.constant 0 : index
    %c0_458 = arith.constant 0 : index
    %558 = vector.load %arg5[%c0_457, %c0_458] : memref<1x128xf32, #tpu.memory_space<vmem>>, vector<1x128xf32>
    %559 = vector.broadcast %558 : vector<1x128xf32> to vector<112x128xf32>
    %560 = arith.addf %557, %559 : vector<112x128xf32>
    %cst_459 = arith.constant 2.000000e-01 : f32
    %561 = vector.broadcast %cst_459 : f32 to vector<112x128xf32>
    %562 = arith.mulf %561, %560 : vector<112x128xf32>
    %563 = arith.maximumf %560, %562 : vector<112x128xf32>
    %564 = vector.extract_strided_slice %563 {offsets = [0, 0], sizes = [16, 128], strides = [1, 1]} : vector<112x128xf32> to vector<16x128xf32>
    %c5_460 = arith.constant 5 : index
    %c0_461 = arith.constant 0 : index
    %c0_462 = arith.constant 0 : index
    %565 = vector.load %arg6[%c5_460, %c0_461, %c0_462] : memref<7x7x128xf32, #tpu.memory_space<vmem>>, vector<1x1x128xf32>
    %566 = vector.shape_cast %565 : vector<1x1x128xf32> to vector<1x128xf32>
    %567 = vector.broadcast %566 : vector<1x128xf32> to vector<16x128xf32>
    %568 = arith.mulf %564, %567 : vector<16x128xf32>
    %569 = arith.addf %530, %568 : vector<16x128xf32>
    %570 = vector.extract_strided_slice %563 {offsets = [16, 0], sizes = [16, 128], strides = [1, 1]} : vector<112x128xf32> to vector<16x128xf32>
    %c5_463 = arith.constant 5 : index
    %c1_464 = arith.constant 1 : index
    %c0_465 = arith.constant 0 : index
    %571 = vector.load %arg6[%c5_463, %c1_464, %c0_465] : memref<7x7x128xf32, #tpu.memory_space<vmem>>, vector<1x1x128xf32>
    %572 = vector.shape_cast %571 : vector<1x1x128xf32> to vector<1x128xf32>
    %573 = vector.broadcast %572 : vector<1x128xf32> to vector<16x128xf32>
    %574 = arith.mulf %570, %573 : vector<16x128xf32>
    %575 = arith.addf %569, %574 : vector<16x128xf32>
    %576 = vector.extract_strided_slice %563 {offsets = [32, 0], sizes = [16, 128], strides = [1, 1]} : vector<112x128xf32> to vector<16x128xf32>
    %c5_466 = arith.constant 5 : index
    %c2_467 = arith.constant 2 : index
    %c0_468 = arith.constant 0 : index
    %577 = vector.load %arg6[%c5_466, %c2_467, %c0_468] : memref<7x7x128xf32, #tpu.memory_space<vmem>>, vector<1x1x128xf32>
    %578 = vector.shape_cast %577 : vector<1x1x128xf32> to vector<1x128xf32>
    %579 = vector.broadcast %578 : vector<1x128xf32> to vector<16x128xf32>
    %580 = arith.mulf %576, %579 : vector<16x128xf32>
    %581 = arith.addf %575, %580 : vector<16x128xf32>
    %582 = vector.extract_strided_slice %563 {offsets = [48, 0], sizes = [16, 128], strides = [1, 1]} : vector<112x128xf32> to vector<16x128xf32>
    %c5_469 = arith.constant 5 : index
    %c3_470 = arith.constant 3 : index
    %c0_471 = arith.constant 0 : index
    %583 = vector.load %arg6[%c5_469, %c3_470, %c0_471] : memref<7x7x128xf32, #tpu.memory_space<vmem>>, vector<1x1x128xf32>
    %584 = vector.shape_cast %583 : vector<1x1x128xf32> to vector<1x128xf32>
    %585 = vector.broadcast %584 : vector<1x128xf32> to vector<16x128xf32>
    %586 = arith.mulf %582, %585 : vector<16x128xf32>
    %587 = arith.addf %581, %586 : vector<16x128xf32>
    %588 = vector.extract_strided_slice %563 {offsets = [64, 0], sizes = [16, 128], strides = [1, 1]} : vector<112x128xf32> to vector<16x128xf32>
    %c5_472 = arith.constant 5 : index
    %c4_473 = arith.constant 4 : index
    %c0_474 = arith.constant 0 : index
    %589 = vector.load %arg6[%c5_472, %c4_473, %c0_474] : memref<7x7x128xf32, #tpu.memory_space<vmem>>, vector<1x1x128xf32>
    %590 = vector.shape_cast %589 : vector<1x1x128xf32> to vector<1x128xf32>
    %591 = vector.broadcast %590 : vector<1x128xf32> to vector<16x128xf32>
    %592 = arith.mulf %588, %591 : vector<16x128xf32>
    %593 = arith.addf %587, %592 : vector<16x128xf32>
    %594 = vector.extract_strided_slice %563 {offsets = [80, 0], sizes = [16, 128], strides = [1, 1]} : vector<112x128xf32> to vector<16x128xf32>
    %c5_475 = arith.constant 5 : index
    %c5_476 = arith.constant 5 : index
    %c0_477 = arith.constant 0 : index
    %595 = vector.load %arg6[%c5_475, %c5_476, %c0_477] : memref<7x7x128xf32, #tpu.memory_space<vmem>>, vector<1x1x128xf32>
    %596 = vector.shape_cast %595 : vector<1x1x128xf32> to vector<1x128xf32>
    %597 = vector.broadcast %596 : vector<1x128xf32> to vector<16x128xf32>
    %598 = arith.mulf %594, %597 : vector<16x128xf32>
    %599 = arith.addf %593, %598 : vector<16x128xf32>
    %600 = vector.extract_strided_slice %563 {offsets = [96, 0], sizes = [16, 128], strides = [1, 1]} : vector<112x128xf32> to vector<16x128xf32>
    %c5_478 = arith.constant 5 : index
    %c6_479 = arith.constant 6 : index
    %c0_480 = arith.constant 0 : index
    %601 = vector.load %arg6[%c5_478, %c6_479, %c0_480] : memref<7x7x128xf32, #tpu.memory_space<vmem>>, vector<1x1x128xf32>
    %602 = vector.shape_cast %601 : vector<1x1x128xf32> to vector<1x128xf32>
    %603 = vector.broadcast %602 : vector<1x128xf32> to vector<16x128xf32>
    %604 = arith.mulf %600, %603 : vector<16x128xf32>
    %605 = arith.addf %599, %604 : vector<16x128xf32>
    %c6_481 = arith.constant 6 : index
    %c0_482 = arith.constant 0 : index
    %c0_483 = arith.constant 0 : index
    %c0_484 = arith.constant 0 : index
    %606 = vector.load %arg9[%c6_481, %c0_482, %c0_483, %c0_484] : memref<7x16x16x256xbf16, #tpu.memory_space<vmem>>, vector<1x7x16x256xbf16>
    %607 = vector.shape_cast %606 : vector<1x7x16x256xbf16> to vector<7x16x256xbf16>
    %608 = vector.shape_cast %607 : vector<7x16x256xbf16> to vector<112x256xbf16>
    %c0_485 = arith.constant 0 : index
    %c0_486 = arith.constant 0 : index
    %c0_487 = arith.constant 0 : index
    %609 = vector.load %arg4[%c0_485, %c0_486, %c0_487] : memref<4x256x128xbf16, #tpu.memory_space<vmem>>, vector<1x256x128xbf16>
    %610 = vector.shape_cast %609 : vector<1x256x128xbf16> to vector<256x128xbf16>
    %cst_488 = arith.constant dense<0.000000e+00> : vector<112x128xf32>
    %611 = tpu.matmul %608, %610, %cst_488 {dimension_numbers = #tpu.dot_dimension_numbers<[1], [0], [0], [1], [0, 0, 1, 1], [], []>} : vector<112x256xbf16>, vector<256x128xbf16>, vector<112x128xf32> -> vector<112x128xf32>
    %c6_489 = arith.constant 6 : index
    %c8_490 = arith.constant 8 : index
    %c0_491 = arith.constant 0 : index
    %c0_492 = arith.constant 0 : index
    %612 = vector.load %arg9[%c6_489, %c8_490, %c0_491, %c0_492] : memref<7x16x16x256xbf16, #tpu.memory_space<vmem>>, vector<1x7x16x256xbf16>
    %613 = vector.shape_cast %612 : vector<1x7x16x256xbf16> to vector<7x16x256xbf16>
    %614 = vector.shape_cast %613 : vector<7x16x256xbf16> to vector<112x256xbf16>
    %c1_493 = arith.constant 1 : index
    %c0_494 = arith.constant 0 : index
    %c0_495 = arith.constant 0 : index
    %615 = vector.load %arg4[%c1_493, %c0_494, %c0_495] : memref<4x256x128xbf16, #tpu.memory_space<vmem>>, vector<1x256x128xbf16>
    %616 = vector.shape_cast %615 : vector<1x256x128xbf16> to vector<256x128xbf16>
    %cst_496 = arith.constant dense<0.000000e+00> : vector<112x128xf32>
    %617 = tpu.matmul %614, %616, %cst_496 {dimension_numbers = #tpu.dot_dimension_numbers<[1], [0], [0], [1], [0, 0, 1, 1], [], []>} : vector<112x256xbf16>, vector<256x128xbf16>, vector<112x128xf32> -> vector<112x128xf32>
    %618 = arith.addf %611, %617 : vector<112x128xf32>
    %c6_497 = arith.constant 6 : index
    %c1_498 = arith.constant 1 : index
    %c0_499 = arith.constant 0 : index
    %c0_500 = arith.constant 0 : index
    %619 = vector.load %arg9[%c6_497, %c1_498, %c0_499, %c0_500] : memref<7x16x16x256xbf16, #tpu.memory_space<vmem>>, vector<1x7x16x256xbf16>
    %620 = vector.shape_cast %619 : vector<1x7x16x256xbf16> to vector<7x16x256xbf16>
    %621 = vector.shape_cast %620 : vector<7x16x256xbf16> to vector<112x256xbf16>
    %c2_501 = arith.constant 2 : index
    %c0_502 = arith.constant 0 : index
    %c0_503 = arith.constant 0 : index
    %622 = vector.load %arg4[%c2_501, %c0_502, %c0_503] : memref<4x256x128xbf16, #tpu.memory_space<vmem>>, vector<1x256x128xbf16>
    %623 = vector.shape_cast %622 : vector<1x256x128xbf16> to vector<256x128xbf16>
    %cst_504 = arith.constant dense<0.000000e+00> : vector<112x128xf32>
    %624 = tpu.matmul %621, %623, %cst_504 {dimension_numbers = #tpu.dot_dimension_numbers<[1], [0], [0], [1], [0, 0, 1, 1], [], []>} : vector<112x256xbf16>, vector<256x128xbf16>, vector<112x128xf32> -> vector<112x128xf32>
    %625 = arith.addf %618, %624 : vector<112x128xf32>
    %c6_505 = arith.constant 6 : index
    %c9_506 = arith.constant 9 : index
    %c0_507 = arith.constant 0 : index
    %c0_508 = arith.constant 0 : index
    %626 = vector.load %arg9[%c6_505, %c9_506, %c0_507, %c0_508] : memref<7x16x16x256xbf16, #tpu.memory_space<vmem>>, vector<1x7x16x256xbf16>
    %627 = vector.shape_cast %626 : vector<1x7x16x256xbf16> to vector<7x16x256xbf16>
    %628 = vector.shape_cast %627 : vector<7x16x256xbf16> to vector<112x256xbf16>
    %c3_509 = arith.constant 3 : index
    %c0_510 = arith.constant 0 : index
    %c0_511 = arith.constant 0 : index
    %629 = vector.load %arg4[%c3_509, %c0_510, %c0_511] : memref<4x256x128xbf16, #tpu.memory_space<vmem>>, vector<1x256x128xbf16>
    %630 = vector.shape_cast %629 : vector<1x256x128xbf16> to vector<256x128xbf16>
    %cst_512 = arith.constant dense<0.000000e+00> : vector<112x128xf32>
    %631 = tpu.matmul %628, %630, %cst_512 {dimension_numbers = #tpu.dot_dimension_numbers<[1], [0], [0], [1], [0, 0, 1, 1], [], []>} : vector<112x256xbf16>, vector<256x128xbf16>, vector<112x128xf32> -> vector<112x128xf32>
    %632 = arith.addf %625, %631 : vector<112x128xf32>
    %c0_513 = arith.constant 0 : index
    %c0_514 = arith.constant 0 : index
    %633 = vector.load %arg5[%c0_513, %c0_514] : memref<1x128xf32, #tpu.memory_space<vmem>>, vector<1x128xf32>
    %634 = vector.broadcast %633 : vector<1x128xf32> to vector<112x128xf32>
    %635 = arith.addf %632, %634 : vector<112x128xf32>
    %cst_515 = arith.constant 2.000000e-01 : f32
    %636 = vector.broadcast %cst_515 : f32 to vector<112x128xf32>
    %637 = arith.mulf %636, %635 : vector<112x128xf32>
    %638 = arith.maximumf %635, %637 : vector<112x128xf32>
    %639 = vector.extract_strided_slice %638 {offsets = [0, 0], sizes = [16, 128], strides = [1, 1]} : vector<112x128xf32> to vector<16x128xf32>
    %c6_516 = arith.constant 6 : index
    %c0_517 = arith.constant 0 : index
    %c0_518 = arith.constant 0 : index
    %640 = vector.load %arg6[%c6_516, %c0_517, %c0_518] : memref<7x7x128xf32, #tpu.memory_space<vmem>>, vector<1x1x128xf32>
    %641 = vector.shape_cast %640 : vector<1x1x128xf32> to vector<1x128xf32>
    %642 = vector.broadcast %641 : vector<1x128xf32> to vector<16x128xf32>
    %643 = arith.mulf %639, %642 : vector<16x128xf32>
    %644 = arith.addf %605, %643 : vector<16x128xf32>
    %645 = vector.extract_strided_slice %638 {offsets = [16, 0], sizes = [16, 128], strides = [1, 1]} : vector<112x128xf32> to vector<16x128xf32>
    %c6_519 = arith.constant 6 : index
    %c1_520 = arith.constant 1 : index
    %c0_521 = arith.constant 0 : index
    %646 = vector.load %arg6[%c6_519, %c1_520, %c0_521] : memref<7x7x128xf32, #tpu.memory_space<vmem>>, vector<1x1x128xf32>
    %647 = vector.shape_cast %646 : vector<1x1x128xf32> to vector<1x128xf32>
    %648 = vector.broadcast %647 : vector<1x128xf32> to vector<16x128xf32>
    %649 = arith.mulf %645, %648 : vector<16x128xf32>
    %650 = arith.addf %644, %649 : vector<16x128xf32>
    %651 = vector.extract_strided_slice %638 {offsets = [32, 0], sizes = [16, 128], strides = [1, 1]} : vector<112x128xf32> to vector<16x128xf32>
    %c6_522 = arith.constant 6 : index
    %c2_523 = arith.constant 2 : index
    %c0_524 = arith.constant 0 : index
    %652 = vector.load %arg6[%c6_522, %c2_523, %c0_524] : memref<7x7x128xf32, #tpu.memory_space<vmem>>, vector<1x1x128xf32>
    %653 = vector.shape_cast %652 : vector<1x1x128xf32> to vector<1x128xf32>
    %654 = vector.broadcast %653 : vector<1x128xf32> to vector<16x128xf32>
    %655 = arith.mulf %651, %654 : vector<16x128xf32>
    %656 = arith.addf %650, %655 : vector<16x128xf32>
    %657 = vector.extract_strided_slice %638 {offsets = [48, 0], sizes = [16, 128], strides = [1, 1]} : vector<112x128xf32> to vector<16x128xf32>
    %c6_525 = arith.constant 6 : index
    %c3_526 = arith.constant 3 : index
    %c0_527 = arith.constant 0 : index
    %658 = vector.load %arg6[%c6_525, %c3_526, %c0_527] : memref<7x7x128xf32, #tpu.memory_space<vmem>>, vector<1x1x128xf32>
    %659 = vector.shape_cast %658 : vector<1x1x128xf32> to vector<1x128xf32>
    %660 = vector.broadcast %659 : vector<1x128xf32> to vector<16x128xf32>
    %661 = arith.mulf %657, %660 : vector<16x128xf32>
    %662 = arith.addf %656, %661 : vector<16x128xf32>
    %663 = vector.extract_strided_slice %638 {offsets = [64, 0], sizes = [16, 128], strides = [1, 1]} : vector<112x128xf32> to vector<16x128xf32>
    %c6_528 = arith.constant 6 : index
    %c4_529 = arith.constant 4 : index
    %c0_530 = arith.constant 0 : index
    %664 = vector.load %arg6[%c6_528, %c4_529, %c0_530] : memref<7x7x128xf32, #tpu.memory_space<vmem>>, vector<1x1x128xf32>
    %665 = vector.shape_cast %664 : vector<1x1x128xf32> to vector<1x128xf32>
    %666 = vector.broadcast %665 : vector<1x128xf32> to vector<16x128xf32>
    %667 = arith.mulf %663, %666 : vector<16x128xf32>
    %668 = arith.addf %662, %667 : vector<16x128xf32>
    %669 = vector.extract_strided_slice %638 {offsets = [80, 0], sizes = [16, 128], strides = [1, 1]} : vector<112x128xf32> to vector<16x128xf32>
    %c6_531 = arith.constant 6 : index
    %c5_532 = arith.constant 5 : index
    %c0_533 = arith.constant 0 : index
    %670 = vector.load %arg6[%c6_531, %c5_532, %c0_533] : memref<7x7x128xf32, #tpu.memory_space<vmem>>, vector<1x1x128xf32>
    %671 = vector.shape_cast %670 : vector<1x1x128xf32> to vector<1x128xf32>
    %672 = vector.broadcast %671 : vector<1x128xf32> to vector<16x128xf32>
    %673 = arith.mulf %669, %672 : vector<16x128xf32>
    %674 = arith.addf %668, %673 : vector<16x128xf32>
    %675 = vector.extract_strided_slice %638 {offsets = [96, 0], sizes = [16, 128], strides = [1, 1]} : vector<112x128xf32> to vector<16x128xf32>
    %c6_534 = arith.constant 6 : index
    %c6_535 = arith.constant 6 : index
    %c0_536 = arith.constant 0 : index
    %676 = vector.load %arg6[%c6_534, %c6_535, %c0_536] : memref<7x7x128xf32, #tpu.memory_space<vmem>>, vector<1x1x128xf32>
    %677 = vector.shape_cast %676 : vector<1x1x128xf32> to vector<1x128xf32>
    %678 = vector.broadcast %677 : vector<1x128xf32> to vector<16x128xf32>
    %679 = arith.mulf %675, %678 : vector<16x128xf32>
    %680 = arith.addf %674, %679 : vector<16x128xf32>
    %cst_537 = arith.constant dense<0.000000e+00> : vector<16xf32>
    %681 = vector.multi_reduction <add>, %680, %cst_537 [1] : vector<16x128xf32> to vector<16xf32>
    %682 = vector.shape_cast %681 : vector<16xf32> to vector<16x1xf32>
    %c0_538 = arith.constant 0 : index
    %c0_539 = arith.constant 0 : index
    %683 = vector.load %arg7[%c0_538, %c0_539] : memref<1x1xf32, #tpu.memory_space<vmem>>, vector<1x1xf32>
    %684 = vector.broadcast %683 : vector<1x1xf32> to vector<16x1xf32>
    %685 = arith.addf %682, %684 : vector<16x1xf32>
    %c0_540 = arith.constant 0 : index
    %c0_541 = arith.constant 0 : index
    %686 = vector.load %arg8[%c0_540, %c0_541] : memref<16x1xf32, #tpu.memory_space<vmem>>, vector<16x1xf32>
    tpu.vector_store %arg8[%c0_540, %c0_541], %685 {strides = array<i32>} : memref<16x1xf32, #tpu.memory_space<vmem>>, vector<16x1xf32>,
    return
  }
  func.func @transform_0(%arg0: i32) -> (i32, i32, i32, i32) {
    %c0_i32 = arith.constant 0 : i32
    %c0_i32_0 = arith.constant 0 : i32
    %c0_i32_1 = arith.constant 0 : i32
    %c0_i32_2 = arith.constant 0 : i32
    return %c0_i32, %c0_i32_0, %arg0, %c0_i32_1 : i32, i32, i32, i32
  }
  func.func @transform_1(%arg0: i32) -> (i32, i32) {
    %c0_i32 = arith.constant 0 : i32
    %c0_i32_0 = arith.constant 0 : i32
    %c0_i32_1 = arith.constant 0 : i32
    return %c0_i32, %c0_i32_0 : i32, i32
  }
  func.func @transform_2(%arg0: i32) -> (i32, i32) {
    %c0_i32 = arith.constant 0 : i32
    %c0_i32_0 = arith.constant 0 : i32
    %c0_i32_1 = arith.constant 0 : i32
    return %c0_i32, %c0_i32_0 : i32, i32
  }
  func.func @transform_3(%arg0: i32) -> (i32, i32, i32) {
    %c0_i32 = arith.constant 0 : i32
    %c0_i32_0 = arith.constant 0 : i32
    %c0_i32_1 = arith.constant 0 : i32
    %c0_i32_2 = arith.constant 0 : i32
    return %c0_i32, %c0_i32_0, %c0_i32_1 : i32, i32, i32
  }
  func.func @transform_4(%arg0: i32) -> (i32, i32) {
    %c0_i32 = arith.constant 0 : i32
    %c0_i32_0 = arith.constant 0 : i32
    %c0_i32_1 = arith.constant 0 : i32
    return %c0_i32, %c0_i32_0 : i32, i32
  }
  func.func @transform_5(%arg0: i32) -> (i32, i32, i32) {
    %c0_i32 = arith.constant 0 : i32
    %c0_i32_0 = arith.constant 0 : i32
    %c0_i32_1 = arith.constant 0 : i32
    %c0_i32_2 = arith.constant 0 : i32
    return %c0_i32, %c0_i32_0, %c0_i32_1 : i32, i32, i32
  }
  func.func @transform_6(%arg0: i32) -> (i32, i32) {
    %c0_i32 = arith.constant 0 : i32
    %c0_i32_0 = arith.constant 0 : i32
    %c0_i32_1 = arith.constant 0 : i32
    return %c0_i32, %c0_i32_0 : i32, i32
  }
  func.func @transform_7(%arg0: i32) -> (i32, i32) {
    %c0_i32 = arith.constant 0 : i32
    %c0_i32_0 = arith.constant 0 : i32
    return %arg0, %c0_i32 : i32, i32
  }
}

</mosaic_0001>

<llo_original>
// kernel: tile.8
$region0: #{tile.8}
  #allocation0 [shape = 's32[1]{0}', space=sflag, size = 0x4, scoped, tag = 'scoped memory for tile.8']
  %s0 = inlined_call_operand.vmem [shape: f32[64], index: 0, kind: input, shape index: {}]
  %s1 = inlined_call_operand.vmem [shape: f32[4,64], index: 1, kind: output, shape index: {}]
  // Predicated region
  $region2: #{tile.8} parent=0 // pred_check
    _
  $region3: #{tile.8} parent=0 // pred_check_branch
    %3 = sbr.rel (0) target = $region5
  $region4: #{tile.8} parent=0 // pred_region
    _
  $region5: #{tile.8} parent=0 // pred_fallthru
    _
  %v4 = vld [vmem:[%s0] ss:$0 sm:$0xff]
  %5 = vst [vmem:[%s1] sm:$0xf] %v4

// kernel: tile.9
$region0: #{tile.9}
  %s0 = inlined_call_operand.vmem [shape: f32[4,64], index: 0, kind: input, shape index: {}]
  %s1 = inlined_call_operand.vmem [shape: f32[256], index: 1, kind: output, shape index: {}]
  $region1: #{tile.9} parent=0
    #allocation0 [shape = 'u8[4096]{0}', space=vmem, size = 0x1000, scoped, tag = 'scoped mem for output reshape']
    #allocation1 [shape = 'u8[4096]{0}', space=vmem, size = 0x1000, scoped, tag = 'scoped mem for input reshape']
    %s3 = sshllo.u32 0, 4
    %v4 = vld [vmem:[%s0] sm:%s3]
    %5 = vst [vmem:[#allocation1] sm:%s3] %v4
    %s6 = smov 3
    %v7 = vld [vmem:[#allocation1] ss:$2 sm:%s6]
    %vm8 = vcmask 523264
    %9 = vst.msk [vmem:[#allocation0] sm:$0x3] %vm8, %v7
    %s10 = scalar_lea.vmem [#allocation1], 1
    %s11 = smov 3
    %v12 = vld [vmem:[%s10] ss:$2 sm:%s11]
    %13 = vrot.lane.b32.xlu0 %v12, 64
    %v14 = vpop.permute.xlu0 %13
    %vm15 = vcmask 1048064
    %16 = vst.msk [vmem:[#allocation0] sm:$0x3] %vm15, %v14
    %s18 = sshllo.u32 0, 2
    %v20 = vld [vmem:[#allocation0] sm:%s18]
    %s21 = sshllo.u32 0, 2
    %22 = vst [vmem:[%s1] sm:%s21] %v20

// kernel: critic_forward.1
$region0: #{critic_forward.1}
  #allocation0 [shape = 'u32[]', space=smem, size = 0x4, offset = 0x4, fixed_abs, tag = 'smem constant byte address 0x4 - core index']
  #allocation1 [shape = 'u32[144,128]{1,0:T(1,128)}', space=vmem, size = 0x12000, scoped, tag = 'internal scratch']
  #allocation2 [shape = 'bf16[7,16,16,256]{3,2,1,0:T(16,128)(2,1)}', space=vmem, size = 0xe0000, scoped, tag = 'scratch operand']
  #allocation3 [shape = 'f32[1,1]{1,0:T(1,128)S(1)}', space=vmem, size = 0x200, scoped, tag = 'scoped memory for critic_forward.1']
  %s0 = inlined_call_operand.vmem [shape: bf16[7,14,16,64], index: 0, kind: input, shape index: {}]
  %s1 = inlined_call_operand.vmem [shape: bf16[64,256], index: 1, kind: input, shape index: {}]
  %s2 = inlined_call_operand.vmem [shape: f32[7,256], index: 2, kind: input, shape index: {}]
  %s3 = inlined_call_operand.vmem [shape: bf16[4,256,128], index: 3, kind: input, shape index: {}]
  %s4 = inlined_call_operand.vmem [shape: f32[1,128], index: 4, kind: input, shape index: {}]
  %s5 = inlined_call_operand.vmem [shape: f32[7,7,128], index: 5, kind: input, shape index: {}]
  %s6 = inlined_call_operand.<no memory space> [shape: f32[1,1], index: 6, kind: input, shape index: {}]
  %s7 = inlined_call_operand.vmem [shape: f32[16,1], index: 7, kind: output, shape index: {}]
  %s8 = sld [smem:[#allocation0]]
  $region38: #{critic_forward.1} parent=0
    _
  %s10 = ssub.s32 1, %s8
  %s11 = scalar_select 0, %s10, %s8
  %v12 = vstv %s6
  %13 = vst [vmem:[#allocation3] sm:$0x1] %v12
  // Predicated region
  $region2: #{critic_forward.1} parent=0 // pred_check
    _
  $region3: #{critic_forward.1} parent=0 // pred_check_branch
    %15 = sbr.rel (0) target = $region5
  $region4: #{critic_forward.1} parent=0 // pred_region
    _
  $region5: #{critic_forward.1} parent=0 // pred_fallthru
    _
  // Predicated region
  $region6: #{critic_forward.1} parent=0 // pred_check
    _
  $region7: #{critic_forward.1} parent=0 // pred_check_branch
    %17 = sbr.rel (0) target = $region9
  $region8: #{critic_forward.1} parent=0 // pred_region
    _
  $region9: #{critic_forward.1} parent=0 // pred_fallthru
    _
  // Predicated region
  $region10: #{critic_forward.1} parent=0 // pred_check
    _
  $region11: #{critic_forward.1} parent=0 // pred_check_branch
    %19 = sbr.rel (0) target = $region13
  $region12: #{critic_forward.1} parent=0 // pred_region
    _
  $region13: #{critic_forward.1} parent=0 // pred_fallthru
    _
  // Predicated region
  $region14: #{critic_forward.1} parent=0 // pred_check
    _
  $region15: #{critic_forward.1} parent=0 // pred_check_branch
    %21 = sbr.rel (0) target = $region17
  $region16: #{critic_forward.1} parent=0 // pred_region
    _
  $region17: #{critic_forward.1} parent=0 // pred_fallthru
    _
  // Predicated region
  $region18: #{critic_forward.1} parent=0 // pred_check
    _
  $region19: #{critic_forward.1} parent=0 // pred_check_branch
    %23 = sbr.rel (0) target = $region21
  $region20: #{critic_forward.1} parent=0 // pred_region
    _
  $region21: #{critic_forward.1} parent=0 // pred_fallthru
    _
  // Predicated region
  $region22: #{critic_forward.1} parent=0 // pred_check
    _
  $region23: #{critic_forward.1} parent=0 // pred_check_branch
    %25 = sbr.rel (0) target = $region25
  $region24: #{critic_forward.1} parent=0 // pred_region
    _
  $region25: #{critic_forward.1} parent=0 // pred_fallthru
    _
  // Predicated region
  $region26: #{critic_forward.1} parent=0 // pred_check
    _
  $region27: #{critic_forward.1} parent=0 // pred_check_branch
    %27 = sbr.rel (0) target = $region29
  $region28: #{critic_forward.1} parent=0 // pred_region
    _
  $region29: #{critic_forward.1} parent=0 // pred_fallthru
    _
  %30 = vst [vmem:[#allocation2] sm:$0xff] 0
  %31 = vst [vmem:[#allocation2 + $0x8] sm:$0xff] 0
  %s32 = scalar_lea.vmem [#allocation2], 240
  %33 = vst [vmem:[%s32] sm:$0xff] 0
  %34 = vst [vmem:[%s32 + $0x8] sm:$0xff] 0
  %s35 = scalar_lea.vmem [#allocation2], 256
  %36 = vst [vmem:[%s35] sm:$0xff] 0
  %37 = vst [vmem:[%s35 + $0x8] sm:$0xff] 0
  %s38 = scalar_lea.vmem [#allocation2], 496
  %39 = vst [vmem:[%s38] sm:$0xff] 0
  %40 = vst [vmem:[%s38 + $0x8] sm:$0xff] 0
  %s41 = scalar_lea.vmem [#allocation2], 512
  %42 = vst [vmem:[%s41] sm:$0xff] 0
  %43 = vst [vmem:[%s41 + $0x8] sm:$0xff] 0
  %s44 = scalar_lea.vmem [#allocation2], 752
  %45 = vst [vmem:[%s44] sm:$0xff] 0
  %46 = vst [vmem:[%s44 + $0x8] sm:$0xff] 0
  %s47 = scalar_lea.vmem [#allocation2], 768
  %48 = vst [vmem:[%s47] sm:$0xff] 0
  %49 = vst [vmem:[%s47 + $0x8] sm:$0xff] 0
  %s50 = scalar_lea.vmem [#allocation2], 1008
  %51 = vst [vmem:[%s50] sm:$0xff] 0
  %52 = vst [vmem:[%s50 + $0x8] sm:$0xff] 0
  %s53 = scalar_lea.vmem [#allocation2], 1024
  %54 = vst [vmem:[%s53] sm:$0xff] 0
  %55 = vst [vmem:[%s53 + $0x8] sm:$0xff] 0
  %s56 = scalar_lea.vmem [#allocation2], 1264
  %57 = vst [vmem:[%s56] sm:$0xff] 0
  %58 = vst [vmem:[%s56 + $0x8] sm:$0xff] 0
  %s59 = scalar_lea.vmem [#allocation2], 1280
  %60 = vst [vmem:[%s59] sm:$0xff] 0
  %61 = vst [vmem:[%s59 + $0x8] sm:$0xff] 0
  %s62 = scalar_lea.vmem [#allocation2], 1520
  %63 = vst [vmem:[%s62] sm:$0xff] 0
  %64 = vst [vmem:[%s62 + $0x8] sm:$0xff] 0
  %s65 = scalar_lea.vmem [#allocation2], 1536
  %66 = vst [vmem:[%s65] sm:$0xff] 0
  %67 = vst [vmem:[%s65 + $0x8] sm:$0xff] 0
  %s68 = scalar_lea.vmem [#allocation2], 1776
  %69 = vst [vmem:[%s68] sm:$0xff] 0
  %70 = vst [vmem:[%s68 + $0x8] sm:$0xff] 0
  %v71 = vld [vmem:[%s0] sm:$0xf]
  %v72 = vld [vmem:[%s0 + $0x4] sm:$0xf]
  %v73 = vld [vmem:[%s0 + $0x8] sm:$0xf]
  %v74 = vld [vmem:[%s0 + $0xc] sm:$0xf]
  %v75 = vld [vmem:[%s0 + $0x10] sm:$0xf]
  %v76 = vld [vmem:[%s0 + $0x14] sm:$0xf]
  %v77 = vld [vmem:[%s0 + $0x18] sm:$0xf]
  %v78 = vld [vmem:[%s0 + $0x1c] sm:$0xf]
  %v79 = vld [vmem:[%s0 + $0x20] sm:$0xf]
  %v80 = vld [vmem:[%s0 + $0x24] sm:$0xf]
  %v81 = vld [vmem:[%s0 + $0x28] sm:$0xf]
  %v82 = vld [vmem:[%s0 + $0x2c] sm:$0xf]
  %v83 = vld [vmem:[%s0 + $0x30] sm:$0xf]
  %v84 = vld [vmem:[%s0 + $0x34] sm:$0xf]
  %v85 = vld [vmem:[%s0 + $0x38] sm:$0xf]
  %v86 = vld [vmem:[%s0 + $0x3c] sm:$0xf]
  %v87 = vld [vmem:[%s0 + $0x40] sm:$0xf]
  %v88 = vld [vmem:[%s0 + $0x44] sm:$0xf]
  %v89 = vld [vmem:[%s0 + $0x48] sm:$0xf]
  %v90 = vld [vmem:[%s0 + $0x4c] sm:$0xf]
  %v91 = vld [vmem:[%s0 + $0x50] sm:$0xf]
  %v92 = vld [vmem:[%s0 + $0x54] sm:$0xf]
  %v93 = vld [vmem:[%s0 + $0x58] sm:$0xf]
  %v94 = vld [vmem:[%s0 + $0x5c] sm:$0xf]
  %v95 = vld [vmem:[%s0 + $0x60] sm:$0xf]
  %v96 = vld [vmem:[%s0 + $0x64] sm:$0xf]
  %v97 = vld [vmem:[%s0 + $0x68] sm:$0xf]
  %v98 = vld [vmem:[%s0 + $0x6c] sm:$0xf]
  %v99 = vld [vmem:[%s1] sm:$0xff]
  %v100 = vld [vmem:[%s1 + $0x8] sm:$0xff]
  %v101 = vld [vmem:[%s1 + $0x10] sm:$0xff]
  %v102 = vld [vmem:[%s1 + $0x18] sm:$0xff]
  %v103 = vld [vmem:[%s1 + $0x20] sm:$0xff]
  %v104 = vld [vmem:[%s1 + $0x28] sm:$0xff]
  %v105 = vld [vmem:[%s1 + $0x30] sm:$0xff]
  %v106 = vld [vmem:[%s1 + $0x38] sm:$0xff]
  %v107 = vld [vmem:[%s2] ss:$8 sm:$0x3]
  %v109 = vlaneseq
  %v110 = vshrl.u32 %v109, 7
  %v111 = vsub.s32 0, %v110
  %v112 = vrot.slane %v107, %v111
  %v113 = vlaneseq
  %v114 = vshrl.u32 %v113, 7
  %v115 = vsub.s32 1, %v114
  %v116 = vrot.slane %v107, %v115
  %v147 = vunpack.c.l.b16 %v71
  %v148 = vunpack.c.l.b16 %v72
  %v149 = vunpack.c.l.b16 %v73
  %v150 = vunpack.c.l.b16 %v74
  %v151 = vunpack.c.l.b16 %v75
  %v152 = vunpack.c.l.b16 %v76
  %v153 = vunpack.c.l.b16 %v77
  %v154 = vunpack.c.l.b16 %v78
  %v155 = vunpack.c.l.b16 %v79
  %v156 = vunpack.c.l.b16 %v80
  %v157 = vunpack.c.l.b16 %v81
  %v158 = vunpack.c.l.b16 %v82
  %v159 = vunpack.c.l.b16 %v83
  %v160 = vunpack.c.l.b16 %v84
  %v161 = vunpack.c.l.b16 %v85
  %v162 = vunpack.c.l.b16 %v86
  %v163 = vunpack.c.l.b16 %v87
  %v164 = vunpack.c.l.b16 %v88
  %v165 = vunpack.c.l.b16 %v89
  %v166 = vunpack.c.l.b16 %v90
  %v167 = vunpack.c.l.b16 %v91
  %v168 = vunpack.c.l.b16 %v92
  %v169 = vunpack.c.l.b16 %v93
  %v170 = vunpack.c.l.b16 %v94
  %v171 = vunpack.c.l.b16 %v95
  %v172 = vunpack.c.l.b16 %v96
  %v173 = vunpack.c.l.b16 %v97
  %v174 = vunpack.c.l.b16 %v98
  %v175 = vpack.c.b16 %v148, %v147
  %v176 = vpack.c.b16 %v150, %v149
  %v177 = vpack.c.b16 %v152, %v151
  %v178 = vpack.c.b16 %v154, %v153
  %v179 = vpack.c.b16 %v156, %v155
  %v180 = vpack.c.b16 %v158, %v157
  %v181 = vpack.c.b16 %v160, %v159
  %v182 = vpack.c.b16 %v162, %v161
  %v183 = vpack.c.b16 %v164, %v163
  %v184 = vpack.c.b16 %v166, %v165
  %v185 = vpack.c.b16 %v168, %v167
  %v186 = vpack.c.b16 %v170, %v169
  %v187 = vpack.c.b16 %v172, %v171
  %v188 = vpack.c.b16 %v174, %v173
  %v197 = vunpack.c.l.b16 %v99
  %v198 = vunpack.c.h.b16 %v99
  %v199 = vunpack.c.l.b16 %v100
  %v200 = vunpack.c.h.b16 %v100
  %v201 = vunpack.c.l.b16 %v101
  %v202 = vunpack.c.h.b16 %v101
  %v203 = vunpack.c.l.b16 %v102
  %v204 = vunpack.c.h.b16 %v102
  %v205 = vunpack.c.l.b16 %v103
  %v206 = vunpack.c.h.b16 %v103
  %v207 = vunpack.c.l.b16 %v104
  %v208 = vunpack.c.h.b16 %v104
  %v209 = vunpack.c.l.b16 %v105
  %v210 = vunpack.c.h.b16 %v105
  %v211 = vunpack.c.l.b16 %v106
  %v212 = vunpack.c.h.b16 %v106
  %v213 = vpack.c.b16 %v199, %v197
  %v214 = vpack.c.b16 %v200, %v198
  %v215 = vpack.c.b16 %v203, %v201
  %v216 = vpack.c.b16 %v204, %v202
  %v217 = vpack.c.b16 %v207, %v205
  %v218 = vpack.c.b16 %v208, %v206
  %v219 = vpack.c.b16 %v211, %v209
  %v220 = vpack.c.b16 %v212, %v210
  %vm229 = vcmask 523264
  %v231 = vsel %vm229, %v175, 0
  %v234 = vsel %vm229, %v176, 0
  %v237 = vsel %vm229, %v177, 0
  %v240 = vsel %vm229, %v178, 0
  %v243 = vsel %vm229, %v179, 0
  %v246 = vsel %vm229, %v180, 0
  %v249 = vsel %vm229, %v181, 0
  %v252 = vsel %vm229, %v182, 0
  %v255 = vsel %vm229, %v183, 0
  %v258 = vsel %vm229, %v184, 0
  %v261 = vsel %vm229, %v185, 0
  %v264 = vsel %vm229, %v186, 0
  %v267 = vsel %vm229, %v187, 0
  %v270 = vsel %vm229, %v188, 0
  %272 = vmatprep.subr.bf16.mxu0 %v214
  %273 = vmatpush1.bf16.msra.mxu0 %v213
  %274 = vmatprep.subr.bf16.mxu0 %v216
  %275 = vmatpush1.bf16.msra.mxu0 %v215
  %276 = vmatprep.subr.bf16.mxu0 %v218
  %277 = vmatpush1.bf16.msra.mxu0 %v217
  %278 = vmatprep.subr.bf16.mxu0 %v220
  %279 = vmatpush1.bf16.msra.mxu0 %v219
  %280 = vmatprep.subr.bf16.mxu0 0
  %281 = vmatpush1.bf16.msra.mxu0 0
  %282 = vmatprep.subr.bf16.mxu0 0
  %283 = vmatpush1.bf16.msra.mxu0 0
  %284 = vmatprep.subr.bf16.mxu0 0
  %285 = vmatpush1.bf16.msra.mxu0 0
  %286 = vmatprep.subr.bf16.mxu0 0
  %287 = vmatpush1.bf16.msra.mxu0 0
  %288 = vmatprep.subr.bf16.mxu0 0
  %289 = vmatpush1.bf16.msra.mxu0 0
  %290 = vmatprep.subr.bf16.mxu0 0
  %291 = vmatpush1.bf16.msra.mxu0 0
  %292 = vmatprep.subr.bf16.mxu0 0
  %293 = vmatpush1.bf16.msra.mxu0 0
  %294 = vmatprep.subr.bf16.mxu0 0
  %295 = vmatpush1.bf16.msra.mxu0 0
  %296 = vmatprep.subr.bf16.mxu0 0
  %297 = vmatpush1.bf16.msra.mxu0 0
  %298 = vmatprep.subr.bf16.mxu0 0
  %299 = vmatpush1.bf16.msra.mxu0 0
  %300 = vmatprep.subr.bf16.mxu0 0
  %301 = vmatpush1.bf16.msra.mxu0 0
  %302 = vmatprep.subr.bf16.mxu0 0
  %303 = vmatpush1.bf16.msra.mxu0 0
  %304 = vmatprep.mubr.bf16.mxu0 0
  %305 = vmatmul.mubr.bf16.gmra.mrb[0].mxu0 %v231
  %v306 = vpop.f32.mrb[0].mxu0
  %v307 = vadd.f32 %v112, %v306
  %v308 = vpop.f32.mrb[0].mxu0
  %v309 = vadd.f32 %v116, %v308
  %v310 = vpop.f32.mrb[0].mxu0
  %v311 = vadd.f32 %v112, %v310
  %v312 = vpop.f32.mrb[0].mxu0
  %v313 = vadd.f32 %v116, %v312
  %314 = vmatprep.mubr.bf16.mxu0 0
  %315 = vmatmul.mubr.bf16.gmra.mrb[0].mxu0 %v234
  %v316 = vpop.f32.mrb[0].mxu0
  %v317 = vadd.f32 %v112, %v316
  %v318 = vpop.f32.mrb[0].mxu0
  %v319 = vadd.f32 %v116, %v318
  %v320 = vpop.f32.mrb[0].mxu0
  %v321 = vadd.f32 %v112, %v320
  %v322 = vpop.f32.mrb[0].mxu0
  %v323 = vadd.f32 %v116, %v322
  %324 = vmatprep.mubr.bf16.mxu0 0
  %325 = vmatmul.mubr.bf16.gmra.mrb[0].mxu0 %v237
  %v326 = vpop.f32.mrb[0].mxu0
  %v327 = vadd.f32 %v112, %v326
  %v328 = vpop.f32.mrb[0].mxu0
  %v329 = vadd.f32 %v116, %v328
  %v330 = vpop.f32.mrb[0].mxu0
  %v331 = vadd.f32 %v112, %v330
  %v332 = vpop.f32.mrb[0].mxu0
  %v333 = vadd.f32 %v116, %v332
  %334 = vmatprep.mubr.bf16.mxu0 0
  %335 = vmatmul.mubr.bf16.gmra.mrb[0].mxu0 %v240
  %v336 = vpop.f32.mrb[0].mxu0
  %v337 = vadd.f32 %v112, %v336
  %v338 = vpop.f32.mrb[0].mxu0
  %v339 = vadd.f32 %v116, %v338
  %v340 = vpop.f32.mrb[0].mxu0
  %v341 = vadd.f32 %v112, %v340
  %v342 = vpop.f32.mrb[0].mxu0
  %v343 = vadd.f32 %v116, %v342
  %344 = vmatprep.mubr.bf16.mxu0 0
  %345 = vmatmul.mubr.bf16.gmra.mrb[0].mxu0 %v243
  %v346 = vpop.f32.mrb[0].mxu0
  %v347 = vadd.f32 %v112, %v346
  %v348 = vpop.f32.mrb[0].mxu0
  %v349 = vadd.f32 %v116, %v348
  %v350 = vpop.f32.mrb[0].mxu0
  %v351 = vadd.f32 %v112, %v350
  %v352 = vpop.f32.mrb[0].mxu0
  %v353 = vadd.f32 %v116, %v352
  %354 = vmatprep.mubr.bf16.mxu0 0
  %355 = vmatmul.mubr.bf16.gmra.mrb[0].mxu0 %v246
  %v356 = vpop.f32.mrb[0].mxu0
  %v357 = vadd.f32 %v112, %v356
  %v358 = vpop.f32.mrb[0].mxu0
  %v359 = vadd.f32 %v116, %v358
  %v360 = vpop.f32.mrb[0].mxu0
  %v361 = vadd.f32 %v112, %v360
  %v362 = vpop.f32.mrb[0].mxu0
  %v363 = vadd.f32 %v116, %v362
  %364 = vmatprep.mubr.bf16.mxu0 0
  %365 = vmatmul.mubr.bf16.gmra.mrb[0].mxu0 %v249
  %v366 = vpop.f32.mrb[0].mxu0
  %v367 = vadd.f32 %v112, %v366
  %v368 = vpop.f32.mrb[0].mxu0
  %v369 = vadd.f32 %v116, %v368
  %v370 = vpop.f32.mrb[0].mxu0
  %v371 = vadd.f32 %v112, %v370
  %v372 = vpop.f32.mrb[0].mxu0
  %v373 = vadd.f32 %v116, %v372
  %374 = vmatprep.mubr.bf16.mxu0 0
  %375 = vmatmul.mubr.bf16.gmra.mrb[0].mxu0 %v252
  %v376 = vpop.f32.mrb[0].mxu0
  %v377 = vadd.f32 %v112, %v376
  %v378 = vpop.f32.mrb[0].mxu0
  %v379 = vadd.f32 %v116, %v378
  %v380 = vpop.f32.mrb[0].mxu0
  %v381 = vadd.f32 %v112, %v380
  %v382 = vpop.f32.mrb[0].mxu0
  %v383 = vadd.f32 %v116, %v382
  %384 = vmatprep.mubr.bf16.mxu0 0
  %385 = vmatmul.mubr.bf16.gmra.mrb[0].mxu0 %v255
  %v386 = vpop.f32.mrb[0].mxu0
  %v387 = vadd.f32 %v112, %v386
  %v388 = vpop.f32.mrb[0].mxu0
  %v389 = vadd.f32 %v116, %v388
  %v390 = vpop.f32.mrb[0].mxu0
  %v391 = vadd.f32 %v112, %v390
  %v392 = vpop.f32.mrb[0].mxu0
  %v393 = vadd.f32 %v116, %v392
  %394 = vmatprep.mubr.bf16.mxu0 0
  %395 = vmatmul.mubr.bf16.gmra.mrb[0].mxu0 %v258
  %v396 = vpop.f32.mrb[0].mxu0
  %v397 = vadd.f32 %v112, %v396
  %v398 = vpop.f32.mrb[0].mxu0
  %v399 = vadd.f32 %v116, %v398
  %v400 = vpop.f32.mrb[0].mxu0
  %v401 = vadd.f32 %v112, %v400
  %v402 = vpop.f32.mrb[0].mxu0
  %v403 = vadd.f32 %v116, %v402
  %404 = vmatprep.mubr.bf16.mxu0 0
  %405 = vmatmul.mubr.bf16.gmra.mrb[0].mxu0 %v261
  %v406 = vpop.f32.mrb[0].mxu0
  %v407 = vadd.f32 %v112, %v406
  %v408 = vpop.f32.mrb[0].mxu0
  %v409 = vadd.f32 %v116, %v408
  %v410 = vpop.f32.mrb[0].mxu0
  %v411 = vadd.f32 %v112, %v410
  %v412 = vpop.f32.mrb[0].mxu0
  %v413 = vadd.f32 %v116, %v412
  %414 = vmatprep.mubr.bf16.mxu0 0
  %415 = vmatmul.mubr.bf16.gmra.mrb[0].mxu0 %v264
  %v416 = vpop.f32.mrb[0].mxu0
  %v417 = vadd.f32 %v112, %v416
  %v418 = vpop.f32.mrb[0].mxu0
  %v419 = vadd.f32 %v116, %v418
  %v420 = vpop.f32.mrb[0].mxu0
  %v421 = vadd.f32 %v112, %v420
  %v422 = vpop.f32.mrb[0].mxu0
  %v423 = vadd.f32 %v116, %v422
  %424 = vmatprep.mubr.bf16.mxu0 0
  %425 = vmatmul.mubr.bf16.gmra.mrb[0].mxu0 %v267
  %v426 = vpop.f32.mrb[0].mxu0
  %v427 = vadd.f32 %v112, %v426
  %v428 = vpop.f32.mrb[0].mxu0
  %v429 = vadd.f32 %v116, %v428
  %v430 = vpop.f32.mrb[0].mxu0
  %v431 = vadd.f32 %v112, %v430
  %v432 = vpop.f32.mrb[0].mxu0
  %v433 = vadd.f32 %v116, %v432
  %434 = vmatprep.mubr.bf16.mxu0 0
  %435 = vmatmul.mubr.bf16.gmra.mrb[0].mxu0 %v270
  %v436 = vpop.f32.mrb[0].mxu0
  %v437 = vadd.f32 %v112, %v436
  %v438 = vpop.f32.mrb[0].mxu0
  %v439 = vadd.f32 %v116, %v438
  %v440 = vpop.f32.mrb[0].mxu0
  %v441 = vadd.f32 %v112, %v440
  %v442 = vpop.f32.mrb[0].mxu0
  %v443 = vadd.f32 %v116, %v442
  %444 = vdwg.mxu0
  %v445 = vpack.c.bf16 %v311, %v307
  %v446 = vpack.c.bf16 %v313, %v309
  %v447 = vpack.c.bf16 %v321, %v317
  %v448 = vpack.c.bf16 %v323, %v319
  %v449 = vpack.c.bf16 %v331, %v327
  %v450 = vpack.c.bf16 %v333, %v329
  %v451 = vpack.c.bf16 %v341, %v337
  %v452 = vpack.c.bf16 %v343, %v339
  %v453 = vpack.c.bf16 %v351, %v347
  %v454 = vpack.c.bf16 %v353, %v349
  %v455 = vpack.c.bf16 %v361, %v357
  %v456 = vpack.c.bf16 %v363, %v359
  %v457 = vpack.c.bf16 %v371, %v367
  %v458 = vpack.c.bf16 %v373, %v369
  %v459 = vpack.c.bf16 %v381, %v377
  %v460 = vpack.c.bf16 %v383, %v379
  %v461 = vpack.c.bf16 %v391, %v387
  %v462 = vpack.c.bf16 %v393, %v389
  %v463 = vpack.c.bf16 %v401, %v397
  %v464 = vpack.c.bf16 %v403, %v399
  %v465 = vpack.c.bf16 %v411, %v407
  %v466 = vpack.c.bf16 %v413, %v409
  %v467 = vpack.c.bf16 %v421, %v417
  %v468 = vpack.c.bf16 %v423, %v419
  %v469 = vpack.c.bf16 %v431, %v427
  %v470 = vpack.c.bf16 %v433, %v429
  %v471 = vpack.c.bf16 %v441, %v437
  %v472 = vpack.c.bf16 %v443, %v439
  %v473 = vmul.bf16 %v445, 1045249613
  %v474 = vmul.bf16 %v446, 1045249613
  %v475 = vmul.bf16 %v447, 1045249613
  %v476 = vmul.bf16 %v448, 1045249613
  %v477 = vmul.bf16 %v449, 1045249613
  %v478 = vmul.bf16 %v450, 1045249613
  %v479 = vmul.bf16 %v451, 1045249613
  %v480 = vmul.bf16 %v452, 1045249613
  %v481 = vmul.bf16 %v453, 1045249613
  %v482 = vmul.bf16 %v454, 1045249613
  %v483 = vmul.bf16 %v455, 1045249613
  %v484 = vmul.bf16 %v456, 1045249613
  %v485 = vmul.bf16 %v457, 1045249613
  %v486 = vmul.bf16 %v458, 1045249613
  %v487 = vmul.bf16 %v459, 1045249613
  %v488 = vmul.bf16 %v460, 1045249613
  %v489 = vmul.bf16 %v461, 1045249613
  %v490 = vmul.bf16 %v462, 1045249613
  %v491 = vmul.bf16 %v463, 1045249613
  %v492 = vmul.bf16 %v464, 1045249613
  %v493 = vmul.bf16 %v465, 1045249613
  %v494 = vmul.bf16 %v466, 1045249613
  %v495 = vmul.bf16 %v467, 1045249613
  %v496 = vmul.bf16 %v468, 1045249613
  %v497 = vmul.bf16 %v469, 1045249613
  %v498 = vmul.bf16 %v470, 1045249613
  %v499 = vmul.bf16 %v471, 1045249613
  %v500 = vmul.bf16 %v472, 1045249613
  %v501 = vmax.bf16 %v445, %v473
  %v502 = vmax.bf16 %v446, %v474
  %v503 = vmax.bf16 %v447, %v475
  %v504 = vmax.bf16 %v448, %v476
  %v505 = vmax.bf16 %v449, %v477
  %v506 = vmax.bf16 %v450, %v478
  %v507 = vmax.bf16 %v451, %v479
  %v508 = vmax.bf16 %v452, %v480
  %v509 = vmax.bf16 %v453, %v481
  %v510 = vmax.bf16 %v454, %v482
  %v511 = vmax.bf16 %v455, %v483
  %v512 = vmax.bf16 %v456, %v484
  %v513 = vmax.bf16 %v457, %v485
  %v514 = vmax.bf16 %v458, %v486
  %v515 = vmax.bf16 %v459, %v487
  %v516 = vmax.bf16 %v460, %v488
  %v517 = vmax.bf16 %v461, %v489
  %v518 = vmax.bf16 %v462, %v490
  %v519 = vmax.bf16 %v463, %v491
  %v520 = vmax.bf16 %v464, %v492
  %v521 = vmax.bf16 %v465, %v493
  %v522 = vmax.bf16 %v466, %v494
  %v523 = vmax.bf16 %v467, %v495
  %v524 = vmax.bf16 %v468, %v496
  %v525 = vmax.bf16 %v469, %v497
  %v526 = vmax.bf16 %v470, %v498
  %v527 = vmax.bf16 %v471, %v499
  %v528 = vmax.bf16 %v472, %v500
  %s529 = scalar_lea.vmem [#allocation2], 16
  %530 = vst [vmem:[%s529] sm:$0xff] %v501
  %531 = vst [vmem:[%s529 + $0x8] sm:$0xff] %v502
  %532 = vst [vmem:[%s529 + $0x10] sm:$0xff] %v503
  %533 = vst [vmem:[%s529 + $0x18] sm:$0xff] %v504
  %534 = vst [vmem:[%s529 + $0x20] sm:$0xff] %v505
  %535 = vst [vmem:[%s529 + $0x28] sm:$0xff] %v506
  %536 = vst [vmem:[%s529 + $0x30] sm:$0xff] %v507
  %537 = vst [vmem:[%s529 + $0x38] sm:$0xff] %v508
  %538 = vst [vmem:[%s529 + $0x40] sm:$0xff] %v509
  %539 = vst [vmem:[%s529 + $0x48] sm:$0xff] %v510
  %540 = vst [vmem:[%s529 + $0x50] sm:$0xff] %v511
  %541 = vst [vmem:[%s529 + $0x58] sm:$0xff] %v512
  %542 = vst [vmem:[%s529 + $0x60] sm:$0xff] %v513
  %543 = vst [vmem:[%s529 + $0x68] sm:$0xff] %v514
  %544 = vst [vmem:[%s529 + $0x70] sm:$0xff] %v515
  %545 = vst [vmem:[%s529 + $0x78] sm:$0xff] %v516
  %546 = vst [vmem:[%s529 + $0x80] sm:$0xff] %v517
  %547 = vst [vmem:[%s529 + $0x88] sm:$0xff] %v518
  %548 = vst [vmem:[%s529 + $0x90] sm:$0xff] %v519
  %549 = vst [vmem:[%s529 + $0x98] sm:$0xff] %v520
  %550 = vst [vmem:[%s529 + $0xa0] sm:$0xff] %v521
  %551 = vst [vmem:[%s529 + $0xa8] sm:$0xff] %v522
  %552 = vst [vmem:[%s529 + $0xb0] sm:$0xff] %v523
  %553 = vst [vmem:[%s529 + $0xb8] sm:$0xff] %v524
  %554 = vst [vmem:[%s529 + $0xc0] sm:$0xff] %v525
  %555 = vst [vmem:[%s529 + $0xc8] sm:$0xff] %v526
  %556 = vst [vmem:[%s529 + $0xd0] sm:$0xff] %v527
  %557 = vst [vmem:[%s529 + $0xd8] sm:$0xff] %v528
  %s558 = scalar_lea.vmem %s0, 112
  %v559 = vld [vmem:[%s558] sm:$0xf]
  %v560 = vld [vmem:[%s558 + $0x4] sm:$0xf]
  %v561 = vld [vmem:[%s558 + $0x8] sm:$0xf]
  %v562 = vld [vmem:[%s558 + $0xc] sm:$0xf]
  %v563 = vld [vmem:[%s558 + $0x10] sm:$0xf]
  %v564 = vld [vmem:[%s558 + $0x14] sm:$0xf]
  %v565 = vld [vmem:[%s558 + $0x18] sm:$0xf]
  %v566 = vld [vmem:[%s558 + $0x1c] sm:$0xf]
  %v567 = vld [vmem:[%s558 + $0x20] sm:$0xf]
  %v568 = vld [vmem:[%s558 + $0x24] sm:$0xf]
  %v569 = vld [vmem:[%s558 + $0x28] sm:$0xf]
  %v570 = vld [vmem:[%s558 + $0x2c] sm:$0xf]
  %v571 = vld [vmem:[%s558 + $0x30] sm:$0xf]
  %v572 = vld [vmem:[%s558 + $0x34] sm:$0xf]
  %v573 = vld [vmem:[%s558 + $0x38] sm:$0xf]
  %v574 = vld [vmem:[%s558 + $0x3c] sm:$0xf]
  %v575 = vld [vmem:[%s558 + $0x40] sm:$0xf]
  %v576 = vld [vmem:[%s558 + $0x44] sm:$0xf]
  %v577 = vld [vmem:[%s558 + $0x48] sm:$0xf]
  %v578 = vld [vmem:[%s558 + $0x4c] sm:$0xf]
  %v579 = vld [vmem:[%s558 + $0x50] sm:$0xf]
  %v580 = vld [vmem:[%s558 + $0x54] sm:$0xf]
  %v581 = vld [vmem:[%s558 + $0x58] sm:$0xf]
  %v582 = vld [vmem:[%s558 + $0x5c] sm:$0xf]
  %v583 = vld [vmem:[%s558 + $0x60] sm:$0xf]
  %v584 = vld [vmem:[%s558 + $0x64] sm:$0xf]
  %v585 = vld [vmem:[%s558 + $0x68] sm:$0xf]
  %v586 = vld [vmem:[%s558 + $0x6c] sm:$0xf]
  %v587 = vld [vmem:[%s1] sm:$0xff]
  %v588 = vld [vmem:[%s1 + $0x8] sm:$0xff]
  %v589 = vld [vmem:[%s1 + $0x10] sm:$0xff]
  %v590 = vld [vmem:[%s1 + $0x18] sm:$0xff]
  %v591 = vld [vmem:[%s1 + $0x20] sm:$0xff]
  %v592 = vld [vmem:[%s1 + $0x28] sm:$0xff]
  %v593 = vld [vmem:[%s1 + $0x30] sm:$0xff]
  %v594 = vld [vmem:[%s1 + $0x38] sm:$0xff]
  %s595 = scalar_lea.vmem %s2, 1
  %v596 = vld [vmem:[%s595] ss:$8 sm:$0x3]
  %v598 = vlaneseq
  %v599 = vshrl.u32 %v598, 7
  %v600 = vsub.s32 0, %v599
  %v601 = vrot.slane %v596, %v600
  %v602 = vlaneseq
  %v603 = vshrl.u32 %v602, 7
  %v604 = vsub.s32 1, %v603
  %v605 = vrot.slane %v596, %v604
  %v636 = vunpack.c.l.b16 %v559
  %v637 = vunpack.c.l.b16 %v560
  %v638 = vunpack.c.l.b16 %v561
  %v639 = vunpack.c.l.b16 %v562
  %v640 = vunpack.c.l.b16 %v563
  %v641 = vunpack.c.l.b16 %v564
  %v642 = vunpack.c.l.b16 %v565
  %v643 = vunpack.c.l.b16 %v566
  %v644 = vunpack.c.l.b16 %v567
  %v645 = vunpack.c.l.b16 %v568
  %v646 = vunpack.c.l.b16 %v569
  %v647 = vunpack.c.l.b16 %v570
  %v648 = vunpack.c.l.b16 %v571
  %v649 = vunpack.c.l.b16 %v572
  %v650 = vunpack.c.l.b16 %v573
  %v651 = vunpack.c.l.b16 %v574
  %v652 = vunpack.c.l.b16 %v575
  %v653 = vunpack.c.l.b16 %v576
  %v654 = vunpack.c.l.b16 %v577
  %v655 = vunpack.c.l.b16 %v578
  %v656 = vunpack.c.l.b16 %v579
  %v657 = vunpack.c.l.b16 %v580
  %v658 = vunpack.c.l.b16 %v581
  %v659 = vunpack.c.l.b16 %v582
  %v660 = vunpack.c.l.b16 %v583
  %v661 = vunpack.c.l.b16 %v584
  %v662 = vunpack.c.l.b16 %v585
  %v663 = vunpack.c.l.b16 %v586
  %v664 = vpack.c.b16 %v637, %v636
  %v665 = vpack.c.b16 %v639, %v638
  %v666 = vpack.c.b16 %v641, %v640
  %v667 = vpack.c.b16 %v643, %v642
  %v668 = vpack.c.b16 %v645, %v644
  %v669 = vpack.c.b16 %v647, %v646
  %v670 = vpack.c.b16 %v649, %v648
  %v671 = vpack.c.b16 %v651, %v650
  %v672 = vpack.c.b16 %v653, %v652
  %v673 = vpack.c.b16 %v655, %v654
  %v674 = vpack.c.b16 %v657, %v656
  %v675 = vpack.c.b16 %v659, %v658
  %v676 = vpack.c.b16 %v661, %v660
  %v677 = vpack.c.b16 %v663, %v662
  %v686 = vunpack.c.l.b16 %v587
  %v687 = vunpack.c.h.b16 %v587
  %v688 = vunpack.c.l.b16 %v588
  %v689 = vunpack.c.h.b16 %v588
  %v690 = vunpack.c.l.b16 %v589
  %v691 = vunpack.c.h.b16 %v589
  %v692 = vunpack.c.l.b16 %v590
  %v693 = vunpack.c.h.b16 %v590
  %v694 = vunpack.c.l.b16 %v591
  %v695 = vunpack.c.h.b16 %v591
  %v696 = vunpack.c.l.b16 %v592
  %v697 = vunpack.c.h.b16 %v592
  %v698 = vunpack.c.l.b16 %v593
  %v699 = vunpack.c.h.b16 %v593
  %v700 = vunpack.c.l.b16 %v594
  %v701 = vunpack.c.h.b16 %v594
  %v702 = vpack.c.b16 %v688, %v686
  %v703 = vpack.c.b16 %v689, %v687
  %v704 = vpack.c.b16 %v692, %v690
  %v705 = vpack.c.b16 %v693, %v691
  %v706 = vpack.c.b16 %v696, %v694
  %v707 = vpack.c.b16 %v697, %v695
  %v708 = vpack.c.b16 %v700, %v698
  %v709 = vpack.c.b16 %v701, %v699
  %v719 = vsel %vm229, %v664, 0
  %v722 = vsel %vm229, %v665, 0
  %v725 = vsel %vm229, %v666, 0
  %v728 = vsel %vm229, %v667, 0
  %v731 = vsel %vm229, %v668, 0
  %v734 = vsel %vm229, %v669, 0
  %v737 = vsel %vm229, %v670, 0
  %v740 = vsel %vm229, %v671, 0
  %v743 = vsel %vm229, %v672, 0
  %v746 = vsel %vm229, %v673, 0
  %v749 = vsel %vm229, %v674, 0
  %v752 = vsel %vm229, %v675, 0
  %v755 = vsel %vm229, %v676, 0
  %v758 = vsel %vm229, %v677, 0
  %760 = vmatprep.subr.bf16.mxu0 %v703
  %761 = vmatpush1.bf16.msra.mxu0 %v702
  %762 = vmatprep.subr.bf16.mxu0 %v705
  %763 = vmatpush1.bf16.msra.mxu0 %v704
  %764 = vmatprep.subr.bf16.mxu0 %v707
  %765 = vmatpush1.bf16.msra.mxu0 %v706
  %766 = vmatprep.subr.bf16.mxu0 %v709
  %767 = vmatpush1.bf16.msra.mxu0 %v708
  %768 = vmatprep.subr.bf16.mxu0 0
  %769 = vmatpush1.bf16.msra.mxu0 0
  %770 = vmatprep.subr.bf16.mxu0 0
  %771 = vmatpush1.bf16.msra.mxu0 0
  %772 = vmatprep.subr.bf16.mxu0 0
  %773 = vmatpush1.bf16.msra.mxu0 0
  %774 = vmatprep.subr.bf16.mxu0 0
  %775 = vmatpush1.bf16.msra.mxu0 0
  %776 = vmatprep.subr.bf16.mxu0 0
  %777 = vmatpush1.bf16.msra.mxu0 0
  %778 = vmatprep.subr.bf16.mxu0 0
  %779 = vmatpush1.bf16.msra.mxu0 0
  %780 = vmatprep.subr.bf16.mxu0 0
  %781 = vmatpush1.bf16.msra.mxu0 0
  %782 = vmatprep.subr.bf16.mxu0 0
  %783 = vmatpush1.bf16.msra.mxu0 0
  %784 = vmatprep.subr.bf16.mxu0 0
  %785 = vmatpush1.bf16.msra.mxu0 0
  %786 = vmatprep.subr.bf16.mxu0 0
  %787 = vmatpush1.bf16.msra.mxu0 0
  %788 = vmatprep.subr.bf16.mxu0 0
  %789 = vmatpush1.bf16.msra.mxu0 0
  %790 = vmatprep.subr.bf16.mxu0 0
  %791 = vmatpush1.bf16.msra.mxu0 0
  %792 = vmatprep.mubr.bf16.mxu0 0
  %793 = vmatmul.mubr.bf16.gmra.mrb[0].mxu0 %v719
  %v794 = vpop.f32.mrb[0].mxu0
  %v795 = vadd.f32 %v601, %v794
  %v796 = vpop.f32.mrb[0].mxu0
  %v797 = vadd.f32 %v605, %v796
  %v798 = vpop.f32.mrb[0].mxu0
  %v799 = vadd.f32 %v601, %v798
  %v800 = vpop.f32.mrb[0].mxu0
  %v801 = vadd.f32 %v605, %v800
  %802 = vmatprep.mubr.bf16.mxu0 0
  %803 = vmatmul.mubr.bf16.gmra.mrb[0].mxu0 %v722
  %v804 = vpop.f32.mrb[0].mxu0
  %v805 = vadd.f32 %v601, %v804
  %v806 = vpop.f32.mrb[0].mxu0
  %v807 = vadd.f32 %v605, %v806
  %v808 = vpop.f32.mrb[0].mxu0
  %v809 = vadd.f32 %v601, %v808
  %v810 = vpop.f32.mrb[0].mxu0
  %v811 = vadd.f32 %v605, %v810
  %812 = vmatprep.mubr.bf16.mxu0 0
  %813 = vmatmul.mubr.bf16.gmra.mrb[0].mxu0 %v725
  %v814 = vpop.f32.mrb[0].mxu0
  %v815 = vadd.f32 %v601, %v814
  %v816 = vpop.f32.mrb[0].mxu0
  %v817 = vadd.f32 %v605, %v816
  %v818 = vpop.f32.mrb[0].mxu0
  %v819 = vadd.f32 %v601, %v818
  %v820 = vpop.f32.mrb[0].mxu0
  %v821 = vadd.f32 %v605, %v820
  %822 = vmatprep.mubr.bf16.mxu0 0
  %823 = vmatmul.mubr.bf16.gmra.mrb[0].mxu0 %v728
  %v824 = vpop.f32.mrb[0].mxu0
  %v825 = vadd.f32 %v601, %v824
  %v826 = vpop.f32.mrb[0].mxu0
  %v827 = vadd.f32 %v605, %v826
  %v828 = vpop.f32.mrb[0].mxu0
  %v829 = vadd.f32 %v601, %v828
  %v830 = vpop.f32.mrb[0].mxu0
  %v831 = vadd.f32 %v605, %v830
  %832 = vmatprep.mubr.bf16.mxu0 0
  %833 = vmatmul.mubr.bf16.gmra.mrb[0].mxu0 %v731
  %v834 = vpop.f32.mrb[0].mxu0
  %v835 = vadd.f32 %v601, %v834
  %v836 = vpop.f32.mrb[0].mxu0
  %v837 = vadd.f32 %v605, %v836
  %v838 = vpop.f32.mrb[0].mxu0
  %v839 = vadd.f32 %v601, %v838
  %v840 = vpop.f32.mrb[0].mxu0
  %v841 = vadd.f32 %v605, %v840
  %842 = vmatprep.mubr.bf16.mxu0 0
  %843 = vmatmul.mubr.bf16.gmra.mrb[0].mxu0 %v734
  %v844 = vpop.f32.mrb[0].mxu0
  %v845 = vadd.f32 %v601, %v844
  %v846 = vpop.f32.mrb[0].mxu0
  %v847 = vadd.f32 %v605, %v846
  %v848 = vpop.f32.mrb[0].mxu0
  %v849 = vadd.f32 %v601, %v848
  %v850 = vpop.f32.mrb[0].mxu0
  %v851 = vadd.f32 %v605, %v850
  %852 = vmatprep.mubr.bf16.mxu0 0
  %853 = vmatmul.mubr.bf16.gmra.mrb[0].mxu0 %v737
  %v854 = vpop.f32.mrb[0].mxu0
  %v855 = vadd.f32 %v601, %v854
  %v856 = vpop.f32.mrb[0].mxu0
  %v857 = vadd.f32 %v605, %v856
  %v858 = vpop.f32.mrb[0].mxu0
  %v859 = vadd.f32 %v601, %v858
  %v860 = vpop.f32.mrb[0].mxu0
  %v861 = vadd.f32 %v605, %v860
  %862 = vmatprep.mubr.bf16.mxu0 0
  %863 = vmatmul.mubr.bf16.gmra.mrb[0].mxu0 %v740
  %v864 = vpop.f32.mrb[0].mxu0
  %v865 = vadd.f32 %v601, %v864
  %v866 = vpop.f32.mrb[0].mxu0
  %v867 = vadd.f32 %v605, %v866
  %v868 = vpop.f32.mrb[0].mxu0
  %v869 = vadd.f32 %v601, %v868
  %v870 = vpop.f32.mrb[0].mxu0
  %v871 = vadd.f32 %v605, %v870
  %872 = vmatprep.mubr.bf16.mxu0 0
  %873 = vmatmul.mubr.bf16.gmra.mrb[0].mxu0 %v743
  %v874 = vpop.f32.mrb[0].mxu0
  %v875 = vadd.f32 %v601, %v874
  %v876 = vpop.f32.mrb[0].mxu0
  %v877 = vadd.f32 %v605, %v876
  %v878 = vpop.f32.mrb[0].mxu0
  %v879 = vadd.f32 %v601, %v878
  %v880 = vpop.f32.mrb[0].mxu0
  %v881 = vadd.f32 %v605, %v880
  %882 = vmatprep.mubr.bf16.mxu0 0
  %883 = vmatmul.mubr.bf16.gmra.mrb[0].mxu0 %v746
  %v884 = vpop.f32.mrb[0].mxu0
  %v885 = vadd.f32 %v601, %v884
  %v886 = vpop.f32.mrb[0].mxu0
  %v887 = vadd.f32 %v605, %v886
  %v888 = vpop.f32.mrb[0].mxu0
  %v889 = vadd.f32 %v601, %v888
  %v890 = vpop.f32.mrb[0].mxu0
  %v891 = vadd.f32 %v605, %v890
  %892 = vmatprep.mubr.bf16.mxu0 0
  %893 = vmatmul.mubr.bf16.gmra.mrb[0].mxu0 %v749
  %v894 = vpop.f32.mrb[0].mxu0
  %v895 = vadd.f32 %v601, %v894
  %v896 = vpop.f32.mrb[0].mxu0
  %v897 = vadd.f32 %v605, %v896
  %v898 = vpop.f32.mrb[0].mxu0
  %v899 = vadd.f32 %v601, %v898
  %v900 = vpop.f32.mrb[0].mxu0
  %v901 = vadd.f32 %v605, %v900
  %902 = vmatprep.mubr.bf16.mxu0 0
  %903 = vmatmul.mubr.bf16.gmra.mrb[0].mxu0 %v752
  %v904 = vpop.f32.mrb[0].mxu0
  %v905 = vadd.f32 %v601, %v904
  %v906 = vpop.f32.mrb[0].mxu0
  %v907 = vadd.f32 %v605, %v906
  %v908 = vpop.f32.mrb[0].mxu0
  %v909 = vadd.f32 %v601, %v908
  %v910 = vpop.f32.mrb[0].mxu0
  %v911 = vadd.f32 %v605, %v910
  %912 = vmatprep.mubr.bf16.mxu0 0
  %913 = vmatmul.mubr.bf16.gmra.mrb[0].mxu0 %v755
  %v914 = vpop.f32.mrb[0].mxu0
  %v915 = vadd.f32 %v601, %v914
  %v916 = vpop.f32.mrb[0].mxu0
  %v917 = vadd.f32 %v605, %v916
  %v918 = vpop.f32.mrb[0].mxu0
  %v919 = vadd.f32 %v601, %v918
  %v920 = vpop.f32.mrb[0].mxu0
  %v921 = vadd.f32 %v605, %v920
  %922 = vmatprep.mubr.bf16.mxu0 0
  %923 = vmatmul.mubr.bf16.gmra.mrb[0].mxu0 %v758
  %v924 = vpop.f32.mrb[0].mxu0
  %v925 = vadd.f32 %v601, %v924
  %v926 = vpop.f32.mrb[0].mxu0
  %v927 = vadd.f32 %v605, %v926
  %v928 = vpop.f32.mrb[0].mxu0
  %v929 = vadd.f32 %v601, %v928
  %v930 = vpop.f32.mrb[0].mxu0
  %v931 = vadd.f32 %v605, %v930
  %932 = vdwg.mxu0
  %v933 = vpack.c.bf16 %v799, %v795
  %v934 = vpack.c.bf16 %v801, %v797
  %v935 = vpack.c.bf16 %v809, %v805
  %v936 = vpack.c.bf16 %v811, %v807
  %v937 = vpack.c.bf16 %v819, %v815
  %v938 = vpack.c.bf16 %v821, %v817
  %v939 = vpack.c.bf16 %v829, %v825
  %v940 = vpack.c.bf16 %v831, %v827
  %v941 = vpack.c.bf16 %v839, %v835
  %v942 = vpack.c.bf16 %v841, %v837
  %v943 = vpack.c.bf16 %v849, %v845
  %v944 = vpack.c.bf16 %v851, %v847
  %v945 = vpack.c.bf16 %v859, %v855
  %v946 = vpack.c.bf16 %v861, %v857
  %v947 = vpack.c.bf16 %v869, %v865
  %v948 = vpack.c.bf16 %v871, %v867
  %v949 = vpack.c.bf16 %v879, %v875
  %v950 = vpack.c.bf16 %v881, %v877
  %v951 = vpack.c.bf16 %v889, %v885
  %v952 = vpack.c.bf16 %v891, %v887
  %v953 = vpack.c.bf16 %v899, %v895
  %v954 = vpack.c.bf16 %v901, %v897
  %v955 = vpack.c.bf16 %v909, %v905
  %v956 = vpack.c.bf16 %v911, %v907
  %v957 = vpack.c.bf16 %v919, %v915
  %v958 = vpack.c.bf16 %v921, %v917
  %v959 = vpack.c.bf16 %v929, %v925
  %v960 = vpack.c.bf16 %v931, %v927
  %v961 = vmul.bf16 %v933, 1045249613
  %v962 = vmul.bf16 %v934, 1045249613
  %v963 = vmul.bf16 %v935, 1045249613
  %v964 = vmul.bf16 %v936, 1045249613
  %v965 = vmul.bf16 %v937, 1045249613
  %v966 = vmul.bf16 %v938, 1045249613
  %v967 = vmul.bf16 %v939, 1045249613
  %v968 = vmul.bf16 %v940, 1045249613
  %v969 = vmul.bf16 %v941, 1045249613
  %v970 = vmul.bf16 %v942, 1045249613
  %v971 = vmul.bf16 %v943, 1045249613
  %v972 = vmul.bf16 %v944, 1045249613
  %v973 = vmul.bf16 %v945, 1045249613
  %v974 = vmul.bf16 %v946, 1045249613
  %v975 = vmul.bf16 %v947, 1045249613
  %v976 = vmul.bf16 %v948, 1045249613
  %v977 = vmul.bf16 %v949, 1045249613
  %v978 = vmul.bf16 %v950, 1045249613
  %v979 = vmul.bf16 %v951, 1045249613
  %v980 = vmul.bf16 %v952, 1045249613
  %v981 = vmul.bf16 %v953, 1045249613
  %v982 = vmul.bf16 %v954, 1045249613
  %v983 = vmul.bf16 %v955, 1045249613
  %v984 = vmul.bf16 %v956, 1045249613
  %v985 = vmul.bf16 %v957, 1045249613
  %v986 = vmul.bf16 %v958, 1045249613
  %v987 = vmul.bf16 %v959, 1045249613
  %v988 = vmul.bf16 %v960, 1045249613
  %v989 = vmax.bf16 %v933, %v961
  %v990 = vmax.bf16 %v934, %v962
  %v991 = vmax.bf16 %v935, %v963
  %v992 = vmax.bf16 %v936, %v964
  %v993 = vmax.bf16 %v937, %v965
  %v994 = vmax.bf16 %v938, %v966
  %v995 = vmax.bf16 %v939, %v967
  %v996 = vmax.bf16 %v940, %v968
  %v997 = vmax.bf16 %v941, %v969
  %v998 = vmax.bf16 %v942, %v970
  %v999 = vmax.bf16 %v943, %v971
  %v1000 = vmax.bf16 %v944, %v972
  %v1001 = vmax.bf16 %v945, %v973
  %v1002 = vmax.bf16 %v946, %v974
  %v1003 = vmax.bf16 %v947, %v975
  %v1004 = vmax.bf16 %v948, %v976
  %v1005 = vmax.bf16 %v949, %v977
  %v1006 = vmax.bf16 %v950, %v978
  %v1007 = vmax.bf16 %v951, %v979
  %v1008 = vmax.bf16 %v952, %v980
  %v1009 = vmax.bf16 %v953, %v981
  %v1010 = vmax.bf16 %v954, %v982
  %v1011 = vmax.bf16 %v955, %v983
  %v1012 = vmax.bf16 %v956, %v984
  %v1013 = vmax.bf16 %v957, %v985
  %v1014 = vmax.bf16 %v958, %v986
  %v1015 = vmax.bf16 %v959, %v987
  %v1016 = vmax.bf16 %v960, %v988
  %s1017 = scalar_lea.vmem [#allocation2], 272
  %1018 = vst [vmem:[%s1017] sm:$0xff] %v989
  %1019 = vst [vmem:[%s1017 + $0x8] sm:$0xff] %v990
  %1020 = vst [vmem:[%s1017 + $0x10] sm:$0xff] %v991
  %1021 = vst [vmem:[%s1017 + $0x18] sm:$0xff] %v992
  %1022 = vst [vmem:[%s1017 + $0x20] sm:$0xff] %v993
  %1023 = vst [vmem:[%s1017 + $0x28] sm:$0xff] %v994
  %1024 = vst [vmem:[%s1017 + $0x30] sm:$0xff] %v995
  %1025 = vst [vmem:[%s1017 + $0x38] sm:$0xff] %v996
  %1026 = vst [vmem:[%s1017 + $0x40] sm:$0xff] %v997
  %1027 = vst [vmem:[%s1017 + $0x48] sm:$0xff] %v998
  %1028 = vst [vmem:[%s1017 + $0x50] sm:$0xff] %v999
  %1029 = vst [vmem:[%s1017 + $0x58] sm:$0xff] %v1000
  %1030 = vst [vmem:[%s1017 + $0x60] sm:$0xff] %v1001
  %1031 = vst [vmem:[%s1017 + $0x68] sm:$0xff] %v1002
  %1032 = vst [vmem:[%s1017 + $0x70] sm:$0xff] %v1003
  %1033 = vst [vmem:[%s1017 + $0x78] sm:$0xff] %v1004
  %1034 = vst [vmem:[%s1017 + $0x80] sm:$0xff] %v1005
  %1035 = vst [vmem:[%s1017 + $0x88] sm:$0xff] %v1006
  %1036 = vst [vmem:[%s1017 + $0x90] sm:$0xff] %v1007
  %1037 = vst [vmem:[%s1017 + $0x98] sm:$0xff] %v1008
  %1038 = vst [vmem:[%s1017 + $0xa0] sm:$0xff] %v1009
  %1039 = vst [vmem:[%s1017 + $0xa8] sm:$0xff] %v1010
  %1040 = vst [vmem:[%s1017 + $0xb0] sm:$0xff] %v1011
  %1041 = vst [vmem:[%s1017 + $0xb8] sm:$0xff] %v1012
  %1042 = vst [vmem:[%s1017 + $0xc0] sm:$0xff] %v1013
  %1043 = vst [vmem:[%s1017 + $0xc8] sm:$0xff] %v1014
  %1044 = vst [vmem:[%s1017 + $0xd0] sm:$0xff] %v1015
  %1045 = vst [vmem:[%s1017 + $0xd8] sm:$0xff] %v1016
  %s1046 = scalar_lea.vmem %s0, 224
  %v1047 = vld [vmem:[%s1046] sm:$0xf]
  %v1048 = vld [vmem:[%s1046 + $0x4] sm:$0xf]
  %v1049 = vld [vmem:[%s1046 + $0x8] sm:$0xf]
  %v1050 = vld [vmem:[%s1046 + $0xc] sm:$0xf]
  %v1051 = vld [vmem:[%s1046 + $0x10] sm:$0xf]
  %v1052 = vld [vmem:[%s1046 + $0x14] sm:$0xf]
  %v1053 = vld [vmem:[%s1046 + $0x18] sm:$0xf]
  %v1054 = vld [vmem:[%s1046 + $0x1c] sm:$0xf]
  %v1055 = vld [vmem:[%s1046 + $0x20] sm:$0xf]
  %v1056 = vld [vmem:[%s1046 + $0x24] sm:$0xf]
  %v1057 = vld [vmem:[%s1046 + $0x28] sm:$0xf]
  %v1058 = vld [vmem:[%s1046 + $0x2c] sm:$0xf]
  %v1059 = vld [vmem:[%s1046 + $0x30] sm:$0xf]
  %v1060 = vld [vmem:[%s1046 + $0x34] sm:$0xf]
  %v1061 = vld [vmem:[%s1046 + $0x38] sm:$0xf]
  %v1062 = vld [vmem:[%s1046 + $0x3c] sm:$0xf]
  %v1063 = vld [vmem:[%s1046 + $0x40] sm:$0xf]
  %v1064 = vld [vmem:[%s1046 + $0x44] sm:$0xf]
  %v1065 = vld [vmem:[%s1046 + $0x48] sm:$0xf]
  %v1066 = vld [vmem:[%s1046 + $0x4c] sm:$0xf]
  %v1067 = vld [vmem:[%s1046 + $0x50] sm:$0xf]
  %v1068 = vld [vmem:[%s1046 + $0x54] sm:$0xf]
  %v1069 = vld [vmem:[%s1046 + $0x58] sm:$0xf]
  %v1070 = vld [vmem:[%s1046 + $0x5c] sm:$0xf]
  %v1071 = vld [vmem:[%s1046 + $0x60] sm:$0xf]
  %v1072 = vld [vmem:[%s1046 + $0x64] sm:$0xf]
  %v1073 = vld [vmem:[%s1046 + $0x68] sm:$0xf]
  %v1074 = vld [vmem:[%s1046 + $0x6c] sm:$0xf]
  %v1075 = vld [vmem:[%s1] sm:$0xff]
  %v1076 = vld [vmem:[%s1 + $0x8] sm:$0xff]
  %v1077 = vld [vmem:[%s1 + $0x10] sm:$0xff]
  %v1078 = vld [vmem:[%s1 + $0x18] sm:$0xff]
  %v1079 = vld [vmem:[%s1 + $0x20] sm:$0xff]
  %v1080 = vld [vmem:[%s1 + $0x28] sm:$0xff]
  %v1081 = vld [vmem:[%s1 + $0x30] sm:$0xff]
  %v1082 = vld [vmem:[%s1 + $0x38] sm:$0xff]
  %s1083 = scalar_lea.vmem %s2, 2
  %v1084 = vld [vmem:[%s1083] ss:$8 sm:$0x3]
  %v1086 = vlaneseq
  %v1087 = vshrl.u32 %v1086, 7
  %v1088 = vsub.s32 0, %v1087
  %v1089 = vrot.slane %v1084, %v1088
  %v1090 = vlaneseq
  %v1091 = vshrl.u32 %v1090, 7
  %v1092 = vsub.s32 1, %v1091
  %v1093 = vrot.slane %v1084, %v1092
  %v1124 = vunpack.c.l.b16 %v1047
  %v1125 = vunpack.c.l.b16 %v1048
  %v1126 = vunpack.c.l.b16 %v1049
  %v1127 = vunpack.c.l.b16 %v1050
  %v1128 = vunpack.c.l.b16 %v1051
  %v1129 = vunpack.c.l.b16 %v1052
  %v1130 = vunpack.c.l.b16 %v1053
  %v1131 = vunpack.c.l.b16 %v1054
  %v1132 = vunpack.c.l.b16 %v1055
  %v1133 = vunpack.c.l.b16 %v1056
  %v1134 = vunpack.c.l.b16 %v1057
  %v1135 = vunpack.c.l.b16 %v1058
  %v1136 = vunpack.c.l.b16 %v1059
  %v1137 = vunpack.c.l.b16 %v1060
  %v1138 = vunpack.c.l.b16 %v1061
  %v1139 = vunpack.c.l.b16 %v1062
  %v1140 = vunpack.c.l.b16 %v1063
  %v1141 = vunpack.c.l.b16 %v1064
  %v1142 = vunpack.c.l.b16 %v1065
  %v1143 = vunpack.c.l.b16 %v1066
  %v1144 = vunpack.c.l.b16 %v1067
  %v1145 = vunpack.c.l.b16 %v1068
  %v1146 = vunpack.c.l.b16 %v1069
  %v1147 = vunpack.c.l.b16 %v1070
  %v1148 = vunpack.c.l.b16 %v1071
  %v1149 = vunpack.c.l.b16 %v1072
  %v1150 = vunpack.c.l.b16 %v1073
  %v1151 = vunpack.c.l.b16 %v1074
  %v1152 = vpack.c.b16 %v1125, %v1124
  %v1153 = vpack.c.b16 %v1127, %v1126
  %v1154 = vpack.c.b16 %v1129, %v1128
  %v1155 = vpack.c.b16 %v1131, %v1130
  %v1156 = vpack.c.b16 %v1133, %v1132
  %v1157 = vpack.c.b16 %v1135, %v1134
  %v1158 = vpack.c.b16 %v1137, %v1136
  %v1159 = vpack.c.b16 %v1139, %v1138
  %v1160 = vpack.c.b16 %v1141, %v1140
  %v1161 = vpack.c.b16 %v1143, %v1142
  %v1162 = vpack.c.b16 %v1145, %v1144
  %v1163 = vpack.c.b16 %v1147, %v1146
  %v1164 = vpack.c.b16 %v1149, %v1148
  %v1165 = vpack.c.b16 %v1151, %v1150
  %v1174 = vunpack.c.l.b16 %v1075
  %v1175 = vunpack.c.h.b16 %v1075
  %v1176 = vunpack.c.l.b16 %v1076
  %v1177 = vunpack.c.h.b16 %v1076
  %v1178 = vunpack.c.l.b16 %v1077
  %v1179 = vunpack.c.h.b16 %v1077
  %v1180 = vunpack.c.l.b16 %v1078
  %v1181 = vunpack.c.h.b16 %v1078
  %v1182 = vunpack.c.l.b16 %v1079
  %v1183 = vunpack.c.h.b16 %v1079
  %v1184 = vunpack.c.l.b16 %v1080
  %v1185 = vunpack.c.h.b16 %v1080
  %v1186 = vunpack.c.l.b16 %v1081
  %v1187 = vunpack.c.h.b16 %v1081
  %v1188 = vunpack.c.l.b16 %v1082
  %v1189 = vunpack.c.h.b16 %v1082
  %v1190 = vpack.c.b16 %v1176, %v1174
  %v1191 = vpack.c.b16 %v1177, %v1175
  %v1192 = vpack.c.b16 %v1180, %v1178
  %v1193 = vpack.c.b16 %v1181, %v1179
  %v1194 = vpack.c.b16 %v1184, %v1182
  %v1195 = vpack.c.b16 %v1185, %v1183
  %v1196 = vpack.c.b16 %v1188, %v1186
  %v1197 = vpack.c.b16 %v1189, %v1187
  %v1207 = vsel %vm229, %v1152, 0
  %v1210 = vsel %vm229, %v1153, 0
  %v1213 = vsel %vm229, %v1154, 0
  %v1216 = vsel %vm229, %v1155, 0
  %v1219 = vsel %vm229, %v1156, 0
  %v1222 = vsel %vm229, %v1157, 0
  %v1225 = vsel %vm229, %v1158, 0
  %v1228 = vsel %vm229, %v1159, 0
  %v1231 = vsel %vm229, %v1160, 0
  %v1234 = vsel %vm229, %v1161, 0
  %v1237 = vsel %vm229, %v1162, 0
  %v1240 = vsel %vm229, %v1163, 0
  %v1243 = vsel %vm229, %v1164, 0
  %v1246 = vsel %vm229, %v1165, 0
  %1248 = vmatprep.subr.bf16.mxu0 %v1191
  %1249 = vmatpush1.bf16.msra.mxu0 %v1190
  %1250 = vmatprep.subr.bf16.mxu0 %v1193
  %1251 = vmatpush1.bf16.msra.mxu0 %v1192
  %1252 = vmatprep.subr.bf16.mxu0 %v1195
  %1253 = vmatpush1.bf16.msra.mxu0 %v1194
  %1254 = vmatprep.subr.bf16.mxu0 %v1197
  %1255 = vmatpush1.bf16.msra.mxu0 %v1196
  %1256 = vmatprep.subr.bf16.mxu0 0
  %1257 = vmatpush1.bf16.msra.mxu0 0
  %1258 = vmatprep.subr.bf16.mxu0 0
  %1259 = vmatpush1.bf16.msra.mxu0 0
  %1260 = vmatprep.subr.bf16.mxu0 0
  %1261 = vmatpush1.bf16.msra.mxu0 0
  %1262 = vmatprep.subr.bf16.mxu0 0
  %1263 = vmatpush1.bf16.msra.mxu0 0
  %1264 = vmatprep.subr.bf16.mxu0 0
  %1265 = vmatpush1.bf16.msra.mxu0 0
  %1266 = vmatprep.subr.bf16.mxu0 0
  %1267 = vmatpush1.bf16.msra.mxu0 0
  %1268 = vmatprep.subr.bf16.mxu0 0
  %1269 = vmatpush1.bf16.msra.mxu0 0
  %1270 = vmatprep.subr.bf16.mxu0 0
  %1271 = vmatpush1.bf16.msra.mxu0 0
  %1272 = vmatprep.subr.bf16.mxu0 0
  %1273 = vmatpush1.bf16.msra.mxu0 0
  %1274 = vmatprep.subr.bf16.mxu0 0
  %1275 = vmatpush1.bf16.msra.mxu0 0
  %1276 = vmatprep.subr.bf16.mxu0 0
  %1277 = vmatpush1.bf16.msra.mxu0 0
  %1278 = vmatprep.subr.bf16.mxu0 0
  %1279 = vmatpush1.bf16.msra.mxu0 0
  %1280 = vmatprep.mubr.bf16.mxu0 0
  %1281 = vmatmul.mubr.bf16.gmra.mrb[0].mxu0 %v1207
  %v1282 = vpop.f32.mrb[0].mxu0
  %v1283 = vadd.f32 %v1089, %v1282
  %v1284 = vpop.f32.mrb[0].mxu0
  %v1285 = vadd.f32 %v1093, %v1284
  %v1286 = vpop.f32.mrb[0].mxu0
  %v1287 = vadd.f32 %v1089, %v1286
  %v1288 = vpop.f32.mrb[0].mxu0
  %v1289 = vadd.f32 %v1093, %v1288
  %1290 = vmatprep.mubr.bf16.mxu0 0
  %1291 = vmatmul.mubr.bf16.gmra.mrb[0].mxu0 %v1210
  %v1292 = vpop.f32.mrb[0].mxu0
  %v1293 = vadd.f32 %v1089, %v1292
  %v1294 = vpop.f32.mrb[0].mxu0
  %v1295 = vadd.f32 %v1093, %v1294
  %v1296 = vpop.f32.mrb[0].mxu0
  %v1297 = vadd.f32 %v1089, %v1296
  %v1298 = vpop.f32.mrb[0].mxu0
  %v1299 = vadd.f32 %v1093, %v1298
  %1300 = vmatprep.mubr.bf16.mxu0 0
  %1301 = vmatmul.mubr.bf16.gmra.mrb[0].mxu0 %v1213
  %v1302 = vpop.f32.mrb[0].mxu0
  %v1303 = vadd.f32 %v1089, %v1302
  %v1304 = vpop.f32.mrb[0].mxu0
  %v1305 = vadd.f32 %v1093, %v1304
  %v1306 = vpop.f32.mrb[0].mxu0
  %v1307 = vadd.f32 %v1089, %v1306
  %v1308 = vpop.f32.mrb[0].mxu0
  %v1309 = vadd.f32 %v1093, %v1308
  %1310 = vmatprep.mubr.bf16.mxu0 0
  %1311 = vmatmul.mubr.bf16.gmra.mrb[0].mxu0 %v1216
  %v1312 = vpop.f32.mrb[0].mxu0
  %v1313 = vadd.f32 %v1089, %v1312
  %v1314 = vpop.f32.mrb[0].mxu0
  %v1315 = vadd.f32 %v1093, %v1314
  %v1316 = vpop.f32.mrb[0].mxu0
  %v1317 = vadd.f32 %v1089, %v1316
  %v1318 = vpop.f32.mrb[0].mxu0
  %v1319 = vadd.f32 %v1093, %v1318
  %1320 = vmatprep.mubr.bf16.mxu0 0
  %1321 = vmatmul.mubr.bf16.gmra.mrb[0].mxu0 %v1219
  %v1322 = vpop.f32.mrb[0].mxu0
  %v1323 = vadd.f32 %v1089, %v1322
  %v1324 = vpop.f32.mrb[0].mxu0
  %v1325 = vadd.f32 %v1093, %v1324
  %v1326 = vpop.f32.mrb[0].mxu0
  %v1327 = vadd.f32 %v1089, %v1326
  %v1328 = vpop.f32.mrb[0].mxu0
  %v1329 = vadd.f32 %v1093, %v1328
  %1330 = vmatprep.mubr.bf16.mxu0 0
  %1331 = vmatmul.mubr.bf16.gmra.mrb[0].mxu0 %v1222
  %v1332 = vpop.f32.mrb[0].mxu0
  %v1333 = vadd.f32 %v1089, %v1332
  %v1334 = vpop.f32.mrb[0].mxu0
  %v1335 = vadd.f32 %v1093, %v1334
  %v1336 = vpop.f32.mrb[0].mxu0
  %v1337 = vadd.f32 %v1089, %v1336
  %v1338 = vpop.f32.mrb[0].mxu0
  %v1339 = vadd.f32 %v1093, %v1338
  %1340 = vmatprep.mubr.bf16.mxu0 0
  %1341 = vmatmul.mubr.bf16.gmra.mrb[0].mxu0 %v1225
  %v1342 = vpop.f32.mrb[0].mxu0
  %v1343 = vadd.f32 %v1089, %v1342
  %v1344 = vpop.f32.mrb[0].mxu0
  %v1345 = vadd.f32 %v1093, %v1344
  %v1346 = vpop.f32.mrb[0].mxu0
  %v1347 = vadd.f32 %v1089, %v1346
  %v1348 = vpop.f32.mrb[0].mxu0
  %v1349 = vadd.f32 %v1093, %v1348
  %1350 = vmatprep.mubr.bf16.mxu0 0
  %1351 = vmatmul.mubr.bf16.gmra.mrb[0].mxu0 %v1228
  %v1352 = vpop.f32.mrb[0].mxu0
  %v1353 = vadd.f32 %v1089, %v1352
  %v1354 = vpop.f32.mrb[0].mxu0
  %v1355 = vadd.f32 %v1093, %v1354
  %v1356 = vpop.f32.mrb[0].mxu0
  %v1357 = vadd.f32 %v1089, %v1356
  %v1358 = vpop.f32.mrb[0].mxu0
  %v1359 = vadd.f32 %v1093, %v1358
  %1360 = vmatprep.mubr.bf16.mxu0 0
  %1361 = vmatmul.mubr.bf16.gmra.mrb[0].mxu0 %v1231
  %v1362 = vpop.f32.mrb[0].mxu0
  %v1363 = vadd.f32 %v1089, %v1362
  %v1364 = vpop.f32.mrb[0].mxu0
  %v1365 = vadd.f32 %v1093, %v1364
  %v1366 = vpop.f32.mrb[0].mxu0
  %v1367 = vadd.f32 %v1089, %v1366
  %v1368 = vpop.f32.mrb[0].mxu0
  %v1369 = vadd.f32 %v1093, %v1368
  %1370 = vmatprep.mubr.bf16.mxu0 0
  %1371 = vmatmul.mubr.bf16.gmra.mrb[0].mxu0 %v1234
  %v1372 = vpop.f32.mrb[0].mxu0
  %v1373 = vadd.f32 %v1089, %v1372
  %v1374 = vpop.f32.mrb[0].mxu0
  %v1375 = vadd.f32 %v1093, %v1374
  %v1376 = vpop.f32.mrb[0].mxu0
  %v1377 = vadd.f32 %v1089, %v1376
  %v1378 = vpop.f32.mrb[0].mxu0
  %v1379 = vadd.f32 %v1093, %v1378
  %1380 = vmatprep.mubr.bf16.mxu0 0
  %1381 = vmatmul.mubr.bf16.gmra.mrb[0].mxu0 %v1237
  %v1382 = vpop.f32.mrb[0].mxu0
  %v1383 = vadd.f32 %v1089, %v1382
  %v1384 = vpop.f32.mrb[0].mxu0
  %v1385 = vadd.f32 %v1093, %v1384
  %v1386 = vpop.f32.mrb[0].mxu0
  %v1387 = vadd.f32 %v1089, %v1386
  %v1388 = vpop.f32.mrb[0].mxu0
  %v1389 = vadd.f32 %v1093, %v1388
  %1390 = vmatprep.mubr.bf16.mxu0 0
  %1391 = vmatmul.mubr.bf16.gmra.mrb[0].mxu0 %v1240
  %v1392 = vpop.f32.mrb[0].mxu0
  %v1393 = vadd.f32 %v1089, %v1392
  %v1394 = vpop.f32.mrb[0].mxu0
  %v1395 = vadd.f32 %v1093, %v1394
  %v1396 = vpop.f32.mrb[0].mxu0
  %v1397 = vadd.f32 %v1089, %v1396
  %v1398 = vpop.f32.mrb[0].mxu0
  %v1399 = vadd.f32 %v1093, %v1398
  %1400 = vmatprep.mubr.bf16.mxu0 0
  %1401 = vmatmul.mubr.bf16.gmra.mrb[0].mxu0 %v1243
  %v1402 = vpop.f32.mrb[0].mxu0
  %v1403 = vadd.f32 %v1089, %v1402
  %v1404 = vpop.f32.mrb[0].mxu0
  %v1405 = vadd.f32 %v1093, %v1404
  %v1406 = vpop.f32.mrb[0].mxu0
  %v1407 = vadd.f32 %v1089, %v1406
  %v1408 = vpop.f32.mrb[0].mxu0
  %v1409 = vadd.f32 %v1093, %v1408
  %1410 = vmatprep.mubr.bf16.mxu0 0
  %1411 = vmatmul.mubr.bf16.gmra.mrb[0].mxu0 %v1246
  %v1412 = vpop.f32.mrb[0].mxu0
  %v1413 = vadd.f32 %v1089, %v1412
  %v1414 = vpop.f32.mrb[0].mxu0
  %v1415 = vadd.f32 %v1093, %v1414
  %v1416 = vpop.f32.mrb[0].mxu0
  %v1417 = vadd.f32 %v1089, %v1416
  %v1418 = vpop.f32.mrb[0].mxu0
  %v1419 = vadd.f32 %v1093, %v1418
  %1420 = vdwg.mxu0
  %v1421 = vpack.c.bf16 %v1287, %v1283
  %v1422 = vpack.c.bf16 %v1289, %v1285
  %v1423 = vpack.c.bf16 %v1297, %v1293
  %v1424 = vpack.c.bf16 %v1299, %v1295
  %v1425 = vpack.c.bf16 %v1307, %v1303
  %v1426 = vpack.c.bf16 %v1309, %v1305
  %v1427 = vpack.c.bf16 %v1317, %v1313
  %v1428 = vpack.c.bf16 %v1319, %v1315
  %v1429 = vpack.c.bf16 %v1327, %v1323
  %v1430 = vpack.c.bf16 %v1329, %v1325
  %v1431 = vpack.c.bf16 %v1337, %v1333
  %v1432 = vpack.c.bf16 %v1339, %v1335
  %v1433 = vpack.c.bf16 %v1347, %v1343
  %v1434 = vpack.c.bf16 %v1349, %v1345
  %v1435 = vpack.c.bf16 %v1357, %v1353
  %v1436 = vpack.c.bf16 %v1359, %v1355
  %v1437 = vpack.c.bf16 %v1367, %v1363
  %v1438 = vpack.c.bf16 %v1369, %v1365
  %v1439 = vpack.c.bf16 %v1377, %v1373
  %v1440 = vpack.c.bf16 %v1379, %v1375
  %v1441 = vpack.c.bf16 %v1387, %v1383
  %v1442 = vpack.c.bf16 %v1389, %v1385
  %v1443 = vpack.c.bf16 %v1397, %v1393
  %v1444 = vpack.c.bf16 %v1399, %v1395
  %v1445 = vpack.c.bf16 %v1407, %v1403
  %v1446 = vpack.c.bf16 %v1409, %v1405
  %v1447 = vpack.c.bf16 %v1417, %v1413
  %v1448 = vpack.c.bf16 %v1419, %v1415
  %v1449 = vmul.bf16 %v1421, 1045249613
  %v1450 = vmul.bf16 %v1422, 1045249613
  %v1451 = vmul.bf16 %v1423, 1045249613
  %v1452 = vmul.bf16 %v1424, 1045249613
  %v1453 = vmul.bf16 %v1425, 1045249613
  %v1454 = vmul.bf16 %v1426, 1045249613
  %v1455 = vmul.bf16 %v1427, 1045249613
  %v1456 = vmul.bf16 %v1428, 1045249613
  %v1457 = vmul.bf16 %v1429, 1045249613
  %v1458 = vmul.bf16 %v1430, 1045249613
  %v1459 = vmul.bf16 %v1431, 1045249613
  %v1460 = vmul.bf16 %v1432, 1045249613
  %v1461 = vmul.bf16 %v1433, 1045249613
  %v1462 = vmul.bf16 %v1434, 1045249613
  %v1463 = vmul.bf16 %v1435, 1045249613
  %v1464 = vmul.bf16 %v1436, 1045249613
  %v1465 = vmul.bf16 %v1437, 1045249613
  %v1466 = vmul.bf16 %v1438, 1045249613
  %v1467 = vmul.bf16 %v1439, 1045249613
  %v1468 = vmul.bf16 %v1440, 1045249613
  %v1469 = vmul.bf16 %v1441, 1045249613
  %v1470 = vmul.bf16 %v1442, 1045249613
  %v1471 = vmul.bf16 %v1443, 1045249613
  %v1472 = vmul.bf16 %v1444, 1045249613
  %v1473 = vmul.bf16 %v1445, 1045249613
  %v1474 = vmul.bf16 %v1446, 1045249613
  %v1475 = vmul.bf16 %v1447, 1045249613
  %v1476 = vmul.bf16 %v1448, 1045249613
  %v1477 = vmax.bf16 %v1421, %v1449
  %v1478 = vmax.bf16 %v1422, %v1450
  %v1479 = vmax.bf16 %v1423, %v1451
  %v1480 = vmax.bf16 %v1424, %v1452
  %v1481 = vmax.bf16 %v1425, %v1453
  %v1482 = vmax.bf16 %v1426, %v1454
  %v1483 = vmax.bf16 %v1427, %v1455
  %v1484 = vmax.bf16 %v1428, %v1456
  %v1485 = vmax.bf16 %v1429, %v1457
  %v1486 = vmax.bf16 %v1430, %v1458
  %v1487 = vmax.bf16 %v1431, %v1459
  %v1488 = vmax.bf16 %v1432, %v1460
  %v1489 = vmax.bf16 %v1433, %v1461
  %v1490 = vmax.bf16 %v1434, %v1462
  %v1491 = vmax.bf16 %v1435, %v1463
  %v1492 = vmax.bf16 %v1436, %v1464
  %v1493 = vmax.bf16 %v1437, %v1465
  %v1494 = vmax.bf16 %v1438, %v1466
  %v1495 = vmax.bf16 %v1439, %v1467
  %v1496 = vmax.bf16 %v1440, %v1468
  %v1497 = vmax.bf16 %v1441, %v1469
  %v1498 = vmax.bf16 %v1442, %v1470
  %v1499 = vmax.bf16 %v1443, %v1471
  %v1500 = vmax.bf16 %v1444, %v1472
  %v1501 = vmax.bf16 %v1445, %v1473
  %v1502 = vmax.bf16 %v1446, %v1474
  %v1503 = vmax.bf16 %v1447, %v1475
  %v1504 = vmax.bf16 %v1448, %v1476
  %s1505 = scalar_lea.vmem [#allocation2], 528
  %1506 = vst [vmem:[%s1505] sm:$0xff] %v1477
  %1507 = vst [vmem:[%s1505 + $0x8] sm:$0xff] %v1478
  %1508 = vst [vmem:[%s1505 + $0x10] sm:$0xff] %v1479
  %1509 = vst [vmem:[%s1505 + $0x18] sm:$0xff] %v1480
  %1510 = vst [vmem:[%s1505 + $0x20] sm:$0xff] %v1481
  %1511 = vst [vmem:[%s1505 + $0x28] sm:$0xff] %v1482
  %1512 = vst [vmem:[%s1505 + $0x30] sm:$0xff] %v1483
  %1513 = vst [vmem:[%s1505 + $0x38] sm:$0xff] %v1484
  %1514 = vst [vmem:[%s1505 + $0x40] sm:$0xff] %v1485
  %1515 = vst [vmem:[%s1505 + $0x48] sm:$0xff] %v1486
  %1516 = vst [vmem:[%s1505 + $0x50] sm:$0xff] %v1487
  %1517 = vst [vmem:[%s1505 + $0x58] sm:$0xff] %v1488
  %1518 = vst [vmem:[%s1505 + $0x60] sm:$0xff] %v1489
  %1519 = vst [vmem:[%s1505 + $0x68] sm:$0xff] %v1490
  %1520 = vst [vmem:[%s1505 + $0x70] sm:$0xff] %v1491
  %1521 = vst [vmem:[%s1505 + $0x78] sm:$0xff] %v1492
  %1522 = vst [vmem:[%s1505 + $0x80] sm:$0xff] %v1493
  %1523 = vst [vmem:[%s1505 + $0x88] sm:$0xff] %v1494
  %1524 = vst [vmem:[%s1505 + $0x90] sm:$0xff] %v1495
  %1525 = vst [vmem:[%s1505 + $0x98] sm:$0xff] %v1496
  %1526 = vst [vmem:[%s1505 + $0xa0] sm:$0xff] %v1497
  %1527 = vst [vmem:[%s1505 + $0xa8] sm:$0xff] %v1498
  %1528 = vst [vmem:[%s1505 + $0xb0] sm:$0xff] %v1499
  %1529 = vst [vmem:[%s1505 + $0xb8] sm:$0xff] %v1500
  %1530 = vst [vmem:[%s1505 + $0xc0] sm:$0xff] %v1501
  %1531 = vst [vmem:[%s1505 + $0xc8] sm:$0xff] %v1502
  %1532 = vst [vmem:[%s1505 + $0xd0] sm:$0xff] %v1503
  %1533 = vst [vmem:[%s1505 + $0xd8] sm:$0xff] %v1504
  %s1534 = scalar_lea.vmem %s0, 336
  %v1535 = vld [vmem:[%s1534] sm:$0xf]
  %v1536 = vld [vmem:[%s1534 + $0x4] sm:$0xf]
  %v1537 = vld [vmem:[%s1534 + $0x8] sm:$0xf]
  %v1538 = vld [vmem:[%s1534 + $0xc] sm:$0xf]
  %v1539 = vld [vmem:[%s1534 + $0x10] sm:$0xf]
  %v1540 = vld [vmem:[%s1534 + $0x14] sm:$0xf]
  %v1541 = vld [vmem:[%s1534 + $0x18] sm:$0xf]
  %v1542 = vld [vmem:[%s1534 + $0x1c] sm:$0xf]
  %v1543 = vld [vmem:[%s1534 + $0x20] sm:$0xf]
  %v1544 = vld [vmem:[%s1534 + $0x24] sm:$0xf]
  %v1545 = vld [vmem:[%s1534 + $0x28] sm:$0xf]
  %v1546 = vld [vmem:[%s1534 + $0x2c] sm:$0xf]
  %v1547 = vld [vmem:[%s1534 + $0x30] sm:$0xf]
  %v1548 = vld [vmem:[%s1534 + $0x34] sm:$0xf]
  %v1549 = vld [vmem:[%s1534 + $0x38] sm:$0xf]
  %v1550 = vld [vmem:[%s1534 + $0x3c] sm:$0xf]
  %v1551 = vld [vmem:[%s1534 + $0x40] sm:$0xf]
  %v1552 = vld [vmem:[%s1534 + $0x44] sm:$0xf]
  %v1553 = vld [vmem:[%s1534 + $0x48] sm:$0xf]
  %v1554 = vld [vmem:[%s1534 + $0x4c] sm:$0xf]
  %v1555 = vld [vmem:[%s1534 + $0x50] sm:$0xf]
  %v1556 = vld [vmem:[%s1534 + $0x54] sm:$0xf]
  %v1557 = vld [vmem:[%s1534 + $0x58] sm:$0xf]
  %v1558 = vld [vmem:[%s1534 + $0x5c] sm:$0xf]
  %v1559 = vld [vmem:[%s1534 + $0x60] sm:$0xf]
  %v1560 = vld [vmem:[%s1534 + $0x64] sm:$0xf]
  %v1561 = vld [vmem:[%s1534 + $0x68] sm:$0xf]
  %v1562 = vld [vmem:[%s1534 + $0x6c] sm:$0xf]
  %v1563 = vld [vmem:[%s1] sm:$0xff]
  %v1564 = vld [vmem:[%s1 + $0x8] sm:$0xff]
  %v1565 = vld [vmem:[%s1 + $0x10] sm:$0xff]
  %v1566 = vld [vmem:[%s1 + $0x18] sm:$0xff]
  %v1567 = vld [vmem:[%s1 + $0x20] sm:$0xff]
  %v1568 = vld [vmem:[%s1 + $0x28] sm:$0xff]
  %v1569 = vld [vmem:[%s1 + $0x30] sm:$0xff]
  %v1570 = vld [vmem:[%s1 + $0x38] sm:$0xff]
  %s1571 = scalar_lea.vmem %s2, 3
  %v1572 = vld [vmem:[%s1571] ss:$8 sm:$0x3]
  %v1574 = vlaneseq
  %v1575 = vshrl.u32 %v1574, 7
  %v1576 = vsub.s32 0, %v1575
  %v1577 = vrot.slane %v1572, %v1576
  %v1578 = vlaneseq
  %v1579 = vshrl.u32 %v1578, 7
  %v1580 = vsub.s32 1, %v1579
  %v1581 = vrot.slane %v1572, %v1580
  %v1612 = vunpack.c.l.b16 %v1535
  %v1613 = vunpack.c.l.b16 %v1536
  %v1614 = vunpack.c.l.b16 %v1537
  %v1615 = vunpack.c.l.b16 %v1538
  %v1616 = vunpack.c.l.b16 %v1539
  %v1617 = vunpack.c.l.b16 %v1540
  %v1618 = vunpack.c.l.b16 %v1541
  %v1619 = vunpack.c.l.b16 %v1542
  %v1620 = vunpack.c.l.b16 %v1543
  %v1621 = vunpack.c.l.b16 %v1544
  %v1622 = vunpack.c.l.b16 %v1545
  %v1623 = vunpack.c.l.b16 %v1546
  %v1624 = vunpack.c.l.b16 %v1547
  %v1625 = vunpack.c.l.b16 %v1548
  %v1626 = vunpack.c.l.b16 %v1549
  %v1627 = vunpack.c.l.b16 %v1550
  %v1628 = vunpack.c.l.b16 %v1551
  %v1629 = vunpack.c.l.b16 %v1552
  %v1630 = vunpack.c.l.b16 %v1553
  %v1631 = vunpack.c.l.b16 %v1554
  %v1632 = vunpack.c.l.b16 %v1555
  %v1633 = vunpack.c.l.b16 %v1556
  %v1634 = vunpack.c.l.b16 %v1557
  %v1635 = vunpack.c.l.b16 %v1558
  %v1636 = vunpack.c.l.b16 %v1559
  %v1637 = vunpack.c.l.b16 %v1560
  %v1638 = vunpack.c.l.b16 %v1561
  %v1639 = vunpack.c.l.b16 %v1562
  %v1640 = vpack.c.b16 %v1613, %v1612
  %v1641 = vpack.c.b16 %v1615, %v1614
  %v1642 = vpack.c.b16 %v1617, %v1616
  %v1643 = vpack.c.b16 %v1619, %v1618
  %v1644 = vpack.c.b16 %v1621, %v1620
  %v1645 = vpack.c.b16 %v1623, %v1622
  %v1646 = vpack.c.b16 %v1625, %v1624
  %v1647 = vpack.c.b16 %v1627, %v1626
  %v1648 = vpack.c.b16 %v1629, %v1628
  %v1649 = vpack.c.b16 %v1631, %v1630
  %v1650 = vpack.c.b16 %v1633, %v1632
  %v1651 = vpack.c.b16 %v1635, %v1634
  %v1652 = vpack.c.b16 %v1637, %v1636
  %v1653 = vpack.c.b16 %v1639, %v1638
  %v1662 = vunpack.c.l.b16 %v1563
  %v1663 = vunpack.c.h.b16 %v1563
  %v1664 = vunpack.c.l.b16 %v1564
  %v1665 = vunpack.c.h.b16 %v1564
  %v1666 = vunpack.c.l.b16 %v1565
  %v1667 = vunpack.c.h.b16 %v1565
  %v1668 = vunpack.c.l.b16 %v1566
  %v1669 = vunpack.c.h.b16 %v1566
  %v1670 = vunpack.c.l.b16 %v1567
  %v1671 = vunpack.c.h.b16 %v1567
  %v1672 = vunpack.c.l.b16 %v1568
  %v1673 = vunpack.c.h.b16 %v1568
  %v1674 = vunpack.c.l.b16 %v1569
  %v1675 = vunpack.c.h.b16 %v1569
  %v1676 = vunpack.c.l.b16 %v1570
  %v1677 = vunpack.c.h.b16 %v1570
  %v1678 = vpack.c.b16 %v1664, %v1662
  %v1679 = vpack.c.b16 %v1665, %v1663
  %v1680 = vpack.c.b16 %v1668, %v1666
  %v1681 = vpack.c.b16 %v1669, %v1667
  %v1682 = vpack.c.b16 %v1672, %v1670
  %v1683 = vpack.c.b16 %v1673, %v1671
  %v1684 = vpack.c.b16 %v1676, %v1674
  %v1685 = vpack.c.b16 %v1677, %v1675
  %v1695 = vsel %vm229, %v1640, 0
  %v1698 = vsel %vm229, %v1641, 0
  %v1701 = vsel %vm229, %v1642, 0
  %v1704 = vsel %vm229, %v1643, 0
  %v1707 = vsel %vm229, %v1644, 0
  %v1710 = vsel %vm229, %v1645, 0
  %v1713 = vsel %vm229, %v1646, 0
  %v1716 = vsel %vm229, %v1647, 0
  %v1719 = vsel %vm229, %v1648, 0
  %v1722 = vsel %vm229, %v1649, 0
  %v1725 = vsel %vm229, %v1650, 0
  %v1728 = vsel %vm229, %v1651, 0
  %v1731 = vsel %vm229, %v1652, 0
  %v1734 = vsel %vm229, %v1653, 0
  %1736 = vmatprep.subr.bf16.mxu0 %v1679
  %1737 = vmatpush1.bf16.msra.mxu0 %v1678
  %1738 = vmatprep.subr.bf16.mxu0 %v1681
  %1739 = vmatpush1.bf16.msra.mxu0 %v1680
  %1740 = vmatprep.subr.bf16.mxu0 %v1683
  %1741 = vmatpush1.bf16.msra.mxu0 %v1682
  %1742 = vmatprep.subr.bf16.mxu0 %v1685
  %1743 = vmatpush1.bf16.msra.mxu0 %v1684
  %1744 = vmatprep.subr.bf16.mxu0 0
  %1745 = vmatpush1.bf16.msra.mxu0 0
  %1746 = vmatprep.subr.bf16.mxu0 0
  %1747 = vmatpush1.bf16.msra.mxu0 0
  %1748 = vmatprep.subr.bf16.mxu0 0
  %1749 = vmatpush1.bf16.msra.mxu0 0
  %1750 = vmatprep.subr.bf16.mxu0 0
  %1751 = vmatpush1.bf16.msra.mxu0 0
  %1752 = vmatprep.subr.bf16.mxu0 0
  %1753 = vmatpush1.bf16.msra.mxu0 0
  %1754 = vmatprep.subr.bf16.mxu0 0
  %1755 = vmatpush1.bf16.msra.mxu0 0
  %1756 = vmatprep.subr.bf16.mxu0 0
  %1757 = vmatpush1.bf16.msra.mxu0 0
  %1758 = vmatprep.subr.bf16.mxu0 0
  %1759 = vmatpush1.bf16.msra.mxu0 0
  %1760 = vmatprep.subr.bf16.mxu0 0
  %1761 = vmatpush1.bf16.msra.mxu0 0
  %1762 = vmatprep.subr.bf16.mxu0 0
  %1763 = vmatpush1.bf16.msra.mxu0 0
  %1764 = vmatprep.subr.bf16.mxu0 0
  %1765 = vmatpush1.bf16.msra.mxu0 0
  %1766 = vmatprep.subr.bf16.mxu0 0
  %1767 = vmatpush1.bf16.msra.mxu0 0
  %1768 = vmatprep.mubr.bf16.mxu0 0
  %1769 = vmatmul.mubr.bf16.gmra.mrb[0].mxu0 %v1695
  %v1770 = vpop.f32.mrb[0].mxu0
  %v1771 = vadd.f32 %v1577, %v1770
  %v1772 = vpop.f32.mrb[0].mxu0
  %v1773 = vadd.f32 %v1581, %v1772
  %v1774 = vpop.f32.mrb[0].mxu0
  %v1775 = vadd.f32 %v1577, %v1774
  %v1776 = vpop.f32.mrb[0].mxu0
  %v1777 = vadd.f32 %v1581, %v1776
  %1778 = vmatprep.mubr.bf16.mxu0 0
  %1779 = vmatmul.mubr.bf16.gmra.mrb[0].mxu0 %v1698
  %v1780 = vpop.f32.mrb[0].mxu0
  %v1781 = vadd.f32 %v1577, %v1780
  %v1782 = vpop.f32.mrb[0].mxu0
  %v1783 = vadd.f32 %v1581, %v1782
  %v1784 = vpop.f32.mrb[0].mxu0
  %v1785 = vadd.f32 %v1577, %v1784
  %v1786 = vpop.f32.mrb[0].mxu0
  %v1787 = vadd.f32 %v1581, %v1786
  %1788 = vmatprep.mubr.bf16.mxu0 0
  %1789 = vmatmul.mubr.bf16.gmra.mrb[0].mxu0 %v1701
  %v1790 = vpop.f32.mrb[0].mxu0
  %v1791 = vadd.f32 %v1577, %v1790
  %v1792 = vpop.f32.mrb[0].mxu0
  %v1793 = vadd.f32 %v1581, %v1792
  %v1794 = vpop.f32.mrb[0].mxu0
  %v1795 = vadd.f32 %v1577, %v1794
  %v1796 = vpop.f32.mrb[0].mxu0
  %v1797 = vadd.f32 %v1581, %v1796
  %1798 = vmatprep.mubr.bf16.mxu0 0
  %1799 = vmatmul.mubr.bf16.gmra.mrb[0].mxu0 %v1704
  %v1800 = vpop.f32.mrb[0].mxu0
  %v1801 = vadd.f32 %v1577, %v1800
  %v1802 = vpop.f32.mrb[0].mxu0
  %v1803 = vadd.f32 %v1581, %v1802
  %v1804 = vpop.f32.mrb[0].mxu0
  %v1805 = vadd.f32 %v1577, %v1804
  %v1806 = vpop.f32.mrb[0].mxu0
  %v1807 = vadd.f32 %v1581, %v1806
  %1808 = vmatprep.mubr.bf16.mxu0 0
  %1809 = vmatmul.mubr.bf16.gmra.mrb[0].mxu0 %v1707
  %v1810 = vpop.f32.mrb[0].mxu0
  %v1811 = vadd.f32 %v1577, %v1810
  %v1812 = vpop.f32.mrb[0].mxu0
  %v1813 = vadd.f32 %v1581, %v1812
  %v1814 = vpop.f32.mrb[0].mxu0
  %v1815 = vadd.f32 %v1577, %v1814
  %v1816 = vpop.f32.mrb[0].mxu0
  %v1817 = vadd.f32 %v1581, %v1816
  %1818 = vmatprep.mubr.bf16.mxu0 0
  %1819 = vmatmul.mubr.bf16.gmra.mrb[0].mxu0 %v1710
  %v1820 = vpop.f32.mrb[0].mxu0
  %v1821 = vadd.f32 %v1577, %v1820
  %v1822 = vpop.f32.mrb[0].mxu0
  %v1823 = vadd.f32 %v1581, %v1822
  %v1824 = vpop.f32.mrb[0].mxu0
  %v1825 = vadd.f32 %v1577, %v1824
  %v1826 = vpop.f32.mrb[0].mxu0
  %v1827 = vadd.f32 %v1581, %v1826
  %1828 = vmatprep.mubr.bf16.mxu0 0
  %1829 = vmatmul.mubr.bf16.gmra.mrb[0].mxu0 %v1713
  %v1830 = vpop.f32.mrb[0].mxu0
  %v1831 = vadd.f32 %v1577, %v1830
  %v1832 = vpop.f32.mrb[0].mxu0
  %v1833 = vadd.f32 %v1581, %v1832
  %v1834 = vpop.f32.mrb[0].mxu0
  %v1835 = vadd.f32 %v1577, %v1834
  %v1836 = vpop.f32.mrb[0].mxu0
  %v1837 = vadd.f32 %v1581, %v1836
  %1838 = vmatprep.mubr.bf16.mxu0 0
  %1839 = vmatmul.mubr.bf16.gmra.mrb[0].mxu0 %v1716
  %v1840 = vpop.f32.mrb[0].mxu0
  %v1841 = vadd.f32 %v1577, %v1840
  %v1842 = vpop.f32.mrb[0].mxu0
  %v1843 = vadd.f32 %v1581, %v1842
  %v1844 = vpop.f32.mrb[0].mxu0
  %v1845 = vadd.f32 %v1577, %v1844
  %v1846 = vpop.f32.mrb[0].mxu0
  %v1847 = vadd.f32 %v1581, %v1846
  %1848 = vmatprep.mubr.bf16.mxu0 0
  %1849 = vmatmul.mubr.bf16.gmra.mrb[0].mxu0 %v1719
  %v1850 = vpop.f32.mrb[0].mxu0
  %v1851 = vadd.f32 %v1577, %v1850
  %v1852 = vpop.f32.mrb[0].mxu0
  %v1853 = vadd.f32 %v1581, %v1852
  %v1854 = vpop.f32.mrb[0].mxu0
  %v1855 = vadd.f32 %v1577, %v1854
  %v1856 = vpop.f32.mrb[0].mxu0
  %v1857 = vadd.f32 %v1581, %v1856
  %1858 = vmatprep.mubr.bf16.mxu0 0
  %1859 = vmatmul.mubr.bf16.gmra.mrb[0].mxu0 %v1722
  %v1860 = vpop.f32.mrb[0].mxu0
  %v1861 = vadd.f32 %v1577, %v1860
  %v1862 = vpop.f32.mrb[0].mxu0
  %v1863 = vadd.f32 %v1581, %v1862
  %v1864 = vpop.f32.mrb[0].mxu0
  %v1865 = vadd.f32 %v1577, %v1864
  %v1866 = vpop.f32.mrb[0].mxu0
  %v1867 = vadd.f32 %v1581, %v1866
  %1868 = vmatprep.mubr.bf16.mxu0 0
  %1869 = vmatmul.mubr.bf16.gmra.mrb[0].mxu0 %v1725
  %v1870 = vpop.f32.mrb[0].mxu0
  %v1871 = vadd.f32 %v1577, %v1870
  %v1872 = vpop.f32.mrb[0].mxu0
  %v1873 = vadd.f32 %v1581, %v1872
  %v1874 = vpop.f32.mrb[0].mxu0
  %v1875 = vadd.f32 %v1577, %v1874
  %v1876 = vpop.f32.mrb[0].mxu0
  %v1877 = vadd.f32 %v1581, %v1876
  %1878 = vmatprep.mubr.bf16.mxu0 0
  %1879 = vmatmul.mubr.bf16.gmra.mrb[0].mxu0 %v1728
  %v1880 = vpop.f32.mrb[0].mxu0
  %v1881 = vadd.f32 %v1577, %v1880
  %v1882 = vpop.f32.mrb[0].mxu0
  %v1883 = vadd.f32 %v1581, %v1882
  %v1884 = vpop.f32.mrb[0].mxu0
  %v1885 = vadd.f32 %v1577, %v1884
  %v1886 = vpop.f32.mrb[0].mxu0
  %v1887 = vadd.f32 %v1581, %v1886
  %1888 = vmatprep.mubr.bf16.mxu0 0
  %1889 = vmatmul.mubr.bf16.gmra.mrb[0].mxu0 %v1731
  %v1890 = vpop.f32.mrb[0].mxu0
  %v1891 = vadd.f32 %v1577, %v1890
  %v1892 = vpop.f32.mrb[0].mxu0
  %v1893 = vadd.f32 %v1581, %v1892
  %v1894 = vpop.f32.mrb[0].mxu0
  %v1895 = vadd.f32 %v1577, %v1894
  %v1896 = vpop.f32.mrb[0].mxu0
  %v1897 = vadd.f32 %v1581, %v1896
  %1898 = vmatprep.mubr.bf16.mxu0 0
  %1899 = vmatmul.mubr.bf16.gmra.mrb[0].mxu0 %v1734
  %v1900 = vpop.f32.mrb[0].mxu0
  %v1901 = vadd.f32 %v1577, %v1900
  %v1902 = vpop.f32.mrb[0].mxu0
  %v1903 = vadd.f32 %v1581, %v1902
  %v1904 = vpop.f32.mrb[0].mxu0
  %v1905 = vadd.f32 %v1577, %v1904
  %v1906 = vpop.f32.mrb[0].mxu0
  %v1907 = vadd.f32 %v1581, %v1906
  %1908 = vdwg.mxu0
  %v1909 = vpack.c.bf16 %v1775, %v1771
  %v1910 = vpack.c.bf16 %v1777, %v1773
  %v1911 = vpack.c.bf16 %v1785, %v1781
  %v1912 = vpack.c.bf16 %v1787, %v1783
  %v1913 = vpack.c.bf16 %v1795, %v1791
  %v1914 = vpack.c.bf16 %v1797, %v1793
  %v1915 = vpack.c.bf16 %v1805, %v1801
  %v1916 = vpack.c.bf16 %v1807, %v1803
  %v1917 = vpack.c.bf16 %v1815, %v1811
  %v1918 = vpack.c.bf16 %v1817, %v1813
  %v1919 = vpack.c.bf16 %v1825, %v1821
  %v1920 = vpack.c.bf16 %v1827, %v1823
  %v1921 = vpack.c.bf16 %v1835, %v1831
  %v1922 = vpack.c.bf16 %v1837, %v1833
  %v1923 = vpack.c.bf16 %v1845, %v1841
  %v1924 = vpack.c.bf16 %v1847, %v1843
  %v1925 = vpack.c.bf16 %v1855, %v1851
  %v1926 = vpack.c.bf16 %v1857, %v1853
  %v1927 = vpack.c.bf16 %v1865, %v1861
  %v1928 = vpack.c.bf16 %v1867, %v1863
  %v1929 = vpack.c.bf16 %v1875, %v1871
  %v1930 = vpack.c.bf16 %v1877, %v1873
  %v1931 = vpack.c.bf16 %v1885, %v1881
  %v1932 = vpack.c.bf16 %v1887, %v1883
  %v1933 = vpack.c.bf16 %v1895, %v1891
  %v1934 = vpack.c.bf16 %v1897, %v1893
  %v1935 = vpack.c.bf16 %v1905, %v1901
  %v1936 = vpack.c.bf16 %v1907, %v1903
  %v1937 = vmul.bf16 %v1909, 1045249613
  %v1938 = vmul.bf16 %v1910, 1045249613
  %v1939 = vmul.bf16 %v1911, 1045249613
  %v1940 = vmul.bf16 %v1912, 1045249613
  %v1941 = vmul.bf16 %v1913, 1045249613
  %v1942 = vmul.bf16 %v1914, 1045249613
  %v1943 = vmul.bf16 %v1915, 1045249613
  %v1944 = vmul.bf16 %v1916, 1045249613
  %v1945 = vmul.bf16 %v1917, 1045249613
  %v1946 = vmul.bf16 %v1918, 1045249613
  %v1947 = vmul.bf16 %v1919, 1045249613
  %v1948 = vmul.bf16 %v1920, 1045249613
  %v1949 = vmul.bf16 %v1921, 1045249613
  %v1950 = vmul.bf16 %v1922, 1045249613
  %v1951 = vmul.bf16 %v1923, 1045249613
  %v1952 = vmul.bf16 %v1924, 1045249613
  %v1953 = vmul.bf16 %v1925, 1045249613
  %v1954 = vmul.bf16 %v1926, 1045249613
  %v1955 = vmul.bf16 %v1927, 1045249613
  %v1956 = vmul.bf16 %v1928, 1045249613
  %v1957 = vmul.bf16 %v1929, 1045249613
  %v1958 = vmul.bf16 %v1930, 1045249613
  %v1959 = vmul.bf16 %v1931, 1045249613
  %v1960 = vmul.bf16 %v1932, 1045249613
  %v1961 = vmul.bf16 %v1933, 1045249613
  %v1962 = vmul.bf16 %v1934, 1045249613
  %v1963 = vmul.bf16 %v1935, 1045249613
  %v1964 = vmul.bf16 %v1936, 1045249613
  %v1965 = vmax.bf16 %v1909, %v1937
  %v1966 = vmax.bf16 %v1910, %v1938
  %v1967 = vmax.bf16 %v1911, %v1939
  %v1968 = vmax.bf16 %v1912, %v1940
  %v1969 = vmax.bf16 %v1913, %v1941
  %v1970 = vmax.bf16 %v1914, %v1942
  %v1971 = vmax.bf16 %v1915, %v1943
  %v1972 = vmax.bf16 %v1916, %v1944
  %v1973 = vmax.bf16 %v1917, %v1945
  %v1974 = vmax.bf16 %v1918, %v1946
  %v1975 = vmax.bf16 %v1919, %v1947
  %v1976 = vmax.bf16 %v1920, %v1948
  %v1977 = vmax.bf16 %v1921, %v1949
  %v1978 = vmax.bf16 %v1922, %v1950
  %v1979 = vmax.bf16 %v1923, %v1951
  %v1980 = vmax.bf16 %v1924, %v1952
  %v1981 = vmax.bf16 %v1925, %v1953
  %v1982 = vmax.bf16 %v1926, %v1954
  %v1983 = vmax.bf16 %v1927, %v1955
  %v1984 = vmax.bf16 %v1928, %v1956
  %v1985 = vmax.bf16 %v1929, %v1957
  %v1986 = vmax.bf16 %v1930, %v1958
  %v1987 = vmax.bf16 %v1931, %v1959
  %v1988 = vmax.bf16 %v1932, %v1960
  %v1989 = vmax.bf16 %v1933, %v1961
  %v1990 = vmax.bf16 %v1934, %v1962
  %v1991 = vmax.bf16 %v1935, %v1963
  %v1992 = vmax.bf16 %v1936, %v1964
  %s1993 = scalar_lea.vmem [#allocation2], 784
  %1994 = vst [vmem:[%s1993] sm:$0xff] %v1965
  %1995 = vst [vmem:[%s1993 + $0x8] sm:$0xff] %v1966
  %1996 = vst [vmem:[%s1993 + $0x10] sm:$0xff] %v1967
  %1997 = vst [vmem:[%s1993 + $0x18] sm:$0xff] %v1968
  %1998 = vst [vmem:[%s1993 + $0x20] sm:$0xff] %v1969
  %1999 = vst [vmem:[%s1993 + $0x28] sm:$0xff] %v1970
  %2000 = vst [vmem:[%s1993 + $0x30] sm:$0xff] %v1971
  %2001 = vst [vmem:[%s1993 + $0x38] sm:$0xff] %v1972
  %2002 = vst [vmem:[%s1993 + $0x40] sm:$0xff] %v1973
  %2003 = vst [vmem:[%s1993 + $0x48] sm:$0xff] %v1974
  %2004 = vst [vmem:[%s1993 + $0x50] sm:$0xff] %v1975
  %2005 = vst [vmem:[%s1993 + $0x58] sm:$0xff] %v1976
  %2006 = vst [vmem:[%s1993 + $0x60] sm:$0xff] %v1977
  %2007 = vst [vmem:[%s1993 + $0x68] sm:$0xff] %v1978
  %2008 = vst [vmem:[%s1993 + $0x70] sm:$0xff] %v1979
  %2009 = vst [vmem:[%s1993 + $0x78] sm:$0xff] %v1980
  %2010 = vst [vmem:[%s1993 + $0x80] sm:$0xff] %v1981
  %2011 = vst [vmem:[%s1993 + $0x88] sm:$0xff] %v1982
  %2012 = vst [vmem:[%s1993 + $0x90] sm:$0xff] %v1983
  %2013 = vst [vmem:[%s1993 + $0x98] sm:$0xff] %v1984
  %2014 = vst [vmem:[%s1993 + $0xa0] sm:$0xff] %v1985
  %2015 = vst [vmem:[%s1993 + $0xa8] sm:$0xff] %v1986
  %2016 = vst [vmem:[%s1993 + $0xb0] sm:$0xff] %v1987
  %2017 = vst [vmem:[%s1993 + $0xb8] sm:$0xff] %v1988
  %2018 = vst [vmem:[%s1993 + $0xc0] sm:$0xff] %v1989
  %2019 = vst [vmem:[%s1993 + $0xc8] sm:$0xff] %v1990
  %2020 = vst [vmem:[%s1993 + $0xd0] sm:$0xff] %v1991
  %2021 = vst [vmem:[%s1993 + $0xd8] sm:$0xff] %v1992
  %s2022 = scalar_lea.vmem %s0, 448
  %v2023 = vld [vmem:[%s2022] sm:$0xf]
  %v2024 = vld [vmem:[%s2022 + $0x4] sm:$0xf]
  %v2025 = vld [vmem:[%s2022 + $0x8] sm:$0xf]
  %v2026 = vld [vmem:[%s2022 + $0xc] sm:$0xf]
  %v2027 = vld [vmem:[%s2022 + $0x10] sm:$0xf]
  %v2028 = vld [vmem:[%s2022 + $0x14] sm:$0xf]
  %v2029 = vld [vmem:[%s2022 + $0x18] sm:$0xf]
  %v2030 = vld [vmem:[%s2022 + $0x1c] sm:$0xf]
  %v2031 = vld [vmem:[%s2022 + $0x20] sm:$0xf]
  %v2032 = vld [vmem:[%s2022 + $0x24] sm:$0xf]
  %v2033 = vld [vmem:[%s2022 + $0x28] sm:$0xf]
  %v2034 = vld [vmem:[%s2022 + $0x2c] sm:$0xf]
  %v2035 = vld [vmem:[%s2022 + $0x30] sm:$0xf]
  %v2036 = vld [vmem:[%s2022 + $0x34] sm:$0xf]
  %v2037 = vld [vmem:[%s2022 + $0x38] sm:$0xf]
  %v2038 = vld [vmem:[%s2022 + $0x3c] sm:$0xf]
  %v2039 = vld [vmem:[%s2022 + $0x40] sm:$0xf]
  %v2040 = vld [vmem:[%s2022 + $0x44] sm:$0xf]
  %v2041 = vld [vmem:[%s2022 + $0x48] sm:$0xf]
  %v2042 = vld [vmem:[%s2022 + $0x4c] sm:$0xf]
  %v2043 = vld [vmem:[%s2022 + $0x50] sm:$0xf]
  %v2044 = vld [vmem:[%s2022 + $0x54] sm:$0xf]
  %v2045 = vld [vmem:[%s2022 + $0x58] sm:$0xf]
  %v2046 = vld [vmem:[%s2022 + $0x5c] sm:$0xf]
  %v2047 = vld [vmem:[%s2022 + $0x60] sm:$0xf]
  %v2048 = vld [vmem:[%s2022 + $0x64] sm:$0xf]
  %v2049 = vld [vmem:[%s2022 + $0x68] sm:$0xf]
  %v2050 = vld [vmem:[%s2022 + $0x6c] sm:$0xf]
  %v2051 = vld [vmem:[%s1] sm:$0xff]
  %v2052 = vld [vmem:[%s1 + $0x8] sm:$0xff]
  %v2053 = vld [vmem:[%s1 + $0x10] sm:$0xff]
  %v2054 = vld [vmem:[%s1 + $0x18] sm:$0xff]
  %v2055 = vld [vmem:[%s1 + $0x20] sm:$0xff]
  %v2056 = vld [vmem:[%s1 + $0x28] sm:$0xff]
  %v2057 = vld [vmem:[%s1 + $0x30] sm:$0xff]
  %v2058 = vld [vmem:[%s1 + $0x38] sm:$0xff]
  %s2059 = scalar_lea.vmem %s2, 4
  %v2060 = vld [vmem:[%s2059] ss:$8 sm:$0x3]
  %v2062 = vlaneseq
  %v2063 = vshrl.u32 %v2062, 7
  %v2064 = vsub.s32 0, %v2063
  %v2065 = vrot.slane %v2060, %v2064
  %v2066 = vlaneseq
  %v2067 = vshrl.u32 %v2066, 7
  %v2068 = vsub.s32 1, %v2067
  %v2069 = vrot.slane %v2060, %v2068
  %v2100 = vunpack.c.l.b16 %v2023
  %v2101 = vunpack.c.l.b16 %v2024
  %v2102 = vunpack.c.l.b16 %v2025
  %v2103 = vunpack.c.l.b16 %v2026
  %v2104 = vunpack.c.l.b16 %v2027
  %v2105 = vunpack.c.l.b16 %v2028
  %v2106 = vunpack.c.l.b16 %v2029
  %v2107 = vunpack.c.l.b16 %v2030
  %v2108 = vunpack.c.l.b16 %v2031
  %v2109 = vunpack.c.l.b16 %v2032
  %v2110 = vunpack.c.l.b16 %v2033
  %v2111 = vunpack.c.l.b16 %v2034
  %v2112 = vunpack.c.l.b16 %v2035
  %v2113 = vunpack.c.l.b16 %v2036
  %v2114 = vunpack.c.l.b16 %v2037
  %v2115 = vunpack.c.l.b16 %v2038
  %v2116 = vunpack.c.l.b16 %v2039
  %v2117 = vunpack.c.l.b16 %v2040
  %v2118 = vunpack.c.l.b16 %v2041
  %v2119 = vunpack.c.l.b16 %v2042
  %v2120 = vunpack.c.l.b16 %v2043
  %v2121 = vunpack.c.l.b16 %v2044
  %v2122 = vunpack.c.l.b16 %v2045
  %v2123 = vunpack.c.l.b16 %v2046
  %v2124 = vunpack.c.l.b16 %v2047
  %v2125 = vunpack.c.l.b16 %v2048
  %v2126 = vunpack.c.l.b16 %v2049
  %v2127 = vunpack.c.l.b16 %v2050
  %v2128 = vpack.c.b16 %v2101, %v2100
  %v2129 = vpack.c.b16 %v2103, %v2102
  %v2130 = vpack.c.b16 %v2105, %v2104
  %v2131 = vpack.c.b16 %v2107, %v2106
  %v2132 = vpack.c.b16 %v2109, %v2108
  %v2133 = vpack.c.b16 %v2111, %v2110
  %v2134 = vpack.c.b16 %v2113, %v2112
  %v2135 = vpack.c.b16 %v2115, %v2114
  %v2136 = vpack.c.b16 %v2117, %v2116
  %v2137 = vpack.c.b16 %v2119, %v2118
  %v2138 = vpack.c.b16 %v2121, %v2120
  %v2139 = vpack.c.b16 %v2123, %v2122
  %v2140 = vpack.c.b16 %v2125, %v2124
  %v2141 = vpack.c.b16 %v2127, %v2126
  %v2150 = vunpack.c.l.b16 %v2051
  %v2151 = vunpack.c.h.b16 %v2051
  %v2152 = vunpack.c.l.b16 %v2052
  %v2153 = vunpack.c.h.b16 %v2052
  %v2154 = vunpack.c.l.b16 %v2053
  %v2155 = vunpack.c.h.b16 %v2053
  %v2156 = vunpack.c.l.b16 %v2054
  %v2157 = vunpack.c.h.b16 %v2054
  %v2158 = vunpack.c.l.b16 %v2055
  %v2159 = vunpack.c.h.b16 %v2055
  %v2160 = vunpack.c.l.b16 %v2056
  %v2161 = vunpack.c.h.b16 %v2056
  %v2162 = vunpack.c.l.b16 %v2057
  %v2163 = vunpack.c.h.b16 %v2057
  %v2164 = vunpack.c.l.b16 %v2058
  %v2165 = vunpack.c.h.b16 %v2058
  %v2166 = vpack.c.b16 %v2152, %v2150
  %v2167 = vpack.c.b16 %v2153, %v2151
  %v2168 = vpack.c.b16 %v2156, %v2154
  %v2169 = vpack.c.b16 %v2157, %v2155
  %v2170 = vpack.c.b16 %v2160, %v2158
  %v2171 = vpack.c.b16 %v2161, %v2159
  %v2172 = vpack.c.b16 %v2164, %v2162
  %v2173 = vpack.c.b16 %v2165, %v2163
  %v2183 = vsel %vm229, %v2128, 0
  %v2186 = vsel %vm229, %v2129, 0
  %v2189 = vsel %vm229, %v2130, 0
  %v2192 = vsel %vm229, %v2131, 0
  %v2195 = vsel %vm229, %v2132, 0
  %v2198 = vsel %vm229, %v2133, 0
  %v2201 = vsel %vm229, %v2134, 0
  %v2204 = vsel %vm229, %v2135, 0
  %v2207 = vsel %vm229, %v2136, 0
  %v2210 = vsel %vm229, %v2137, 0
  %v2213 = vsel %vm229, %v2138, 0
  %v2216 = vsel %vm229, %v2139, 0
  %v2219 = vsel %vm229, %v2140, 0
  %v2222 = vsel %vm229, %v2141, 0
  %2224 = vmatprep.subr.bf16.mxu0 %v2167
  %2225 = vmatpush1.bf16.msra.mxu0 %v2166
  %2226 = vmatprep.subr.bf16.mxu0 %v2169
  %2227 = vmatpush1.bf16.msra.mxu0 %v2168
  %2228 = vmatprep.subr.bf16.mxu0 %v2171
  %2229 = vmatpush1.bf16.msra.mxu0 %v2170
  %2230 = vmatprep.subr.bf16.mxu0 %v2173
  %2231 = vmatpush1.bf16.msra.mxu0 %v2172
  %2232 = vmatprep.subr.bf16.mxu0 0
  %2233 = vmatpush1.bf16.msra.mxu0 0
  %2234 = vmatprep.subr.bf16.mxu0 0
  %2235 = vmatpush1.bf16.msra.mxu0 0
  %2236 = vmatprep.subr.bf16.mxu0 0
  %2237 = vmatpush1.bf16.msra.mxu0 0
  %2238 = vmatprep.subr.bf16.mxu0 0
  %2239 = vmatpush1.bf16.msra.mxu0 0
  %2240 = vmatprep.subr.bf16.mxu0 0
  %2241 = vmatpush1.bf16.msra.mxu0 0
  %2242 = vmatprep.subr.bf16.mxu0 0
  %2243 = vmatpush1.bf16.msra.mxu0 0
  %2244 = vmatprep.subr.bf16.mxu0 0
  %2245 = vmatpush1.bf16.msra.mxu0 0
  %2246 = vmatprep.subr.bf16.mxu0 0
  %2247 = vmatpush1.bf16.msra.mxu0 0
  %2248 = vmatprep.subr.bf16.mxu0 0
  %2249 = vmatpush1.bf16.msra.mxu0 0
  %2250 = vmatprep.subr.bf16.mxu0 0
  %2251 = vmatpush1.bf16.msra.mxu0 0
  %2252 = vmatprep.subr.bf16.mxu0 0
  %2253 = vmatpush1.bf16.msra.mxu0 0
  %2254 = vmatprep.subr.bf16.mxu0 0
  %2255 = vmatpush1.bf16.msra.mxu0 0
  %2256 = vmatprep.mubr.bf16.mxu0 0
  %2257 = vmatmul.mubr.bf16.gmra.mrb[0].mxu0 %v2183
  %v2258 = vpop.f32.mrb[0].mxu0
  %v2259 = vadd.f32 %v2065, %v2258
  %v2260 = vpop.f32.mrb[0].mxu0
  %v2261 = vadd.f32 %v2069, %v2260
  %v2262 = vpop.f32.mrb[0].mxu0
  %v2263 = vadd.f32 %v2065, %v2262
  %v2264 = vpop.f32.mrb[0].mxu0
  %v2265 = vadd.f32 %v2069, %v2264
  %2266 = vmatprep.mubr.bf16.mxu0 0
  %2267 = vmatmul.mubr.bf16.gmra.mrb[0].mxu0 %v2186
  %v2268 = vpop.f32.mrb[0].mxu0
  %v2269 = vadd.f32 %v2065, %v2268
  %v2270 = vpop.f32.mrb[0].mxu0
  %v2271 = vadd.f32 %v2069, %v2270
  %v2272 = vpop.f32.mrb[0].mxu0
  %v2273 = vadd.f32 %v2065, %v2272
  %v2274 = vpop.f32.mrb[0].mxu0
  %v2275 = vadd.f32 %v2069, %v2274
  %2276 = vmatprep.mubr.bf16.mxu0 0
  %2277 = vmatmul.mubr.bf16.gmra.mrb[0].mxu0 %v2189
  %v2278 = vpop.f32.mrb[0].mxu0
  %v2279 = vadd.f32 %v2065, %v2278
  %v2280 = vpop.f32.mrb[0].mxu0
  %v2281 = vadd.f32 %v2069, %v2280
  %v2282 = vpop.f32.mrb[0].mxu0
  %v2283 = vadd.f32 %v2065, %v2282
  %v2284 = vpop.f32.mrb[0].mxu0
  %v2285 = vadd.f32 %v2069, %v2284
  %2286 = vmatprep.mubr.bf16.mxu0 0
  %2287 = vmatmul.mubr.bf16.gmra.mrb[0].mxu0 %v2192
  %v2288 = vpop.f32.mrb[0].mxu0
  %v2289 = vadd.f32 %v2065, %v2288
  %v2290 = vpop.f32.mrb[0].mxu0
  %v2291 = vadd.f32 %v2069, %v2290
  %v2292 = vpop.f32.mrb[0].mxu0
  %v2293 = vadd.f32 %v2065, %v2292
  %v2294 = vpop.f32.mrb[0].mxu0
  %v2295 = vadd.f32 %v2069, %v2294
  %2296 = vmatprep.mubr.bf16.mxu0 0
  %2297 = vmatmul.mubr.bf16.gmra.mrb[0].mxu0 %v2195
  %v2298 = vpop.f32.mrb[0].mxu0
  %v2299 = vadd.f32 %v2065, %v2298
  %v2300 = vpop.f32.mrb[0].mxu0
  %v2301 = vadd.f32 %v2069, %v2300
  %v2302 = vpop.f32.mrb[0].mxu0
  %v2303 = vadd.f32 %v2065, %v2302
  %v2304 = vpop.f32.mrb[0].mxu0
  %v2305 = vadd.f32 %v2069, %v2304
  %2306 = vmatprep.mubr.bf16.mxu0 0
  %2307 = vmatmul.mubr.bf16.gmra.mrb[0].mxu0 %v2198
  %v2308 = vpop.f32.mrb[0].mxu0
  %v2309 = vadd.f32 %v2065, %v2308
  %v2310 = vpop.f32.mrb[0].mxu0
  %v2311 = vadd.f32 %v2069, %v2310
  %v2312 = vpop.f32.mrb[0].mxu0
  %v2313 = vadd.f32 %v2065, %v2312
  %v2314 = vpop.f32.mrb[0].mxu0
  %v2315 = vadd.f32 %v2069, %v2314
  %2316 = vmatprep.mubr.bf16.mxu0 0
  %2317 = vmatmul.mubr.bf16.gmra.mrb[0].mxu0 %v2201
  %v2318 = vpop.f32.mrb[0].mxu0
  %v2319 = vadd.f32 %v2065, %v2318
  %v2320 = vpop.f32.mrb[0].mxu0
  %v2321 = vadd.f32 %v2069, %v2320
  %v2322 = vpop.f32.mrb[0].mxu0
  %v2323 = vadd.f32 %v2065, %v2322
  %v2324 = vpop.f32.mrb[0].mxu0
  %v2325 = vadd.f32 %v2069, %v2324
  %2326 = vmatprep.mubr.bf16.mxu0 0
  %2327 = vmatmul.mubr.bf16.gmra.mrb[0].mxu0 %v2204
  %v2328 = vpop.f32.mrb[0].mxu0
  %v2329 = vadd.f32 %v2065, %v2328
  %v2330 = vpop.f32.mrb[0].mxu0
  %v2331 = vadd.f32 %v2069, %v2330
  %v2332 = vpop.f32.mrb[0].mxu0
  %v2333 = vadd.f32 %v2065, %v2332
  %v2334 = vpop.f32.mrb[0].mxu0
  %v2335 = vadd.f32 %v2069, %v2334
  %2336 = vmatprep.mubr.bf16.mxu0 0
  %2337 = vmatmul.mubr.bf16.gmra.mrb[0].mxu0 %v2207
  %v2338 = vpop.f32.mrb[0].mxu0
  %v2339 = vadd.f32 %v2065, %v2338
  %v2340 = vpop.f32.mrb[0].mxu0
  %v2341 = vadd.f32 %v2069, %v2340
  %v2342 = vpop.f32.mrb[0].mxu0
  %v2343 = vadd.f32 %v2065, %v2342
  %v2344 = vpop.f32.mrb[0].mxu0
  %v2345 = vadd.f32 %v2069, %v2344
  %2346 = vmatprep.mubr.bf16.mxu0 0
  %2347 = vmatmul.mubr.bf16.gmra.mrb[0].mxu0 %v2210
  %v2348 = vpop.f32.mrb[0].mxu0
  %v2349 = vadd.f32 %v2065, %v2348
  %v2350 = vpop.f32.mrb[0].mxu0
  %v2351 = vadd.f32 %v2069, %v2350
  %v2352 = vpop.f32.mrb[0].mxu0
  %v2353 = vadd.f32 %v2065, %v2352
  %v2354 = vpop.f32.mrb[0].mxu0
  %v2355 = vadd.f32 %v2069, %v2354
  %2356 = vmatprep.mubr.bf16.mxu0 0
  %2357 = vmatmul.mubr.bf16.gmra.mrb[0].mxu0 %v2213
  %v2358 = vpop.f32.mrb[0].mxu0
  %v2359 = vadd.f32 %v2065, %v2358
  %v2360 = vpop.f32.mrb[0].mxu0
  %v2361 = vadd.f32 %v2069, %v2360
  %v2362 = vpop.f32.mrb[0].mxu0
  %v2363 = vadd.f32 %v2065, %v2362
  %v2364 = vpop.f32.mrb[0].mxu0
  %v2365 = vadd.f32 %v2069, %v2364
  %2366 = vmatprep.mubr.bf16.mxu0 0
  %2367 = vmatmul.mubr.bf16.gmra.mrb[0].mxu0 %v2216
  %v2368 = vpop.f32.mrb[0].mxu0
  %v2369 = vadd.f32 %v2065, %v2368
  %v2370 = vpop.f32.mrb[0].mxu0
  %v2371 = vadd.f32 %v2069, %v2370
  %v2372 = vpop.f32.mrb[0].mxu0
  %v2373 = vadd.f32 %v2065, %v2372
  %v2374 = vpop.f32.mrb[0].mxu0
  %v2375 = vadd.f32 %v2069, %v2374
  %2376 = vmatprep.mubr.bf16.mxu0 0
  %2377 = vmatmul.mubr.bf16.gmra.mrb[0].mxu0 %v2219
  %v2378 = vpop.f32.mrb[0].mxu0
  %v2379 = vadd.f32 %v2065, %v2378
  %v2380 = vpop.f32.mrb[0].mxu0
  %v2381 = vadd.f32 %v2069, %v2380
  %v2382 = vpop.f32.mrb[0].mxu0
  %v2383 = vadd.f32 %v2065, %v2382
  %v2384 = vpop.f32.mrb[0].mxu0
  %v2385 = vadd.f32 %v2069, %v2384
  %2386 = vmatprep.mubr.bf16.mxu0 0
  %2387 = vmatmul.mubr.bf16.gmra.mrb[0].mxu0 %v2222
  %v2388 = vpop.f32.mrb[0].mxu0
  %v2389 = vadd.f32 %v2065, %v2388
  %v2390 = vpop.f32.mrb[0].mxu0
  %v2391 = vadd.f32 %v2069, %v2390
  %v2392 = vpop.f32.mrb[0].mxu0
  %v2393 = vadd.f32 %v2065, %v2392
  %v2394 = vpop.f32.mrb[0].mxu0
  %v2395 = vadd.f32 %v2069, %v2394
  %2396 = vdwg.mxu0
  %v2397 = vpack.c.bf16 %v2263, %v2259
  %v2398 = vpack.c.bf16 %v2265, %v2261
  %v2399 = vpack.c.bf16 %v2273, %v2269
  %v2400 = vpack.c.bf16 %v2275, %v2271
  %v2401 = vpack.c.bf16 %v2283, %v2279
  %v2402 = vpack.c.bf16 %v2285, %v2281
  %v2403 = vpack.c.bf16 %v2293, %v2289
  %v2404 = vpack.c.bf16 %v2295, %v2291
  %v2405 = vpack.c.bf16 %v2303, %v2299
  %v2406 = vpack.c.bf16 %v2305, %v2301
  %v2407 = vpack.c.bf16 %v2313, %v2309
  %v2408 = vpack.c.bf16 %v2315, %v2311
  %v2409 = vpack.c.bf16 %v2323, %v2319
  %v2410 = vpack.c.bf16 %v2325, %v2321
  %v2411 = vpack.c.bf16 %v2333, %v2329
  %v2412 = vpack.c.bf16 %v2335, %v2331
  %v2413 = vpack.c.bf16 %v2343, %v2339
  %v2414 = vpack.c.bf16 %v2345, %v2341
  %v2415 = vpack.c.bf16 %v2353, %v2349
  %v2416 = vpack.c.bf16 %v2355, %v2351
  %v2417 = vpack.c.bf16 %v2363, %v2359
  %v2418 = vpack.c.bf16 %v2365, %v2361
  %v2419 = vpack.c.bf16 %v2373, %v2369
  %v2420 = vpack.c.bf16 %v2375, %v2371
  %v2421 = vpack.c.bf16 %v2383, %v2379
  %v2422 = vpack.c.bf16 %v2385, %v2381
  %v2423 = vpack.c.bf16 %v2393, %v2389
  %v2424 = vpack.c.bf16 %v2395, %v2391
  %v2425 = vmul.bf16 %v2397, 1045249613
  %v2426 = vmul.bf16 %v2398, 1045249613
  %v2427 = vmul.bf16 %v2399, 1045249613
  %v2428 = vmul.bf16 %v2400, 1045249613
  %v2429 = vmul.bf16 %v2401, 1045249613
  %v2430 = vmul.bf16 %v2402, 1045249613
  %v2431 = vmul.bf16 %v2403, 1045249613
  %v2432 = vmul.bf16 %v2404, 1045249613
  %v2433 = vmul.bf16 %v2405, 1045249613
  %v2434 = vmul.bf16 %v2406, 1045249613
  %v2435 = vmul.bf16 %v2407, 1045249613
  %v2436 = vmul.bf16 %v2408, 1045249613
  %v2437 = vmul.bf16 %v2409, 1045249613
  %v2438 = vmul.bf16 %v2410, 1045249613
  %v2439 = vmul.bf16 %v2411, 1045249613
  %v2440 = vmul.bf16 %v2412, 1045249613
  %v2441 = vmul.bf16 %v2413, 1045249613
  %v2442 = vmul.bf16 %v2414, 1045249613
  %v2443 = vmul.bf16 %v2415, 1045249613
  %v2444 = vmul.bf16 %v2416, 1045249613
  %v2445 = vmul.bf16 %v2417, 1045249613
  %v2446 = vmul.bf16 %v2418, 1045249613
  %v2447 = vmul.bf16 %v2419, 1045249613
  %v2448 = vmul.bf16 %v2420, 1045249613
  %v2449 = vmul.bf16 %v2421, 1045249613
  %v2450 = vmul.bf16 %v2422, 1045249613
  %v2451 = vmul.bf16 %v2423, 1045249613
  %v2452 = vmul.bf16 %v2424, 1045249613
  %v2453 = vmax.bf16 %v2397, %v2425
  %v2454 = vmax.bf16 %v2398, %v2426
  %v2455 = vmax.bf16 %v2399, %v2427
  %v2456 = vmax.bf16 %v2400, %v2428
  %v2457 = vmax.bf16 %v2401, %v2429
  %v2458 = vmax.bf16 %v2402, %v2430
  %v2459 = vmax.bf16 %v2403, %v2431
  %v2460 = vmax.bf16 %v2404, %v2432
  %v2461 = vmax.bf16 %v2405, %v2433
  %v2462 = vmax.bf16 %v2406, %v2434
  %v2463 = vmax.bf16 %v2407, %v2435
  %v2464 = vmax.bf16 %v2408, %v2436
  %v2465 = vmax.bf16 %v2409, %v2437
  %v2466 = vmax.bf16 %v2410, %v2438
  %v2467 = vmax.bf16 %v2411, %v2439
  %v2468 = vmax.bf16 %v2412, %v2440
  %v2469 = vmax.bf16 %v2413, %v2441
  %v2470 = vmax.bf16 %v2414, %v2442
  %v2471 = vmax.bf16 %v2415, %v2443
  %v2472 = vmax.bf16 %v2416, %v2444
  %v2473 = vmax.bf16 %v2417, %v2445
  %v2474 = vmax.bf16 %v2418, %v2446
  %v2475 = vmax.bf16 %v2419, %v2447
  %v2476 = vmax.bf16 %v2420, %v2448
  %v2477 = vmax.bf16 %v2421, %v2449
  %v2478 = vmax.bf16 %v2422, %v2450
  %v2479 = vmax.bf16 %v2423, %v2451
  %v2480 = vmax.bf16 %v2424, %v2452
  %s2481 = scalar_lea.vmem [#allocation2], 1040
  %2482 = vst [vmem:[%s2481] sm:$0xff] %v2453
  %2483 = vst [vmem:[%s2481 + $0x8] sm:$0xff] %v2454
  %2484 = vst [vmem:[%s2481 + $0x10] sm:$0xff] %v2455
  %2485 = vst [vmem:[%s2481 + $0x18] sm:$0xff] %v2456
  %2486 = vst [vmem:[%s2481 + $0x20] sm:$0xff] %v2457
  %2487 = vst [vmem:[%s2481 + $0x28] sm:$0xff] %v2458
  %2488 = vst [vmem:[%s2481 + $0x30] sm:$0xff] %v2459
  %2489 = vst [vmem:[%s2481 + $0x38] sm:$0xff] %v2460
  %2490 = vst [vmem:[%s2481 + $0x40] sm:$0xff] %v2461
  %2491 = vst [vmem:[%s2481 + $0x48] sm:$0xff] %v2462
  %2492 = vst [vmem:[%s2481 + $0x50] sm:$0xff] %v2463
  %2493 = vst [vmem:[%s2481 + $0x58] sm:$0xff] %v2464
  %2494 = vst [vmem:[%s2481 + $0x60] sm:$0xff] %v2465
  %2495 = vst [vmem:[%s2481 + $0x68] sm:$0xff] %v2466
  %2496 = vst [vmem:[%s2481 + $0x70] sm:$0xff] %v2467
  %2497 = vst [vmem:[%s2481 + $0x78] sm:$0xff] %v2468
  %2498 = vst [vmem:[%s2481 + $0x80] sm:$0xff] %v2469
  %2499 = vst [vmem:[%s2481 + $0x88] sm:$0xff] %v2470
  %2500 = vst [vmem:[%s2481 + $0x90] sm:$0xff] %v2471
  %2501 = vst [vmem:[%s2481 + $0x98] sm:$0xff] %v2472
  %2502 = vst [vmem:[%s2481 + $0xa0] sm:$0xff] %v2473
  %2503 = vst [vmem:[%s2481 + $0xa8] sm:$0xff] %v2474
  %2504 = vst [vmem:[%s2481 + $0xb0] sm:$0xff] %v2475
  %2505 = vst [vmem:[%s2481 + $0xb8] sm:$0xff] %v2476
  %2506 = vst [vmem:[%s2481 + $0xc0] sm:$0xff] %v2477
  %2507 = vst [vmem:[%s2481 + $0xc8] sm:$0xff] %v2478
  %2508 = vst [vmem:[%s2481 + $0xd0] sm:$0xff] %v2479
  %2509 = vst [vmem:[%s2481 + $0xd8] sm:$0xff] %v2480
  %s2510 = scalar_lea.vmem %s0, 560
  %v2511 = vld [vmem:[%s2510] sm:$0xf]
  %v2512 = vld [vmem:[%s2510 + $0x4] sm:$0xf]
  %v2513 = vld [vmem:[%s2510 + $0x8] sm:$0xf]
  %v2514 = vld [vmem:[%s2510 + $0xc] sm:$0xf]
  %v2515 = vld [vmem:[%s2510 + $0x10] sm:$0xf]
  %v2516 = vld [vmem:[%s2510 + $0x14] sm:$0xf]
  %v2517 = vld [vmem:[%s2510 + $0x18] sm:$0xf]
  %v2518 = vld [vmem:[%s2510 + $0x1c] sm:$0xf]
  %v2519 = vld [vmem:[%s2510 + $0x20] sm:$0xf]
  %v2520 = vld [vmem:[%s2510 + $0x24] sm:$0xf]
  %v2521 = vld [vmem:[%s2510 + $0x28] sm:$0xf]
  %v2522 = vld [vmem:[%s2510 + $0x2c] sm:$0xf]
  %v2523 = vld [vmem:[%s2510 + $0x30] sm:$0xf]
  %v2524 = vld [vmem:[%s2510 + $0x34] sm:$0xf]
  %v2525 = vld [vmem:[%s2510 + $0x38] sm:$0xf]
  %v2526 = vld [vmem:[%s2510 + $0x3c] sm:$0xf]
  %v2527 = vld [vmem:[%s2510 + $0x40] sm:$0xf]
  %v2528 = vld [vmem:[%s2510 + $0x44] sm:$0xf]
  %v2529 = vld [vmem:[%s2510 + $0x48] sm:$0xf]
  %v2530 = vld [vmem:[%s2510 + $0x4c] sm:$0xf]
  %v2531 = vld [vmem:[%s2510 + $0x50] sm:$0xf]
  %v2532 = vld [vmem:[%s2510 + $0x54] sm:$0xf]
  %v2533 = vld [vmem:[%s2510 + $0x58] sm:$0xf]
  %v2534 = vld [vmem:[%s2510 + $0x5c] sm:$0xf]
  %v2535 = vld [vmem:[%s2510 + $0x60] sm:$0xf]
  %v2536 = vld [vmem:[%s2510 + $0x64] sm:$0xf]
  %v2537 = vld [vmem:[%s2510 + $0x68] sm:$0xf]
  %v2538 = vld [vmem:[%s2510 + $0x6c] sm:$0xf]
  %v2539 = vld [vmem:[%s1] sm:$0xff]
  %v2540 = vld [vmem:[%s1 + $0x8] sm:$0xff]
  %v2541 = vld [vmem:[%s1 + $0x10] sm:$0xff]
  %v2542 = vld [vmem:[%s1 + $0x18] sm:$0xff]
  %v2543 = vld [vmem:[%s1 + $0x20] sm:$0xff]
  %v2544 = vld [vmem:[%s1 + $0x28] sm:$0xff]
  %v2545 = vld [vmem:[%s1 + $0x30] sm:$0xff]
  %v2546 = vld [vmem:[%s1 + $0x38] sm:$0xff]
  %s2547 = scalar_lea.vmem %s2, 5
  %v2548 = vld [vmem:[%s2547] ss:$8 sm:$0x3]
  %v2550 = vlaneseq
  %v2551 = vshrl.u32 %v2550, 7
  %v2552 = vsub.s32 0, %v2551
  %v2553 = vrot.slane %v2548, %v2552
  %v2554 = vlaneseq
  %v2555 = vshrl.u32 %v2554, 7
  %v2556 = vsub.s32 1, %v2555
  %v2557 = vrot.slane %v2548, %v2556
  %v2588 = vunpack.c.l.b16 %v2511
  %v2589 = vunpack.c.l.b16 %v2512
  %v2590 = vunpack.c.l.b16 %v2513
  %v2591 = vunpack.c.l.b16 %v2514
  %v2592 = vunpack.c.l.b16 %v2515
  %v2593 = vunpack.c.l.b16 %v2516
  %v2594 = vunpack.c.l.b16 %v2517
  %v2595 = vunpack.c.l.b16 %v2518
  %v2596 = vunpack.c.l.b16 %v2519
  %v2597 = vunpack.c.l.b16 %v2520
  %v2598 = vunpack.c.l.b16 %v2521
  %v2599 = vunpack.c.l.b16 %v2522
  %v2600 = vunpack.c.l.b16 %v2523
  %v2601 = vunpack.c.l.b16 %v2524
  %v2602 = vunpack.c.l.b16 %v2525
  %v2603 = vunpack.c.l.b16 %v2526
  %v2604 = vunpack.c.l.b16 %v2527
  %v2605 = vunpack.c.l.b16 %v2528
  %v2606 = vunpack.c.l.b16 %v2529
  %v2607 = vunpack.c.l.b16 %v2530
  %v2608 = vunpack.c.l.b16 %v2531
  %v2609 = vunpack.c.l.b16 %v2532
  %v2610 = vunpack.c.l.b16 %v2533
  %v2611 = vunpack.c.l.b16 %v2534
  %v2612 = vunpack.c.l.b16 %v2535
  %v2613 = vunpack.c.l.b16 %v2536
  %v2614 = vunpack.c.l.b16 %v2537
  %v2615 = vunpack.c.l.b16 %v2538
  %v2616 = vpack.c.b16 %v2589, %v2588
  %v2617 = vpack.c.b16 %v2591, %v2590
  %v2618 = vpack.c.b16 %v2593, %v2592
  %v2619 = vpack.c.b16 %v2595, %v2594
  %v2620 = vpack.c.b16 %v2597, %v2596
  %v2621 = vpack.c.b16 %v2599, %v2598
  %v2622 = vpack.c.b16 %v2601, %v2600
  %v2623 = vpack.c.b16 %v2603, %v2602
  %v2624 = vpack.c.b16 %v2605, %v2604
  %v2625 = vpack.c.b16 %v2607, %v2606
  %v2626 = vpack.c.b16 %v2609, %v2608
  %v2627 = vpack.c.b16 %v2611, %v2610
  %v2628 = vpack.c.b16 %v2613, %v2612
  %v2629 = vpack.c.b16 %v2615, %v2614
  %v2638 = vunpack.c.l.b16 %v2539
  %v2639 = vunpack.c.h.b16 %v2539
  %v2640 = vunpack.c.l.b16 %v2540
  %v2641 = vunpack.c.h.b16 %v2540
  %v2642 = vunpack.c.l.b16 %v2541
  %v2643 = vunpack.c.h.b16 %v2541
  %v2644 = vunpack.c.l.b16 %v2542
  %v2645 = vunpack.c.h.b16 %v2542
  %v2646 = vunpack.c.l.b16 %v2543
  %v2647 = vunpack.c.h.b16 %v2543
  %v2648 = vunpack.c.l.b16 %v2544
  %v2649 = vunpack.c.h.b16 %v2544
  %v2650 = vunpack.c.l.b16 %v2545
  %v2651 = vunpack.c.h.b16 %v2545
  %v2652 = vunpack.c.l.b16 %v2546
  %v2653 = vunpack.c.h.b16 %v2546
  %v2654 = vpack.c.b16 %v2640, %v2638
  %v2655 = vpack.c.b16 %v2641, %v2639
  %v2656 = vpack.c.b16 %v2644, %v2642
  %v2657 = vpack.c.b16 %v2645, %v2643
  %v2658 = vpack.c.b16 %v2648, %v2646
  %v2659 = vpack.c.b16 %v2649, %v2647
  %v2660 = vpack.c.b16 %v2652, %v2650
  %v2661 = vpack.c.b16 %v2653, %v2651
  %v2671 = vsel %vm229, %v2616, 0
  %v2674 = vsel %vm229, %v2617, 0
  %v2677 = vsel %vm229, %v2618, 0
  %v2680 = vsel %vm229, %v2619, 0
  %v2683 = vsel %vm229, %v2620, 0
  %v2686 = vsel %vm229, %v2621, 0
  %v2689 = vsel %vm229, %v2622, 0
  %v2692 = vsel %vm229, %v2623, 0
  %v2695 = vsel %vm229, %v2624, 0
  %v2698 = vsel %vm229, %v2625, 0
  %v2701 = vsel %vm229, %v2626, 0
  %v2704 = vsel %vm229, %v2627, 0
  %v2707 = vsel %vm229, %v2628, 0
  %v2710 = vsel %vm229, %v2629, 0
  %2712 = vmatprep.subr.bf16.mxu0 %v2655
  %2713 = vmatpush1.bf16.msra.mxu0 %v2654
  %2714 = vmatprep.subr.bf16.mxu0 %v2657
  %2715 = vmatpush1.bf16.msra.mxu0 %v2656
  %2716 = vmatprep.subr.bf16.mxu0 %v2659
  %2717 = vmatpush1.bf16.msra.mxu0 %v2658
  %2718 = vmatprep.subr.bf16.mxu0 %v2661
  %2719 = vmatpush1.bf16.msra.mxu0 %v2660
  %2720 = vmatprep.subr.bf16.mxu0 0
  %2721 = vmatpush1.bf16.msra.mxu0 0
  %2722 = vmatprep.subr.bf16.mxu0 0
  %2723 = vmatpush1.bf16.msra.mxu0 0
  %2724 = vmatprep.subr.bf16.mxu0 0
  %2725 = vmatpush1.bf16.msra.mxu0 0
  %2726 = vmatprep.subr.bf16.mxu0 0
  %2727 = vmatpush1.bf16.msra.mxu0 0
  %2728 = vmatprep.subr.bf16.mxu0 0
  %2729 = vmatpush1.bf16.msra.mxu0 0
  %2730 = vmatprep.subr.bf16.mxu0 0
  %2731 = vmatpush1.bf16.msra.mxu0 0
  %2732 = vmatprep.subr.bf16.mxu0 0
  %2733 = vmatpush1.bf16.msra.mxu0 0
  %2734 = vmatprep.subr.bf16.mxu0 0
  %2735 = vmatpush1.bf16.msra.mxu0 0
  %2736 = vmatprep.subr.bf16.mxu0 0
  %2737 = vmatpush1.bf16.msra.mxu0 0
  %2738 = vmatprep.subr.bf16.mxu0 0
  %2739 = vmatpush1.bf16.msra.mxu0 0
  %2740 = vmatprep.subr.bf16.mxu0 0
  %2741 = vmatpush1.bf16.msra.mxu0 0
  %2742 = vmatprep.subr.bf16.mxu0 0
  %2743 = vmatpush1.bf16.msra.mxu0 0
  %2744 = vmatprep.mubr.bf16.mxu0 0
  %2745 = vmatmul.mubr.bf16.gmra.mrb[0].mxu0 %v2671
  %v2746 = vpop.f32.mrb[0].mxu0
  %v2747 = vadd.f32 %v2553, %v2746
  %v2748 = vpop.f32.mrb[0].mxu0
  %v2749 = vadd.f32 %v2557, %v2748
  %v2750 = vpop.f32.mrb[0].mxu0
  %v2751 = vadd.f32 %v2553, %v2750
  %v2752 = vpop.f32.mrb[0].mxu0
  %v2753 = vadd.f32 %v2557, %v2752
  %2754 = vmatprep.mubr.bf16.mxu0 0
  %2755 = vmatmul.mubr.bf16.gmra.mrb[0].mxu0 %v2674
  %v2756 = vpop.f32.mrb[0].mxu0
  %v2757 = vadd.f32 %v2553, %v2756
  %v2758 = vpop.f32.mrb[0].mxu0
  %v2759 = vadd.f32 %v2557, %v2758
  %v2760 = vpop.f32.mrb[0].mxu0
  %v2761 = vadd.f32 %v2553, %v2760
  %v2762 = vpop.f32.mrb[0].mxu0
  %v2763 = vadd.f32 %v2557, %v2762
  %2764 = vmatprep.mubr.bf16.mxu0 0
  %2765 = vmatmul.mubr.bf16.gmra.mrb[0].mxu0 %v2677
  %v2766 = vpop.f32.mrb[0].mxu0
  %v2767 = vadd.f32 %v2553, %v2766
  %v2768 = vpop.f32.mrb[0].mxu0
  %v2769 = vadd.f32 %v2557, %v2768
  %v2770 = vpop.f32.mrb[0].mxu0
  %v2771 = vadd.f32 %v2553, %v2770
  %v2772 = vpop.f32.mrb[0].mxu0
  %v2773 = vadd.f32 %v2557, %v2772
  %2774 = vmatprep.mubr.bf16.mxu0 0
  %2775 = vmatmul.mubr.bf16.gmra.mrb[0].mxu0 %v2680
  %v2776 = vpop.f32.mrb[0].mxu0
  %v2777 = vadd.f32 %v2553, %v2776
  %v2778 = vpop.f32.mrb[0].mxu0
  %v2779 = vadd.f32 %v2557, %v2778
  %v2780 = vpop.f32.mrb[0].mxu0
  %v2781 = vadd.f32 %v2553, %v2780
  %v2782 = vpop.f32.mrb[0].mxu0
  %v2783 = vadd.f32 %v2557, %v2782
  %2784 = vmatprep.mubr.bf16.mxu0 0
  %2785 = vmatmul.mubr.bf16.gmra.mrb[0].mxu0 %v2683
  %v2786 = vpop.f32.mrb[0].mxu0
  %v2787 = vadd.f32 %v2553, %v2786
  %v2788 = vpop.f32.mrb[0].mxu0
  %v2789 = vadd.f32 %v2557, %v2788
  %v2790 = vpop.f32.mrb[0].mxu0
  %v2791 = vadd.f32 %v2553, %v2790
  %v2792 = vpop.f32.mrb[0].mxu0
  %v2793 = vadd.f32 %v2557, %v2792
  %2794 = vmatprep.mubr.bf16.mxu0 0
  %2795 = vmatmul.mubr.bf16.gmra.mrb[0].mxu0 %v2686
  %v2796 = vpop.f32.mrb[0].mxu0
  %v2797 = vadd.f32 %v2553, %v2796
  %v2798 = vpop.f32.mrb[0].mxu0
  %v2799 = vadd.f32 %v2557, %v2798
  %v2800 = vpop.f32.mrb[0].mxu0
  %v2801 = vadd.f32 %v2553, %v2800
  %v2802 = vpop.f32.mrb[0].mxu0
  %v2803 = vadd.f32 %v2557, %v2802
  %2804 = vmatprep.mubr.bf16.mxu0 0
  %2805 = vmatmul.mubr.bf16.gmra.mrb[0].mxu0 %v2689
  %v2806 = vpop.f32.mrb[0].mxu0
  %v2807 = vadd.f32 %v2553, %v2806
  %v2808 = vpop.f32.mrb[0].mxu0
  %v2809 = vadd.f32 %v2557, %v2808
  %v2810 = vpop.f32.mrb[0].mxu0
  %v2811 = vadd.f32 %v2553, %v2810
  %v2812 = vpop.f32.mrb[0].mxu0
  %v2813 = vadd.f32 %v2557, %v2812
  %2814 = vmatprep.mubr.bf16.mxu0 0
  %2815 = vmatmul.mubr.bf16.gmra.mrb[0].mxu0 %v2692
  %v2816 = vpop.f32.mrb[0].mxu0
  %v2817 = vadd.f32 %v2553, %v2816
  %v2818 = vpop.f32.mrb[0].mxu0
  %v2819 = vadd.f32 %v2557, %v2818
  %v2820 = vpop.f32.mrb[0].mxu0
  %v2821 = vadd.f32 %v2553, %v2820
  %v2822 = vpop.f32.mrb[0].mxu0
  %v2823 = vadd.f32 %v2557, %v2822
  %2824 = vmatprep.mubr.bf16.mxu0 0
  %2825 = vmatmul.mubr.bf16.gmra.mrb[0].mxu0 %v2695
  %v2826 = vpop.f32.mrb[0].mxu0
  %v2827 = vadd.f32 %v2553, %v2826
  %v2828 = vpop.f32.mrb[0].mxu0
  %v2829 = vadd.f32 %v2557, %v2828
  %v2830 = vpop.f32.mrb[0].mxu0
  %v2831 = vadd.f32 %v2553, %v2830
  %v2832 = vpop.f32.mrb[0].mxu0
  %v2833 = vadd.f32 %v2557, %v2832
  %2834 = vmatprep.mubr.bf16.mxu0 0
  %2835 = vmatmul.mubr.bf16.gmra.mrb[0].mxu0 %v2698
  %v2836 = vpop.f32.mrb[0].mxu0
  %v2837 = vadd.f32 %v2553, %v2836
  %v2838 = vpop.f32.mrb[0].mxu0
  %v2839 = vadd.f32 %v2557, %v2838
  %v2840 = vpop.f32.mrb[0].mxu0
  %v2841 = vadd.f32 %v2553, %v2840
  %v2842 = vpop.f32.mrb[0].mxu0
  %v2843 = vadd.f32 %v2557, %v2842
  %2844 = vmatprep.mubr.bf16.mxu0 0
  %2845 = vmatmul.mubr.bf16.gmra.mrb[0].mxu0 %v2701
  %v2846 = vpop.f32.mrb[0].mxu0
  %v2847 = vadd.f32 %v2553, %v2846
  %v2848 = vpop.f32.mrb[0].mxu0
  %v2849 = vadd.f32 %v2557, %v2848
  %v2850 = vpop.f32.mrb[0].mxu0
  %v2851 = vadd.f32 %v2553, %v2850
  %v2852 = vpop.f32.mrb[0].mxu0
  %v2853 = vadd.f32 %v2557, %v2852
  %2854 = vmatprep.mubr.bf16.mxu0 0
  %2855 = vmatmul.mubr.bf16.gmra.mrb[0].mxu0 %v2704
  %v2856 = vpop.f32.mrb[0].mxu0
  %v2857 = vadd.f32 %v2553, %v2856
  %v2858 = vpop.f32.mrb[0].mxu0
  %v2859 = vadd.f32 %v2557, %v2858
  %v2860 = vpop.f32.mrb[0].mxu0
  %v2861 = vadd.f32 %v2553, %v2860
  %v2862 = vpop.f32.mrb[0].mxu0
  %v2863 = vadd.f32 %v2557, %v2862
  %2864 = vmatprep.mubr.bf16.mxu0 0
  %2865 = vmatmul.mubr.bf16.gmra.mrb[0].mxu0 %v2707
  %v2866 = vpop.f32.mrb[0].mxu0
  %v2867 = vadd.f32 %v2553, %v2866
  %v2868 = vpop.f32.mrb[0].mxu0
  %v2869 = vadd.f32 %v2557, %v2868
  %v2870 = vpop.f32.mrb[0].mxu0
  %v2871 = vadd.f32 %v2553, %v2870
  %v2872 = vpop.f32.mrb[0].mxu0
  %v2873 = vadd.f32 %v2557, %v2872
  %2874 = vmatprep.mubr.bf16.mxu0 0
  %2875 = vmatmul.mubr.bf16.gmra.mrb[0].mxu0 %v2710
  %v2876 = vpop.f32.mrb[0].mxu0
  %v2877 = vadd.f32 %v2553, %v2876
  %v2878 = vpop.f32.mrb[0].mxu0
  %v2879 = vadd.f32 %v2557, %v2878
  %v2880 = vpop.f32.mrb[0].mxu0
  %v2881 = vadd.f32 %v2553, %v2880
  %v2882 = vpop.f32.mrb[0].mxu0
  %v2883 = vadd.f32 %v2557, %v2882
  %2884 = vdwg.mxu0
  %v2885 = vpack.c.bf16 %v2751, %v2747
  %v2886 = vpack.c.bf16 %v2753, %v2749
  %v2887 = vpack.c.bf16 %v2761, %v2757
  %v2888 = vpack.c.bf16 %v2763, %v2759
  %v2889 = vpack.c.bf16 %v2771, %v2767
  %v2890 = vpack.c.bf16 %v2773, %v2769
  %v2891 = vpack.c.bf16 %v2781, %v2777
  %v2892 = vpack.c.bf16 %v2783, %v2779
  %v2893 = vpack.c.bf16 %v2791, %v2787
  %v2894 = vpack.c.bf16 %v2793, %v2789
  %v2895 = vpack.c.bf16 %v2801, %v2797
  %v2896 = vpack.c.bf16 %v2803, %v2799
  %v2897 = vpack.c.bf16 %v2811, %v2807
  %v2898 = vpack.c.bf16 %v2813, %v2809
  %v2899 = vpack.c.bf16 %v2821, %v2817
  %v2900 = vpack.c.bf16 %v2823, %v2819
  %v2901 = vpack.c.bf16 %v2831, %v2827
  %v2902 = vpack.c.bf16 %v2833, %v2829
  %v2903 = vpack.c.bf16 %v2841, %v2837
  %v2904 = vpack.c.bf16 %v2843, %v2839
  %v2905 = vpack.c.bf16 %v2851, %v2847
  %v2906 = vpack.c.bf16 %v2853, %v2849
  %v2907 = vpack.c.bf16 %v2861, %v2857
  %v2908 = vpack.c.bf16 %v2863, %v2859
  %v2909 = vpack.c.bf16 %v2871, %v2867
  %v2910 = vpack.c.bf16 %v2873, %v2869
  %v2911 = vpack.c.bf16 %v2881, %v2877
  %v2912 = vpack.c.bf16 %v2883, %v2879
  %v2913 = vmul.bf16 %v2885, 1045249613
  %v2914 = vmul.bf16 %v2886, 1045249613
  %v2915 = vmul.bf16 %v2887, 1045249613
  %v2916 = vmul.bf16 %v2888, 1045249613
  %v2917 = vmul.bf16 %v2889, 1045249613
  %v2918 = vmul.bf16 %v2890, 1045249613
  %v2919 = vmul.bf16 %v2891, 1045249613
  %v2920 = vmul.bf16 %v2892, 1045249613
  %v2921 = vmul.bf16 %v2893, 1045249613
  %v2922 = vmul.bf16 %v2894, 1045249613
  %v2923 = vmul.bf16 %v2895, 1045249613
  %v2924 = vmul.bf16 %v2896, 1045249613
  %v2925 = vmul.bf16 %v2897, 1045249613
  %v2926 = vmul.bf16 %v2898, 1045249613
  %v2927 = vmul.bf16 %v2899, 1045249613
  %v2928 = vmul.bf16 %v2900, 1045249613
  %v2929 = vmul.bf16 %v2901, 1045249613
  %v2930 = vmul.bf16 %v2902, 1045249613
  %v2931 = vmul.bf16 %v2903, 1045249613
  %v2932 = vmul.bf16 %v2904, 1045249613
  %v2933 = vmul.bf16 %v2905, 1045249613
  %v2934 = vmul.bf16 %v2906, 1045249613
  %v2935 = vmul.bf16 %v2907, 1045249613
  %v2936 = vmul.bf16 %v2908, 1045249613
  %v2937 = vmul.bf16 %v2909, 1045249613
  %v2938 = vmul.bf16 %v2910, 1045249613
  %v2939 = vmul.bf16 %v2911, 1045249613
  %v2940 = vmul.bf16 %v2912, 1045249613
  %v2941 = vmax.bf16 %v2885, %v2913
  %v2942 = vmax.bf16 %v2886, %v2914
  %v2943 = vmax.bf16 %v2887, %v2915
  %v2944 = vmax.bf16 %v2888, %v2916
  %v2945 = vmax.bf16 %v2889, %v2917
  %v2946 = vmax.bf16 %v2890, %v2918
  %v2947 = vmax.bf16 %v2891, %v2919
  %v2948 = vmax.bf16 %v2892, %v2920
  %v2949 = vmax.bf16 %v2893, %v2921
  %v2950 = vmax.bf16 %v2894, %v2922
  %v2951 = vmax.bf16 %v2895, %v2923
  %v2952 = vmax.bf16 %v2896, %v2924
  %v2953 = vmax.bf16 %v2897, %v2925
  %v2954 = vmax.bf16 %v2898, %v2926
  %v2955 = vmax.bf16 %v2899, %v2927
  %v2956 = vmax.bf16 %v2900, %v2928
  %v2957 = vmax.bf16 %v2901, %v2929
  %v2958 = vmax.bf16 %v2902, %v2930
  %v2959 = vmax.bf16 %v2903, %v2931
  %v2960 = vmax.bf16 %v2904, %v2932
  %v2961 = vmax.bf16 %v2905, %v2933
  %v2962 = vmax.bf16 %v2906, %v2934
  %v2963 = vmax.bf16 %v2907, %v2935
  %v2964 = vmax.bf16 %v2908, %v2936
  %v2965 = vmax.bf16 %v2909, %v2937
  %v2966 = vmax.bf16 %v2910, %v2938
  %v2967 = vmax.bf16 %v2911, %v2939
  %v2968 = vmax.bf16 %v2912, %v2940
  %s2969 = scalar_lea.vmem [#allocation2], 1296
  %2970 = vst [vmem:[%s2969] sm:$0xff] %v2941
  %2971 = vst [vmem:[%s2969 + $0x8] sm:$0xff] %v2942
  %2972 = vst [vmem:[%s2969 + $0x10] sm:$0xff] %v2943
  %2973 = vst [vmem:[%s2969 + $0x18] sm:$0xff] %v2944
  %2974 = vst [vmem:[%s2969 + $0x20] sm:$0xff] %v2945
  %2975 = vst [vmem:[%s2969 + $0x28] sm:$0xff] %v2946
  %2976 = vst [vmem:[%s2969 + $0x30] sm:$0xff] %v2947
  %2977 = vst [vmem:[%s2969 + $0x38] sm:$0xff] %v2948
  %2978 = vst [vmem:[%s2969 + $0x40] sm:$0xff] %v2949
  %2979 = vst [vmem:[%s2969 + $0x48] sm:$0xff] %v2950
  %2980 = vst [vmem:[%s2969 + $0x50] sm:$0xff] %v2951
  %2981 = vst [vmem:[%s2969 + $0x58] sm:$0xff] %v2952
  %2982 = vst [vmem:[%s2969 + $0x60] sm:$0xff] %v2953
  %2983 = vst [vmem:[%s2969 + $0x68] sm:$0xff] %v2954
  %2984 = vst [vmem:[%s2969 + $0x70] sm:$0xff] %v2955
  %2985 = vst [vmem:[%s2969 + $0x78] sm:$0xff] %v2956
  %2986 = vst [vmem:[%s2969 + $0x80] sm:$0xff] %v2957
  %2987 = vst [vmem:[%s2969 + $0x88] sm:$0xff] %v2958
  %2988 = vst [vmem:[%s2969 + $0x90] sm:$0xff] %v2959
  %2989 = vst [vmem:[%s2969 + $0x98] sm:$0xff] %v2960
  %2990 = vst [vmem:[%s2969 + $0xa0] sm:$0xff] %v2961
  %2991 = vst [vmem:[%s2969 + $0xa8] sm:$0xff] %v2962
  %2992 = vst [vmem:[%s2969 + $0xb0] sm:$0xff] %v2963
  %2993 = vst [vmem:[%s2969 + $0xb8] sm:$0xff] %v2964
  %2994 = vst [vmem:[%s2969 + $0xc0] sm:$0xff] %v2965
  %2995 = vst [vmem:[%s2969 + $0xc8] sm:$0xff] %v2966
  %2996 = vst [vmem:[%s2969 + $0xd0] sm:$0xff] %v2967
  %2997 = vst [vmem:[%s2969 + $0xd8] sm:$0xff] %v2968
  %s2998 = scalar_lea.vmem %s0, 672
  %v2999 = vld [vmem:[%s2998] sm:$0xf]
  %v3000 = vld [vmem:[%s2998 + $0x4] sm:$0xf]
  %v3001 = vld [vmem:[%s2998 + $0x8] sm:$0xf]
  %v3002 = vld [vmem:[%s2998 + $0xc] sm:$0xf]
  %v3003 = vld [vmem:[%s2998 + $0x10] sm:$0xf]
  %v3004 = vld [vmem:[%s2998 + $0x14] sm:$0xf]
  %v3005 = vld [vmem:[%s2998 + $0x18] sm:$0xf]
  %v3006 = vld [vmem:[%s2998 + $0x1c] sm:$0xf]
  %v3007 = vld [vmem:[%s2998 + $0x20] sm:$0xf]
  %v3008 = vld [vmem:[%s2998 + $0x24] sm:$0xf]
  %v3009 = vld [vmem:[%s2998 + $0x28] sm:$0xf]
  %v3010 = vld [vmem:[%s2998 + $0x2c] sm:$0xf]
  %v3011 = vld [vmem:[%s2998 + $0x30] sm:$0xf]
  %v3012 = vld [vmem:[%s2998 + $0x34] sm:$0xf]
  %v3013 = vld [vmem:[%s2998 + $0x38] sm:$0xf]
  %v3014 = vld [vmem:[%s2998 + $0x3c] sm:$0xf]
  %v3015 = vld [vmem:[%s2998 + $0x40] sm:$0xf]
  %v3016 = vld [vmem:[%s2998 + $0x44] sm:$0xf]
  %v3017 = vld [vmem:[%s2998 + $0x48] sm:$0xf]
  %v3018 = vld [vmem:[%s2998 + $0x4c] sm:$0xf]
  %v3019 = vld [vmem:[%s2998 + $0x50] sm:$0xf]
  %v3020 = vld [vmem:[%s2998 + $0x54] sm:$0xf]
  %v3021 = vld [vmem:[%s2998 + $0x58] sm:$0xf]
  %v3022 = vld [vmem:[%s2998 + $0x5c] sm:$0xf]
  %v3023 = vld [vmem:[%s2998 + $0x60] sm:$0xf]
  %v3024 = vld [vmem:[%s2998 + $0x64] sm:$0xf]
  %v3025 = vld [vmem:[%s2998 + $0x68] sm:$0xf]
  %v3026 = vld [vmem:[%s2998 + $0x6c] sm:$0xf]
  %v3027 = vld [vmem:[%s1] sm:$0xff]
  %v3028 = vld [vmem:[%s1 + $0x8] sm:$0xff]
  %v3029 = vld [vmem:[%s1 + $0x10] sm:$0xff]
  %v3030 = vld [vmem:[%s1 + $0x18] sm:$0xff]
  %v3031 = vld [vmem:[%s1 + $0x20] sm:$0xff]
  %v3032 = vld [vmem:[%s1 + $0x28] sm:$0xff]
  %v3033 = vld [vmem:[%s1 + $0x30] sm:$0xff]
  %v3034 = vld [vmem:[%s1 + $0x38] sm:$0xff]
  %s3035 = scalar_lea.vmem %s2, 6
  %v3036 = vld [vmem:[%s3035] ss:$8 sm:$0x3]
  %v3038 = vlaneseq
  %v3039 = vshrl.u32 %v3038, 7
  %v3040 = vsub.s32 0, %v3039
  %v3041 = vrot.slane %v3036, %v3040
  %v3042 = vlaneseq
  %v3043 = vshrl.u32 %v3042, 7
  %v3044 = vsub.s32 1, %v3043
  %v3045 = vrot.slane %v3036, %v3044
  %v3076 = vunpack.c.l.b16 %v2999
  %v3077 = vunpack.c.l.b16 %v3000
  %v3078 = vunpack.c.l.b16 %v3001
  %v3079 = vunpack.c.l.b16 %v3002
  %v3080 = vunpack.c.l.b16 %v3003
  %v3081 = vunpack.c.l.b16 %v3004
  %v3082 = vunpack.c.l.b16 %v3005
  %v3083 = vunpack.c.l.b16 %v3006
  %v3084 = vunpack.c.l.b16 %v3007
  %v3085 = vunpack.c.l.b16 %v3008
  %v3086 = vunpack.c.l.b16 %v3009
  %v3087 = vunpack.c.l.b16 %v3010
  %v3088 = vunpack.c.l.b16 %v3011
  %v3089 = vunpack.c.l.b16 %v3012
  %v3090 = vunpack.c.l.b16 %v3013
  %v3091 = vunpack.c.l.b16 %v3014
  %v3092 = vunpack.c.l.b16 %v3015
  %v3093 = vunpack.c.l.b16 %v3016
  %v3094 = vunpack.c.l.b16 %v3017
  %v3095 = vunpack.c.l.b16 %v3018
  %v3096 = vunpack.c.l.b16 %v3019
  %v3097 = vunpack.c.l.b16 %v3020
  %v3098 = vunpack.c.l.b16 %v3021
  %v3099 = vunpack.c.l.b16 %v3022
  %v3100 = vunpack.c.l.b16 %v3023
  %v3101 = vunpack.c.l.b16 %v3024
  %v3102 = vunpack.c.l.b16 %v3025
  %v3103 = vunpack.c.l.b16 %v3026
  %v3104 = vpack.c.b16 %v3077, %v3076
  %v3105 = vpack.c.b16 %v3079, %v3078
  %v3106 = vpack.c.b16 %v3081, %v3080
  %v3107 = vpack.c.b16 %v3083, %v3082
  %v3108 = vpack.c.b16 %v3085, %v3084
  %v3109 = vpack.c.b16 %v3087, %v3086
  %v3110 = vpack.c.b16 %v3089, %v3088
  %v3111 = vpack.c.b16 %v3091, %v3090
  %v3112 = vpack.c.b16 %v3093, %v3092
  %v3113 = vpack.c.b16 %v3095, %v3094
  %v3114 = vpack.c.b16 %v3097, %v3096
  %v3115 = vpack.c.b16 %v3099, %v3098
  %v3116 = vpack.c.b16 %v3101, %v3100
  %v3117 = vpack.c.b16 %v3103, %v3102
  %v3126 = vunpack.c.l.b16 %v3027
  %v3127 = vunpack.c.h.b16 %v3027
  %v3128 = vunpack.c.l.b16 %v3028
  %v3129 = vunpack.c.h.b16 %v3028
  %v3130 = vunpack.c.l.b16 %v3029
  %v3131 = vunpack.c.h.b16 %v3029
  %v3132 = vunpack.c.l.b16 %v3030
  %v3133 = vunpack.c.h.b16 %v3030
  %v3134 = vunpack.c.l.b16 %v3031
  %v3135 = vunpack.c.h.b16 %v3031
  %v3136 = vunpack.c.l.b16 %v3032
  %v3137 = vunpack.c.h.b16 %v3032
  %v3138 = vunpack.c.l.b16 %v3033
  %v3139 = vunpack.c.h.b16 %v3033
  %v3140 = vunpack.c.l.b16 %v3034
  %v3141 = vunpack.c.h.b16 %v3034
  %v3142 = vpack.c.b16 %v3128, %v3126
  %v3143 = vpack.c.b16 %v3129, %v3127
  %v3144 = vpack.c.b16 %v3132, %v3130
  %v3145 = vpack.c.b16 %v3133, %v3131
  %v3146 = vpack.c.b16 %v3136, %v3134
  %v3147 = vpack.c.b16 %v3137, %v3135
  %v3148 = vpack.c.b16 %v3140, %v3138
  %v3149 = vpack.c.b16 %v3141, %v3139
  %v3159 = vsel %vm229, %v3104, 0
  %v3162 = vsel %vm229, %v3105, 0
  %v3165 = vsel %vm229, %v3106, 0
  %v3168 = vsel %vm229, %v3107, 0
  %v3171 = vsel %vm229, %v3108, 0
  %v3174 = vsel %vm229, %v3109, 0
  %v3177 = vsel %vm229, %v3110, 0
  %v3180 = vsel %vm229, %v3111, 0
  %v3183 = vsel %vm229, %v3112, 0
  %v3186 = vsel %vm229, %v3113, 0
  %v3189 = vsel %vm229, %v3114, 0
  %v3192 = vsel %vm229, %v3115, 0
  %v3195 = vsel %vm229, %v3116, 0
  %v3198 = vsel %vm229, %v3117, 0
  %3200 = vmatprep.subr.bf16.mxu0 %v3143
  %3201 = vmatpush1.bf16.msra.mxu0 %v3142
  %3202 = vmatprep.subr.bf16.mxu0 %v3145
  %3203 = vmatpush1.bf16.msra.mxu0 %v3144
  %3204 = vmatprep.subr.bf16.mxu0 %v3147
  %3205 = vmatpush1.bf16.msra.mxu0 %v3146
  %3206 = vmatprep.subr.bf16.mxu0 %v3149
  %3207 = vmatpush1.bf16.msra.mxu0 %v3148
  %3208 = vmatprep.subr.bf16.mxu0 0
  %3209 = vmatpush1.bf16.msra.mxu0 0
  %3210 = vmatprep.subr.bf16.mxu0 0
  %3211 = vmatpush1.bf16.msra.mxu0 0
  %3212 = vmatprep.subr.bf16.mxu0 0
  %3213 = vmatpush1.bf16.msra.mxu0 0
  %3214 = vmatprep.subr.bf16.mxu0 0
  %3215 = vmatpush1.bf16.msra.mxu0 0
  %3216 = vmatprep.subr.bf16.mxu0 0
  %3217 = vmatpush1.bf16.msra.mxu0 0
  %3218 = vmatprep.subr.bf16.mxu0 0
  %3219 = vmatpush1.bf16.msra.mxu0 0
  %3220 = vmatprep.subr.bf16.mxu0 0
  %3221 = vmatpush1.bf16.msra.mxu0 0
  %3222 = vmatprep.subr.bf16.mxu0 0
  %3223 = vmatpush1.bf16.msra.mxu0 0
  %3224 = vmatprep.subr.bf16.mxu0 0
  %3225 = vmatpush1.bf16.msra.mxu0 0
  %3226 = vmatprep.subr.bf16.mxu0 0
  %3227 = vmatpush1.bf16.msra.mxu0 0
  %3228 = vmatprep.subr.bf16.mxu0 0
  %3229 = vmatpush1.bf16.msra.mxu0 0
  %3230 = vmatprep.subr.bf16.mxu0 0
  %3231 = vmatpush1.bf16.msra.mxu0 0
  %3232 = vmatprep.mubr.bf16.mxu0 0
  %3233 = vmatmul.mubr.bf16.gmra.mrb[0].mxu0 %v3159
  %v3234 = vpop.f32.mrb[0].mxu0
  %v3235 = vadd.f32 %v3041, %v3234
  %v3236 = vpop.f32.mrb[0].mxu0
  %v3237 = vadd.f32 %v3045, %v3236
  %v3238 = vpop.f32.mrb[0].mxu0
  %v3239 = vadd.f32 %v3041, %v3238
  %v3240 = vpop.f32.mrb[0].mxu0
  %v3241 = vadd.f32 %v3045, %v3240
  %3242 = vmatprep.mubr.bf16.mxu0 0
  %3243 = vmatmul.mubr.bf16.gmra.mrb[0].mxu0 %v3162
  %v3244 = vpop.f32.mrb[0].mxu0
  %v3245 = vadd.f32 %v3041, %v3244
  %v3246 = vpop.f32.mrb[0].mxu0
  %v3247 = vadd.f32 %v3045, %v3246
  %v3248 = vpop.f32.mrb[0].mxu0
  %v3249 = vadd.f32 %v3041, %v3248
  %v3250 = vpop.f32.mrb[0].mxu0
  %v3251 = vadd.f32 %v3045, %v3250
  %3252 = vmatprep.mubr.bf16.mxu0 0
  %3253 = vmatmul.mubr.bf16.gmra.mrb[0].mxu0 %v3165
  %v3254 = vpop.f32.mrb[0].mxu0
  %v3255 = vadd.f32 %v3041, %v3254
  %v3256 = vpop.f32.mrb[0].mxu0
  %v3257 = vadd.f32 %v3045, %v3256
  %v3258 = vpop.f32.mrb[0].mxu0
  %v3259 = vadd.f32 %v3041, %v3258
  %v3260 = vpop.f32.mrb[0].mxu0
  %v3261 = vadd.f32 %v3045, %v3260
  %3262 = vmatprep.mubr.bf16.mxu0 0
  %3263 = vmatmul.mubr.bf16.gmra.mrb[0].mxu0 %v3168
  %v3264 = vpop.f32.mrb[0].mxu0
  %v3265 = vadd.f32 %v3041, %v3264
  %v3266 = vpop.f32.mrb[0].mxu0
  %v3267 = vadd.f32 %v3045, %v3266
  %v3268 = vpop.f32.mrb[0].mxu0
  %v3269 = vadd.f32 %v3041, %v3268
  %v3270 = vpop.f32.mrb[0].mxu0
  %v3271 = vadd.f32 %v3045, %v3270
  %3272 = vmatprep.mubr.bf16.mxu0 0
  %3273 = vmatmul.mubr.bf16.gmra.mrb[0].mxu0 %v3171
  %v3274 = vpop.f32.mrb[0].mxu0
  %v3275 = vadd.f32 %v3041, %v3274
  %v3276 = vpop.f32.mrb[0].mxu0
  %v3277 = vadd.f32 %v3045, %v3276
  %v3278 = vpop.f32.mrb[0].mxu0
  %v3279 = vadd.f32 %v3041, %v3278
  %v3280 = vpop.f32.mrb[0].mxu0
  %v3281 = vadd.f32 %v3045, %v3280
  %3282 = vmatprep.mubr.bf16.mxu0 0
  %3283 = vmatmul.mubr.bf16.gmra.mrb[0].mxu0 %v3174
  %v3284 = vpop.f32.mrb[0].mxu0
  %v3285 = vadd.f32 %v3041, %v3284
  %v3286 = vpop.f32.mrb[0].mxu0
  %v3287 = vadd.f32 %v3045, %v3286
  %v3288 = vpop.f32.mrb[0].mxu0
  %v3289 = vadd.f32 %v3041, %v3288
  %v3290 = vpop.f32.mrb[0].mxu0
  %v3291 = vadd.f32 %v3045, %v3290
  %3292 = vmatprep.mubr.bf16.mxu0 0
  %3293 = vmatmul.mubr.bf16.gmra.mrb[0].mxu0 %v3177
  %v3294 = vpop.f32.mrb[0].mxu0
  %v3295 = vadd.f32 %v3041, %v3294
  %v3296 = vpop.f32.mrb[0].mxu0
  %v3297 = vadd.f32 %v3045, %v3296
  %v3298 = vpop.f32.mrb[0].mxu0
  %v3299 = vadd.f32 %v3041, %v3298
  %v3300 = vpop.f32.mrb[0].mxu0
  %v3301 = vadd.f32 %v3045, %v3300
  %3302 = vmatprep.mubr.bf16.mxu0 0
  %3303 = vmatmul.mubr.bf16.gmra.mrb[0].mxu0 %v3180
  %v3304 = vpop.f32.mrb[0].mxu0
  %v3305 = vadd.f32 %v3041, %v3304
  %v3306 = vpop.f32.mrb[0].mxu0
  %v3307 = vadd.f32 %v3045, %v3306
  %v3308 = vpop.f32.mrb[0].mxu0
  %v3309 = vadd.f32 %v3041, %v3308
  %v3310 = vpop.f32.mrb[0].mxu0
  %v3311 = vadd.f32 %v3045, %v3310
  %3312 = vmatprep.mubr.bf16.mxu0 0
  %3313 = vmatmul.mubr.bf16.gmra.mrb[0].mxu0 %v3183
  %v3314 = vpop.f32.mrb[0].mxu0
  %v3315 = vadd.f32 %v3041, %v3314
  %v3316 = vpop.f32.mrb[0].mxu0
  %v3317 = vadd.f32 %v3045, %v3316
  %v3318 = vpop.f32.mrb[0].mxu0
  %v3319 = vadd.f32 %v3041, %v3318
  %v3320 = vpop.f32.mrb[0].mxu0
  %v3321 = vadd.f32 %v3045, %v3320
  %3322 = vmatprep.mubr.bf16.mxu0 0
  %3323 = vmatmul.mubr.bf16.gmra.mrb[0].mxu0 %v3186
  %v3324 = vpop.f32.mrb[0].mxu0
  %v3325 = vadd.f32 %v3041, %v3324
  %v3326 = vpop.f32.mrb[0].mxu0
  %v3327 = vadd.f32 %v3045, %v3326
  %v3328 = vpop.f32.mrb[0].mxu0
  %v3329 = vadd.f32 %v3041, %v3328
  %v3330 = vpop.f32.mrb[0].mxu0
  %v3331 = vadd.f32 %v3045, %v3330
  %3332 = vmatprep.mubr.bf16.mxu0 0
  %3333 = vmatmul.mubr.bf16.gmra.mrb[0].mxu0 %v3189
  %v3334 = vpop.f32.mrb[0].mxu0
  %v3335 = vadd.f32 %v3041, %v3334
  %v3336 = vpop.f32.mrb[0].mxu0
  %v3337 = vadd.f32 %v3045, %v3336
  %v3338 = vpop.f32.mrb[0].mxu0
  %v3339 = vadd.f32 %v3041, %v3338
  %v3340 = vpop.f32.mrb[0].mxu0
  %v3341 = vadd.f32 %v3045, %v3340
  %3342 = vmatprep.mubr.bf16.mxu0 0
  %3343 = vmatmul.mubr.bf16.gmra.mrb[0].mxu0 %v3192
  %v3344 = vpop.f32.mrb[0].mxu0
  %v3345 = vadd.f32 %v3041, %v3344
  %v3346 = vpop.f32.mrb[0].mxu0
  %v3347 = vadd.f32 %v3045, %v3346
  %v3348 = vpop.f32.mrb[0].mxu0
  %v3349 = vadd.f32 %v3041, %v3348
  %v3350 = vpop.f32.mrb[0].mxu0
  %v3351 = vadd.f32 %v3045, %v3350
  %3352 = vmatprep.mubr.bf16.mxu0 0
  %3353 = vmatmul.mubr.bf16.gmra.mrb[0].mxu0 %v3195
  %v3354 = vpop.f32.mrb[0].mxu0
  %v3355 = vadd.f32 %v3041, %v3354
  %v3356 = vpop.f32.mrb[0].mxu0
  %v3357 = vadd.f32 %v3045, %v3356
  %v3358 = vpop.f32.mrb[0].mxu0
  %v3359 = vadd.f32 %v3041, %v3358
  %v3360 = vpop.f32.mrb[0].mxu0
  %v3361 = vadd.f32 %v3045, %v3360
  %3362 = vmatprep.mubr.bf16.mxu0 0
  %3363 = vmatmul.mubr.bf16.gmra.mrb[0].mxu0 %v3198
  %v3364 = vpop.f32.mrb[0].mxu0
  %v3365 = vadd.f32 %v3041, %v3364
  %v3366 = vpop.f32.mrb[0].mxu0
  %v3367 = vadd.f32 %v3045, %v3366
  %v3368 = vpop.f32.mrb[0].mxu0
  %v3369 = vadd.f32 %v3041, %v3368
  %v3370 = vpop.f32.mrb[0].mxu0
  %v3371 = vadd.f32 %v3045, %v3370
  %3372 = vdwg.mxu0
  %v3373 = vpack.c.bf16 %v3239, %v3235
  %v3374 = vpack.c.bf16 %v3241, %v3237
  %v3375 = vpack.c.bf16 %v3249, %v3245
  %v3376 = vpack.c.bf16 %v3251, %v3247
  %v3377 = vpack.c.bf16 %v3259, %v3255
  %v3378 = vpack.c.bf16 %v3261, %v3257
  %v3379 = vpack.c.bf16 %v3269, %v3265
  %v3380 = vpack.c.bf16 %v3271, %v3267
  %v3381 = vpack.c.bf16 %v3279, %v3275
  %v3382 = vpack.c.bf16 %v3281, %v3277
  %v3383 = vpack.c.bf16 %v3289, %v3285
  %v3384 = vpack.c.bf16 %v3291, %v3287
  %v3385 = vpack.c.bf16 %v3299, %v3295
  %v3386 = vpack.c.bf16 %v3301, %v3297
  %v3387 = vpack.c.bf16 %v3309, %v3305
  %v3388 = vpack.c.bf16 %v3311, %v3307
  %v3389 = vpack.c.bf16 %v3319, %v3315
  %v3390 = vpack.c.bf16 %v3321, %v3317
  %v3391 = vpack.c.bf16 %v3329, %v3325
  %v3392 = vpack.c.bf16 %v3331, %v3327
  %v3393 = vpack.c.bf16 %v3339, %v3335
  %v3394 = vpack.c.bf16 %v3341, %v3337
  %v3395 = vpack.c.bf16 %v3349, %v3345
  %v3396 = vpack.c.bf16 %v3351, %v3347
  %v3397 = vpack.c.bf16 %v3359, %v3355
  %v3398 = vpack.c.bf16 %v3361, %v3357
  %v3399 = vpack.c.bf16 %v3369, %v3365
  %v3400 = vpack.c.bf16 %v3371, %v3367
  %v3401 = vmul.bf16 %v3373, 1045249613
  %v3402 = vmul.bf16 %v3374, 1045249613
  %v3403 = vmul.bf16 %v3375, 1045249613
  %v3404 = vmul.bf16 %v3376, 1045249613
  %v3405 = vmul.bf16 %v3377, 1045249613
  %v3406 = vmul.bf16 %v3378, 1045249613
  %v3407 = vmul.bf16 %v3379, 1045249613
  %v3408 = vmul.bf16 %v3380, 1045249613
  %v3409 = vmul.bf16 %v3381, 1045249613
  %v3410 = vmul.bf16 %v3382, 1045249613
  %v3411 = vmul.bf16 %v3383, 1045249613
  %v3412 = vmul.bf16 %v3384, 1045249613
  %v3413 = vmul.bf16 %v3385, 1045249613
  %v3414 = vmul.bf16 %v3386, 1045249613
  %v3415 = vmul.bf16 %v3387, 1045249613
  %v3416 = vmul.bf16 %v3388, 1045249613
  %v3417 = vmul.bf16 %v3389, 1045249613
  %v3418 = vmul.bf16 %v3390, 1045249613
  %v3419 = vmul.bf16 %v3391, 1045249613
  %v3420 = vmul.bf16 %v3392, 1045249613
  %v3421 = vmul.bf16 %v3393, 1045249613
  %v3422 = vmul.bf16 %v3394, 1045249613
  %v3423 = vmul.bf16 %v3395, 1045249613
  %v3424 = vmul.bf16 %v3396, 1045249613
  %v3425 = vmul.bf16 %v3397, 1045249613
  %v3426 = vmul.bf16 %v3398, 1045249613
  %v3427 = vmul.bf16 %v3399, 1045249613
  %v3428 = vmul.bf16 %v3400, 1045249613
  %v3429 = vmax.bf16 %v3373, %v3401
  %v3430 = vmax.bf16 %v3374, %v3402
  %v3431 = vmax.bf16 %v3375, %v3403
  %v3432 = vmax.bf16 %v3376, %v3404
  %v3433 = vmax.bf16 %v3377, %v3405
  %v3434 = vmax.bf16 %v3378, %v3406
  %v3435 = vmax.bf16 %v3379, %v3407
  %v3436 = vmax.bf16 %v3380, %v3408
  %v3437 = vmax.bf16 %v3381, %v3409
  %v3438 = vmax.bf16 %v3382, %v3410
  %v3439 = vmax.bf16 %v3383, %v3411
  %v3440 = vmax.bf16 %v3384, %v3412
  %v3441 = vmax.bf16 %v3385, %v3413
  %v3442 = vmax.bf16 %v3386, %v3414
  %v3443 = vmax.bf16 %v3387, %v3415
  %v3444 = vmax.bf16 %v3388, %v3416
  %v3445 = vmax.bf16 %v3389, %v3417
  %v3446 = vmax.bf16 %v3390, %v3418
  %v3447 = vmax.bf16 %v3391, %v3419
  %v3448 = vmax.bf16 %v3392, %v3420
  %v3449 = vmax.bf16 %v3393, %v3421
  %v3450 = vmax.bf16 %v3394, %v3422
  %v3451 = vmax.bf16 %v3395, %v3423
  %v3452 = vmax.bf16 %v3396, %v3424
  %v3453 = vmax.bf16 %v3397, %v3425
  %v3454 = vmax.bf16 %v3398, %v3426
  %v3455 = vmax.bf16 %v3399, %v3427
  %v3456 = vmax.bf16 %v3400, %v3428
  %s3457 = scalar_lea.vmem [#allocation2], 1552
  %3458 = vst [vmem:[%s3457] sm:$0xff] %v3429
  %3459 = vst [vmem:[%s3457 + $0x8] sm:$0xff] %v3430
  %3460 = vst [vmem:[%s3457 + $0x10] sm:$0xff] %v3431
  %3461 = vst [vmem:[%s3457 + $0x18] sm:$0xff] %v3432
  %3462 = vst [vmem:[%s3457 + $0x20] sm:$0xff] %v3433
  %3463 = vst [vmem:[%s3457 + $0x28] sm:$0xff] %v3434
  %3464 = vst [vmem:[%s3457 + $0x30] sm:$0xff] %v3435
  %3465 = vst [vmem:[%s3457 + $0x38] sm:$0xff] %v3436
  %3466 = vst [vmem:[%s3457 + $0x40] sm:$0xff] %v3437
  %3467 = vst [vmem:[%s3457 + $0x48] sm:$0xff] %v3438
  %3468 = vst [vmem:[%s3457 + $0x50] sm:$0xff] %v3439
  %3469 = vst [vmem:[%s3457 + $0x58] sm:$0xff] %v3440
  %3470 = vst [vmem:[%s3457 + $0x60] sm:$0xff] %v3441
  %3471 = vst [vmem:[%s3457 + $0x68] sm:$0xff] %v3442
  %3472 = vst [vmem:[%s3457 + $0x70] sm:$0xff] %v3443
  %3473 = vst [vmem:[%s3457 + $0x78] sm:$0xff] %v3444
  %3474 = vst [vmem:[%s3457 + $0x80] sm:$0xff] %v3445
  %3475 = vst [vmem:[%s3457 + $0x88] sm:$0xff] %v3446
  %3476 = vst [vmem:[%s3457 + $0x90] sm:$0xff] %v3447
  %3477 = vst [vmem:[%s3457 + $0x98] sm:$0xff] %v3448
  %3478 = vst [vmem:[%s3457 + $0xa0] sm:$0xff] %v3449
  %3479 = vst [vmem:[%s3457 + $0xa8] sm:$0xff] %v3450
  %3480 = vst [vmem:[%s3457 + $0xb0] sm:$0xff] %v3451
  %3481 = vst [vmem:[%s3457 + $0xb8] sm:$0xff] %v3452
  %3482 = vst [vmem:[%s3457 + $0xc0] sm:$0xff] %v3453
  %3483 = vst [vmem:[%s3457 + $0xc8] sm:$0xff] %v3454
  %3484 = vst [vmem:[%s3457 + $0xd0] sm:$0xff] %v3455
  %3485 = vst [vmem:[%s3457 + $0xd8] sm:$0xff] %v3456
  %v3486 = vld [vmem:[#allocation2] sm:$0xff]
  %v3487 = vld [vmem:[#allocation2 + $0x8] sm:$0xff]
  %v3488 = vld [vmem:[#allocation2 + $0x10] sm:$0xff]
  %v3489 = vld [vmem:[#allocation2 + $0x18] sm:$0xff]
  %v3490 = vld [vmem:[#allocation2 + $0x20] sm:$0xff]
  %v3491 = vld [vmem:[#allocation2 + $0x28] sm:$0xff]
  %v3492 = vld [vmem:[#allocation2 + $0x30] sm:$0xff]
  %v3493 = vld [vmem:[#allocation2 + $0x38] sm:$0xff]
  %v3494 = vld [vmem:[#allocation2 + $0x40] sm:$0xff]
  %v3495 = vld [vmem:[#allocation2 + $0x48] sm:$0xff]
  %v3496 = vld [vmem:[#allocation2 + $0x50] sm:$0xff]
  %v3497 = vld [vmem:[#allocation2 + $0x58] sm:$0xff]
  %v3498 = vld [vmem:[#allocation2 + $0x60] sm:$0xff]
  %v3499 = vld [vmem:[#allocation2 + $0x68] sm:$0xff]
  %v3500 = vld [vmem:[%s3] sm:$0xf]
  %v3501 = vld [vmem:[%s3 + $0x4] sm:$0xf]
  %v3502 = vld [vmem:[%s3 + $0x8] sm:$0xf]
  %v3503 = vld [vmem:[%s3 + $0xc] sm:$0xf]
  %v3504 = vld [vmem:[%s3 + $0x10] sm:$0xf]
  %v3505 = vld [vmem:[%s3 + $0x14] sm:$0xf]
  %v3506 = vld [vmem:[%s3 + $0x18] sm:$0xf]
  %v3507 = vld [vmem:[%s3 + $0x1c] sm:$0xf]
  %v3508 = vld [vmem:[%s3 + $0x20] sm:$0xf]
  %v3509 = vld [vmem:[%s3 + $0x24] sm:$0xf]
  %v3510 = vld [vmem:[%s3 + $0x28] sm:$0xf]
  %v3511 = vld [vmem:[%s3 + $0x2c] sm:$0xf]
  %v3512 = vld [vmem:[%s3 + $0x30] sm:$0xf]
  %v3513 = vld [vmem:[%s3 + $0x34] sm:$0xf]
  %v3514 = vld [vmem:[%s3 + $0x38] sm:$0xf]
  %v3515 = vld [vmem:[%s3 + $0x3c] sm:$0xf]
  %v3516 = vld [vmem:[%s3 + $0x40] sm:$0xf]
  %v3517 = vld [vmem:[%s3 + $0x44] sm:$0xf]
  %v3518 = vld [vmem:[%s3 + $0x48] sm:$0xf]
  %v3519 = vld [vmem:[%s3 + $0x4c] sm:$0xf]
  %v3520 = vld [vmem:[%s3 + $0x50] sm:$0xf]
  %v3521 = vld [vmem:[%s3 + $0x54] sm:$0xf]
  %v3522 = vld [vmem:[%s3 + $0x58] sm:$0xf]
  %v3523 = vld [vmem:[%s3 + $0x5c] sm:$0xf]
  %v3524 = vld [vmem:[%s3 + $0x60] sm:$0xf]
  %v3525 = vld [vmem:[%s3 + $0x64] sm:$0xf]
  %v3526 = vld [vmem:[%s3 + $0x68] sm:$0xf]
  %v3527 = vld [vmem:[%s3 + $0x6c] sm:$0xf]
  %v3528 = vld [vmem:[%s3 + $0x70] sm:$0xf]
  %v3529 = vld [vmem:[%s3 + $0x74] sm:$0xf]
  %v3530 = vld [vmem:[%s3 + $0x78] sm:$0xf]
  %v3531 = vld [vmem:[%s3 + $0x7c] sm:$0xf]
  %s3532 = scalar_lea.vmem [#allocation2], 128
  %v3533 = vld [vmem:[%s3532] sm:$0xff]
  %v3534 = vld [vmem:[%s3532 + $0x8] sm:$0xff]
  %v3535 = vld [vmem:[%s3532 + $0x10] sm:$0xff]
  %v3536 = vld [vmem:[%s3532 + $0x18] sm:$0xff]
  %v3537 = vld [vmem:[%s3532 + $0x20] sm:$0xff]
  %v3538 = vld [vmem:[%s3532 + $0x28] sm:$0xff]
  %v3539 = vld [vmem:[%s3532 + $0x30] sm:$0xff]
  %v3540 = vld [vmem:[%s3532 + $0x38] sm:$0xff]
  %v3541 = vld [vmem:[%s3532 + $0x40] sm:$0xff]
  %v3542 = vld [vmem:[%s3532 + $0x48] sm:$0xff]
  %v3543 = vld [vmem:[%s3532 + $0x50] sm:$0xff]
  %v3544 = vld [vmem:[%s3532 + $0x58] sm:$0xff]
  %v3545 = vld [vmem:[%s3532 + $0x60] sm:$0xff]
  %v3546 = vld [vmem:[%s3532 + $0x68] sm:$0xff]
  %s3547 = scalar_lea.vmem %s3, 128
  %v3548 = vld [vmem:[%s3547] sm:$0xf]
  %v3549 = vld [vmem:[%s3547 + $0x4] sm:$0xf]
  %v3550 = vld [vmem:[%s3547 + $0x8] sm:$0xf]
  %v3551 = vld [vmem:[%s3547 + $0xc] sm:$0xf]
  %v3552 = vld [vmem:[%s3547 + $0x10] sm:$0xf]
  %v3553 = vld [vmem:[%s3547 + $0x14] sm:$0xf]
  %v3554 = vld [vmem:[%s3547 + $0x18] sm:$0xf]
  %v3555 = vld [vmem:[%s3547 + $0x1c] sm:$0xf]
  %v3556 = vld [vmem:[%s3547 + $0x20] sm:$0xf]
  %v3557 = vld [vmem:[%s3547 + $0x24] sm:$0xf]
  %v3558 = vld [vmem:[%s3547 + $0x28] sm:$0xf]
  %v3559 = vld [vmem:[%s3547 + $0x2c] sm:$0xf]
  %v3560 = vld [vmem:[%s3547 + $0x30] sm:$0xf]
  %v3561 = vld [vmem:[%s3547 + $0x34] sm:$0xf]
  %v3562 = vld [vmem:[%s3547 + $0x38] sm:$0xf]
  %v3563 = vld [vmem:[%s3547 + $0x3c] sm:$0xf]
  %v3564 = vld [vmem:[%s3547 + $0x40] sm:$0xf]
  %v3565 = vld [vmem:[%s3547 + $0x44] sm:$0xf]
  %v3566 = vld [vmem:[%s3547 + $0x48] sm:$0xf]
  %v3567 = vld [vmem:[%s3547 + $0x4c] sm:$0xf]
  %v3568 = vld [vmem:[%s3547 + $0x50] sm:$0xf]
  %v3569 = vld [vmem:[%s3547 + $0x54] sm:$0xf]
  %v3570 = vld [vmem:[%s3547 + $0x58] sm:$0xf]
  %v3571 = vld [vmem:[%s3547 + $0x5c] sm:$0xf]
  %v3572 = vld [vmem:[%s3547 + $0x60] sm:$0xf]
  %v3573 = vld [vmem:[%s3547 + $0x64] sm:$0xf]
  %v3574 = vld [vmem:[%s3547 + $0x68] sm:$0xf]
  %v3575 = vld [vmem:[%s3547 + $0x6c] sm:$0xf]
  %v3576 = vld [vmem:[%s3547 + $0x70] sm:$0xf]
  %v3577 = vld [vmem:[%s3547 + $0x74] sm:$0xf]
  %v3578 = vld [vmem:[%s3547 + $0x78] sm:$0xf]
  %v3579 = vld [vmem:[%s3547 + $0x7c] sm:$0xf]
  %v3612 = vunpack.c.l.b16 %v3548
  %v3613 = vunpack.c.l.b16 %v3549
  %v3614 = vunpack.c.l.b16 %v3550
  %v3615 = vunpack.c.l.b16 %v3551
  %v3616 = vunpack.c.l.b16 %v3552
  %v3617 = vunpack.c.l.b16 %v3553
  %v3618 = vunpack.c.l.b16 %v3554
  %v3619 = vunpack.c.l.b16 %v3555
  %v3620 = vunpack.c.l.b16 %v3556
  %v3621 = vunpack.c.l.b16 %v3557
  %v3622 = vunpack.c.l.b16 %v3558
  %v3623 = vunpack.c.l.b16 %v3559
  %v3624 = vunpack.c.l.b16 %v3560
  %v3625 = vunpack.c.l.b16 %v3561
  %v3626 = vunpack.c.l.b16 %v3562
  %v3627 = vunpack.c.l.b16 %v3563
  %v3628 = vunpack.c.l.b16 %v3564
  %v3629 = vunpack.c.l.b16 %v3565
  %v3630 = vunpack.c.l.b16 %v3566
  %v3631 = vunpack.c.l.b16 %v3567
  %v3632 = vunpack.c.l.b16 %v3568
  %v3633 = vunpack.c.l.b16 %v3569
  %v3634 = vunpack.c.l.b16 %v3570
  %v3635 = vunpack.c.l.b16 %v3571
  %v3636 = vunpack.c.l.b16 %v3572
  %v3637 = vunpack.c.l.b16 %v3573
  %v3638 = vunpack.c.l.b16 %v3574
  %v3639 = vunpack.c.l.b16 %v3575
  %v3640 = vunpack.c.l.b16 %v3576
  %v3641 = vunpack.c.l.b16 %v3577
  %v3642 = vunpack.c.l.b16 %v3578
  %v3643 = vunpack.c.l.b16 %v3579
  %v3644 = vpack.c.b16 %v3613, %v3612
  %v3645 = vpack.c.b16 %v3615, %v3614
  %v3646 = vpack.c.b16 %v3617, %v3616
  %v3647 = vpack.c.b16 %v3619, %v3618
  %v3648 = vpack.c.b16 %v3621, %v3620
  %v3649 = vpack.c.b16 %v3623, %v3622
  %v3650 = vpack.c.b16 %v3625, %v3624
  %v3651 = vpack.c.b16 %v3627, %v3626
  %v3652 = vpack.c.b16 %v3629, %v3628
  %v3653 = vpack.c.b16 %v3631, %v3630
  %v3654 = vpack.c.b16 %v3633, %v3632
  %v3655 = vpack.c.b16 %v3635, %v3634
  %v3656 = vpack.c.b16 %v3637, %v3636
  %v3657 = vpack.c.b16 %v3639, %v3638
  %v3658 = vpack.c.b16 %v3641, %v3640
  %v3659 = vpack.c.b16 %v3643, %v3642
  %3676 = vmatprep.subr.bf16.mxu0 0
  %3677 = vmatpush1.bf16.msra.mxu0 %v3644
  %3678 = vmatprep.subr.bf16.mxu0 0
  %3679 = vmatpush1.bf16.msra.mxu0 %v3645
  %3680 = vmatprep.subr.bf16.mxu0 0
  %3681 = vmatpush1.bf16.msra.mxu0 %v3646
  %3682 = vmatprep.subr.bf16.mxu0 0
  %3683 = vmatpush1.bf16.msra.mxu0 %v3647
  %3684 = vmatprep.subr.bf16.mxu0 0
  %3685 = vmatpush1.bf16.msra.mxu0 %v3648
  %3686 = vmatprep.subr.bf16.mxu0 0
  %3687 = vmatpush1.bf16.msra.mxu0 %v3649
  %3688 = vmatprep.subr.bf16.mxu0 0
  %3689 = vmatpush1.bf16.msra.mxu0 %v3650
  %3690 = vmatprep.subr.bf16.mxu0 0
  %3691 = vmatpush1.bf16.msra.mxu0 %v3651
  %3692 = vmatprep.subr.bf16.mxu0 0
  %3693 = vmatpush1.bf16.msra.mxu0 %v3652
  %3694 = vmatprep.subr.bf16.mxu0 0
  %3695 = vmatpush1.bf16.msra.mxu0 %v3653
  %3696 = vmatprep.subr.bf16.mxu0 0
  %3697 = vmatpush1.bf16.msra.mxu0 %v3654
  %3698 = vmatprep.subr.bf16.mxu0 0
  %3699 = vmatpush1.bf16.msra.mxu0 %v3655
  %3700 = vmatprep.subr.bf16.mxu0 0
  %3701 = vmatpush1.bf16.msra.mxu0 %v3656
  %3702 = vmatprep.subr.bf16.mxu0 0
  %3703 = vmatpush1.bf16.msra.mxu0 %v3657
  %3704 = vmatprep.subr.bf16.mxu0 0
  %3705 = vmatpush1.bf16.msra.mxu0 %v3658
  %3706 = vmatprep.subr.bf16.mxu0 0
  %3707 = vmatpush1.bf16.msra.mxu0 %v3659
  %3708 = vmatprep.mubr.bf16.mxu0 %v3534
  %3709 = vmatmul.mubr.bf16.gmra.mrb[0].mxu0 %v3533
  %v3710 = vpop.f32.mrb[0].mxu0
  %v3711 = vadd.f32 0.0, %v3710
  %v3712 = vpop.f32.mrb[0].mxu0
  %v3713 = vpop.f32.mrb[0].mxu0
  %v3714 = vadd.f32 0.0, %v3713
  %v3715 = vpop.f32.mrb[0].mxu0
  %3716 = vmatprep.mubr.bf16.mxu0 %v3536
  %3717 = vmatmul.mubr.bf16.gmra.mrb[0].mxu0 %v3535
  %v3718 = vpop.f32.mrb[0].mxu0
  %v3719 = vadd.f32 0.0, %v3718
  %v3720 = vpop.f32.mrb[0].mxu0
  %v3721 = vpop.f32.mrb[0].mxu0
  %v3722 = vadd.f32 0.0, %v3721
  %v3723 = vpop.f32.mrb[0].mxu0
  %3724 = vmatprep.mubr.bf16.mxu0 %v3538
  %3725 = vmatmul.mubr.bf16.gmra.mrb[0].mxu0 %v3537
  %v3726 = vpop.f32.mrb[0].mxu0
  %v3727 = vadd.f32 0.0, %v3726
  %v3728 = vpop.f32.mrb[0].mxu0
  %v3729 = vpop.f32.mrb[0].mxu0
  %v3730 = vadd.f32 0.0, %v3729
  %v3731 = vpop.f32.mrb[0].mxu0
  %3732 = vmatprep.mubr.bf16.mxu0 %v3540
  %3733 = vmatmul.mubr.bf16.gmra.mrb[0].mxu0 %v3539
  %v3734 = vpop.f32.mrb[0].mxu0
  %v3735 = vadd.f32 0.0, %v3734
  %v3736 = vpop.f32.mrb[0].mxu0
  %v3737 = vpop.f32.mrb[0].mxu0
  %v3738 = vadd.f32 0.0, %v3737
  %v3739 = vpop.f32.mrb[0].mxu0
  %3740 = vmatprep.mubr.bf16.mxu0 %v3542
  %3741 = vmatmul.mubr.bf16.gmra.mrb[0].mxu0 %v3541
  %v3742 = vpop.f32.mrb[0].mxu0
  %v3743 = vadd.f32 0.0, %v3742
  %v3744 = vpop.f32.mrb[0].mxu0
  %v3745 = vpop.f32.mrb[0].mxu0
  %v3746 = vadd.f32 0.0, %v3745
  %v3747 = vpop.f32.mrb[0].mxu0
  %3748 = vmatprep.mubr.bf16.mxu0 %v3544
  %3749 = vmatmul.mubr.bf16.gmra.mrb[0].mxu0 %v3543
  %v3750 = vpop.f32.mrb[0].mxu0
  %v3751 = vadd.f32 0.0, %v3750
  %v3752 = vpop.f32.mrb[0].mxu0
  %v3753 = vpop.f32.mrb[0].mxu0
  %v3754 = vadd.f32 0.0, %v3753
  %v3755 = vpop.f32.mrb[0].mxu0
  %3756 = vmatprep.mubr.bf16.mxu0 %v3546
  %3757 = vmatmul.mubr.bf16.gmra.mrb[0].mxu0 %v3545
  %v3758 = vpop.f32.mrb[0].mxu0
  %v3759 = vadd.f32 0.0, %v3758
  %v3760 = vpop.f32.mrb[0].mxu0
  %v3761 = vpop.f32.mrb[0].mxu0
  %v3762 = vadd.f32 0.0, %v3761
  %v3763 = vpop.f32.mrb[0].mxu0
  %3764 = vdwg.mxu0
  %v3797 = vunpack.c.l.b16 %v3500
  %v3798 = vunpack.c.l.b16 %v3501
  %v3799 = vunpack.c.l.b16 %v3502
  %v3800 = vunpack.c.l.b16 %v3503
  %v3801 = vunpack.c.l.b16 %v3504
  %v3802 = vunpack.c.l.b16 %v3505
  %v3803 = vunpack.c.l.b16 %v3506
  %v3804 = vunpack.c.l.b16 %v3507
  %v3805 = vunpack.c.l.b16 %v3508
  %v3806 = vunpack.c.l.b16 %v3509
  %v3807 = vunpack.c.l.b16 %v3510
  %v3808 = vunpack.c.l.b16 %v3511
  %v3809 = vunpack.c.l.b16 %v3512
  %v3810 = vunpack.c.l.b16 %v3513
  %v3811 = vunpack.c.l.b16 %v3514
  %v3812 = vunpack.c.l.b16 %v3515
  %v3813 = vunpack.c.l.b16 %v3516
  %v3814 = vunpack.c.l.b16 %v3517
  %v3815 = vunpack.c.l.b16 %v3518
  %v3816 = vunpack.c.l.b16 %v3519
  %v3817 = vunpack.c.l.b16 %v3520
  %v3818 = vunpack.c.l.b16 %v3521
  %v3819 = vunpack.c.l.b16 %v3522
  %v3820 = vunpack.c.l.b16 %v3523
  %v3821 = vunpack.c.l.b16 %v3524
  %v3822 = vunpack.c.l.b16 %v3525
  %v3823 = vunpack.c.l.b16 %v3526
  %v3824 = vunpack.c.l.b16 %v3527
  %v3825 = vunpack.c.l.b16 %v3528
  %v3826 = vunpack.c.l.b16 %v3529
  %v3827 = vunpack.c.l.b16 %v3530
  %v3828 = vunpack.c.l.b16 %v3531
  %v3829 = vpack.c.b16 %v3798, %v3797
  %v3830 = vpack.c.b16 %v3800, %v3799
  %v3831 = vpack.c.b16 %v3802, %v3801
  %v3832 = vpack.c.b16 %v3804, %v3803
  %v3833 = vpack.c.b16 %v3806, %v3805
  %v3834 = vpack.c.b16 %v3808, %v3807
  %v3835 = vpack.c.b16 %v3810, %v3809
  %v3836 = vpack.c.b16 %v3812, %v3811
  %v3837 = vpack.c.b16 %v3814, %v3813
  %v3838 = vpack.c.b16 %v3816, %v3815
  %v3839 = vpack.c.b16 %v3818, %v3817
  %v3840 = vpack.c.b16 %v3820, %v3819
  %v3841 = vpack.c.b16 %v3822, %v3821
  %v3842 = vpack.c.b16 %v3824, %v3823
  %v3843 = vpack.c.b16 %v3826, %v3825
  %v3844 = vpack.c.b16 %v3828, %v3827
  %3861 = vmatprep.subr.bf16.mxu0 0
  %3862 = vmatpush1.bf16.msra.mxu0 %v3829
  %3863 = vmatprep.subr.bf16.mxu0 0
  %3864 = vmatpush1.bf16.msra.mxu0 %v3830
  %3865 = vmatprep.subr.bf16.mxu0 0
  %3866 = vmatpush1.bf16.msra.mxu0 %v3831
  %3867 = vmatprep.subr.bf16.mxu0 0
  %3868 = vmatpush1.bf16.msra.mxu0 %v3832
  %3869 = vmatprep.subr.bf16.mxu0 0
  %3870 = vmatpush1.bf16.msra.mxu0 %v3833
  %3871 = vmatprep.subr.bf16.mxu0 0
  %3872 = vmatpush1.bf16.msra.mxu0 %v3834
  %3873 = vmatprep.subr.bf16.mxu0 0
  %3874 = vmatpush1.bf16.msra.mxu0 %v3835
  %3875 = vmatprep.subr.bf16.mxu0 0
  %3876 = vmatpush1.bf16.msra.mxu0 %v3836
  %3877 = vmatprep.subr.bf16.mxu0 0
  %3878 = vmatpush1.bf16.msra.mxu0 %v3837
  %3879 = vmatprep.subr.bf16.mxu0 0
  %3880 = vmatpush1.bf16.msra.mxu0 %v3838
  %3881 = vmatprep.subr.bf16.mxu0 0
  %3882 = vmatpush1.bf16.msra.mxu0 %v3839
  %3883 = vmatprep.subr.bf16.mxu0 0
  %3884 = vmatpush1.bf16.msra.mxu0 %v3840
  %3885 = vmatprep.subr.bf16.mxu0 0
  %3886 = vmatpush1.bf16.msra.mxu0 %v3841
  %3887 = vmatprep.subr.bf16.mxu0 0
  %3888 = vmatpush1.bf16.msra.mxu0 %v3842
  %3889 = vmatprep.subr.bf16.mxu0 0
  %3890 = vmatpush1.bf16.msra.mxu0 %v3843
  %3891 = vmatprep.subr.bf16.mxu0 0
  %3892 = vmatpush1.bf16.msra.mxu0 %v3844
  %3893 = vmatprep.mubr.bf16.mxu0 %v3487
  %3894 = vmatmul.mubr.bf16.gmra.mrb[0].mxu0 %v3486
  %v3895 = vpop.f32.mrb[0].mxu0
  %v3896 = vadd.f32 %v3711, %v3895
  %v3897 = vpop.f32.mrb[0].mxu0
  %v3898 = vpop.f32.mrb[0].mxu0
  %v3899 = vadd.f32 %v3714, %v3898
  %v3900 = vpop.f32.mrb[0].mxu0
  %3901 = vmatprep.mubr.bf16.mxu0 %v3489
  %3902 = vmatmul.mubr.bf16.gmra.mrb[0].mxu0 %v3488
  %v3903 = vpop.f32.mrb[0].mxu0
  %v3904 = vadd.f32 %v3719, %v3903
  %v3905 = vpop.f32.mrb[0].mxu0
  %v3906 = vpop.f32.mrb[0].mxu0
  %v3907 = vadd.f32 %v3722, %v3906
  %v3908 = vpop.f32.mrb[0].mxu0
  %3909 = vmatprep.mubr.bf16.mxu0 %v3491
  %3910 = vmatmul.mubr.bf16.gmra.mrb[0].mxu0 %v3490
  %v3911 = vpop.f32.mrb[0].mxu0
  %v3912 = vadd.f32 %v3727, %v3911
  %v3913 = vpop.f32.mrb[0].mxu0
  %v3914 = vpop.f32.mrb[0].mxu0
  %v3915 = vadd.f32 %v3730, %v3914
  %v3916 = vpop.f32.mrb[0].mxu0
  %3917 = vmatprep.mubr.bf16.mxu0 %v3493
  %3918 = vmatmul.mubr.bf16.gmra.mrb[0].mxu0 %v3492
  %v3919 = vpop.f32.mrb[0].mxu0
  %v3920 = vadd.f32 %v3735, %v3919
  %v3921 = vpop.f32.mrb[0].mxu0
  %v3922 = vpop.f32.mrb[0].mxu0
  %v3923 = vadd.f32 %v3738, %v3922
  %v3924 = vpop.f32.mrb[0].mxu0
  %3925 = vmatprep.mubr.bf16.mxu0 %v3495
  %3926 = vmatmul.mubr.bf16.gmra.mrb[0].mxu0 %v3494
  %v3927 = vpop.f32.mrb[0].mxu0
  %v3928 = vadd.f32 %v3743, %v3927
  %v3929 = vpop.f32.mrb[0].mxu0
  %v3930 = vpop.f32.mrb[0].mxu0
  %v3931 = vadd.f32 %v3746, %v3930
  %v3932 = vpop.f32.mrb[0].mxu0
  %3933 = vmatprep.mubr.bf16.mxu0 %v3497
  %3934 = vmatmul.mubr.bf16.gmra.mrb[0].mxu0 %v3496
  %v3935 = vpop.f32.mrb[0].mxu0
  %v3936 = vadd.f32 %v3751, %v3935
  %v3937 = vpop.f32.mrb[0].mxu0
  %v3938 = vpop.f32.mrb[0].mxu0
  %v3939 = vadd.f32 %v3754, %v3938
  %v3940 = vpop.f32.mrb[0].mxu0
  %3941 = vmatprep.mubr.bf16.mxu0 %v3499
  %3942 = vmatmul.mubr.bf16.gmra.mrb[0].mxu0 %v3498
  %v3943 = vpop.f32.mrb[0].mxu0
  %v3944 = vadd.f32 %v3759, %v3943
  %v3945 = vpop.f32.mrb[0].mxu0
  %v3946 = vpop.f32.mrb[0].mxu0
  %v3947 = vadd.f32 %v3762, %v3946
  %v3948 = vpop.f32.mrb[0].mxu0
  %3949 = vdwg.mxu0
  %v3950 = vld [vmem:[%s529] sm:$0xff]
  %v3951 = vld [vmem:[%s529 + $0x8] sm:$0xff]
  %v3952 = vld [vmem:[%s529 + $0x10] sm:$0xff]
  %v3953 = vld [vmem:[%s529 + $0x18] sm:$0xff]
  %v3954 = vld [vmem:[%s529 + $0x20] sm:$0xff]
  %v3955 = vld [vmem:[%s529 + $0x28] sm:$0xff]
  %v3956 = vld [vmem:[%s529 + $0x30] sm:$0xff]
  %v3957 = vld [vmem:[%s529 + $0x38] sm:$0xff]
  %v3958 = vld [vmem:[%s529 + $0x40] sm:$0xff]
  %v3959 = vld [vmem:[%s529 + $0x48] sm:$0xff]
  %v3960 = vld [vmem:[%s529 + $0x50] sm:$0xff]
  %v3961 = vld [vmem:[%s529 + $0x58] sm:$0xff]
  %v3962 = vld [vmem:[%s529 + $0x60] sm:$0xff]
  %v3963 = vld [vmem:[%s529 + $0x68] sm:$0xff]
  %s3964 = scalar_lea.vmem %s3, 256
  %v3965 = vld [vmem:[%s3964] sm:$0xf]
  %v3966 = vld [vmem:[%s3964 + $0x4] sm:$0xf]
  %v3967 = vld [vmem:[%s3964 + $0x8] sm:$0xf]
  %v3968 = vld [vmem:[%s3964 + $0xc] sm:$0xf]
  %v3969 = vld [vmem:[%s3964 + $0x10] sm:$0xf]
  %v3970 = vld [vmem:[%s3964 + $0x14] sm:$0xf]
  %v3971 = vld [vmem:[%s3964 + $0x18] sm:$0xf]
  %v3972 = vld [vmem:[%s3964 + $0x1c] sm:$0xf]
  %v3973 = vld [vmem:[%s3964 + $0x20] sm:$0xf]
  %v3974 = vld [vmem:[%s3964 + $0x24] sm:$0xf]
  %v3975 = vld [vmem:[%s3964 + $0x28] sm:$0xf]
  %v3976 = vld [vmem:[%s3964 + $0x2c] sm:$0xf]
  %v3977 = vld [vmem:[%s3964 + $0x30] sm:$0xf]
  %v3978 = vld [vmem:[%s3964 + $0x34] sm:$0xf]
  %v3979 = vld [vmem:[%s3964 + $0x38] sm:$0xf]
  %v3980 = vld [vmem:[%s3964 + $0x3c] sm:$0xf]
  %v3981 = vld [vmem:[%s3964 + $0x40] sm:$0xf]
  %v3982 = vld [vmem:[%s3964 + $0x44] sm:$0xf]
  %v3983 = vld [vmem:[%s3964 + $0x48] sm:$0xf]
  %v3984 = vld [vmem:[%s3964 + $0x4c] sm:$0xf]
  %v3985 = vld [vmem:[%s3964 + $0x50] sm:$0xf]
  %v3986 = vld [vmem:[%s3964 + $0x54] sm:$0xf]
  %v3987 = vld [vmem:[%s3964 + $0x58] sm:$0xf]
  %v3988 = vld [vmem:[%s3964 + $0x5c] sm:$0xf]
  %v3989 = vld [vmem:[%s3964 + $0x60] sm:$0xf]
  %v3990 = vld [vmem:[%s3964 + $0x64] sm:$0xf]
  %v3991 = vld [vmem:[%s3964 + $0x68] sm:$0xf]
  %v3992 = vld [vmem:[%s3964 + $0x6c] sm:$0xf]
  %v3993 = vld [vmem:[%s3964 + $0x70] sm:$0xf]
  %v3994 = vld [vmem:[%s3964 + $0x74] sm:$0xf]
  %v3995 = vld [vmem:[%s3964 + $0x78] sm:$0xf]
  %v3996 = vld [vmem:[%s3964 + $0x7c] sm:$0xf]
  %v4029 = vunpack.c.l.b16 %v3965
  %v4030 = vunpack.c.l.b16 %v3966
  %v4031 = vunpack.c.l.b16 %v3967
  %v4032 = vunpack.c.l.b16 %v3968
  %v4033 = vunpack.c.l.b16 %v3969
  %v4034 = vunpack.c.l.b16 %v3970
  %v4035 = vunpack.c.l.b16 %v3971
  %v4036 = vunpack.c.l.b16 %v3972
  %v4037 = vunpack.c.l.b16 %v3973
  %v4038 = vunpack.c.l.b16 %v3974
  %v4039 = vunpack.c.l.b16 %v3975
  %v4040 = vunpack.c.l.b16 %v3976
  %v4041 = vunpack.c.l.b16 %v3977
  %v4042 = vunpack.c.l.b16 %v3978
  %v4043 = vunpack.c.l.b16 %v3979
  %v4044 = vunpack.c.l.b16 %v3980
  %v4045 = vunpack.c.l.b16 %v3981
  %v4046 = vunpack.c.l.b16 %v3982
  %v4047 = vunpack.c.l.b16 %v3983
  %v4048 = vunpack.c.l.b16 %v3984
  %v4049 = vunpack.c.l.b16 %v3985
  %v4050 = vunpack.c.l.b16 %v3986
  %v4051 = vunpack.c.l.b16 %v3987
  %v4052 = vunpack.c.l.b16 %v3988
  %v4053 = vunpack.c.l.b16 %v3989
  %v4054 = vunpack.c.l.b16 %v3990
  %v4055 = vunpack.c.l.b16 %v3991
  %v4056 = vunpack.c.l.b16 %v3992
  %v4057 = vunpack.c.l.b16 %v3993
  %v4058 = vunpack.c.l.b16 %v3994
  %v4059 = vunpack.c.l.b16 %v3995
  %v4060 = vunpack.c.l.b16 %v3996
  %v4061 = vpack.c.b16 %v4030, %v4029
  %v4062 = vpack.c.b16 %v4032, %v4031
  %v4063 = vpack.c.b16 %v4034, %v4033
  %v4064 = vpack.c.b16 %v4036, %v4035
  %v4065 = vpack.c.b16 %v4038, %v4037
  %v4066 = vpack.c.b16 %v4040, %v4039
  %v4067 = vpack.c.b16 %v4042, %v4041
  %v4068 = vpack.c.b16 %v4044, %v4043
  %v4069 = vpack.c.b16 %v4046, %v4045
  %v4070 = vpack.c.b16 %v4048, %v4047
  %v4071 = vpack.c.b16 %v4050, %v4049
  %v4072 = vpack.c.b16 %v4052, %v4051
  %v4073 = vpack.c.b16 %v4054, %v4053
  %v4074 = vpack.c.b16 %v4056, %v4055
  %v4075 = vpack.c.b16 %v4058, %v4057
  %v4076 = vpack.c.b16 %v4060, %v4059
  %4093 = vmatprep.subr.bf16.mxu0 0
  %4094 = vmatpush1.bf16.msra.mxu0 %v4061
  %4095 = vmatprep.subr.bf16.mxu0 0
  %4096 = vmatpush1.bf16.msra.mxu0 %v4062
  %4097 = vmatprep.subr.bf16.mxu0 0
  %4098 = vmatpush1.bf16.msra.mxu0 %v4063
  %4099 = vmatprep.subr.bf16.mxu0 0
  %4100 = vmatpush1.bf16.msra.mxu0 %v4064
  %4101 = vmatprep.subr.bf16.mxu0 0
  %4102 = vmatpush1.bf16.msra.mxu0 %v4065
  %4103 = vmatprep.subr.bf16.mxu0 0
  %4104 = vmatpush1.bf16.msra.mxu0 %v4066
  %4105 = vmatprep.subr.bf16.mxu0 0
  %4106 = vmatpush1.bf16.msra.mxu0 %v4067
  %4107 = vmatprep.subr.bf16.mxu0 0
  %4108 = vmatpush1.bf16.msra.mxu0 %v4068
  %4109 = vmatprep.subr.bf16.mxu0 0
  %4110 = vmatpush1.bf16.msra.mxu0 %v4069
  %4111 = vmatprep.subr.bf16.mxu0 0
  %4112 = vmatpush1.bf16.msra.mxu0 %v4070
  %4113 = vmatprep.subr.bf16.mxu0 0
  %4114 = vmatpush1.bf16.msra.mxu0 %v4071
  %4115 = vmatprep.subr.bf16.mxu0 0
  %4116 = vmatpush1.bf16.msra.mxu0 %v4072
  %4117 = vmatprep.subr.bf16.mxu0 0
  %4118 = vmatpush1.bf16.msra.mxu0 %v4073
  %4119 = vmatprep.subr.bf16.mxu0 0
  %4120 = vmatpush1.bf16.msra.mxu0 %v4074
  %4121 = vmatprep.subr.bf16.mxu0 0
  %4122 = vmatpush1.bf16.msra.mxu0 %v4075
  %4123 = vmatprep.subr.bf16.mxu0 0
  %4124 = vmatpush1.bf16.msra.mxu0 %v4076
  %4125 = vmatprep.mubr.bf16.mxu0 %v3951
  %4126 = vmatmul.mubr.bf16.gmra.mrb[0].mxu0 %v3950
  %v4127 = vpop.f32.mrb[0].mxu0
  %v4128 = vadd.f32 0.0, %v4127
  %v4129 = vpop.f32.mrb[0].mxu0
  %v4130 = vpop.f32.mrb[0].mxu0
  %v4131 = vadd.f32 0.0, %v4130
  %v4132 = vpop.f32.mrb[0].mxu0
  %4133 = vmatprep.mubr.bf16.mxu0 %v3953
  %4134 = vmatmul.mubr.bf16.gmra.mrb[0].mxu0 %v3952
  %v4135 = vpop.f32.mrb[0].mxu0
  %v4136 = vadd.f32 0.0, %v4135
  %v4137 = vpop.f32.mrb[0].mxu0
  %v4138 = vpop.f32.mrb[0].mxu0
  %v4139 = vadd.f32 0.0, %v4138
  %v4140 = vpop.f32.mrb[0].mxu0
  %4141 = vmatprep.mubr.bf16.mxu0 %v3955
  %4142 = vmatmul.mubr.bf16.gmra.mrb[0].mxu0 %v3954
  %v4143 = vpop.f32.mrb[0].mxu0
  %v4144 = vadd.f32 0.0, %v4143
  %v4145 = vpop.f32.mrb[0].mxu0
  %v4146 = vpop.f32.mrb[0].mxu0
  %v4147 = vadd.f32 0.0, %v4146
  %v4148 = vpop.f32.mrb[0].mxu0
  %4149 = vmatprep.mubr.bf16.mxu0 %v3957
  %4150 = vmatmul.mubr.bf16.gmra.mrb[0].mxu0 %v3956
  %v4151 = vpop.f32.mrb[0].mxu0
  %v4152 = vadd.f32 0.0, %v4151
  %v4153 = vpop.f32.mrb[0].mxu0
  %v4154 = vpop.f32.mrb[0].mxu0
  %v4155 = vadd.f32 0.0, %v4154
  %v4156 = vpop.f32.mrb[0].mxu0
  %4157 = vmatprep.mubr.bf16.mxu0 %v3959
  %4158 = vmatmul.mubr.bf16.gmra.mrb[0].mxu0 %v3958
  %v4159 = vpop.f32.mrb[0].mxu0
  %v4160 = vadd.f32 0.0, %v4159
  %v4161 = vpop.f32.mrb[0].mxu0
  %v4162 = vpop.f32.mrb[0].mxu0
  %v4163 = vadd.f32 0.0, %v4162
  %v4164 = vpop.f32.mrb[0].mxu0
  %4165 = vmatprep.mubr.bf16.mxu0 %v3961
  %4166 = vmatmul.mubr.bf16.gmra.mrb[0].mxu0 %v3960
  %v4167 = vpop.f32.mrb[0].mxu0
  %v4168 = vadd.f32 0.0, %v4167
  %v4169 = vpop.f32.mrb[0].mxu0
  %v4170 = vpop.f32.mrb[0].mxu0
  %v4171 = vadd.f32 0.0, %v4170
  %v4172 = vpop.f32.mrb[0].mxu0
  %4173 = vmatprep.mubr.bf16.mxu0 %v3963
  %4174 = vmatmul.mubr.bf16.gmra.mrb[0].mxu0 %v3962
  %v4175 = vpop.f32.mrb[0].mxu0
  %v4176 = vadd.f32 0.0, %v4175
  %v4177 = vpop.f32.mrb[0].mxu0
  %v4178 = vpop.f32.mrb[0].mxu0
  %v4179 = vadd.f32 0.0, %v4178
  %v4180 = vpop.f32.mrb[0].mxu0
  %4181 = vdwg.mxu0
  %v4182 = vadd.f32 %v3896, %v4128
  %v4183 = vadd.f32 %v3899, %v4131
  %v4184 = vadd.f32 %v3904, %v4136
  %v4185 = vadd.f32 %v3907, %v4139
  %v4186 = vadd.f32 %v3912, %v4144
  %v4187 = vadd.f32 %v3915, %v4147
  %v4188 = vadd.f32 %v3920, %v4152
  %v4189 = vadd.f32 %v3923, %v4155
  %v4190 = vadd.f32 %v3928, %v4160
  %v4191 = vadd.f32 %v3931, %v4163
  %v4192 = vadd.f32 %v3936, %v4168
  %v4193 = vadd.f32 %v3939, %v4171
  %v4194 = vadd.f32 %v3944, %v4176
  %v4195 = vadd.f32 %v3947, %v4179
  %s4196 = scalar_lea.vmem [#allocation2], 144
  %v4197 = vld [vmem:[%s4196] sm:$0xff]
  %v4198 = vld [vmem:[%s4196 + $0x8] sm:$0xff]
  %v4199 = vld [vmem:[%s4196 + $0x10] sm:$0xff]
  %v4200 = vld [vmem:[%s4196 + $0x18] sm:$0xff]
  %v4201 = vld [vmem:[%s4196 + $0x20] sm:$0xff]
  %v4202 = vld [vmem:[%s4196 + $0x28] sm:$0xff]
  %v4203 = vld [vmem:[%s4196 + $0x30] sm:$0xff]
  %v4204 = vld [vmem:[%s4196 + $0x38] sm:$0xff]
  %v4205 = vld [vmem:[%s4196 + $0x40] sm:$0xff]
  %v4206 = vld [vmem:[%s4196 + $0x48] sm:$0xff]
  %v4207 = vld [vmem:[%s4196 + $0x50] sm:$0xff]
  %v4208 = vld [vmem:[%s4196 + $0x58] sm:$0xff]
  %v4209 = vld [vmem:[%s4196 + $0x60] sm:$0xff]
  %v4210 = vld [vmem:[%s4196 + $0x68] sm:$0xff]
  %s4211 = scalar_lea.vmem %s3, 384
  %v4212 = vld [vmem:[%s4211] sm:$0xf]
  %v4213 = vld [vmem:[%s4211 + $0x4] sm:$0xf]
  %v4214 = vld [vmem:[%s4211 + $0x8] sm:$0xf]
  %v4215 = vld [vmem:[%s4211 + $0xc] sm:$0xf]
  %v4216 = vld [vmem:[%s4211 + $0x10] sm:$0xf]
  %v4217 = vld [vmem:[%s4211 + $0x14] sm:$0xf]
  %v4218 = vld [vmem:[%s4211 + $0x18] sm:$0xf]
  %v4219 = vld [vmem:[%s4211 + $0x1c] sm:$0xf]
  %v4220 = vld [vmem:[%s4211 + $0x20] sm:$0xf]
  %v4221 = vld [vmem:[%s4211 + $0x24] sm:$0xf]
  %v4222 = vld [vmem:[%s4211 + $0x28] sm:$0xf]
  %v4223 = vld [vmem:[%s4211 + $0x2c] sm:$0xf]
  %v4224 = vld [vmem:[%s4211 + $0x30] sm:$0xf]
  %v4225 = vld [vmem:[%s4211 + $0x34] sm:$0xf]
  %v4226 = vld [vmem:[%s4211 + $0x38] sm:$0xf]
  %v4227 = vld [vmem:[%s4211 + $0x3c] sm:$0xf]
  %v4228 = vld [vmem:[%s4211 + $0x40] sm:$0xf]
  %v4229 = vld [vmem:[%s4211 + $0x44] sm:$0xf]
  %v4230 = vld [vmem:[%s4211 + $0x48] sm:$0xf]
  %v4231 = vld [vmem:[%s4211 + $0x4c] sm:$0xf]
  %v4232 = vld [vmem:[%s4211 + $0x50] sm:$0xf]
  %v4233 = vld [vmem:[%s4211 + $0x54] sm:$0xf]
  %v4234 = vld [vmem:[%s4211 + $0x58] sm:$0xf]
  %v4235 = vld [vmem:[%s4211 + $0x5c] sm:$0xf]
  %v4236 = vld [vmem:[%s4211 + $0x60] sm:$0xf]
  %v4237 = vld [vmem:[%s4211 + $0x64] sm:$0xf]
  %v4238 = vld [vmem:[%s4211 + $0x68] sm:$0xf]
  %v4239 = vld [vmem:[%s4211 + $0x6c] sm:$0xf]
  %v4240 = vld [vmem:[%s4211 + $0x70] sm:$0xf]
  %v4241 = vld [vmem:[%s4211 + $0x74] sm:$0xf]
  %v4242 = vld [vmem:[%s4211 + $0x78] sm:$0xf]
  %v4243 = vld [vmem:[%s4211 + $0x7c] sm:$0xf]
  %v4276 = vunpack.c.l.b16 %v4212
  %v4277 = vunpack.c.l.b16 %v4213
  %v4278 = vunpack.c.l.b16 %v4214
  %v4279 = vunpack.c.l.b16 %v4215
  %v4280 = vunpack.c.l.b16 %v4216
  %v4281 = vunpack.c.l.b16 %v4217
  %v4282 = vunpack.c.l.b16 %v4218
  %v4283 = vunpack.c.l.b16 %v4219
  %v4284 = vunpack.c.l.b16 %v4220
  %v4285 = vunpack.c.l.b16 %v4221
  %v4286 = vunpack.c.l.b16 %v4222
  %v4287 = vunpack.c.l.b16 %v4223
  %v4288 = vunpack.c.l.b16 %v4224
  %v4289 = vunpack.c.l.b16 %v4225
  %v4290 = vunpack.c.l.b16 %v4226
  %v4291 = vunpack.c.l.b16 %v4227
  %v4292 = vunpack.c.l.b16 %v4228
  %v4293 = vunpack.c.l.b16 %v4229
  %v4294 = vunpack.c.l.b16 %v4230
  %v4295 = vunpack.c.l.b16 %v4231
  %v4296 = vunpack.c.l.b16 %v4232
  %v4297 = vunpack.c.l.b16 %v4233
  %v4298 = vunpack.c.l.b16 %v4234
  %v4299 = vunpack.c.l.b16 %v4235
  %v4300 = vunpack.c.l.b16 %v4236
  %v4301 = vunpack.c.l.b16 %v4237
  %v4302 = vunpack.c.l.b16 %v4238
  %v4303 = vunpack.c.l.b16 %v4239
  %v4304 = vunpack.c.l.b16 %v4240
  %v4305 = vunpack.c.l.b16 %v4241
  %v4306 = vunpack.c.l.b16 %v4242
  %v4307 = vunpack.c.l.b16 %v4243
  %v4308 = vpack.c.b16 %v4277, %v4276
  %v4309 = vpack.c.b16 %v4279, %v4278
  %v4310 = vpack.c.b16 %v4281, %v4280
  %v4311 = vpack.c.b16 %v4283, %v4282
  %v4312 = vpack.c.b16 %v4285, %v4284
  %v4313 = vpack.c.b16 %v4287, %v4286
  %v4314 = vpack.c.b16 %v4289, %v4288
  %v4315 = vpack.c.b16 %v4291, %v4290
  %v4316 = vpack.c.b16 %v4293, %v4292
  %v4317 = vpack.c.b16 %v4295, %v4294
  %v4318 = vpack.c.b16 %v4297, %v4296
  %v4319 = vpack.c.b16 %v4299, %v4298
  %v4320 = vpack.c.b16 %v4301, %v4300
  %v4321 = vpack.c.b16 %v4303, %v4302
  %v4322 = vpack.c.b16 %v4305, %v4304
  %v4323 = vpack.c.b16 %v4307, %v4306
  %4340 = vmatprep.subr.bf16.mxu0 0
  %4341 = vmatpush1.bf16.msra.mxu0 %v4308
  %4342 = vmatprep.subr.bf16.mxu0 0
  %4343 = vmatpush1.bf16.msra.mxu0 %v4309
  %4344 = vmatprep.subr.bf16.mxu0 0
  %4345 = vmatpush1.bf16.msra.mxu0 %v4310
  %4346 = vmatprep.subr.bf16.mxu0 0
  %4347 = vmatpush1.bf16.msra.mxu0 %v4311
  %4348 = vmatprep.subr.bf16.mxu0 0
  %4349 = vmatpush1.bf16.msra.mxu0 %v4312
  %4350 = vmatprep.subr.bf16.mxu0 0
  %4351 = vmatpush1.bf16.msra.mxu0 %v4313
  %4352 = vmatprep.subr.bf16.mxu0 0
  %4353 = vmatpush1.bf16.msra.mxu0 %v4314
  %4354 = vmatprep.subr.bf16.mxu0 0
  %4355 = vmatpush1.bf16.msra.mxu0 %v4315
  %4356 = vmatprep.subr.bf16.mxu0 0
  %4357 = vmatpush1.bf16.msra.mxu0 %v4316
  %4358 = vmatprep.subr.bf16.mxu0 0
  %4359 = vmatpush1.bf16.msra.mxu0 %v4317
  %4360 = vmatprep.subr.bf16.mxu0 0
  %4361 = vmatpush1.bf16.msra.mxu0 %v4318
  %4362 = vmatprep.subr.bf16.mxu0 0
  %4363 = vmatpush1.bf16.msra.mxu0 %v4319
  %4364 = vmatprep.subr.bf16.mxu0 0
  %4365 = vmatpush1.bf16.msra.mxu0 %v4320
  %4366 = vmatprep.subr.bf16.mxu0 0
  %4367 = vmatpush1.bf16.msra.mxu0 %v4321
  %4368 = vmatprep.subr.bf16.mxu0 0
  %4369 = vmatpush1.bf16.msra.mxu0 %v4322
  %4370 = vmatprep.subr.bf16.mxu0 0
  %4371 = vmatpush1.bf16.msra.mxu0 %v4323
  %4372 = vmatprep.mubr.bf16.mxu0 %v4198
  %4373 = vmatmul.mubr.bf16.gmra.mrb[0].mxu0 %v4197
  %v4374 = vpop.f32.mrb[0].mxu0
  %v4375 = vadd.f32 0.0, %v4374
  %v4376 = vpop.f32.mrb[0].mxu0
  %v4377 = vpop.f32.mrb[0].mxu0
  %v4378 = vadd.f32 0.0, %v4377
  %v4379 = vpop.f32.mrb[0].mxu0
  %4380 = vmatprep.mubr.bf16.mxu0 %v4200
  %4381 = vmatmul.mubr.bf16.gmra.mrb[0].mxu0 %v4199
  %v4382 = vpop.f32.mrb[0].mxu0
  %v4383 = vadd.f32 0.0, %v4382
  %v4384 = vpop.f32.mrb[0].mxu0
  %v4385 = vpop.f32.mrb[0].mxu0
  %v4386 = vadd.f32 0.0, %v4385
  %v4387 = vpop.f32.mrb[0].mxu0
  %4388 = vmatprep.mubr.bf16.mxu0 %v4202
  %4389 = vmatmul.mubr.bf16.gmra.mrb[0].mxu0 %v4201
  %v4390 = vpop.f32.mrb[0].mxu0
  %v4391 = vadd.f32 0.0, %v4390
  %v4392 = vpop.f32.mrb[0].mxu0
  %v4393 = vpop.f32.mrb[0].mxu0
  %v4394 = vadd.f32 0.0, %v4393
  %v4395 = vpop.f32.mrb[0].mxu0
  %4396 = vmatprep.mubr.bf16.mxu0 %v4204
  %4397 = vmatmul.mubr.bf16.gmra.mrb[0].mxu0 %v4203
  %v4398 = vpop.f32.mrb[0].mxu0
  %v4399 = vadd.f32 0.0, %v4398
  %v4400 = vpop.f32.mrb[0].mxu0
  %v4401 = vpop.f32.mrb[0].mxu0
  %v4402 = vadd.f32 0.0, %v4401
  %v4403 = vpop.f32.mrb[0].mxu0
  %4404 = vmatprep.mubr.bf16.mxu0 %v4206
  %4405 = vmatmul.mubr.bf16.gmra.mrb[0].mxu0 %v4205
  %v4406 = vpop.f32.mrb[0].mxu0
  %v4407 = vadd.f32 0.0, %v4406
  %v4408 = vpop.f32.mrb[0].mxu0
  %v4409 = vpop.f32.mrb[0].mxu0
  %v4410 = vadd.f32 0.0, %v4409
  %v4411 = vpop.f32.mrb[0].mxu0
  %4412 = vmatprep.mubr.bf16.mxu0 %v4208
  %4413 = vmatmul.mubr.bf16.gmra.mrb[0].mxu0 %v4207
  %v4414 = vpop.f32.mrb[0].mxu0
  %v4415 = vadd.f32 0.0, %v4414
  %v4416 = vpop.f32.mrb[0].mxu0
  %v4417 = vpop.f32.mrb[0].mxu0
  %v4418 = vadd.f32 0.0, %v4417
  %v4419 = vpop.f32.mrb[0].mxu0
  %4420 = vmatprep.mubr.bf16.mxu0 %v4210
  %4421 = vmatmul.mubr.bf16.gmra.mrb[0].mxu0 %v4209
  %v4422 = vpop.f32.mrb[0].mxu0
  %v4423 = vadd.f32 0.0, %v4422
  %v4424 = vpop.f32.mrb[0].mxu0
  %v4425 = vpop.f32.mrb[0].mxu0
  %v4426 = vadd.f32 0.0, %v4425
  %v4427 = vpop.f32.mrb[0].mxu0
  %4428 = vdwg.mxu0
  %v4429 = vadd.f32 %v4182, %v4375
  %v4430 = vadd.f32 %v4183, %v4378
  %v4431 = vadd.f32 %v4184, %v4383
  %v4432 = vadd.f32 %v4185, %v4386
  %v4433 = vadd.f32 %v4186, %v4391
  %v4434 = vadd.f32 %v4187, %v4394
  %v4435 = vadd.f32 %v4188, %v4399
  %v4436 = vadd.f32 %v4189, %v4402
  %v4437 = vadd.f32 %v4190, %v4407
  %v4438 = vadd.f32 %v4191, %v4410
  %v4439 = vadd.f32 %v4192, %v4415
  %v4440 = vadd.f32 %v4193, %v4418
  %v4441 = vadd.f32 %v4194, %v4423
  %v4442 = vadd.f32 %v4195, %v4426
  %v4443 = vld [vmem:[%s4] sm:$0x1]
  %v4445 = vlaneseq
  %v4446 = vshrl.u32 %v4445, 7
  %v4447 = vsub.s32 0, %v4446
  %v4448 = vrot.slane %v4443, %v4447
  %v4450 = vadd.f32 %v4429, %v4448
  %v4451 = vadd.f32 %v4430, %v4448
  %v4452 = vadd.f32 %v4431, %v4448
  %v4453 = vadd.f32 %v4432, %v4448
  %v4454 = vadd.f32 %v4433, %v4448
  %v4455 = vadd.f32 %v4434, %v4448
  %v4456 = vadd.f32 %v4435, %v4448
  %v4457 = vadd.f32 %v4436, %v4448
  %v4458 = vadd.f32 %v4437, %v4448
  %v4459 = vadd.f32 %v4438, %v4448
  %v4460 = vadd.f32 %v4439, %v4448
  %v4461 = vadd.f32 %v4440, %v4448
  %v4462 = vadd.f32 %v4441, %v4448
  %v4463 = vadd.f32 %v4442, %v4448
  %v4464 = vmul.f32 %v4450, 0.2
  %v4465 = vmul.f32 %v4451, 0.2
  %v4466 = vmul.f32 %v4452, 0.2
  %v4467 = vmul.f32 %v4453, 0.2
  %v4468 = vmul.f32 %v4454, 0.2
  %v4469 = vmul.f32 %v4455, 0.2
  %v4470 = vmul.f32 %v4456, 0.2
  %v4471 = vmul.f32 %v4457, 0.2
  %v4472 = vmul.f32 %v4458, 0.2
  %v4473 = vmul.f32 %v4459, 0.2
  %v4474 = vmul.f32 %v4460, 0.2
  %v4475 = vmul.f32 %v4461, 0.2
  %v4476 = vmul.f32 %v4462, 0.2
  %v4477 = vmul.f32 %v4463, 0.2
  %v4478 = vmax.f32 %v4450, %v4464
  %v4479 = vmax.f32 %v4451, %v4465
  %v4480 = vmax.f32 %v4452, %v4466
  %v4481 = vmax.f32 %v4453, %v4467
  %v4482 = vmax.f32 %v4454, %v4468
  %v4483 = vmax.f32 %v4455, %v4469
  %v4484 = vmax.f32 %v4456, %v4470
  %v4485 = vmax.f32 %v4457, %v4471
  %v4486 = vmax.f32 %v4458, %v4472
  %v4487 = vmax.f32 %v4459, %v4473
  %v4488 = vmax.f32 %v4460, %v4474
  %v4489 = vmax.f32 %v4461, %v4475
  %v4490 = vmax.f32 %v4462, %v4476
  %v4491 = vmax.f32 %v4463, %v4477
  %v4492 = vld [vmem:[%s5] sm:$0x1]
  %v4493 = vlaneseq
  %v4494 = vshrl.u32 %v4493, 7
  %v4495 = vsub.s32 0, %v4494
  %v4496 = vrot.slane %v4492, %v4495
  %v4497 = vmul.f32 %v4478, %v4496
  %v4498 = vmul.f32 %v4479, %v4496
  %v4499 = vadd.f32 %v4497, 0.0
  %v4500 = vadd.f32 %v4498, 0.0
  %v4501 = vld [vmem:[%s5 + $0x1] sm:$0x1]
  %v4502 = vlaneseq
  %v4503 = vshrl.u32 %v4502, 7
  %v4504 = vsub.s32 0, %v4503
  %v4505 = vrot.slane %v4501, %v4504
  %v4506 = vmul.f32 %v4480, %v4505
  %v4507 = vmul.f32 %v4481, %v4505
  %v4508 = vadd.f32 %v4499, %v4506
  %v4509 = vadd.f32 %v4500, %v4507
  %v4510 = vld [vmem:[%s5 + $0x2] sm:$0x1]
  %v4511 = vlaneseq
  %v4512 = vshrl.u32 %v4511, 7
  %v4513 = vsub.s32 0, %v4512
  %v4514 = vrot.slane %v4510, %v4513
  %v4515 = vmul.f32 %v4482, %v4514
  %v4516 = vmul.f32 %v4483, %v4514
  %v4517 = vadd.f32 %v4508, %v4515
  %v4518 = vadd.f32 %v4509, %v4516
  %v4519 = vld [vmem:[%s5 + $0x3] sm:$0x1]
  %v4520 = vlaneseq
  %v4521 = vshrl.u32 %v4520, 7
  %v4522 = vsub.s32 0, %v4521
  %v4523 = vrot.slane %v4519, %v4522
  %v4524 = vmul.f32 %v4484, %v4523
  %v4525 = vmul.f32 %v4485, %v4523
  %v4526 = vadd.f32 %v4517, %v4524
  %v4527 = vadd.f32 %v4518, %v4525
  %v4528 = vld [vmem:[%s5 + $0x4] sm:$0x1]
  %v4529 = vlaneseq
  %v4530 = vshrl.u32 %v4529, 7
  %v4531 = vsub.s32 0, %v4530
  %v4532 = vrot.slane %v4528, %v4531
  %v4533 = vmul.f32 %v4486, %v4532
  %v4534 = vmul.f32 %v4487, %v4532
  %v4535 = vadd.f32 %v4526, %v4533
  %v4536 = vadd.f32 %v4527, %v4534
  %v4537 = vld [vmem:[%s5 + $0x5] sm:$0x1]
  %v4538 = vlaneseq
  %v4539 = vshrl.u32 %v4538, 7
  %v4540 = vsub.s32 0, %v4539
  %v4541 = vrot.slane %v4537, %v4540
  %v4542 = vmul.f32 %v4488, %v4541
  %v4543 = vmul.f32 %v4489, %v4541
  %v4544 = vadd.f32 %v4535, %v4542
  %v4545 = vadd.f32 %v4536, %v4543
  %v4546 = vld [vmem:[%s5 + $0x6] sm:$0x1]
  %v4547 = vlaneseq
  %v4548 = vshrl.u32 %v4547, 7
  %v4549 = vsub.s32 0, %v4548
  %v4550 = vrot.slane %v4546, %v4549
  %v4551 = vmul.f32 %v4490, %v4550
  %v4552 = vmul.f32 %v4491, %v4550
  %v4553 = vadd.f32 %v4544, %v4551
  %v4554 = vadd.f32 %v4545, %v4552
  %v4555 = vld [vmem:[%s35] sm:$0xff]
  %v4556 = vld [vmem:[%s35 + $0x8] sm:$0xff]
  %v4557 = vld [vmem:[%s35 + $0x10] sm:$0xff]
  %v4558 = vld [vmem:[%s35 + $0x18] sm:$0xff]
  %v4559 = vld [vmem:[%s35 + $0x20] sm:$0xff]
  %v4560 = vld [vmem:[%s35 + $0x28] sm:$0xff]
  %v4561 = vld [vmem:[%s35 + $0x30] sm:$0xff]
  %v4562 = vld [vmem:[%s35 + $0x38] sm:$0xff]
  %v4563 = vld [vmem:[%s35 + $0x40] sm:$0xff]
  %v4564 = vld [vmem:[%s35 + $0x48] sm:$0xff]
  %v4565 = vld [vmem:[%s35 + $0x50] sm:$0xff]
  %v4566 = vld [vmem:[%s35 + $0x58] sm:$0xff]
  %v4567 = vld [vmem:[%s35 + $0x60] sm:$0xff]
  %v4568 = vld [vmem:[%s35 + $0x68] sm:$0xff]
  %s4569 = scalar_lea.vmem [#allocation2], 384
  %v4570 = vld [vmem:[%s4569] sm:$0xff]
  %v4571 = vld [vmem:[%s4569 + $0x8] sm:$0xff]
  %v4572 = vld [vmem:[%s4569 + $0x10] sm:$0xff]
  %v4573 = vld [vmem:[%s4569 + $0x18] sm:$0xff]
  %v4574 = vld [vmem:[%s4569 + $0x20] sm:$0xff]
  %v4575 = vld [vmem:[%s4569 + $0x28] sm:$0xff]
  %v4576 = vld [vmem:[%s4569 + $0x30] sm:$0xff]
  %v4577 = vld [vmem:[%s4569 + $0x38] sm:$0xff]
  %v4578 = vld [vmem:[%s4569 + $0x40] sm:$0xff]
  %v4579 = vld [vmem:[%s4569 + $0x48] sm:$0xff]
  %v4580 = vld [vmem:[%s4569 + $0x50] sm:$0xff]
  %v4581 = vld [vmem:[%s4569 + $0x58] sm:$0xff]
  %v4582 = vld [vmem:[%s4569 + $0x60] sm:$0xff]
  %v4583 = vld [vmem:[%s4569 + $0x68] sm:$0xff]
  %4584 = vmatprep.subr.bf16.mxu0 0
  %4585 = vmatpush1.bf16.msra.mxu0 %v3644
  %4586 = vmatprep.subr.bf16.mxu0 0
  %4587 = vmatpush1.bf16.msra.mxu0 %v3645
  %4588 = vmatprep.subr.bf16.mxu0 0
  %4589 = vmatpush1.bf16.msra.mxu0 %v3646
  %4590 = vmatprep.subr.bf16.mxu0 0
  %4591 = vmatpush1.bf16.msra.mxu0 %v3647
  %4592 = vmatprep.subr.bf16.mxu0 0
  %4593 = vmatpush1.bf16.msra.mxu0 %v3648
  %4594 = vmatprep.subr.bf16.mxu0 0
  %4595 = vmatpush1.bf16.msra.mxu0 %v3649
  %4596 = vmatprep.subr.bf16.mxu0 0
  %4597 = vmatpush1.bf16.msra.mxu0 %v3650
  %4598 = vmatprep.subr.bf16.mxu0 0
  %4599 = vmatpush1.bf16.msra.mxu0 %v3651
  %4600 = vmatprep.subr.bf16.mxu0 0
  %4601 = vmatpush1.bf16.msra.mxu0 %v3652
  %4602 = vmatprep.subr.bf16.mxu0 0
  %4603 = vmatpush1.bf16.msra.mxu0 %v3653
  %4604 = vmatprep.subr.bf16.mxu0 0
  %4605 = vmatpush1.bf16.msra.mxu0 %v3654
  %4606 = vmatprep.subr.bf16.mxu0 0
  %4607 = vmatpush1.bf16.msra.mxu0 %v3655
  %4608 = vmatprep.subr.bf16.mxu0 0
  %4609 = vmatpush1.bf16.msra.mxu0 %v3656
  %4610 = vmatprep.subr.bf16.mxu0 0
  %4611 = vmatpush1.bf16.msra.mxu0 %v3657
  %4612 = vmatprep.subr.bf16.mxu0 0
  %4613 = vmatpush1.bf16.msra.mxu0 %v3658
  %4614 = vmatprep.subr.bf16.mxu0 0
  %4615 = vmatpush1.bf16.msra.mxu0 %v3659
  %4616 = vmatprep.mubr.bf16.mxu0 %v4571
  %4617 = vmatmul.mubr.bf16.gmra.mrb[0].mxu0 %v4570
  %v4618 = vpop.f32.mrb[0].mxu0
  %v4619 = vadd.f32 0.0, %v4618
  %v4620 = vpop.f32.mrb[0].mxu0
  %v4621 = vpop.f32.mrb[0].mxu0
  %v4622 = vadd.f32 0.0, %v4621
  %v4623 = vpop.f32.mrb[0].mxu0
  %4624 = vmatprep.mubr.bf16.mxu0 %v4573
  %4625 = vmatmul.mubr.bf16.gmra.mrb[0].mxu0 %v4572
  %v4626 = vpop.f32.mrb[0].mxu0
  %v4627 = vadd.f32 0.0, %v4626
  %v4628 = vpop.f32.mrb[0].mxu0
  %v4629 = vpop.f32.mrb[0].mxu0
  %v4630 = vadd.f32 0.0, %v4629
  %v4631 = vpop.f32.mrb[0].mxu0
  %4632 = vmatprep.mubr.bf16.mxu0 %v4575
  %4633 = vmatmul.mubr.bf16.gmra.mrb[0].mxu0 %v4574
  %v4634 = vpop.f32.mrb[0].mxu0
  %v4635 = vadd.f32 0.0, %v4634
  %v4636 = vpop.f32.mrb[0].mxu0
  %v4637 = vpop.f32.mrb[0].mxu0
  %v4638 = vadd.f32 0.0, %v4637
  %v4639 = vpop.f32.mrb[0].mxu0
  %4640 = vmatprep.mubr.bf16.mxu0 %v4577
  %4641 = vmatmul.mubr.bf16.gmra.mrb[0].mxu0 %v4576
  %v4642 = vpop.f32.mrb[0].mxu0
  %v4643 = vadd.f32 0.0, %v4642
  %v4644 = vpop.f32.mrb[0].mxu0
  %v4645 = vpop.f32.mrb[0].mxu0
  %v4646 = vadd.f32 0.0, %v4645
  %v4647 = vpop.f32.mrb[0].mxu0
  %4648 = vmatprep.mubr.bf16.mxu0 %v4579
  %4649 = vmatmul.mubr.bf16.gmra.mrb[0].mxu0 %v4578
  %v4650 = vpop.f32.mrb[0].mxu0
  %v4651 = vadd.f32 0.0, %v4650
  %v4652 = vpop.f32.mrb[0].mxu0
  %v4653 = vpop.f32.mrb[0].mxu0
  %v4654 = vadd.f32 0.0, %v4653
  %v4655 = vpop.f32.mrb[0].mxu0
  %4656 = vmatprep.mubr.bf16.mxu0 %v4581
  %4657 = vmatmul.mubr.bf16.gmra.mrb[0].mxu0 %v4580
  %v4658 = vpop.f32.mrb[0].mxu0
  %v4659 = vadd.f32 0.0, %v4658
  %v4660 = vpop.f32.mrb[0].mxu0
  %v4661 = vpop.f32.mrb[0].mxu0
  %v4662 = vadd.f32 0.0, %v4661
  %v4663 = vpop.f32.mrb[0].mxu0
  %4664 = vmatprep.mubr.bf16.mxu0 %v4583
  %4665 = vmatmul.mubr.bf16.gmra.mrb[0].mxu0 %v4582
  %v4666 = vpop.f32.mrb[0].mxu0
  %v4667 = vadd.f32 0.0, %v4666
  %v4668 = vpop.f32.mrb[0].mxu0
  %v4669 = vpop.f32.mrb[0].mxu0
  %v4670 = vadd.f32 0.0, %v4669
  %v4671 = vpop.f32.mrb[0].mxu0
  %4672 = vdwg.mxu0
  %4673 = vmatprep.subr.bf16.mxu0 0
  %4674 = vmatpush1.bf16.msra.mxu0 %v3829
  %4675 = vmatprep.subr.bf16.mxu0 0
  %4676 = vmatpush1.bf16.msra.mxu0 %v3830
  %4677 = vmatprep.subr.bf16.mxu0 0
  %4678 = vmatpush1.bf16.msra.mxu0 %v3831
  %4679 = vmatprep.subr.bf16.mxu0 0
  %4680 = vmatpush1.bf16.msra.mxu0 %v3832
  %4681 = vmatprep.subr.bf16.mxu0 0
  %4682 = vmatpush1.bf16.msra.mxu0 %v3833
  %4683 = vmatprep.subr.bf16.mxu0 0
  %4684 = vmatpush1.bf16.msra.mxu0 %v3834
  %4685 = vmatprep.subr.bf16.mxu0 0
  %4686 = vmatpush1.bf16.msra.mxu0 %v3835
  %4687 = vmatprep.subr.bf16.mxu0 0
  %4688 = vmatpush1.bf16.msra.mxu0 %v3836
  %4689 = vmatprep.subr.bf16.mxu0 0
  %4690 = vmatpush1.bf16.msra.mxu0 %v3837
  %4691 = vmatprep.subr.bf16.mxu0 0
  %4692 = vmatpush1.bf16.msra.mxu0 %v3838
  %4693 = vmatprep.subr.bf16.mxu0 0
  %4694 = vmatpush1.bf16.msra.mxu0 %v3839
  %4695 = vmatprep.subr.bf16.mxu0 0
  %4696 = vmatpush1.bf16.msra.mxu0 %v3840
  %4697 = vmatprep.subr.bf16.mxu0 0
  %4698 = vmatpush1.bf16.msra.mxu0 %v3841
  %4699 = vmatprep.subr.bf16.mxu0 0
  %4700 = vmatpush1.bf16.msra.mxu0 %v3842
  %4701 = vmatprep.subr.bf16.mxu0 0
  %4702 = vmatpush1.bf16.msra.mxu0 %v3843
  %4703 = vmatprep.subr.bf16.mxu0 0
  %4704 = vmatpush1.bf16.msra.mxu0 %v3844
  %4705 = vmatprep.mubr.bf16.mxu0 %v4556
  %4706 = vmatmul.mubr.bf16.gmra.mrb[0].mxu0 %v4555
  %v4707 = vpop.f32.mrb[0].mxu0
  %v4708 = vadd.f32 %v4619, %v4707
  %v4709 = vpop.f32.mrb[0].mxu0
  %v4710 = vpop.f32.mrb[0].mxu0
  %v4711 = vadd.f32 %v4622, %v4710
  %v4712 = vpop.f32.mrb[0].mxu0
  %4713 = vmatprep.mubr.bf16.mxu0 %v4558
  %4714 = vmatmul.mubr.bf16.gmra.mrb[0].mxu0 %v4557
  %v4715 = vpop.f32.mrb[0].mxu0
  %v4716 = vadd.f32 %v4627, %v4715
  %v4717 = vpop.f32.mrb[0].mxu0
  %v4718 = vpop.f32.mrb[0].mxu0
  %v4719 = vadd.f32 %v4630, %v4718
  %v4720 = vpop.f32.mrb[0].mxu0
  %4721 = vmatprep.mubr.bf16.mxu0 %v4560
  %4722 = vmatmul.mubr.bf16.gmra.mrb[0].mxu0 %v4559
  %v4723 = vpop.f32.mrb[0].mxu0
  %v4724 = vadd.f32 %v4635, %v4723
  %v4725 = vpop.f32.mrb[0].mxu0
  %v4726 = vpop.f32.mrb[0].mxu0
  %v4727 = vadd.f32 %v4638, %v4726
  %v4728 = vpop.f32.mrb[0].mxu0
  %4729 = vmatprep.mubr.bf16.mxu0 %v4562
  %4730 = vmatmul.mubr.bf16.gmra.mrb[0].mxu0 %v4561
  %v4731 = vpop.f32.mrb[0].mxu0
  %v4732 = vadd.f32 %v4643, %v4731
  %v4733 = vpop.f32.mrb[0].mxu0
  %v4734 = vpop.f32.mrb[0].mxu0
  %v4735 = vadd.f32 %v4646, %v4734
  %v4736 = vpop.f32.mrb[0].mxu0
  %4737 = vmatprep.mubr.bf16.mxu0 %v4564
  %4738 = vmatmul.mubr.bf16.gmra.mrb[0].mxu0 %v4563
  %v4739 = vpop.f32.mrb[0].mxu0
  %v4740 = vadd.f32 %v4651, %v4739
  %v4741 = vpop.f32.mrb[0].mxu0
  %v4742 = vpop.f32.mrb[0].mxu0
  %v4743 = vadd.f32 %v4654, %v4742
  %v4744 = vpop.f32.mrb[0].mxu0
  %4745 = vmatprep.mubr.bf16.mxu0 %v4566
  %4746 = vmatmul.mubr.bf16.gmra.mrb[0].mxu0 %v4565
  %v4747 = vpop.f32.mrb[0].mxu0
  %v4748 = vadd.f32 %v4659, %v4747
  %v4749 = vpop.f32.mrb[0].mxu0
  %v4750 = vpop.f32.mrb[0].mxu0
  %v4751 = vadd.f32 %v4662, %v4750
  %v4752 = vpop.f32.mrb[0].mxu0
  %4753 = vmatprep.mubr.bf16.mxu0 %v4568
  %4754 = vmatmul.mubr.bf16.gmra.mrb[0].mxu0 %v4567
  %v4755 = vpop.f32.mrb[0].mxu0
  %v4756 = vadd.f32 %v4667, %v4755
  %v4757 = vpop.f32.mrb[0].mxu0
  %v4758 = vpop.f32.mrb[0].mxu0
  %v4759 = vadd.f32 %v4670, %v4758
  %v4760 = vpop.f32.mrb[0].mxu0
  %4761 = vdwg.mxu0
  %v4762 = vld [vmem:[%s1017] sm:$0xff]
  %v4763 = vld [vmem:[%s1017 + $0x8] sm:$0xff]
  %v4764 = vld [vmem:[%s1017 + $0x10] sm:$0xff]
  %v4765 = vld [vmem:[%s1017 + $0x18] sm:$0xff]
  %v4766 = vld [vmem:[%s1017 + $0x20] sm:$0xff]
  %v4767 = vld [vmem:[%s1017 + $0x28] sm:$0xff]
  %v4768 = vld [vmem:[%s1017 + $0x30] sm:$0xff]
  %v4769 = vld [vmem:[%s1017 + $0x38] sm:$0xff]
  %v4770 = vld [vmem:[%s1017 + $0x40] sm:$0xff]
  %v4771 = vld [vmem:[%s1017 + $0x48] sm:$0xff]
  %v4772 = vld [vmem:[%s1017 + $0x50] sm:$0xff]
  %v4773 = vld [vmem:[%s1017 + $0x58] sm:$0xff]
  %v4774 = vld [vmem:[%s1017 + $0x60] sm:$0xff]
  %v4775 = vld [vmem:[%s1017 + $0x68] sm:$0xff]
  %4776 = vmatprep.subr.bf16.mxu0 0
  %4777 = vmatpush1.bf16.msra.mxu0 %v4061
  %4778 = vmatprep.subr.bf16.mxu0 0
  %4779 = vmatpush1.bf16.msra.mxu0 %v4062
  %4780 = vmatprep.subr.bf16.mxu0 0
  %4781 = vmatpush1.bf16.msra.mxu0 %v4063
  %4782 = vmatprep.subr.bf16.mxu0 0
  %4783 = vmatpush1.bf16.msra.mxu0 %v4064
  %4784 = vmatprep.subr.bf16.mxu0 0
  %4785 = vmatpush1.bf16.msra.mxu0 %v4065
  %4786 = vmatprep.subr.bf16.mxu0 0
  %4787 = vmatpush1.bf16.msra.mxu0 %v4066
  %4788 = vmatprep.subr.bf16.mxu0 0
  %4789 = vmatpush1.bf16.msra.mxu0 %v4067
  %4790 = vmatprep.subr.bf16.mxu0 0
  %4791 = vmatpush1.bf16.msra.mxu0 %v4068
  %4792 = vmatprep.subr.bf16.mxu0 0
  %4793 = vmatpush1.bf16.msra.mxu0 %v4069
  %4794 = vmatprep.subr.bf16.mxu0 0
  %4795 = vmatpush1.bf16.msra.mxu0 %v4070
  %4796 = vmatprep.subr.bf16.mxu0 0
  %4797 = vmatpush1.bf16.msra.mxu0 %v4071
  %4798 = vmatprep.subr.bf16.mxu0 0
  %4799 = vmatpush1.bf16.msra.mxu0 %v4072
  %4800 = vmatprep.subr.bf16.mxu0 0
  %4801 = vmatpush1.bf16.msra.mxu0 %v4073
  %4802 = vmatprep.subr.bf16.mxu0 0
  %4803 = vmatpush1.bf16.msra.mxu0 %v4074
  %4804 = vmatprep.subr.bf16.mxu0 0
  %4805 = vmatpush1.bf16.msra.mxu0 %v4075
  %4806 = vmatprep.subr.bf16.mxu0 0
  %4807 = vmatpush1.bf16.msra.mxu0 %v4076
  %4808 = vmatprep.mubr.bf16.mxu0 %v4763
  %4809 = vmatmul.mubr.bf16.gmra.mrb[0].mxu0 %v4762
  %v4810 = vpop.f32.mrb[0].mxu0
  %v4811 = vadd.f32 0.0, %v4810
  %v4812 = vpop.f32.mrb[0].mxu0
  %v4813 = vpop.f32.mrb[0].mxu0
  %v4814 = vadd.f32 0.0, %v4813
  %v4815 = vpop.f32.mrb[0].mxu0
  %4816 = vmatprep.mubr.bf16.mxu0 %v4765
  %4817 = vmatmul.mubr.bf16.gmra.mrb[0].mxu0 %v4764
  %v4818 = vpop.f32.mrb[0].mxu0
  %v4819 = vadd.f32 0.0, %v4818
  %v4820 = vpop.f32.mrb[0].mxu0
  %v4821 = vpop.f32.mrb[0].mxu0
  %v4822 = vadd.f32 0.0, %v4821
  %v4823 = vpop.f32.mrb[0].mxu0
  %4824 = vmatprep.mubr.bf16.mxu0 %v4767
  %4825 = vmatmul.mubr.bf16.gmra.mrb[0].mxu0 %v4766
  %v4826 = vpop.f32.mrb[0].mxu0
  %v4827 = vadd.f32 0.0, %v4826
  %v4828 = vpop.f32.mrb[0].mxu0
  %v4829 = vpop.f32.mrb[0].mxu0
  %v4830 = vadd.f32 0.0, %v4829
  %v4831 = vpop.f32.mrb[0].mxu0
  %4832 = vmatprep.mubr.bf16.mxu0 %v4769
  %4833 = vmatmul.mubr.bf16.gmra.mrb[0].mxu0 %v4768
  %v4834 = vpop.f32.mrb[0].mxu0
  %v4835 = vadd.f32 0.0, %v4834
  %v4836 = vpop.f32.mrb[0].mxu0
  %v4837 = vpop.f32.mrb[0].mxu0
  %v4838 = vadd.f32 0.0, %v4837
  %v4839 = vpop.f32.mrb[0].mxu0
  %4840 = vmatprep.mubr.bf16.mxu0 %v4771
  %4841 = vmatmul.mubr.bf16.gmra.mrb[0].mxu0 %v4770
  %v4842 = vpop.f32.mrb[0].mxu0
  %v4843 = vadd.f32 0.0, %v4842
  %v4844 = vpop.f32.mrb[0].mxu0
  %v4845 = vpop.f32.mrb[0].mxu0
  %v4846 = vadd.f32 0.0, %v4845
  %v4847 = vpop.f32.mrb[0].mxu0
  %4848 = vmatprep.mubr.bf16.mxu0 %v4773
  %4849 = vmatmul.mubr.bf16.gmra.mrb[0].mxu0 %v4772
  %v4850 = vpop.f32.mrb[0].mxu0
  %v4851 = vadd.f32 0.0, %v4850
  %v4852 = vpop.f32.mrb[0].mxu0
  %v4853 = vpop.f32.mrb[0].mxu0
  %v4854 = vadd.f32 0.0, %v4853
  %v4855 = vpop.f32.mrb[0].mxu0
  %4856 = vmatprep.mubr.bf16.mxu0 %v4775
  %4857 = vmatmul.mubr.bf16.gmra.mrb[0].mxu0 %v4774
  %v4858 = vpop.f32.mrb[0].mxu0
  %v4859 = vadd.f32 0.0, %v4858
  %v4860 = vpop.f32.mrb[0].mxu0
  %v4861 = vpop.f32.mrb[0].mxu0
  %v4862 = vadd.f32 0.0, %v4861
  %v4863 = vpop.f32.mrb[0].mxu0
  %4864 = vdwg.mxu0
  %v4865 = vadd.f32 %v4708, %v4811
  %v4866 = vadd.f32 %v4711, %v4814
  %v4867 = vadd.f32 %v4716, %v4819
  %v4868 = vadd.f32 %v4719, %v4822
  %v4869 = vadd.f32 %v4724, %v4827
  %v4870 = vadd.f32 %v4727, %v4830
  %v4871 = vadd.f32 %v4732, %v4835
  %v4872 = vadd.f32 %v4735, %v4838
  %v4873 = vadd.f32 %v4740, %v4843
  %v4874 = vadd.f32 %v4743, %v4846
  %v4875 = vadd.f32 %v4748, %v4851
  %v4876 = vadd.f32 %v4751, %v4854
  %v4877 = vadd.f32 %v4756, %v4859
  %v4878 = vadd.f32 %v4759, %v4862
  %s4879 = scalar_lea.vmem [#allocation2], 400
  %v4880 = vld [vmem:[%s4879] sm:$0xff]
  %v4881 = vld [vmem:[%s4879 + $0x8] sm:$0xff]
  %v4882 = vld [vmem:[%s4879 + $0x10] sm:$0xff]
  %v4883 = vld [vmem:[%s4879 + $0x18] sm:$0xff]
  %v4884 = vld [vmem:[%s4879 + $0x20] sm:$0xff]
  %v4885 = vld [vmem:[%s4879 + $0x28] sm:$0xff]
  %v4886 = vld [vmem:[%s4879 + $0x30] sm:$0xff]
  %v4887 = vld [vmem:[%s4879 + $0x38] sm:$0xff]
  %v4888 = vld [vmem:[%s4879 + $0x40] sm:$0xff]
  %v4889 = vld [vmem:[%s4879 + $0x48] sm:$0xff]
  %v4890 = vld [vmem:[%s4879 + $0x50] sm:$0xff]
  %v4891 = vld [vmem:[%s4879 + $0x58] sm:$0xff]
  %v4892 = vld [vmem:[%s4879 + $0x60] sm:$0xff]
  %v4893 = vld [vmem:[%s4879 + $0x68] sm:$0xff]
  %4894 = vmatprep.subr.bf16.mxu0 0
  %4895 = vmatpush1.bf16.msra.mxu0 %v4308
  %4896 = vmatprep.subr.bf16.mxu0 0
  %4897 = vmatpush1.bf16.msra.mxu0 %v4309
  %4898 = vmatprep.subr.bf16.mxu0 0
  %4899 = vmatpush1.bf16.msra.mxu0 %v4310
  %4900 = vmatprep.subr.bf16.mxu0 0
  %4901 = vmatpush1.bf16.msra.mxu0 %v4311
  %4902 = vmatprep.subr.bf16.mxu0 0
  %4903 = vmatpush1.bf16.msra.mxu0 %v4312
  %4904 = vmatprep.subr.bf16.mxu0 0
  %4905 = vmatpush1.bf16.msra.mxu0 %v4313
  %4906 = vmatprep.subr.bf16.mxu0 0
  %4907 = vmatpush1.bf16.msra.mxu0 %v4314
  %4908 = vmatprep.subr.bf16.mxu0 0
  %4909 = vmatpush1.bf16.msra.mxu0 %v4315
  %4910 = vmatprep.subr.bf16.mxu0 0
  %4911 = vmatpush1.bf16.msra.mxu0 %v4316
  %4912 = vmatprep.subr.bf16.mxu0 0
  %4913 = vmatpush1.bf16.msra.mxu0 %v4317
  %4914 = vmatprep.subr.bf16.mxu0 0
  %4915 = vmatpush1.bf16.msra.mxu0 %v4318
  %4916 = vmatprep.subr.bf16.mxu0 0
  %4917 = vmatpush1.bf16.msra.mxu0 %v4319
  %4918 = vmatprep.subr.bf16.mxu0 0
  %4919 = vmatpush1.bf16.msra.mxu0 %v4320
  %4920 = vmatprep.subr.bf16.mxu0 0
  %4921 = vmatpush1.bf16.msra.mxu0 %v4321
  %4922 = vmatprep.subr.bf16.mxu0 0
  %4923 = vmatpush1.bf16.msra.mxu0 %v4322
  %4924 = vmatprep.subr.bf16.mxu0 0
  %4925 = vmatpush1.bf16.msra.mxu0 %v4323
  %4926 = vmatprep.mubr.bf16.mxu0 %v4881
  %4927 = vmatmul.mubr.bf16.gmra.mrb[0].mxu0 %v4880
  %v4928 = vpop.f32.mrb[0].mxu0
  %v4929 = vadd.f32 0.0, %v4928
  %v4930 = vpop.f32.mrb[0].mxu0
  %v4931 = vpop.f32.mrb[0].mxu0
  %v4932 = vadd.f32 0.0, %v4931
  %v4933 = vpop.f32.mrb[0].mxu0
  %4934 = vmatprep.mubr.bf16.mxu0 %v4883
  %4935 = vmatmul.mubr.bf16.gmra.mrb[0].mxu0 %v4882
  %v4936 = vpop.f32.mrb[0].mxu0
  %v4937 = vadd.f32 0.0, %v4936
  %v4938 = vpop.f32.mrb[0].mxu0
  %v4939 = vpop.f32.mrb[0].mxu0
  %v4940 = vadd.f32 0.0, %v4939
  %v4941 = vpop.f32.mrb[0].mxu0
  %4942 = vmatprep.mubr.bf16.mxu0 %v4885
  %4943 = vmatmul.mubr.bf16.gmra.mrb[0].mxu0 %v4884
  %v4944 = vpop.f32.mrb[0].mxu0
  %v4945 = vadd.f32 0.0, %v4944
  %v4946 = vpop.f32.mrb[0].mxu0
  %v4947 = vpop.f32.mrb[0].mxu0
  %v4948 = vadd.f32 0.0, %v4947
  %v4949 = vpop.f32.mrb[0].mxu0
  %4950 = vmatprep.mubr.bf16.mxu0 %v4887
  %4951 = vmatmul.mubr.bf16.gmra.mrb[0].mxu0 %v4886
  %v4952 = vpop.f32.mrb[0].mxu0
  %v4953 = vadd.f32 0.0, %v4952
  %v4954 = vpop.f32.mrb[0].mxu0
  %v4955 = vpop.f32.mrb[0].mxu0
  %v4956 = vadd.f32 0.0, %v4955
  %v4957 = vpop.f32.mrb[0].mxu0
  %4958 = vmatprep.mubr.bf16.mxu0 %v4889
  %4959 = vmatmul.mubr.bf16.gmra.mrb[0].mxu0 %v4888
  %v4960 = vpop.f32.mrb[0].mxu0
  %v4961 = vadd.f32 0.0, %v4960
  %v4962 = vpop.f32.mrb[0].mxu0
  %v4963 = vpop.f32.mrb[0].mxu0
  %v4964 = vadd.f32 0.0, %v4963
  %v4965 = vpop.f32.mrb[0].mxu0
  %4966 = vmatprep.mubr.bf16.mxu0 %v4891
  %4967 = vmatmul.mubr.bf16.gmra.mrb[0].mxu0 %v4890
  %v4968 = vpop.f32.mrb[0].mxu0
  %v4969 = vadd.f32 0.0, %v4968
  %v4970 = vpop.f32.mrb[0].mxu0
  %v4971 = vpop.f32.mrb[0].mxu0
  %v4972 = vadd.f32 0.0, %v4971
  %v4973 = vpop.f32.mrb[0].mxu0
  %4974 = vmatprep.mubr.bf16.mxu0 %v4893
  %4975 = vmatmul.mubr.bf16.gmra.mrb[0].mxu0 %v4892
  %v4976 = vpop.f32.mrb[0].mxu0
  %v4977 = vadd.f32 0.0, %v4976
  %v4978 = vpop.f32.mrb[0].mxu0
  %v4979 = vpop.f32.mrb[0].mxu0
  %v4980 = vadd.f32 0.0, %v4979
  %v4981 = vpop.f32.mrb[0].mxu0
  %4982 = vdwg.mxu0
  %v4983 = vadd.f32 %v4865, %v4929
  %v4984 = vadd.f32 %v4866, %v4932
  %v4985 = vadd.f32 %v4867, %v4937
  %v4986 = vadd.f32 %v4868, %v4940
  %v4987 = vadd.f32 %v4869, %v4945
  %v4988 = vadd.f32 %v4870, %v4948
  %v4989 = vadd.f32 %v4871, %v4953
  %v4990 = vadd.f32 %v4872, %v4956
  %v4991 = vadd.f32 %v4873, %v4961
  %v4992 = vadd.f32 %v4874, %v4964
  %v4993 = vadd.f32 %v4875, %v4969
  %v4994 = vadd.f32 %v4876, %v4972
  %v4995 = vadd.f32 %v4877, %v4977
  %v4996 = vadd.f32 %v4878, %v4980
  %v4997 = vadd.f32 %v4983, %v4448
  %v4998 = vadd.f32 %v4984, %v4448
  %v4999 = vadd.f32 %v4985, %v4448
  %v5000 = vadd.f32 %v4986, %v4448
  %v5001 = vadd.f32 %v4987, %v4448
  %v5002 = vadd.f32 %v4988, %v4448
  %v5003 = vadd.f32 %v4989, %v4448
  %v5004 = vadd.f32 %v4990, %v4448
  %v5005 = vadd.f32 %v4991, %v4448
  %v5006 = vadd.f32 %v4992, %v4448
  %v5007 = vadd.f32 %v4993, %v4448
  %v5008 = vadd.f32 %v4994, %v4448
  %v5009 = vadd.f32 %v4995, %v4448
  %v5010 = vadd.f32 %v4996, %v4448
  %v5011 = vmul.f32 %v4997, 0.2
  %v5012 = vmul.f32 %v4998, 0.2
  %v5013 = vmul.f32 %v4999, 0.2
  %v5014 = vmul.f32 %v5000, 0.2
  %v5015 = vmul.f32 %v5001, 0.2
  %v5016 = vmul.f32 %v5002, 0.2
  %v5017 = vmul.f32 %v5003, 0.2
  %v5018 = vmul.f32 %v5004, 0.2
  %v5019 = vmul.f32 %v5005, 0.2
  %v5020 = vmul.f32 %v5006, 0.2
  %v5021 = vmul.f32 %v5007, 0.2
  %v5022 = vmul.f32 %v5008, 0.2
  %v5023 = vmul.f32 %v5009, 0.2
  %v5024 = vmul.f32 %v5010, 0.2
  %v5025 = vmax.f32 %v4997, %v5011
  %v5026 = vmax.f32 %v4998, %v5012
  %v5027 = vmax.f32 %v4999, %v5013
  %v5028 = vmax.f32 %v5000, %v5014
  %v5029 = vmax.f32 %v5001, %v5015
  %v5030 = vmax.f32 %v5002, %v5016
  %v5031 = vmax.f32 %v5003, %v5017
  %v5032 = vmax.f32 %v5004, %v5018
  %v5033 = vmax.f32 %v5005, %v5019
  %v5034 = vmax.f32 %v5006, %v5020
  %v5035 = vmax.f32 %v5007, %v5021
  %v5036 = vmax.f32 %v5008, %v5022
  %v5037 = vmax.f32 %v5009, %v5023
  %v5038 = vmax.f32 %v5010, %v5024
  %s5039 = scalar_lea.vmem %s5, 8
  %v5040 = vld [vmem:[%s5039] sm:$0x1]
  %v5041 = vlaneseq
  %v5042 = vshrl.u32 %v5041, 7
  %v5043 = vsub.s32 0, %v5042
  %v5044 = vrot.slane %v5040, %v5043
  %v5045 = vmul.f32 %v5025, %v5044
  %v5046 = vmul.f32 %v5026, %v5044
  %v5047 = vadd.f32 %v4553, %v5045
  %v5048 = vadd.f32 %v4554, %v5046
  %v5049 = vld [vmem:[%s5039 + $0x1] sm:$0x1]
  %v5050 = vlaneseq
  %v5051 = vshrl.u32 %v5050, 7
  %v5052 = vsub.s32 0, %v5051
  %v5053 = vrot.slane %v5049, %v5052
  %v5054 = vmul.f32 %v5027, %v5053
  %v5055 = vmul.f32 %v5028, %v5053
  %v5056 = vadd.f32 %v5047, %v5054
  %v5057 = vadd.f32 %v5048, %v5055
  %v5058 = vld [vmem:[%s5039 + $0x2] sm:$0x1]
  %v5059 = vlaneseq
  %v5060 = vshrl.u32 %v5059, 7
  %v5061 = vsub.s32 0, %v5060
  %v5062 = vrot.slane %v5058, %v5061
  %v5063 = vmul.f32 %v5029, %v5062
  %v5064 = vmul.f32 %v5030, %v5062
  %v5065 = vadd.f32 %v5056, %v5063
  %v5066 = vadd.f32 %v5057, %v5064
  %v5067 = vld [vmem:[%s5039 + $0x3] sm:$0x1]
  %v5068 = vlaneseq
  %v5069 = vshrl.u32 %v5068, 7
  %v5070 = vsub.s32 0, %v5069
  %v5071 = vrot.slane %v5067, %v5070
  %v5072 = vmul.f32 %v5031, %v5071
  %v5073 = vmul.f32 %v5032, %v5071
  %v5074 = vadd.f32 %v5065, %v5072
  %v5075 = vadd.f32 %v5066, %v5073
  %v5076 = vld [vmem:[%s5039 + $0x4] sm:$0x1]
  %v5077 = vlaneseq
  %v5078 = vshrl.u32 %v5077, 7
  %v5079 = vsub.s32 0, %v5078
  %v5080 = vrot.slane %v5076, %v5079
  %v5081 = vmul.f32 %v5033, %v5080
  %v5082 = vmul.f32 %v5034, %v5080
  %v5083 = vadd.f32 %v5074, %v5081
  %v5084 = vadd.f32 %v5075, %v5082
  %v5085 = vld [vmem:[%s5039 + $0x5] sm:$0x1]
  %v5086 = vlaneseq
  %v5087 = vshrl.u32 %v5086, 7
  %v5088 = vsub.s32 0, %v5087
  %v5089 = vrot.slane %v5085, %v5088
  %v5090 = vmul.f32 %v5035, %v5089
  %v5091 = vmul.f32 %v5036, %v5089
  %v5092 = vadd.f32 %v5083, %v5090
  %v5093 = vadd.f32 %v5084, %v5091
  %v5094 = vld [vmem:[%s5039 + $0x6] sm:$0x1]
  %v5095 = vlaneseq
  %v5096 = vshrl.u32 %v5095, 7
  %v5097 = vsub.s32 0, %v5096
  %v5098 = vrot.slane %v5094, %v5097
  %v5099 = vmul.f32 %v5037, %v5098
  %v5100 = vmul.f32 %v5038, %v5098
  %v5101 = vadd.f32 %v5092, %v5099
  %v5102 = vadd.f32 %v5093, %v5100
  %v5103 = vld [vmem:[%s41] sm:$0xff]
  %v5104 = vld [vmem:[%s41 + $0x8] sm:$0xff]
  %v5105 = vld [vmem:[%s41 + $0x10] sm:$0xff]
  %v5106 = vld [vmem:[%s41 + $0x18] sm:$0xff]
  %v5107 = vld [vmem:[%s41 + $0x20] sm:$0xff]
  %v5108 = vld [vmem:[%s41 + $0x28] sm:$0xff]
  %v5109 = vld [vmem:[%s41 + $0x30] sm:$0xff]
  %v5110 = vld [vmem:[%s41 + $0x38] sm:$0xff]
  %v5111 = vld [vmem:[%s41 + $0x40] sm:$0xff]
  %v5112 = vld [vmem:[%s41 + $0x48] sm:$0xff]
  %v5113 = vld [vmem:[%s41 + $0x50] sm:$0xff]
  %v5114 = vld [vmem:[%s41 + $0x58] sm:$0xff]
  %v5115 = vld [vmem:[%s41 + $0x60] sm:$0xff]
  %v5116 = vld [vmem:[%s41 + $0x68] sm:$0xff]
  %s5117 = scalar_lea.vmem [#allocation2], 640
  %v5118 = vld [vmem:[%s5117] sm:$0xff]
  %v5119 = vld [vmem:[%s5117 + $0x8] sm:$0xff]
  %v5120 = vld [vmem:[%s5117 + $0x10] sm:$0xff]
  %v5121 = vld [vmem:[%s5117 + $0x18] sm:$0xff]
  %v5122 = vld [vmem:[%s5117 + $0x20] sm:$0xff]
  %v5123 = vld [vmem:[%s5117 + $0x28] sm:$0xff]
  %v5124 = vld [vmem:[%s5117 + $0x30] sm:$0xff]
  %v5125 = vld [vmem:[%s5117 + $0x38] sm:$0xff]
  %v5126 = vld [vmem:[%s5117 + $0x40] sm:$0xff]
  %v5127 = vld [vmem:[%s5117 + $0x48] sm:$0xff]
  %v5128 = vld [vmem:[%s5117 + $0x50] sm:$0xff]
  %v5129 = vld [vmem:[%s5117 + $0x58] sm:$0xff]
  %v5130 = vld [vmem:[%s5117 + $0x60] sm:$0xff]
  %v5131 = vld [vmem:[%s5117 + $0x68] sm:$0xff]
  %5132 = vmatprep.subr.bf16.mxu0 0
  %5133 = vmatpush1.bf16.msra.mxu0 %v3644
  %5134 = vmatprep.subr.bf16.mxu0 0
  %5135 = vmatpush1.bf16.msra.mxu0 %v3645
  %5136 = vmatprep.subr.bf16.mxu0 0
  %5137 = vmatpush1.bf16.msra.mxu0 %v3646
  %5138 = vmatprep.subr.bf16.mxu0 0
  %5139 = vmatpush1.bf16.msra.mxu0 %v3647
  %5140 = vmatprep.subr.bf16.mxu0 0
  %5141 = vmatpush1.bf16.msra.mxu0 %v3648
  %5142 = vmatprep.subr.bf16.mxu0 0
  %5143 = vmatpush1.bf16.msra.mxu0 %v3649
  %5144 = vmatprep.subr.bf16.mxu0 0
  %5145 = vmatpush1.bf16.msra.mxu0 %v3650
  %5146 = vmatprep.subr.bf16.mxu0 0
  %5147 = vmatpush1.bf16.msra.mxu0 %v3651
  %5148 = vmatprep.subr.bf16.mxu0 0
  %5149 = vmatpush1.bf16.msra.mxu0 %v3652
  %5150 = vmatprep.subr.bf16.mxu0 0
  %5151 = vmatpush1.bf16.msra.mxu0 %v3653
  %5152 = vmatprep.subr.bf16.mxu0 0
  %5153 = vmatpush1.bf16.msra.mxu0 %v3654
  %5154 = vmatprep.subr.bf16.mxu0 0
  %5155 = vmatpush1.bf16.msra.mxu0 %v3655
  %5156 = vmatprep.subr.bf16.mxu0 0
  %5157 = vmatpush1.bf16.msra.mxu0 %v3656
  %5158 = vmatprep.subr.bf16.mxu0 0
  %5159 = vmatpush1.bf16.msra.mxu0 %v3657
  %5160 = vmatprep.subr.bf16.mxu0 0
  %5161 = vmatpush1.bf16.msra.mxu0 %v3658
  %5162 = vmatprep.subr.bf16.mxu0 0
  %5163 = vmatpush1.bf16.msra.mxu0 %v3659
  %5164 = vmatprep.mubr.bf16.mxu0 %v5119
  %5165 = vmatmul.mubr.bf16.gmra.mrb[0].mxu0 %v5118
  %v5166 = vpop.f32.mrb[0].mxu0
  %v5167 = vadd.f32 0.0, %v5166
  %v5168 = vpop.f32.mrb[0].mxu0
  %v5169 = vpop.f32.mrb[0].mxu0
  %v5170 = vadd.f32 0.0, %v5169
  %v5171 = vpop.f32.mrb[0].mxu0
  %5172 = vmatprep.mubr.bf16.mxu0 %v5121
  %5173 = vmatmul.mubr.bf16.gmra.mrb[0].mxu0 %v5120
  %v5174 = vpop.f32.mrb[0].mxu0
  %v5175 = vadd.f32 0.0, %v5174
  %v5176 = vpop.f32.mrb[0].mxu0
  %v5177 = vpop.f32.mrb[0].mxu0
  %v5178 = vadd.f32 0.0, %v5177
  %v5179 = vpop.f32.mrb[0].mxu0
  %5180 = vmatprep.mubr.bf16.mxu0 %v5123
  %5181 = vmatmul.mubr.bf16.gmra.mrb[0].mxu0 %v5122
  %v5182 = vpop.f32.mrb[0].mxu0
  %v5183 = vadd.f32 0.0, %v5182
  %v5184 = vpop.f32.mrb[0].mxu0
  %v5185 = vpop.f32.mrb[0].mxu0
  %v5186 = vadd.f32 0.0, %v5185
  %v5187 = vpop.f32.mrb[0].mxu0
  %5188 = vmatprep.mubr.bf16.mxu0 %v5125
  %5189 = vmatmul.mubr.bf16.gmra.mrb[0].mxu0 %v5124
  %v5190 = vpop.f32.mrb[0].mxu0
  %v5191 = vadd.f32 0.0, %v5190
  %v5192 = vpop.f32.mrb[0].mxu0
  %v5193 = vpop.f32.mrb[0].mxu0
  %v5194 = vadd.f32 0.0, %v5193
  %v5195 = vpop.f32.mrb[0].mxu0
  %5196 = vmatprep.mubr.bf16.mxu0 %v5127
  %5197 = vmatmul.mubr.bf16.gmra.mrb[0].mxu0 %v5126
  %v5198 = vpop.f32.mrb[0].mxu0
  %v5199 = vadd.f32 0.0, %v5198
  %v5200 = vpop.f32.mrb[0].mxu0
  %v5201 = vpop.f32.mrb[0].mxu0
  %v5202 = vadd.f32 0.0, %v5201
  %v5203 = vpop.f32.mrb[0].mxu0
  %5204 = vmatprep.mubr.bf16.mxu0 %v5129
  %5205 = vmatmul.mubr.bf16.gmra.mrb[0].mxu0 %v5128
  %v5206 = vpop.f32.mrb[0].mxu0
  %v5207 = vadd.f32 0.0, %v5206
  %v5208 = vpop.f32.mrb[0].mxu0
  %v5209 = vpop.f32.mrb[0].mxu0
  %v5210 = vadd.f32 0.0, %v5209
  %v5211 = vpop.f32.mrb[0].mxu0
  %5212 = vmatprep.mubr.bf16.mxu0 %v5131
  %5213 = vmatmul.mubr.bf16.gmra.mrb[0].mxu0 %v5130
  %v5214 = vpop.f32.mrb[0].mxu0
  %v5215 = vadd.f32 0.0, %v5214
  %v5216 = vpop.f32.mrb[0].mxu0
  %v5217 = vpop.f32.mrb[0].mxu0
  %v5218 = vadd.f32 0.0, %v5217
  %v5219 = vpop.f32.mrb[0].mxu0
  %5220 = vdwg.mxu0
  %5221 = vmatprep.subr.bf16.mxu0 0
  %5222 = vmatpush1.bf16.msra.mxu0 %v3829
  %5223 = vmatprep.subr.bf16.mxu0 0
  %5224 = vmatpush1.bf16.msra.mxu0 %v3830
  %5225 = vmatprep.subr.bf16.mxu0 0
  %5226 = vmatpush1.bf16.msra.mxu0 %v3831
  %5227 = vmatprep.subr.bf16.mxu0 0
  %5228 = vmatpush1.bf16.msra.mxu0 %v3832
  %5229 = vmatprep.subr.bf16.mxu0 0
  %5230 = vmatpush1.bf16.msra.mxu0 %v3833
  %5231 = vmatprep.subr.bf16.mxu0 0
  %5232 = vmatpush1.bf16.msra.mxu0 %v3834
  %5233 = vmatprep.subr.bf16.mxu0 0
  %5234 = vmatpush1.bf16.msra.mxu0 %v3835
  %5235 = vmatprep.subr.bf16.mxu0 0
  %5236 = vmatpush1.bf16.msra.mxu0 %v3836
  %5237 = vmatprep.subr.bf16.mxu0 0
  %5238 = vmatpush1.bf16.msra.mxu0 %v3837
  %5239 = vmatprep.subr.bf16.mxu0 0
  %5240 = vmatpush1.bf16.msra.mxu0 %v3838
  %5241 = vmatprep.subr.bf16.mxu0 0
  %5242 = vmatpush1.bf16.msra.mxu0 %v3839
  %5243 = vmatprep.subr.bf16.mxu0 0
  %5244 = vmatpush1.bf16.msra.mxu0 %v3840
  %5245 = vmatprep.subr.bf16.mxu0 0
  %5246 = vmatpush1.bf16.msra.mxu0 %v3841
  %5247 = vmatprep.subr.bf16.mxu0 0
  %5248 = vmatpush1.bf16.msra.mxu0 %v3842
  %5249 = vmatprep.subr.bf16.mxu0 0
  %5250 = vmatpush1.bf16.msra.mxu0 %v3843
  %5251 = vmatprep.subr.bf16.mxu0 0
  %5252 = vmatpush1.bf16.msra.mxu0 %v3844
  %5253 = vmatprep.mubr.bf16.mxu0 %v5104
  %5254 = vmatmul.mubr.bf16.gmra.mrb[0].mxu0 %v5103
  %v5255 = vpop.f32.mrb[0].mxu0
  %v5256 = vadd.f32 %v5167, %v5255
  %v5257 = vpop.f32.mrb[0].mxu0
  %v5258 = vpop.f32.mrb[0].mxu0
  %v5259 = vadd.f32 %v5170, %v5258
  %v5260 = vpop.f32.mrb[0].mxu0
  %5261 = vmatprep.mubr.bf16.mxu0 %v5106
  %5262 = vmatmul.mubr.bf16.gmra.mrb[0].mxu0 %v5105
  %v5263 = vpop.f32.mrb[0].mxu0
  %v5264 = vadd.f32 %v5175, %v5263
  %v5265 = vpop.f32.mrb[0].mxu0
  %v5266 = vpop.f32.mrb[0].mxu0
  %v5267 = vadd.f32 %v5178, %v5266
  %v5268 = vpop.f32.mrb[0].mxu0
  %5269 = vmatprep.mubr.bf16.mxu0 %v5108
  %5270 = vmatmul.mubr.bf16.gmra.mrb[0].mxu0 %v5107
  %v5271 = vpop.f32.mrb[0].mxu0
  %v5272 = vadd.f32 %v5183, %v5271
  %v5273 = vpop.f32.mrb[0].mxu0
  %v5274 = vpop.f32.mrb[0].mxu0
  %v5275 = vadd.f32 %v5186, %v5274
  %v5276 = vpop.f32.mrb[0].mxu0
  %5277 = vmatprep.mubr.bf16.mxu0 %v5110
  %5278 = vmatmul.mubr.bf16.gmra.mrb[0].mxu0 %v5109
  %v5279 = vpop.f32.mrb[0].mxu0
  %v5280 = vadd.f32 %v5191, %v5279
  %v5281 = vpop.f32.mrb[0].mxu0
  %v5282 = vpop.f32.mrb[0].mxu0
  %v5283 = vadd.f32 %v5194, %v5282
  %v5284 = vpop.f32.mrb[0].mxu0
  %5285 = vmatprep.mubr.bf16.mxu0 %v5112
  %5286 = vmatmul.mubr.bf16.gmra.mrb[0].mxu0 %v5111
  %v5287 = vpop.f32.mrb[0].mxu0
  %v5288 = vadd.f32 %v5199, %v5287
  %v5289 = vpop.f32.mrb[0].mxu0
  %v5290 = vpop.f32.mrb[0].mxu0
  %v5291 = vadd.f32 %v5202, %v5290
  %v5292 = vpop.f32.mrb[0].mxu0
  %5293 = vmatprep.mubr.bf16.mxu0 %v5114
  %5294 = vmatmul.mubr.bf16.gmra.mrb[0].mxu0 %v5113
  %v5295 = vpop.f32.mrb[0].mxu0
  %v5296 = vadd.f32 %v5207, %v5295
  %v5297 = vpop.f32.mrb[0].mxu0
  %v5298 = vpop.f32.mrb[0].mxu0
  %v5299 = vadd.f32 %v5210, %v5298
  %v5300 = vpop.f32.mrb[0].mxu0
  %5301 = vmatprep.mubr.bf16.mxu0 %v5116
  %5302 = vmatmul.mubr.bf16.gmra.mrb[0].mxu0 %v5115
  %v5303 = vpop.f32.mrb[0].mxu0
  %v5304 = vadd.f32 %v5215, %v5303
  %v5305 = vpop.f32.mrb[0].mxu0
  %v5306 = vpop.f32.mrb[0].mxu0
  %v5307 = vadd.f32 %v5218, %v5306
  %v5308 = vpop.f32.mrb[0].mxu0
  %5309 = vdwg.mxu0
  %v5310 = vld [vmem:[%s1505] sm:$0xff]
  %v5311 = vld [vmem:[%s1505 + $0x8] sm:$0xff]
  %v5312 = vld [vmem:[%s1505 + $0x10] sm:$0xff]
  %v5313 = vld [vmem:[%s1505 + $0x18] sm:$0xff]
  %v5314 = vld [vmem:[%s1505 + $0x20] sm:$0xff]
  %v5315 = vld [vmem:[%s1505 + $0x28] sm:$0xff]
  %v5316 = vld [vmem:[%s1505 + $0x30] sm:$0xff]
  %v5317 = vld [vmem:[%s1505 + $0x38] sm:$0xff]
  %v5318 = vld [vmem:[%s1505 + $0x40] sm:$0xff]
  %v5319 = vld [vmem:[%s1505 + $0x48] sm:$0xff]
  %v5320 = vld [vmem:[%s1505 + $0x50] sm:$0xff]
  %v5321 = vld [vmem:[%s1505 + $0x58] sm:$0xff]
  %v5322 = vld [vmem:[%s1505 + $0x60] sm:$0xff]
  %v5323 = vld [vmem:[%s1505 + $0x68] sm:$0xff]
  %5324 = vmatprep.subr.bf16.mxu0 0
  %5325 = vmatpush1.bf16.msra.mxu0 %v4061
  %5326 = vmatprep.subr.bf16.mxu0 0
  %5327 = vmatpush1.bf16.msra.mxu0 %v4062
  %5328 = vmatprep.subr.bf16.mxu0 0
  %5329 = vmatpush1.bf16.msra.mxu0 %v4063
  %5330 = vmatprep.subr.bf16.mxu0 0
  %5331 = vmatpush1.bf16.msra.mxu0 %v4064
  %5332 = vmatprep.subr.bf16.mxu0 0
  %5333 = vmatpush1.bf16.msra.mxu0 %v4065
  %5334 = vmatprep.subr.bf16.mxu0 0
  %5335 = vmatpush1.bf16.msra.mxu0 %v4066
  %5336 = vmatprep.subr.bf16.mxu0 0
  %5337 = vmatpush1.bf16.msra.mxu0 %v4067
  %5338 = vmatprep.subr.bf16.mxu0 0
  %5339 = vmatpush1.bf16.msra.mxu0 %v4068
  %5340 = vmatprep.subr.bf16.mxu0 0
  %5341 = vmatpush1.bf16.msra.mxu0 %v4069
  %5342 = vmatprep.subr.bf16.mxu0 0
  %5343 = vmatpush1.bf16.msra.mxu0 %v4070
  %5344 = vmatprep.subr.bf16.mxu0 0
  %5345 = vmatpush1.bf16.msra.mxu0 %v4071
  %5346 = vmatprep.subr.bf16.mxu0 0
  %5347 = vmatpush1.bf16.msra.mxu0 %v4072
  %5348 = vmatprep.subr.bf16.mxu0 0
  %5349 = vmatpush1.bf16.msra.mxu0 %v4073
  %5350 = vmatprep.subr.bf16.mxu0 0
  %5351 = vmatpush1.bf16.msra.mxu0 %v4074
  %5352 = vmatprep.subr.bf16.mxu0 0
  %5353 = vmatpush1.bf16.msra.mxu0 %v4075
  %5354 = vmatprep.subr.bf16.mxu0 0
  %5355 = vmatpush1.bf16.msra.mxu0 %v4076
  %5356 = vmatprep.mubr.bf16.mxu0 %v5311
  %5357 = vmatmul.mubr.bf16.gmra.mrb[0].mxu0 %v5310
  %v5358 = vpop.f32.mrb[0].mxu0
  %v5359 = vadd.f32 0.0, %v5358
  %v5360 = vpop.f32.mrb[0].mxu0
  %v5361 = vpop.f32.mrb[0].mxu0
  %v5362 = vadd.f32 0.0, %v5361
  %v5363 = vpop.f32.mrb[0].mxu0
  %5364 = vmatprep.mubr.bf16.mxu0 %v5313
  %5365 = vmatmul.mubr.bf16.gmra.mrb[0].mxu0 %v5312
  %v5366 = vpop.f32.mrb[0].mxu0
  %v5367 = vadd.f32 0.0, %v5366
  %v5368 = vpop.f32.mrb[0].mxu0
  %v5369 = vpop.f32.mrb[0].mxu0
  %v5370 = vadd.f32 0.0, %v5369
  %v5371 = vpop.f32.mrb[0].mxu0
  %5372 = vmatprep.mubr.bf16.mxu0 %v5315
  %5373 = vmatmul.mubr.bf16.gmra.mrb[0].mxu0 %v5314
  %v5374 = vpop.f32.mrb[0].mxu0
  %v5375 = vadd.f32 0.0, %v5374
  %v5376 = vpop.f32.mrb[0].mxu0
  %v5377 = vpop.f32.mrb[0].mxu0
  %v5378 = vadd.f32 0.0, %v5377
  %v5379 = vpop.f32.mrb[0].mxu0
  %5380 = vmatprep.mubr.bf16.mxu0 %v5317
  %5381 = vmatmul.mubr.bf16.gmra.mrb[0].mxu0 %v5316
  %v5382 = vpop.f32.mrb[0].mxu0
  %v5383 = vadd.f32 0.0, %v5382
  %v5384 = vpop.f32.mrb[0].mxu0
  %v5385 = vpop.f32.mrb[0].mxu0
  %v5386 = vadd.f32 0.0, %v5385
  %v5387 = vpop.f32.mrb[0].mxu0
  %5388 = vmatprep.mubr.bf16.mxu0 %v5319
  %5389 = vmatmul.mubr.bf16.gmra.mrb[0].mxu0 %v5318
  %v5390 = vpop.f32.mrb[0].mxu0
  %v5391 = vadd.f32 0.0, %v5390
  %v5392 = vpop.f32.mrb[0].mxu0
  %v5393 = vpop.f32.mrb[0].mxu0
  %v5394 = vadd.f32 0.0, %v5393
  %v5395 = vpop.f32.mrb[0].mxu0
  %5396 = vmatprep.mubr.bf16.mxu0 %v5321
  %5397 = vmatmul.mubr.bf16.gmra.mrb[0].mxu0 %v5320
  %v5398 = vpop.f32.mrb[0].mxu0
  %v5399 = vadd.f32 0.0, %v5398
  %v5400 = vpop.f32.mrb[0].mxu0
  %v5401 = vpop.f32.mrb[0].mxu0
  %v5402 = vadd.f32 0.0, %v5401
  %v5403 = vpop.f32.mrb[0].mxu0
  %5404 = vmatprep.mubr.bf16.mxu0 %v5323
  %5405 = vmatmul.mubr.bf16.gmra.mrb[0].mxu0 %v5322
  %v5406 = vpop.f32.mrb[0].mxu0
  %v5407 = vadd.f32 0.0, %v5406
  %v5408 = vpop.f32.mrb[0].mxu0
  %v5409 = vpop.f32.mrb[0].mxu0
  %v5410 = vadd.f32 0.0, %v5409
  %v5411 = vpop.f32.mrb[0].mxu0
  %5412 = vdwg.mxu0
  %v5413 = vadd.f32 %v5256, %v5359
  %v5414 = vadd.f32 %v5259, %v5362
  %v5415 = vadd.f32 %v5264, %v5367
  %v5416 = vadd.f32 %v5267, %v5370
  %v5417 = vadd.f32 %v5272, %v5375
  %v5418 = vadd.f32 %v5275, %v5378
  %v5419 = vadd.f32 %v5280, %v5383
  %v5420 = vadd.f32 %v5283, %v5386
  %v5421 = vadd.f32 %v5288, %v5391
  %v5422 = vadd.f32 %v5291, %v5394
  %v5423 = vadd.f32 %v5296, %v5399
  %v5424 = vadd.f32 %v5299, %v5402
  %v5425 = vadd.f32 %v5304, %v5407
  %v5426 = vadd.f32 %v5307, %v5410
  %s5427 = scalar_lea.vmem [#allocation2], 656
  %v5428 = vld [vmem:[%s5427] sm:$0xff]
  %v5429 = vld [vmem:[%s5427 + $0x8] sm:$0xff]
  %v5430 = vld [vmem:[%s5427 + $0x10] sm:$0xff]
  %v5431 = vld [vmem:[%s5427 + $0x18] sm:$0xff]
  %v5432 = vld [vmem:[%s5427 + $0x20] sm:$0xff]
  %v5433 = vld [vmem:[%s5427 + $0x28] sm:$0xff]
  %v5434 = vld [vmem:[%s5427 + $0x30] sm:$0xff]
  %v5435 = vld [vmem:[%s5427 + $0x38] sm:$0xff]
  %v5436 = vld [vmem:[%s5427 + $0x40] sm:$0xff]
  %v5437 = vld [vmem:[%s5427 + $0x48] sm:$0xff]
  %v5438 = vld [vmem:[%s5427 + $0x50] sm:$0xff]
  %v5439 = vld [vmem:[%s5427 + $0x58] sm:$0xff]
  %v5440 = vld [vmem:[%s5427 + $0x60] sm:$0xff]
  %v5441 = vld [vmem:[%s5427 + $0x68] sm:$0xff]
  %5442 = vmatprep.subr.bf16.mxu0 0
  %5443 = vmatpush1.bf16.msra.mxu0 %v4308
  %5444 = vmatprep.subr.bf16.mxu0 0
  %5445 = vmatpush1.bf16.msra.mxu0 %v4309
  %5446 = vmatprep.subr.bf16.mxu0 0
  %5447 = vmatpush1.bf16.msra.mxu0 %v4310
  %5448 = vmatprep.subr.bf16.mxu0 0
  %5449 = vmatpush1.bf16.msra.mxu0 %v4311
  %5450 = vmatprep.subr.bf16.mxu0 0
  %5451 = vmatpush1.bf16.msra.mxu0 %v4312
  %5452 = vmatprep.subr.bf16.mxu0 0
  %5453 = vmatpush1.bf16.msra.mxu0 %v4313
  %5454 = vmatprep.subr.bf16.mxu0 0
  %5455 = vmatpush1.bf16.msra.mxu0 %v4314
  %5456 = vmatprep.subr.bf16.mxu0 0
  %5457 = vmatpush1.bf16.msra.mxu0 %v4315
  %5458 = vmatprep.subr.bf16.mxu0 0
  %5459 = vmatpush1.bf16.msra.mxu0 %v4316
  %5460 = vmatprep.subr.bf16.mxu0 0
  %5461 = vmatpush1.bf16.msra.mxu0 %v4317
  %5462 = vmatprep.subr.bf16.mxu0 0
  %5463 = vmatpush1.bf16.msra.mxu0 %v4318
  %5464 = vmatprep.subr.bf16.mxu0 0
  %5465 = vmatpush1.bf16.msra.mxu0 %v4319
  %5466 = vmatprep.subr.bf16.mxu0 0
  %5467 = vmatpush1.bf16.msra.mxu0 %v4320
  %5468 = vmatprep.subr.bf16.mxu0 0
  %5469 = vmatpush1.bf16.msra.mxu0 %v4321
  %5470 = vmatprep.subr.bf16.mxu0 0
  %5471 = vmatpush1.bf16.msra.mxu0 %v4322
  %5472 = vmatprep.subr.bf16.mxu0 0
  %5473 = vmatpush1.bf16.msra.mxu0 %v4323
  %5474 = vmatprep.mubr.bf16.mxu0 %v5429
  %5475 = vmatmul.mubr.bf16.gmra.mrb[0].mxu0 %v5428
  %v5476 = vpop.f32.mrb[0].mxu0
  %v5477 = vadd.f32 0.0, %v5476
  %v5478 = vpop.f32.mrb[0].mxu0
  %v5479 = vpop.f32.mrb[0].mxu0
  %v5480 = vadd.f32 0.0, %v5479
  %v5481 = vpop.f32.mrb[0].mxu0
  %5482 = vmatprep.mubr.bf16.mxu0 %v5431
  %5483 = vmatmul.mubr.bf16.gmra.mrb[0].mxu0 %v5430
  %v5484 = vpop.f32.mrb[0].mxu0
  %v5485 = vadd.f32 0.0, %v5484
  %v5486 = vpop.f32.mrb[0].mxu0
  %v5487 = vpop.f32.mrb[0].mxu0
  %v5488 = vadd.f32 0.0, %v5487
  %v5489 = vpop.f32.mrb[0].mxu0
  %5490 = vmatprep.mubr.bf16.mxu0 %v5433
  %5491 = vmatmul.mubr.bf16.gmra.mrb[0].mxu0 %v5432
  %v5492 = vpop.f32.mrb[0].mxu0
  %v5493 = vadd.f32 0.0, %v5492
  %v5494 = vpop.f32.mrb[0].mxu0
  %v5495 = vpop.f32.mrb[0].mxu0
  %v5496 = vadd.f32 0.0, %v5495
  %v5497 = vpop.f32.mrb[0].mxu0
  %5498 = vmatprep.mubr.bf16.mxu0 %v5435
  %5499 = vmatmul.mubr.bf16.gmra.mrb[0].mxu0 %v5434
  %v5500 = vpop.f32.mrb[0].mxu0
  %v5501 = vadd.f32 0.0, %v5500
  %v5502 = vpop.f32.mrb[0].mxu0
  %v5503 = vpop.f32.mrb[0].mxu0
  %v5504 = vadd.f32 0.0, %v5503
  %v5505 = vpop.f32.mrb[0].mxu0
  %5506 = vmatprep.mubr.bf16.mxu0 %v5437
  %5507 = vmatmul.mubr.bf16.gmra.mrb[0].mxu0 %v5436
  %v5508 = vpop.f32.mrb[0].mxu0
  %v5509 = vadd.f32 0.0, %v5508
  %v5510 = vpop.f32.mrb[0].mxu0
  %v5511 = vpop.f32.mrb[0].mxu0
  %v5512 = vadd.f32 0.0, %v5511
  %v5513 = vpop.f32.mrb[0].mxu0
  %5514 = vmatprep.mubr.bf16.mxu0 %v5439
  %5515 = vmatmul.mubr.bf16.gmra.mrb[0].mxu0 %v5438
  %v5516 = vpop.f32.mrb[0].mxu0
  %v5517 = vadd.f32 0.0, %v5516
  %v5518 = vpop.f32.mrb[0].mxu0
  %v5519 = vpop.f32.mrb[0].mxu0
  %v5520 = vadd.f32 0.0, %v5519
  %v5521 = vpop.f32.mrb[0].mxu0
  %5522 = vmatprep.mubr.bf16.mxu0 %v5441
  %5523 = vmatmul.mubr.bf16.gmra.mrb[0].mxu0 %v5440
  %v5524 = vpop.f32.mrb[0].mxu0
  %v5525 = vadd.f32 0.0, %v5524
  %v5526 = vpop.f32.mrb[0].mxu0
  %v5527 = vpop.f32.mrb[0].mxu0
  %v5528 = vadd.f32 0.0, %v5527
  %v5529 = vpop.f32.mrb[0].mxu0
  %5530 = vdwg.mxu0
  %v5531 = vadd.f32 %v5413, %v5477
  %v5532 = vadd.f32 %v5414, %v5480
  %v5533 = vadd.f32 %v5415, %v5485
  %v5534 = vadd.f32 %v5416, %v5488
  %v5535 = vadd.f32 %v5417, %v5493
  %v5536 = vadd.f32 %v5418, %v5496
  %v5537 = vadd.f32 %v5419, %v5501
  %v5538 = vadd.f32 %v5420, %v5504
  %v5539 = vadd.f32 %v5421, %v5509
  %v5540 = vadd.f32 %v5422, %v5512
  %v5541 = vadd.f32 %v5423, %v5517
  %v5542 = vadd.f32 %v5424, %v5520
  %v5543 = vadd.f32 %v5425, %v5525
  %v5544 = vadd.f32 %v5426, %v5528
  %v5545 = vadd.f32 %v5531, %v4448
  %v5546 = vadd.f32 %v5532, %v4448
  %v5547 = vadd.f32 %v5533, %v4448
  %v5548 = vadd.f32 %v5534, %v4448
  %v5549 = vadd.f32 %v5535, %v4448
  %v5550 = vadd.f32 %v5536, %v4448
  %v5551 = vadd.f32 %v5537, %v4448
  %v5552 = vadd.f32 %v5538, %v4448
  %v5553 = vadd.f32 %v5539, %v4448
  %v5554 = vadd.f32 %v5540, %v4448
  %v5555 = vadd.f32 %v5541, %v4448
  %v5556 = vadd.f32 %v5542, %v4448
  %v5557 = vadd.f32 %v5543, %v4448
  %v5558 = vadd.f32 %v5544, %v4448
  %v5559 = vmul.f32 %v5545, 0.2
  %v5560 = vmul.f32 %v5546, 0.2
  %v5561 = vmul.f32 %v5547, 0.2
  %v5562 = vmul.f32 %v5548, 0.2
  %v5563 = vmul.f32 %v5549, 0.2
  %v5564 = vmul.f32 %v5550, 0.2
  %v5565 = vmul.f32 %v5551, 0.2
  %v5566 = vmul.f32 %v5552, 0.2
  %v5567 = vmul.f32 %v5553, 0.2
  %v5568 = vmul.f32 %v5554, 0.2
  %v5569 = vmul.f32 %v5555, 0.2
  %v5570 = vmul.f32 %v5556, 0.2
  %v5571 = vmul.f32 %v5557, 0.2
  %v5572 = vmul.f32 %v5558, 0.2
  %v5573 = vmax.f32 %v5545, %v5559
  %v5574 = vmax.f32 %v5546, %v5560
  %v5575 = vmax.f32 %v5547, %v5561
  %v5576 = vmax.f32 %v5548, %v5562
  %v5577 = vmax.f32 %v5549, %v5563
  %v5578 = vmax.f32 %v5550, %v5564
  %v5579 = vmax.f32 %v5551, %v5565
  %v5580 = vmax.f32 %v5552, %v5566
  %v5581 = vmax.f32 %v5553, %v5567
  %v5582 = vmax.f32 %v5554, %v5568
  %v5583 = vmax.f32 %v5555, %v5569
  %v5584 = vmax.f32 %v5556, %v5570
  %v5585 = vmax.f32 %v5557, %v5571
  %v5586 = vmax.f32 %v5558, %v5572
  %s5587 = scalar_lea.vmem %s5, 16
  %v5588 = vld [vmem:[%s5587] sm:$0x1]
  %v5589 = vlaneseq
  %v5590 = vshrl.u32 %v5589, 7
  %v5591 = vsub.s32 0, %v5590
  %v5592 = vrot.slane %v5588, %v5591
  %v5593 = vmul.f32 %v5573, %v5592
  %v5594 = vmul.f32 %v5574, %v5592
  %v5595 = vadd.f32 %v5101, %v5593
  %v5596 = vadd.f32 %v5102, %v5594
  %v5597 = vld [vmem:[%s5587 + $0x1] sm:$0x1]
  %v5598 = vlaneseq
  %v5599 = vshrl.u32 %v5598, 7
  %v5600 = vsub.s32 0, %v5599
  %v5601 = vrot.slane %v5597, %v5600
  %v5602 = vmul.f32 %v5575, %v5601
  %v5603 = vmul.f32 %v5576, %v5601
  %v5604 = vadd.f32 %v5595, %v5602
  %v5605 = vadd.f32 %v5596, %v5603
  %v5606 = vld [vmem:[%s5587 + $0x2] sm:$0x1]
  %v5607 = vlaneseq
  %v5608 = vshrl.u32 %v5607, 7
  %v5609 = vsub.s32 0, %v5608
  %v5610 = vrot.slane %v5606, %v5609
  %v5611 = vmul.f32 %v5577, %v5610
  %v5612 = vmul.f32 %v5578, %v5610
  %v5613 = vadd.f32 %v5604, %v5611
  %v5614 = vadd.f32 %v5605, %v5612
  %v5615 = vld [vmem:[%s5587 + $0x3] sm:$0x1]
  %v5616 = vlaneseq
  %v5617 = vshrl.u32 %v5616, 7
  %v5618 = vsub.s32 0, %v5617
  %v5619 = vrot.slane %v5615, %v5618
  %v5620 = vmul.f32 %v5579, %v5619
  %v5621 = vmul.f32 %v5580, %v5619
  %v5622 = vadd.f32 %v5613, %v5620
  %v5623 = vadd.f32 %v5614, %v5621
  %v5624 = vld [vmem:[%s5587 + $0x4] sm:$0x1]
  %v5625 = vlaneseq
  %v5626 = vshrl.u32 %v5625, 7
  %v5627 = vsub.s32 0, %v5626
  %v5628 = vrot.slane %v5624, %v5627
  %v5629 = vmul.f32 %v5581, %v5628
  %v5630 = vmul.f32 %v5582, %v5628
  %v5631 = vadd.f32 %v5622, %v5629
  %v5632 = vadd.f32 %v5623, %v5630
  %v5633 = vld [vmem:[%s5587 + $0x5] sm:$0x1]
  %v5634 = vlaneseq
  %v5635 = vshrl.u32 %v5634, 7
  %v5636 = vsub.s32 0, %v5635
  %v5637 = vrot.slane %v5633, %v5636
  %v5638 = vmul.f32 %v5583, %v5637
  %v5639 = vmul.f32 %v5584, %v5637
  %v5640 = vadd.f32 %v5631, %v5638
  %v5641 = vadd.f32 %v5632, %v5639
  %v5642 = vld [vmem:[%s5587 + $0x6] sm:$0x1]
  %v5643 = vlaneseq
  %v5644 = vshrl.u32 %v5643, 7
  %v5645 = vsub.s32 0, %v5644
  %v5646 = vrot.slane %v5642, %v5645
  %v5647 = vmul.f32 %v5585, %v5646
  %v5648 = vmul.f32 %v5586, %v5646
  %v5649 = vadd.f32 %v5640, %v5647
  %v5650 = vadd.f32 %v5641, %v5648
  %v5651 = vld [vmem:[%s47] sm:$0xff]
  %v5652 = vld [vmem:[%s47 + $0x8] sm:$0xff]
  %v5653 = vld [vmem:[%s47 + $0x10] sm:$0xff]
  %v5654 = vld [vmem:[%s47 + $0x18] sm:$0xff]
  %v5655 = vld [vmem:[%s47 + $0x20] sm:$0xff]
  %v5656 = vld [vmem:[%s47 + $0x28] sm:$0xff]
  %v5657 = vld [vmem:[%s47 + $0x30] sm:$0xff]
  %v5658 = vld [vmem:[%s47 + $0x38] sm:$0xff]
  %v5659 = vld [vmem:[%s47 + $0x40] sm:$0xff]
  %v5660 = vld [vmem:[%s47 + $0x48] sm:$0xff]
  %v5661 = vld [vmem:[%s47 + $0x50] sm:$0xff]
  %v5662 = vld [vmem:[%s47 + $0x58] sm:$0xff]
  %v5663 = vld [vmem:[%s47 + $0x60] sm:$0xff]
  %v5664 = vld [vmem:[%s47 + $0x68] sm:$0xff]
  %s5665 = scalar_lea.vmem [#allocation2], 896
  %v5666 = vld [vmem:[%s5665] sm:$0xff]
  %v5667 = vld [vmem:[%s5665 + $0x8] sm:$0xff]
  %v5668 = vld [vmem:[%s5665 + $0x10] sm:$0xff]
  %v5669 = vld [vmem:[%s5665 + $0x18] sm:$0xff]
  %v5670 = vld [vmem:[%s5665 + $0x20] sm:$0xff]
  %v5671 = vld [vmem:[%s5665 + $0x28] sm:$0xff]
  %v5672 = vld [vmem:[%s5665 + $0x30] sm:$0xff]
  %v5673 = vld [vmem:[%s5665 + $0x38] sm:$0xff]
  %v5674 = vld [vmem:[%s5665 + $0x40] sm:$0xff]
  %v5675 = vld [vmem:[%s5665 + $0x48] sm:$0xff]
  %v5676 = vld [vmem:[%s5665 + $0x50] sm:$0xff]
  %v5677 = vld [vmem:[%s5665 + $0x58] sm:$0xff]
  %v5678 = vld [vmem:[%s5665 + $0x60] sm:$0xff]
  %v5679 = vld [vmem:[%s5665 + $0x68] sm:$0xff]
  %5680 = vmatprep.subr.bf16.mxu0 0
  %5681 = vmatpush1.bf16.msra.mxu0 %v3644
  %5682 = vmatprep.subr.bf16.mxu0 0
  %5683 = vmatpush1.bf16.msra.mxu0 %v3645
  %5684 = vmatprep.subr.bf16.mxu0 0
  %5685 = vmatpush1.bf16.msra.mxu0 %v3646
  %5686 = vmatprep.subr.bf16.mxu0 0
  %5687 = vmatpush1.bf16.msra.mxu0 %v3647
  %5688 = vmatprep.subr.bf16.mxu0 0
  %5689 = vmatpush1.bf16.msra.mxu0 %v3648
  %5690 = vmatprep.subr.bf16.mxu0 0
  %5691 = vmatpush1.bf16.msra.mxu0 %v3649
  %5692 = vmatprep.subr.bf16.mxu0 0
  %5693 = vmatpush1.bf16.msra.mxu0 %v3650
  %5694 = vmatprep.subr.bf16.mxu0 0
  %5695 = vmatpush1.bf16.msra.mxu0 %v3651
  %5696 = vmatprep.subr.bf16.mxu0 0
  %5697 = vmatpush1.bf16.msra.mxu0 %v3652
  %5698 = vmatprep.subr.bf16.mxu0 0
  %5699 = vmatpush1.bf16.msra.mxu0 %v3653
  %5700 = vmatprep.subr.bf16.mxu0 0
  %5701 = vmatpush1.bf16.msra.mxu0 %v3654
  %5702 = vmatprep.subr.bf16.mxu0 0
  %5703 = vmatpush1.bf16.msra.mxu0 %v3655
  %5704 = vmatprep.subr.bf16.mxu0 0
  %5705 = vmatpush1.bf16.msra.mxu0 %v3656
  %5706 = vmatprep.subr.bf16.mxu0 0
  %5707 = vmatpush1.bf16.msra.mxu0 %v3657
  %5708 = vmatprep.subr.bf16.mxu0 0
  %5709 = vmatpush1.bf16.msra.mxu0 %v3658
  %5710 = vmatprep.subr.bf16.mxu0 0
  %5711 = vmatpush1.bf16.msra.mxu0 %v3659
  %5712 = vmatprep.mubr.bf16.mxu0 %v5667
  %5713 = vmatmul.mubr.bf16.gmra.mrb[0].mxu0 %v5666
  %v5714 = vpop.f32.mrb[0].mxu0
  %v5715 = vadd.f32 0.0, %v5714
  %v5716 = vpop.f32.mrb[0].mxu0
  %v5717 = vpop.f32.mrb[0].mxu0
  %v5718 = vadd.f32 0.0, %v5717
  %v5719 = vpop.f32.mrb[0].mxu0
  %5720 = vmatprep.mubr.bf16.mxu0 %v5669
  %5721 = vmatmul.mubr.bf16.gmra.mrb[0].mxu0 %v5668
  %v5722 = vpop.f32.mrb[0].mxu0
  %v5723 = vadd.f32 0.0, %v5722
  %v5724 = vpop.f32.mrb[0].mxu0
  %v5725 = vpop.f32.mrb[0].mxu0
  %v5726 = vadd.f32 0.0, %v5725
  %v5727 = vpop.f32.mrb[0].mxu0
  %5728 = vmatprep.mubr.bf16.mxu0 %v5671
  %5729 = vmatmul.mubr.bf16.gmra.mrb[0].mxu0 %v5670
  %v5730 = vpop.f32.mrb[0].mxu0
  %v5731 = vadd.f32 0.0, %v5730
  %v5732 = vpop.f32.mrb[0].mxu0
  %v5733 = vpop.f32.mrb[0].mxu0
  %v5734 = vadd.f32 0.0, %v5733
  %v5735 = vpop.f32.mrb[0].mxu0
  %5736 = vmatprep.mubr.bf16.mxu0 %v5673
  %5737 = vmatmul.mubr.bf16.gmra.mrb[0].mxu0 %v5672
  %v5738 = vpop.f32.mrb[0].mxu0
  %v5739 = vadd.f32 0.0, %v5738
  %v5740 = vpop.f32.mrb[0].mxu0
  %v5741 = vpop.f32.mrb[0].mxu0
  %v5742 = vadd.f32 0.0, %v5741
  %v5743 = vpop.f32.mrb[0].mxu0
  %5744 = vmatprep.mubr.bf16.mxu0 %v5675
  %5745 = vmatmul.mubr.bf16.gmra.mrb[0].mxu0 %v5674
  %v5746 = vpop.f32.mrb[0].mxu0
  %v5747 = vadd.f32 0.0, %v5746
  %v5748 = vpop.f32.mrb[0].mxu0
  %v5749 = vpop.f32.mrb[0].mxu0
  %v5750 = vadd.f32 0.0, %v5749
  %v5751 = vpop.f32.mrb[0].mxu0
  %5752 = vmatprep.mubr.bf16.mxu0 %v5677
  %5753 = vmatmul.mubr.bf16.gmra.mrb[0].mxu0 %v5676
  %v5754 = vpop.f32.mrb[0].mxu0
  %v5755 = vadd.f32 0.0, %v5754
  %v5756 = vpop.f32.mrb[0].mxu0
  %v5757 = vpop.f32.mrb[0].mxu0
  %v5758 = vadd.f32 0.0, %v5757
  %v5759 = vpop.f32.mrb[0].mxu0
  %5760 = vmatprep.mubr.bf16.mxu0 %v5679
  %5761 = vmatmul.mubr.bf16.gmra.mrb[0].mxu0 %v5678
  %v5762 = vpop.f32.mrb[0].mxu0
  %v5763 = vadd.f32 0.0, %v5762
  %v5764 = vpop.f32.mrb[0].mxu0
  %v5765 = vpop.f32.mrb[0].mxu0
  %v5766 = vadd.f32 0.0, %v5765
  %v5767 = vpop.f32.mrb[0].mxu0
  %5768 = vdwg.mxu0
  %5769 = vmatprep.subr.bf16.mxu0 0
  %5770 = vmatpush1.bf16.msra.mxu0 %v3829
  %5771 = vmatprep.subr.bf16.mxu0 0
  %5772 = vmatpush1.bf16.msra.mxu0 %v3830
  %5773 = vmatprep.subr.bf16.mxu0 0
  %5774 = vmatpush1.bf16.msra.mxu0 %v3831
  %5775 = vmatprep.subr.bf16.mxu0 0
  %5776 = vmatpush1.bf16.msra.mxu0 %v3832
  %5777 = vmatprep.subr.bf16.mxu0 0
  %5778 = vmatpush1.bf16.msra.mxu0 %v3833
  %5779 = vmatprep.subr.bf16.mxu0 0
  %5780 = vmatpush1.bf16.msra.mxu0 %v3834
  %5781 = vmatprep.subr.bf16.mxu0 0
  %5782 = vmatpush1.bf16.msra.mxu0 %v3835
  %5783 = vmatprep.subr.bf16.mxu0 0
  %5784 = vmatpush1.bf16.msra.mxu0 %v3836
  %5785 = vmatprep.subr.bf16.mxu0 0
  %5786 = vmatpush1.bf16.msra.mxu0 %v3837
  %5787 = vmatprep.subr.bf16.mxu0 0
  %5788 = vmatpush1.bf16.msra.mxu0 %v3838
  %5789 = vmatprep.subr.bf16.mxu0 0
  %5790 = vmatpush1.bf16.msra.mxu0 %v3839
  %5791 = vmatprep.subr.bf16.mxu0 0
  %5792 = vmatpush1.bf16.msra.mxu0 %v3840
  %5793 = vmatprep.subr.bf16.mxu0 0
  %5794 = vmatpush1.bf16.msra.mxu0 %v3841
  %5795 = vmatprep.subr.bf16.mxu0 0
  %5796 = vmatpush1.bf16.msra.mxu0 %v3842
  %5797 = vmatprep.subr.bf16.mxu0 0
  %5798 = vmatpush1.bf16.msra.mxu0 %v3843
  %5799 = vmatprep.subr.bf16.mxu0 0
  %5800 = vmatpush1.bf16.msra.mxu0 %v3844
  %5801 = vmatprep.mubr.bf16.mxu0 %v5652
  %5802 = vmatmul.mubr.bf16.gmra.mrb[0].mxu0 %v5651
  %v5803 = vpop.f32.mrb[0].mxu0
  %v5804 = vadd.f32 %v5715, %v5803
  %v5805 = vpop.f32.mrb[0].mxu0
  %v5806 = vpop.f32.mrb[0].mxu0
  %v5807 = vadd.f32 %v5718, %v5806
  %v5808 = vpop.f32.mrb[0].mxu0
  %5809 = vmatprep.mubr.bf16.mxu0 %v5654
  %5810 = vmatmul.mubr.bf16.gmra.mrb[0].mxu0 %v5653
  %v5811 = vpop.f32.mrb[0].mxu0
  %v5812 = vadd.f32 %v5723, %v5811
  %v5813 = vpop.f32.mrb[0].mxu0
  %v5814 = vpop.f32.mrb[0].mxu0
  %v5815 = vadd.f32 %v5726, %v5814
  %v5816 = vpop.f32.mrb[0].mxu0
  %5817 = vmatprep.mubr.bf16.mxu0 %v5656
  %5818 = vmatmul.mubr.bf16.gmra.mrb[0].mxu0 %v5655
  %v5819 = vpop.f32.mrb[0].mxu0
  %v5820 = vadd.f32 %v5731, %v5819
  %v5821 = vpop.f32.mrb[0].mxu0
  %v5822 = vpop.f32.mrb[0].mxu0
  %v5823 = vadd.f32 %v5734, %v5822
  %v5824 = vpop.f32.mrb[0].mxu0
  %5825 = vmatprep.mubr.bf16.mxu0 %v5658
  %5826 = vmatmul.mubr.bf16.gmra.mrb[0].mxu0 %v5657
  %v5827 = vpop.f32.mrb[0].mxu0
  %v5828 = vadd.f32 %v5739, %v5827
  %v5829 = vpop.f32.mrb[0].mxu0
  %v5830 = vpop.f32.mrb[0].mxu0
  %v5831 = vadd.f32 %v5742, %v5830
  %v5832 = vpop.f32.mrb[0].mxu0
  %5833 = vmatprep.mubr.bf16.mxu0 %v5660
  %5834 = vmatmul.mubr.bf16.gmra.mrb[0].mxu0 %v5659
  %v5835 = vpop.f32.mrb[0].mxu0
  %v5836 = vadd.f32 %v5747, %v5835
  %v5837 = vpop.f32.mrb[0].mxu0
  %v5838 = vpop.f32.mrb[0].mxu0
  %v5839 = vadd.f32 %v5750, %v5838
  %v5840 = vpop.f32.mrb[0].mxu0
  %5841 = vmatprep.mubr.bf16.mxu0 %v5662
  %5842 = vmatmul.mubr.bf16.gmra.mrb[0].mxu0 %v5661
  %v5843 = vpop.f32.mrb[0].mxu0
  %v5844 = vadd.f32 %v5755, %v5843
  %v5845 = vpop.f32.mrb[0].mxu0
  %v5846 = vpop.f32.mrb[0].mxu0
  %v5847 = vadd.f32 %v5758, %v5846
  %v5848 = vpop.f32.mrb[0].mxu0
  %5849 = vmatprep.mubr.bf16.mxu0 %v5664
  %5850 = vmatmul.mubr.bf16.gmra.mrb[0].mxu0 %v5663
  %v5851 = vpop.f32.mrb[0].mxu0
  %v5852 = vadd.f32 %v5763, %v5851
  %v5853 = vpop.f32.mrb[0].mxu0
  %v5854 = vpop.f32.mrb[0].mxu0
  %v5855 = vadd.f32 %v5766, %v5854
  %v5856 = vpop.f32.mrb[0].mxu0
  %5857 = vdwg.mxu0
  %v5858 = vld [vmem:[%s1993] sm:$0xff]
  %v5859 = vld [vmem:[%s1993 + $0x8] sm:$0xff]
  %v5860 = vld [vmem:[%s1993 + $0x10] sm:$0xff]
  %v5861 = vld [vmem:[%s1993 + $0x18] sm:$0xff]
  %v5862 = vld [vmem:[%s1993 + $0x20] sm:$0xff]
  %v5863 = vld [vmem:[%s1993 + $0x28] sm:$0xff]
  %v5864 = vld [vmem:[%s1993 + $0x30] sm:$0xff]
  %v5865 = vld [vmem:[%s1993 + $0x38] sm:$0xff]
  %v5866 = vld [vmem:[%s1993 + $0x40] sm:$0xff]
  %v5867 = vld [vmem:[%s1993 + $0x48] sm:$0xff]
  %v5868 = vld [vmem:[%s1993 + $0x50] sm:$0xff]
  %v5869 = vld [vmem:[%s1993 + $0x58] sm:$0xff]
  %v5870 = vld [vmem:[%s1993 + $0x60] sm:$0xff]
  %v5871 = vld [vmem:[%s1993 + $0x68] sm:$0xff]
  %5872 = vmatprep.subr.bf16.mxu0 0
  %5873 = vmatpush1.bf16.msra.mxu0 %v4061
  %5874 = vmatprep.subr.bf16.mxu0 0
  %5875 = vmatpush1.bf16.msra.mxu0 %v4062
  %5876 = vmatprep.subr.bf16.mxu0 0
  %5877 = vmatpush1.bf16.msra.mxu0 %v4063
  %5878 = vmatprep.subr.bf16.mxu0 0
  %5879 = vmatpush1.bf16.msra.mxu0 %v4064
  %5880 = vmatprep.subr.bf16.mxu0 0
  %5881 = vmatpush1.bf16.msra.mxu0 %v4065
  %5882 = vmatprep.subr.bf16.mxu0 0
  %5883 = vmatpush1.bf16.msra.mxu0 %v4066
  %5884 = vmatprep.subr.bf16.mxu0 0
  %5885 = vmatpush1.bf16.msra.mxu0 %v4067
  %5886 = vmatprep.subr.bf16.mxu0 0
  %5887 = vmatpush1.bf16.msra.mxu0 %v4068
  %5888 = vmatprep.subr.bf16.mxu0 0
  %5889 = vmatpush1.bf16.msra.mxu0 %v4069
  %5890 = vmatprep.subr.bf16.mxu0 0
  %5891 = vmatpush1.bf16.msra.mxu0 %v4070
  %5892 = vmatprep.subr.bf16.mxu0 0
  %5893 = vmatpush1.bf16.msra.mxu0 %v4071
  %5894 = vmatprep.subr.bf16.mxu0 0
  %5895 = vmatpush1.bf16.msra.mxu0 %v4072
  %5896 = vmatprep.subr.bf16.mxu0 0
  %5897 = vmatpush1.bf16.msra.mxu0 %v4073
  %5898 = vmatprep.subr.bf16.mxu0 0
  %5899 = vmatpush1.bf16.msra.mxu0 %v4074
  %5900 = vmatprep.subr.bf16.mxu0 0
  %5901 = vmatpush1.bf16.msra.mxu0 %v4075
  %5902 = vmatprep.subr.bf16.mxu0 0
  %5903 = vmatpush1.bf16.msra.mxu0 %v4076
  %5904 = vmatprep.mubr.bf16.mxu0 %v5859
  %5905 = vmatmul.mubr.bf16.gmra.mrb[0].mxu0 %v5858
  %v5906 = vpop.f32.mrb[0].mxu0
  %v5907 = vadd.f32 0.0, %v5906
  %v5908 = vpop.f32.mrb[0].mxu0
  %v5909 = vpop.f32.mrb[0].mxu0
  %v5910 = vadd.f32 0.0, %v5909
  %v5911 = vpop.f32.mrb[0].mxu0
  %5912 = vmatprep.mubr.bf16.mxu0 %v5861
  %5913 = vmatmul.mubr.bf16.gmra.mrb[0].mxu0 %v5860
  %v5914 = vpop.f32.mrb[0].mxu0
  %v5915 = vadd.f32 0.0, %v5914
  %v5916 = vpop.f32.mrb[0].mxu0
  %v5917 = vpop.f32.mrb[0].mxu0
  %v5918 = vadd.f32 0.0, %v5917
  %v5919 = vpop.f32.mrb[0].mxu0
  %5920 = vmatprep.mubr.bf16.mxu0 %v5863
  %5921 = vmatmul.mubr.bf16.gmra.mrb[0].mxu0 %v5862
  %v5922 = vpop.f32.mrb[0].mxu0
  %v5923 = vadd.f32 0.0, %v5922
  %v5924 = vpop.f32.mrb[0].mxu0
  %v5925 = vpop.f32.mrb[0].mxu0
  %v5926 = vadd.f32 0.0, %v5925
  %v5927 = vpop.f32.mrb[0].mxu0
  %5928 = vmatprep.mubr.bf16.mxu0 %v5865
  %5929 = vmatmul.mubr.bf16.gmra.mrb[0].mxu0 %v5864
  %v5930 = vpop.f32.mrb[0].mxu0
  %v5931 = vadd.f32 0.0, %v5930
  %v5932 = vpop.f32.mrb[0].mxu0
  %v5933 = vpop.f32.mrb[0].mxu0
  %v5934 = vadd.f32 0.0, %v5933
  %v5935 = vpop.f32.mrb[0].mxu0
  %5936 = vmatprep.mubr.bf16.mxu0 %v5867
  %5937 = vmatmul.mubr.bf16.gmra.mrb[0].mxu0 %v5866
  %v5938 = vpop.f32.mrb[0].mxu0
  %v5939 = vadd.f32 0.0, %v5938
  %v5940 = vpop.f32.mrb[0].mxu0
  %v5941 = vpop.f32.mrb[0].mxu0
  %v5942 = vadd.f32 0.0, %v5941
  %v5943 = vpop.f32.mrb[0].mxu0
  %5944 = vmatprep.mubr.bf16.mxu0 %v5869
  %5945 = vmatmul.mubr.bf16.gmra.mrb[0].mxu0 %v5868
  %v5946 = vpop.f32.mrb[0].mxu0
  %v5947 = vadd.f32 0.0, %v5946
  %v5948 = vpop.f32.mrb[0].mxu0
  %v5949 = vpop.f32.mrb[0].mxu0
  %v5950 = vadd.f32 0.0, %v5949
  %v5951 = vpop.f32.mrb[0].mxu0
  %5952 = vmatprep.mubr.bf16.mxu0 %v5871
  %5953 = vmatmul.mubr.bf16.gmra.mrb[0].mxu0 %v5870
  %v5954 = vpop.f32.mrb[0].mxu0
  %v5955 = vadd.f32 0.0, %v5954
  %v5956 = vpop.f32.mrb[0].mxu0
  %v5957 = vpop.f32.mrb[0].mxu0
  %v5958 = vadd.f32 0.0, %v5957
  %v5959 = vpop.f32.mrb[0].mxu0
  %5960 = vdwg.mxu0
  %v5961 = vadd.f32 %v5804, %v5907
  %v5962 = vadd.f32 %v5807, %v5910
  %v5963 = vadd.f32 %v5812, %v5915
  %v5964 = vadd.f32 %v5815, %v5918
  %v5965 = vadd.f32 %v5820, %v5923
  %v5966 = vadd.f32 %v5823, %v5926
  %v5967 = vadd.f32 %v5828, %v5931
  %v5968 = vadd.f32 %v5831, %v5934
  %v5969 = vadd.f32 %v5836, %v5939
  %v5970 = vadd.f32 %v5839, %v5942
  %v5971 = vadd.f32 %v5844, %v5947
  %v5972 = vadd.f32 %v5847, %v5950
  %v5973 = vadd.f32 %v5852, %v5955
  %v5974 = vadd.f32 %v5855, %v5958
  %s5975 = scalar_lea.vmem [#allocation2], 912
  %v5976 = vld [vmem:[%s5975] sm:$0xff]
  %v5977 = vld [vmem:[%s5975 + $0x8] sm:$0xff]
  %v5978 = vld [vmem:[%s5975 + $0x10] sm:$0xff]
  %v5979 = vld [vmem:[%s5975 + $0x18] sm:$0xff]
  %v5980 = vld [vmem:[%s5975 + $0x20] sm:$0xff]
  %v5981 = vld [vmem:[%s5975 + $0x28] sm:$0xff]
  %v5982 = vld [vmem:[%s5975 + $0x30] sm:$0xff]
  %v5983 = vld [vmem:[%s5975 + $0x38] sm:$0xff]
  %v5984 = vld [vmem:[%s5975 + $0x40] sm:$0xff]
  %v5985 = vld [vmem:[%s5975 + $0x48] sm:$0xff]
  %v5986 = vld [vmem:[%s5975 + $0x50] sm:$0xff]
  %v5987 = vld [vmem:[%s5975 + $0x58] sm:$0xff]
  %v5988 = vld [vmem:[%s5975 + $0x60] sm:$0xff]
  %v5989 = vld [vmem:[%s5975 + $0x68] sm:$0xff]
  %5990 = vmatprep.subr.bf16.mxu0 0
  %5991 = vmatpush1.bf16.msra.mxu0 %v4308
  %5992 = vmatprep.subr.bf16.mxu0 0
  %5993 = vmatpush1.bf16.msra.mxu0 %v4309
  %5994 = vmatprep.subr.bf16.mxu0 0
  %5995 = vmatpush1.bf16.msra.mxu0 %v4310
  %5996 = vmatprep.subr.bf16.mxu0 0
  %5997 = vmatpush1.bf16.msra.mxu0 %v4311
  %5998 = vmatprep.subr.bf16.mxu0 0
  %5999 = vmatpush1.bf16.msra.mxu0 %v4312
  %6000 = vmatprep.subr.bf16.mxu0 0
  %6001 = vmatpush1.bf16.msra.mxu0 %v4313
  %6002 = vmatprep.subr.bf16.mxu0 0
  %6003 = vmatpush1.bf16.msra.mxu0 %v4314
  %6004 = vmatprep.subr.bf16.mxu0 0
  %6005 = vmatpush1.bf16.msra.mxu0 %v4315
  %6006 = vmatprep.subr.bf16.mxu0 0
  %6007 = vmatpush1.bf16.msra.mxu0 %v4316
  %6008 = vmatprep.subr.bf16.mxu0 0
  %6009 = vmatpush1.bf16.msra.mxu0 %v4317
  %6010 = vmatprep.subr.bf16.mxu0 0
  %6011 = vmatpush1.bf16.msra.mxu0 %v4318
  %6012 = vmatprep.subr.bf16.mxu0 0
  %6013 = vmatpush1.bf16.msra.mxu0 %v4319
  %6014 = vmatprep.subr.bf16.mxu0 0
  %6015 = vmatpush1.bf16.msra.mxu0 %v4320
  %6016 = vmatprep.subr.bf16.mxu0 0
  %6017 = vmatpush1.bf16.msra.mxu0 %v4321
  %6018 = vmatprep.subr.bf16.mxu0 0
  %6019 = vmatpush1.bf16.msra.mxu0 %v4322
  %6020 = vmatprep.subr.bf16.mxu0 0
  %6021 = vmatpush1.bf16.msra.mxu0 %v4323
  %6022 = vmatprep.mubr.bf16.mxu0 %v5977
  %6023 = vmatmul.mubr.bf16.gmra.mrb[0].mxu0 %v5976
  %v6024 = vpop.f32.mrb[0].mxu0
  %v6025 = vadd.f32 0.0, %v6024
  %v6026 = vpop.f32.mrb[0].mxu0
  %v6027 = vpop.f32.mrb[0].mxu0
  %v6028 = vadd.f32 0.0, %v6027
  %v6029 = vpop.f32.mrb[0].mxu0
  %6030 = vmatprep.mubr.bf16.mxu0 %v5979
  %6031 = vmatmul.mubr.bf16.gmra.mrb[0].mxu0 %v5978
  %v6032 = vpop.f32.mrb[0].mxu0
  %v6033 = vadd.f32 0.0, %v6032
  %v6034 = vpop.f32.mrb[0].mxu0
  %v6035 = vpop.f32.mrb[0].mxu0
  %v6036 = vadd.f32 0.0, %v6035
  %v6037 = vpop.f32.mrb[0].mxu0
  %6038 = vmatprep.mubr.bf16.mxu0 %v5981
  %6039 = vmatmul.mubr.bf16.gmra.mrb[0].mxu0 %v5980
  %v6040 = vpop.f32.mrb[0].mxu0
  %v6041 = vadd.f32 0.0, %v6040
  %v6042 = vpop.f32.mrb[0].mxu0
  %v6043 = vpop.f32.mrb[0].mxu0
  %v6044 = vadd.f32 0.0, %v6043
  %v6045 = vpop.f32.mrb[0].mxu0
  %6046 = vmatprep.mubr.bf16.mxu0 %v5983
  %6047 = vmatmul.mubr.bf16.gmra.mrb[0].mxu0 %v5982
  %v6048 = vpop.f32.mrb[0].mxu0
  %v6049 = vadd.f32 0.0, %v6048
  %v6050 = vpop.f32.mrb[0].mxu0
  %v6051 = vpop.f32.mrb[0].mxu0
  %v6052 = vadd.f32 0.0, %v6051
  %v6053 = vpop.f32.mrb[0].mxu0
  %6054 = vmatprep.mubr.bf16.mxu0 %v5985
  %6055 = vmatmul.mubr.bf16.gmra.mrb[0].mxu0 %v5984
  %v6056 = vpop.f32.mrb[0].mxu0
  %v6057 = vadd.f32 0.0, %v6056
  %v6058 = vpop.f32.mrb[0].mxu0
  %v6059 = vpop.f32.mrb[0].mxu0
  %v6060 = vadd.f32 0.0, %v6059
  %v6061 = vpop.f32.mrb[0].mxu0
  %6062 = vmatprep.mubr.bf16.mxu0 %v5987
  %6063 = vmatmul.mubr.bf16.gmra.mrb[0].mxu0 %v5986
  %v6064 = vpop.f32.mrb[0].mxu0
  %v6065 = vadd.f32 0.0, %v6064
  %v6066 = vpop.f32.mrb[0].mxu0
  %v6067 = vpop.f32.mrb[0].mxu0
  %v6068 = vadd.f32 0.0, %v6067
  %v6069 = vpop.f32.mrb[0].mxu0
  %6070 = vmatprep.mubr.bf16.mxu0 %v5989
  %6071 = vmatmul.mubr.bf16.gmra.mrb[0].mxu0 %v5988
  %v6072 = vpop.f32.mrb[0].mxu0
  %v6073 = vadd.f32 0.0, %v6072
  %v6074 = vpop.f32.mrb[0].mxu0
  %v6075 = vpop.f32.mrb[0].mxu0
  %v6076 = vadd.f32 0.0, %v6075
  %v6077 = vpop.f32.mrb[0].mxu0
  %6078 = vdwg.mxu0
  %v6079 = vadd.f32 %v5961, %v6025
  %v6080 = vadd.f32 %v5962, %v6028
  %v6081 = vadd.f32 %v5963, %v6033
  %v6082 = vadd.f32 %v5964, %v6036
  %v6083 = vadd.f32 %v5965, %v6041
  %v6084 = vadd.f32 %v5966, %v6044
  %v6085 = vadd.f32 %v5967, %v6049
  %v6086 = vadd.f32 %v5968, %v6052
  %v6087 = vadd.f32 %v5969, %v6057
  %v6088 = vadd.f32 %v5970, %v6060
  %v6089 = vadd.f32 %v5971, %v6065
  %v6090 = vadd.f32 %v5972, %v6068
  %v6091 = vadd.f32 %v5973, %v6073
  %v6092 = vadd.f32 %v5974, %v6076
  %v6093 = vadd.f32 %v6079, %v4448
  %v6094 = vadd.f32 %v6080, %v4448
  %v6095 = vadd.f32 %v6081, %v4448
  %v6096 = vadd.f32 %v6082, %v4448
  %v6097 = vadd.f32 %v6083, %v4448
  %v6098 = vadd.f32 %v6084, %v4448
  %v6099 = vadd.f32 %v6085, %v4448
  %v6100 = vadd.f32 %v6086, %v4448
  %v6101 = vadd.f32 %v6087, %v4448
  %v6102 = vadd.f32 %v6088, %v4448
  %v6103 = vadd.f32 %v6089, %v4448
  %v6104 = vadd.f32 %v6090, %v4448
  %v6105 = vadd.f32 %v6091, %v4448
  %v6106 = vadd.f32 %v6092, %v4448
  %v6107 = vmul.f32 %v6093, 0.2
  %v6108 = vmul.f32 %v6094, 0.2
  %v6109 = vmul.f32 %v6095, 0.2
  %v6110 = vmul.f32 %v6096, 0.2
  %v6111 = vmul.f32 %v6097, 0.2
  %v6112 = vmul.f32 %v6098, 0.2
  %v6113 = vmul.f32 %v6099, 0.2
  %v6114 = vmul.f32 %v6100, 0.2
  %v6115 = vmul.f32 %v6101, 0.2
  %v6116 = vmul.f32 %v6102, 0.2
  %v6117 = vmul.f32 %v6103, 0.2
  %v6118 = vmul.f32 %v6104, 0.2
  %v6119 = vmul.f32 %v6105, 0.2
  %v6120 = vmul.f32 %v6106, 0.2
  %v6121 = vmax.f32 %v6093, %v6107
  %v6122 = vmax.f32 %v6094, %v6108
  %v6123 = vmax.f32 %v6095, %v6109
  %v6124 = vmax.f32 %v6096, %v6110
  %v6125 = vmax.f32 %v6097, %v6111
  %v6126 = vmax.f32 %v6098, %v6112
  %v6127 = vmax.f32 %v6099, %v6113
  %v6128 = vmax.f32 %v6100, %v6114
  %v6129 = vmax.f32 %v6101, %v6115
  %v6130 = vmax.f32 %v6102, %v6116
  %v6131 = vmax.f32 %v6103, %v6117
  %v6132 = vmax.f32 %v6104, %v6118
  %v6133 = vmax.f32 %v6105, %v6119
  %v6134 = vmax.f32 %v6106, %v6120
  %s6135 = scalar_lea.vmem %s5, 24
  %v6136 = vld [vmem:[%s6135] sm:$0x1]
  %v6137 = vlaneseq
  %v6138 = vshrl.u32 %v6137, 7
  %v6139 = vsub.s32 0, %v6138
  %v6140 = vrot.slane %v6136, %v6139
  %v6141 = vmul.f32 %v6121, %v6140
  %v6142 = vmul.f32 %v6122, %v6140
  %v6143 = vadd.f32 %v5649, %v6141
  %v6144 = vadd.f32 %v5650, %v6142
  %v6145 = vld [vmem:[%s6135 + $0x1] sm:$0x1]
  %v6146 = vlaneseq
  %v6147 = vshrl.u32 %v6146, 7
  %v6148 = vsub.s32 0, %v6147
  %v6149 = vrot.slane %v6145, %v6148
  %v6150 = vmul.f32 %v6123, %v6149
  %v6151 = vmul.f32 %v6124, %v6149
  %v6152 = vadd.f32 %v6143, %v6150
  %v6153 = vadd.f32 %v6144, %v6151
  %v6154 = vld [vmem:[%s6135 + $0x2] sm:$0x1]
  %v6155 = vlaneseq
  %v6156 = vshrl.u32 %v6155, 7
  %v6157 = vsub.s32 0, %v6156
  %v6158 = vrot.slane %v6154, %v6157
  %v6159 = vmul.f32 %v6125, %v6158
  %v6160 = vmul.f32 %v6126, %v6158
  %v6161 = vadd.f32 %v6152, %v6159
  %v6162 = vadd.f32 %v6153, %v6160
  %v6163 = vld [vmem:[%s6135 + $0x3] sm:$0x1]
  %v6164 = vlaneseq
  %v6165 = vshrl.u32 %v6164, 7
  %v6166 = vsub.s32 0, %v6165
  %v6167 = vrot.slane %v6163, %v6166
  %v6168 = vmul.f32 %v6127, %v6167
  %v6169 = vmul.f32 %v6128, %v6167
  %v6170 = vadd.f32 %v6161, %v6168
  %v6171 = vadd.f32 %v6162, %v6169
  %v6172 = vld [vmem:[%s6135 + $0x4] sm:$0x1]
  %v6173 = vlaneseq
  %v6174 = vshrl.u32 %v6173, 7
  %v6175 = vsub.s32 0, %v6174
  %v6176 = vrot.slane %v6172, %v6175
  %v6177 = vmul.f32 %v6129, %v6176
  %v6178 = vmul.f32 %v6130, %v6176
  %v6179 = vadd.f32 %v6170, %v6177
  %v6180 = vadd.f32 %v6171, %v6178
  %v6181 = vld [vmem:[%s6135 + $0x5] sm:$0x1]
  %v6182 = vlaneseq
  %v6183 = vshrl.u32 %v6182, 7
  %v6184 = vsub.s32 0, %v6183
  %v6185 = vrot.slane %v6181, %v6184
  %v6186 = vmul.f32 %v6131, %v6185
  %v6187 = vmul.f32 %v6132, %v6185
  %v6188 = vadd.f32 %v6179, %v6186
  %v6189 = vadd.f32 %v6180, %v6187
  %v6190 = vld [vmem:[%s6135 + $0x6] sm:$0x1]
  %v6191 = vlaneseq
  %v6192 = vshrl.u32 %v6191, 7
  %v6193 = vsub.s32 0, %v6192
  %v6194 = vrot.slane %v6190, %v6193
  %v6195 = vmul.f32 %v6133, %v6194
  %v6196 = vmul.f32 %v6134, %v6194
  %v6197 = vadd.f32 %v6188, %v6195
  %v6198 = vadd.f32 %v6189, %v6196
  %v6199 = vld [vmem:[%s53] sm:$0xff]
  %v6200 = vld [vmem:[%s53 + $0x8] sm:$0xff]
  %v6201 = vld [vmem:[%s53 + $0x10] sm:$0xff]
  %v6202 = vld [vmem:[%s53 + $0x18] sm:$0xff]
  %v6203 = vld [vmem:[%s53 + $0x20] sm:$0xff]
  %v6204 = vld [vmem:[%s53 + $0x28] sm:$0xff]
  %v6205 = vld [vmem:[%s53 + $0x30] sm:$0xff]
  %v6206 = vld [vmem:[%s53 + $0x38] sm:$0xff]
  %v6207 = vld [vmem:[%s53 + $0x40] sm:$0xff]
  %v6208 = vld [vmem:[%s53 + $0x48] sm:$0xff]
  %v6209 = vld [vmem:[%s53 + $0x50] sm:$0xff]
  %v6210 = vld [vmem:[%s53 + $0x58] sm:$0xff]
  %v6211 = vld [vmem:[%s53 + $0x60] sm:$0xff]
  %v6212 = vld [vmem:[%s53 + $0x68] sm:$0xff]
  %s6213 = scalar_lea.vmem [#allocation2], 1152
  %v6214 = vld [vmem:[%s6213] sm:$0xff]
  %v6215 = vld [vmem:[%s6213 + $0x8] sm:$0xff]
  %v6216 = vld [vmem:[%s6213 + $0x10] sm:$0xff]
  %v6217 = vld [vmem:[%s6213 + $0x18] sm:$0xff]
  %v6218 = vld [vmem:[%s6213 + $0x20] sm:$0xff]
  %v6219 = vld [vmem:[%s6213 + $0x28] sm:$0xff]
  %v6220 = vld [vmem:[%s6213 + $0x30] sm:$0xff]
  %v6221 = vld [vmem:[%s6213 + $0x38] sm:$0xff]
  %v6222 = vld [vmem:[%s6213 + $0x40] sm:$0xff]
  %v6223 = vld [vmem:[%s6213 + $0x48] sm:$0xff]
  %v6224 = vld [vmem:[%s6213 + $0x50] sm:$0xff]
  %v6225 = vld [vmem:[%s6213 + $0x58] sm:$0xff]
  %v6226 = vld [vmem:[%s6213 + $0x60] sm:$0xff]
  %v6227 = vld [vmem:[%s6213 + $0x68] sm:$0xff]
  %6228 = vmatprep.subr.bf16.mxu0 0
  %6229 = vmatpush1.bf16.msra.mxu0 %v3644
  %6230 = vmatprep.subr.bf16.mxu0 0
  %6231 = vmatpush1.bf16.msra.mxu0 %v3645
  %6232 = vmatprep.subr.bf16.mxu0 0
  %6233 = vmatpush1.bf16.msra.mxu0 %v3646
  %6234 = vmatprep.subr.bf16.mxu0 0
  %6235 = vmatpush1.bf16.msra.mxu0 %v3647
  %6236 = vmatprep.subr.bf16.mxu0 0
  %6237 = vmatpush1.bf16.msra.mxu0 %v3648
  %6238 = vmatprep.subr.bf16.mxu0 0
  %6239 = vmatpush1.bf16.msra.mxu0 %v3649
  %6240 = vmatprep.subr.bf16.mxu0 0
  %6241 = vmatpush1.bf16.msra.mxu0 %v3650
  %6242 = vmatprep.subr.bf16.mxu0 0
  %6243 = vmatpush1.bf16.msra.mxu0 %v3651
  %6244 = vmatprep.subr.bf16.mxu0 0
  %6245 = vmatpush1.bf16.msra.mxu0 %v3652
  %6246 = vmatprep.subr.bf16.mxu0 0
  %6247 = vmatpush1.bf16.msra.mxu0 %v3653
  %6248 = vmatprep.subr.bf16.mxu0 0
  %6249 = vmatpush1.bf16.msra.mxu0 %v3654
  %6250 = vmatprep.subr.bf16.mxu0 0
  %6251 = vmatpush1.bf16.msra.mxu0 %v3655
  %6252 = vmatprep.subr.bf16.mxu0 0
  %6253 = vmatpush1.bf16.msra.mxu0 %v3656
  %6254 = vmatprep.subr.bf16.mxu0 0
  %6255 = vmatpush1.bf16.msra.mxu0 %v3657
  %6256 = vmatprep.subr.bf16.mxu0 0
  %6257 = vmatpush1.bf16.msra.mxu0 %v3658
  %6258 = vmatprep.subr.bf16.mxu0 0
  %6259 = vmatpush1.bf16.msra.mxu0 %v3659
  %6260 = vmatprep.mubr.bf16.mxu0 %v6215
  %6261 = vmatmul.mubr.bf16.gmra.mrb[0].mxu0 %v6214
  %v6262 = vpop.f32.mrb[0].mxu0
  %v6263 = vadd.f32 0.0, %v6262
  %v6264 = vpop.f32.mrb[0].mxu0
  %v6265 = vpop.f32.mrb[0].mxu0
  %v6266 = vadd.f32 0.0, %v6265
  %v6267 = vpop.f32.mrb[0].mxu0
  %6268 = vmatprep.mubr.bf16.mxu0 %v6217
  %6269 = vmatmul.mubr.bf16.gmra.mrb[0].mxu0 %v6216
  %v6270 = vpop.f32.mrb[0].mxu0
  %v6271 = vadd.f32 0.0, %v6270
  %v6272 = vpop.f32.mrb[0].mxu0
  %v6273 = vpop.f32.mrb[0].mxu0
  %v6274 = vadd.f32 0.0, %v6273
  %v6275 = vpop.f32.mrb[0].mxu0
  %6276 = vmatprep.mubr.bf16.mxu0 %v6219
  %6277 = vmatmul.mubr.bf16.gmra.mrb[0].mxu0 %v6218
  %v6278 = vpop.f32.mrb[0].mxu0
  %v6279 = vadd.f32 0.0, %v6278
  %v6280 = vpop.f32.mrb[0].mxu0
  %v6281 = vpop.f32.mrb[0].mxu0
  %v6282 = vadd.f32 0.0, %v6281
  %v6283 = vpop.f32.mrb[0].mxu0
  %6284 = vmatprep.mubr.bf16.mxu0 %v6221
  %6285 = vmatmul.mubr.bf16.gmra.mrb[0].mxu0 %v6220
  %v6286 = vpop.f32.mrb[0].mxu0
  %v6287 = vadd.f32 0.0, %v6286
  %v6288 = vpop.f32.mrb[0].mxu0
  %v6289 = vpop.f32.mrb[0].mxu0
  %v6290 = vadd.f32 0.0, %v6289
  %v6291 = vpop.f32.mrb[0].mxu0
  %6292 = vmatprep.mubr.bf16.mxu0 %v6223
  %6293 = vmatmul.mubr.bf16.gmra.mrb[0].mxu0 %v6222
  %v6294 = vpop.f32.mrb[0].mxu0
  %v6295 = vadd.f32 0.0, %v6294
  %v6296 = vpop.f32.mrb[0].mxu0
  %v6297 = vpop.f32.mrb[0].mxu0
  %v6298 = vadd.f32 0.0, %v6297
  %v6299 = vpop.f32.mrb[0].mxu0
  %6300 = vmatprep.mubr.bf16.mxu0 %v6225
  %6301 = vmatmul.mubr.bf16.gmra.mrb[0].mxu0 %v6224
  %v6302 = vpop.f32.mrb[0].mxu0
  %v6303 = vadd.f32 0.0, %v6302
  %v6304 = vpop.f32.mrb[0].mxu0
  %v6305 = vpop.f32.mrb[0].mxu0
  %v6306 = vadd.f32 0.0, %v6305
  %v6307 = vpop.f32.mrb[0].mxu0
  %6308 = vmatprep.mubr.bf16.mxu0 %v6227
  %6309 = vmatmul.mubr.bf16.gmra.mrb[0].mxu0 %v6226
  %v6310 = vpop.f32.mrb[0].mxu0
  %v6311 = vadd.f32 0.0, %v6310
  %v6312 = vpop.f32.mrb[0].mxu0
  %v6313 = vpop.f32.mrb[0].mxu0
  %v6314 = vadd.f32 0.0, %v6313
  %v6315 = vpop.f32.mrb[0].mxu0
  %6316 = vdwg.mxu0
  %6317 = vmatprep.subr.bf16.mxu0 0
  %6318 = vmatpush1.bf16.msra.mxu0 %v3829
  %6319 = vmatprep.subr.bf16.mxu0 0
  %6320 = vmatpush1.bf16.msra.mxu0 %v3830
  %6321 = vmatprep.subr.bf16.mxu0 0
  %6322 = vmatpush1.bf16.msra.mxu0 %v3831
  %6323 = vmatprep.subr.bf16.mxu0 0
  %6324 = vmatpush1.bf16.msra.mxu0 %v3832
  %6325 = vmatprep.subr.bf16.mxu0 0
  %6326 = vmatpush1.bf16.msra.mxu0 %v3833
  %6327 = vmatprep.subr.bf16.mxu0 0
  %6328 = vmatpush1.bf16.msra.mxu0 %v3834
  %6329 = vmatprep.subr.bf16.mxu0 0
  %6330 = vmatpush1.bf16.msra.mxu0 %v3835
  %6331 = vmatprep.subr.bf16.mxu0 0
  %6332 = vmatpush1.bf16.msra.mxu0 %v3836
  %6333 = vmatprep.subr.bf16.mxu0 0
  %6334 = vmatpush1.bf16.msra.mxu0 %v3837
  %6335 = vmatprep.subr.bf16.mxu0 0
  %6336 = vmatpush1.bf16.msra.mxu0 %v3838
  %6337 = vmatprep.subr.bf16.mxu0 0
  %6338 = vmatpush1.bf16.msra.mxu0 %v3839
  %6339 = vmatprep.subr.bf16.mxu0 0
  %6340 = vmatpush1.bf16.msra.mxu0 %v3840
  %6341 = vmatprep.subr.bf16.mxu0 0
  %6342 = vmatpush1.bf16.msra.mxu0 %v3841
  %6343 = vmatprep.subr.bf16.mxu0 0
  %6344 = vmatpush1.bf16.msra.mxu0 %v3842
  %6345 = vmatprep.subr.bf16.mxu0 0
  %6346 = vmatpush1.bf16.msra.mxu0 %v3843
  %6347 = vmatprep.subr.bf16.mxu0 0
  %6348 = vmatpush1.bf16.msra.mxu0 %v3844
  %6349 = vmatprep.mubr.bf16.mxu0 %v6200
  %6350 = vmatmul.mubr.bf16.gmra.mrb[0].mxu0 %v6199
  %v6351 = vpop.f32.mrb[0].mxu0
  %v6352 = vadd.f32 %v6263, %v6351
  %v6353 = vpop.f32.mrb[0].mxu0
  %v6354 = vpop.f32.mrb[0].mxu0
  %v6355 = vadd.f32 %v6266, %v6354
  %v6356 = vpop.f32.mrb[0].mxu0
  %6357 = vmatprep.mubr.bf16.mxu0 %v6202
  %6358 = vmatmul.mubr.bf16.gmra.mrb[0].mxu0 %v6201
  %v6359 = vpop.f32.mrb[0].mxu0
  %v6360 = vadd.f32 %v6271, %v6359
  %v6361 = vpop.f32.mrb[0].mxu0
  %v6362 = vpop.f32.mrb[0].mxu0
  %v6363 = vadd.f32 %v6274, %v6362
  %v6364 = vpop.f32.mrb[0].mxu0
  %6365 = vmatprep.mubr.bf16.mxu0 %v6204
  %6366 = vmatmul.mubr.bf16.gmra.mrb[0].mxu0 %v6203
  %v6367 = vpop.f32.mrb[0].mxu0
  %v6368 = vadd.f32 %v6279, %v6367
  %v6369 = vpop.f32.mrb[0].mxu0
  %v6370 = vpop.f32.mrb[0].mxu0
  %v6371 = vadd.f32 %v6282, %v6370
  %v6372 = vpop.f32.mrb[0].mxu0
  %6373 = vmatprep.mubr.bf16.mxu0 %v6206
  %6374 = vmatmul.mubr.bf16.gmra.mrb[0].mxu0 %v6205
  %v6375 = vpop.f32.mrb[0].mxu0
  %v6376 = vadd.f32 %v6287, %v6375
  %v6377 = vpop.f32.mrb[0].mxu0
  %v6378 = vpop.f32.mrb[0].mxu0
  %v6379 = vadd.f32 %v6290, %v6378
  %v6380 = vpop.f32.mrb[0].mxu0
  %6381 = vmatprep.mubr.bf16.mxu0 %v6208
  %6382 = vmatmul.mubr.bf16.gmra.mrb[0].mxu0 %v6207
  %v6383 = vpop.f32.mrb[0].mxu0
  %v6384 = vadd.f32 %v6295, %v6383
  %v6385 = vpop.f32.mrb[0].mxu0
  %v6386 = vpop.f32.mrb[0].mxu0
  %v6387 = vadd.f32 %v6298, %v6386
  %v6388 = vpop.f32.mrb[0].mxu0
  %6389 = vmatprep.mubr.bf16.mxu0 %v6210
  %6390 = vmatmul.mubr.bf16.gmra.mrb[0].mxu0 %v6209
  %v6391 = vpop.f32.mrb[0].mxu0
  %v6392 = vadd.f32 %v6303, %v6391
  %v6393 = vpop.f32.mrb[0].mxu0
  %v6394 = vpop.f32.mrb[0].mxu0
  %v6395 = vadd.f32 %v6306, %v6394
  %v6396 = vpop.f32.mrb[0].mxu0
  %6397 = vmatprep.mubr.bf16.mxu0 %v6212
  %6398 = vmatmul.mubr.bf16.gmra.mrb[0].mxu0 %v6211
  %v6399 = vpop.f32.mrb[0].mxu0
  %v6400 = vadd.f32 %v6311, %v6399
  %v6401 = vpop.f32.mrb[0].mxu0
  %v6402 = vpop.f32.mrb[0].mxu0
  %v6403 = vadd.f32 %v6314, %v6402
  %v6404 = vpop.f32.mrb[0].mxu0
  %6405 = vdwg.mxu0
  %v6406 = vld [vmem:[%s2481] sm:$0xff]
  %v6407 = vld [vmem:[%s2481 + $0x8] sm:$0xff]
  %v6408 = vld [vmem:[%s2481 + $0x10] sm:$0xff]
  %v6409 = vld [vmem:[%s2481 + $0x18] sm:$0xff]
  %v6410 = vld [vmem:[%s2481 + $0x20] sm:$0xff]
  %v6411 = vld [vmem:[%s2481 + $0x28] sm:$0xff]
  %v6412 = vld [vmem:[%s2481 + $0x30] sm:$0xff]
  %v6413 = vld [vmem:[%s2481 + $0x38] sm:$0xff]
  %v6414 = vld [vmem:[%s2481 + $0x40] sm:$0xff]
  %v6415 = vld [vmem:[%s2481 + $0x48] sm:$0xff]
  %v6416 = vld [vmem:[%s2481 + $0x50] sm:$0xff]
  %v6417 = vld [vmem:[%s2481 + $0x58] sm:$0xff]
  %v6418 = vld [vmem:[%s2481 + $0x60] sm:$0xff]
  %v6419 = vld [vmem:[%s2481 + $0x68] sm:$0xff]
  %6420 = vmatprep.subr.bf16.mxu0 0
  %6421 = vmatpush1.bf16.msra.mxu0 %v4061
  %6422 = vmatprep.subr.bf16.mxu0 0
  %6423 = vmatpush1.bf16.msra.mxu0 %v4062
  %6424 = vmatprep.subr.bf16.mxu0 0
  %6425 = vmatpush1.bf16.msra.mxu0 %v4063
  %6426 = vmatprep.subr.bf16.mxu0 0
  %6427 = vmatpush1.bf16.msra.mxu0 %v4064
  %6428 = vmatprep.subr.bf16.mxu0 0
  %6429 = vmatpush1.bf16.msra.mxu0 %v4065
  %6430 = vmatprep.subr.bf16.mxu0 0
  %6431 = vmatpush1.bf16.msra.mxu0 %v4066
  %6432 = vmatprep.subr.bf16.mxu0 0
  %6433 = vmatpush1.bf16.msra.mxu0 %v4067
  %6434 = vmatprep.subr.bf16.mxu0 0
  %6435 = vmatpush1.bf16.msra.mxu0 %v4068
  %6436 = vmatprep.subr.bf16.mxu0 0
  %6437 = vmatpush1.bf16.msra.mxu0 %v4069
  %6438 = vmatprep.subr.bf16.mxu0 0
  %6439 = vmatpush1.bf16.msra.mxu0 %v4070
  %6440 = vmatprep.subr.bf16.mxu0 0
  %6441 = vmatpush1.bf16.msra.mxu0 %v4071
  %6442 = vmatprep.subr.bf16.mxu0 0
  %6443 = vmatpush1.bf16.msra.mxu0 %v4072
  %6444 = vmatprep.subr.bf16.mxu0 0
  %6445 = vmatpush1.bf16.msra.mxu0 %v4073
  %6446 = vmatprep.subr.bf16.mxu0 0
  %6447 = vmatpush1.bf16.msra.mxu0 %v4074
  %6448 = vmatprep.subr.bf16.mxu0 0
  %6449 = vmatpush1.bf16.msra.mxu0 %v4075
  %6450 = vmatprep.subr.bf16.mxu0 0
  %6451 = vmatpush1.bf16.msra.mxu0 %v4076
  %6452 = vmatprep.mubr.bf16.mxu0 %v6407
  %6453 = vmatmul.mubr.bf16.gmra.mrb[0].mxu0 %v6406
  %v6454 = vpop.f32.mrb[0].mxu0
  %v6455 = vadd.f32 0.0, %v6454
  %v6456 = vpop.f32.mrb[0].mxu0
  %v6457 = vpop.f32.mrb[0].mxu0
  %v6458 = vadd.f32 0.0, %v6457
  %v6459 = vpop.f32.mrb[0].mxu0
  %6460 = vmatprep.mubr.bf16.mxu0 %v6409
  %6461 = vmatmul.mubr.bf16.gmra.mrb[0].mxu0 %v6408
  %v6462 = vpop.f32.mrb[0].mxu0
  %v6463 = vadd.f32 0.0, %v6462
  %v6464 = vpop.f32.mrb[0].mxu0
  %v6465 = vpop.f32.mrb[0].mxu0
  %v6466 = vadd.f32 0.0, %v6465
  %v6467 = vpop.f32.mrb[0].mxu0
  %6468 = vmatprep.mubr.bf16.mxu0 %v6411
  %6469 = vmatmul.mubr.bf16.gmra.mrb[0].mxu0 %v6410
  %v6470 = vpop.f32.mrb[0].mxu0
  %v6471 = vadd.f32 0.0, %v6470
  %v6472 = vpop.f32.mrb[0].mxu0
  %v6473 = vpop.f32.mrb[0].mxu0
  %v6474 = vadd.f32 0.0, %v6473
  %v6475 = vpop.f32.mrb[0].mxu0
  %6476 = vmatprep.mubr.bf16.mxu0 %v6413
  %6477 = vmatmul.mubr.bf16.gmra.mrb[0].mxu0 %v6412
  %v6478 = vpop.f32.mrb[0].mxu0
  %v6479 = vadd.f32 0.0, %v6478
  %v6480 = vpop.f32.mrb[0].mxu0
  %v6481 = vpop.f32.mrb[0].mxu0
  %v6482 = vadd.f32 0.0, %v6481
  %v6483 = vpop.f32.mrb[0].mxu0
  %6484 = vmatprep.mubr.bf16.mxu0 %v6415
  %6485 = vmatmul.mubr.bf16.gmra.mrb[0].mxu0 %v6414
  %v6486 = vpop.f32.mrb[0].mxu0
  %v6487 = vadd.f32 0.0, %v6486
  %v6488 = vpop.f32.mrb[0].mxu0
  %v6489 = vpop.f32.mrb[0].mxu0
  %v6490 = vadd.f32 0.0, %v6489
  %v6491 = vpop.f32.mrb[0].mxu0
  %6492 = vmatprep.mubr.bf16.mxu0 %v6417
  %6493 = vmatmul.mubr.bf16.gmra.mrb[0].mxu0 %v6416
  %v6494 = vpop.f32.mrb[0].mxu0
  %v6495 = vadd.f32 0.0, %v6494
  %v6496 = vpop.f32.mrb[0].mxu0
  %v6497 = vpop.f32.mrb[0].mxu0
  %v6498 = vadd.f32 0.0, %v6497
  %v6499 = vpop.f32.mrb[0].mxu0
  %6500 = vmatprep.mubr.bf16.mxu0 %v6419
  %6501 = vmatmul.mubr.bf16.gmra.mrb[0].mxu0 %v6418
  %v6502 = vpop.f32.mrb[0].mxu0
  %v6503 = vadd.f32 0.0, %v6502
  %v6504 = vpop.f32.mrb[0].mxu0
  %v6505 = vpop.f32.mrb[0].mxu0
  %v6506 = vadd.f32 0.0, %v6505
  %v6507 = vpop.f32.mrb[0].mxu0
  %6508 = vdwg.mxu0
  %v6509 = vadd.f32 %v6352, %v6455
  %v6510 = vadd.f32 %v6355, %v6458
  %v6511 = vadd.f32 %v6360, %v6463
  %v6512 = vadd.f32 %v6363, %v6466
  %v6513 = vadd.f32 %v6368, %v6471
  %v6514 = vadd.f32 %v6371, %v6474
  %v6515 = vadd.f32 %v6376, %v6479
  %v6516 = vadd.f32 %v6379, %v6482
  %v6517 = vadd.f32 %v6384, %v6487
  %v6518 = vadd.f32 %v6387, %v6490
  %v6519 = vadd.f32 %v6392, %v6495
  %v6520 = vadd.f32 %v6395, %v6498
  %v6521 = vadd.f32 %v6400, %v6503
  %v6522 = vadd.f32 %v6403, %v6506
  %s6523 = scalar_lea.vmem [#allocation2], 1168
  %v6524 = vld [vmem:[%s6523] sm:$0xff]
  %v6525 = vld [vmem:[%s6523 + $0x8] sm:$0xff]
  %v6526 = vld [vmem:[%s6523 + $0x10] sm:$0xff]
  %v6527 = vld [vmem:[%s6523 + $0x18] sm:$0xff]
  %v6528 = vld [vmem:[%s6523 + $0x20] sm:$0xff]
  %v6529 = vld [vmem:[%s6523 + $0x28] sm:$0xff]
  %v6530 = vld [vmem:[%s6523 + $0x30] sm:$0xff]
  %v6531 = vld [vmem:[%s6523 + $0x38] sm:$0xff]
  %v6532 = vld [vmem:[%s6523 + $0x40] sm:$0xff]
  %v6533 = vld [vmem:[%s6523 + $0x48] sm:$0xff]
  %v6534 = vld [vmem:[%s6523 + $0x50] sm:$0xff]
  %v6535 = vld [vmem:[%s6523 + $0x58] sm:$0xff]
  %v6536 = vld [vmem:[%s6523 + $0x60] sm:$0xff]
  %v6537 = vld [vmem:[%s6523 + $0x68] sm:$0xff]
  %6538 = vmatprep.subr.bf16.mxu0 0
  %6539 = vmatpush1.bf16.msra.mxu0 %v4308
  %6540 = vmatprep.subr.bf16.mxu0 0
  %6541 = vmatpush1.bf16.msra.mxu0 %v4309
  %6542 = vmatprep.subr.bf16.mxu0 0
  %6543 = vmatpush1.bf16.msra.mxu0 %v4310
  %6544 = vmatprep.subr.bf16.mxu0 0
  %6545 = vmatpush1.bf16.msra.mxu0 %v4311
  %6546 = vmatprep.subr.bf16.mxu0 0
  %6547 = vmatpush1.bf16.msra.mxu0 %v4312
  %6548 = vmatprep.subr.bf16.mxu0 0
  %6549 = vmatpush1.bf16.msra.mxu0 %v4313
  %6550 = vmatprep.subr.bf16.mxu0 0
  %6551 = vmatpush1.bf16.msra.mxu0 %v4314
  %6552 = vmatprep.subr.bf16.mxu0 0
  %6553 = vmatpush1.bf16.msra.mxu0 %v4315
  %6554 = vmatprep.subr.bf16.mxu0 0
  %6555 = vmatpush1.bf16.msra.mxu0 %v4316
  %6556 = vmatprep.subr.bf16.mxu0 0
  %6557 = vmatpush1.bf16.msra.mxu0 %v4317
  %6558 = vmatprep.subr.bf16.mxu0 0
  %6559 = vmatpush1.bf16.msra.mxu0 %v4318
  %6560 = vmatprep.subr.bf16.mxu0 0
  %6561 = vmatpush1.bf16.msra.mxu0 %v4319
  %6562 = vmatprep.subr.bf16.mxu0 0
  %6563 = vmatpush1.bf16.msra.mxu0 %v4320
  %6564 = vmatprep.subr.bf16.mxu0 0
  %6565 = vmatpush1.bf16.msra.mxu0 %v4321
  %6566 = vmatprep.subr.bf16.mxu0 0
  %6567 = vmatpush1.bf16.msra.mxu0 %v4322
  %6568 = vmatprep.subr.bf16.mxu0 0
  %6569 = vmatpush1.bf16.msra.mxu0 %v4323
  %6570 = vmatprep.mubr.bf16.mxu0 %v6525
  %6571 = vmatmul.mubr.bf16.gmra.mrb[0].mxu0 %v6524
  %v6572 = vpop.f32.mrb[0].mxu0
  %v6573 = vadd.f32 0.0, %v6572
  %v6574 = vpop.f32.mrb[0].mxu0
  %v6575 = vpop.f32.mrb[0].mxu0
  %v6576 = vadd.f32 0.0, %v6575
  %v6577 = vpop.f32.mrb[0].mxu0
  %6578 = vmatprep.mubr.bf16.mxu0 %v6527
  %6579 = vmatmul.mubr.bf16.gmra.mrb[0].mxu0 %v6526
  %v6580 = vpop.f32.mrb[0].mxu0
  %v6581 = vadd.f32 0.0, %v6580
  %v6582 = vpop.f32.mrb[0].mxu0
  %v6583 = vpop.f32.mrb[0].mxu0
  %v6584 = vadd.f32 0.0, %v6583
  %v6585 = vpop.f32.mrb[0].mxu0
  %6586 = vmatprep.mubr.bf16.mxu0 %v6529
  %6587 = vmatmul.mubr.bf16.gmra.mrb[0].mxu0 %v6528
  %v6588 = vpop.f32.mrb[0].mxu0
  %v6589 = vadd.f32 0.0, %v6588
  %v6590 = vpop.f32.mrb[0].mxu0
  %v6591 = vpop.f32.mrb[0].mxu0
  %v6592 = vadd.f32 0.0, %v6591
  %v6593 = vpop.f32.mrb[0].mxu0
  %6594 = vmatprep.mubr.bf16.mxu0 %v6531
  %6595 = vmatmul.mubr.bf16.gmra.mrb[0].mxu0 %v6530
  %v6596 = vpop.f32.mrb[0].mxu0
  %v6597 = vadd.f32 0.0, %v6596
  %v6598 = vpop.f32.mrb[0].mxu0
  %v6599 = vpop.f32.mrb[0].mxu0
  %v6600 = vadd.f32 0.0, %v6599
  %v6601 = vpop.f32.mrb[0].mxu0
  %6602 = vmatprep.mubr.bf16.mxu0 %v6533
  %6603 = vmatmul.mubr.bf16.gmra.mrb[0].mxu0 %v6532
  %v6604 = vpop.f32.mrb[0].mxu0
  %v6605 = vadd.f32 0.0, %v6604
  %v6606 = vpop.f32.mrb[0].mxu0
  %v6607 = vpop.f32.mrb[0].mxu0
  %v6608 = vadd.f32 0.0, %v6607
  %v6609 = vpop.f32.mrb[0].mxu0
  %6610 = vmatprep.mubr.bf16.mxu0 %v6535
  %6611 = vmatmul.mubr.bf16.gmra.mrb[0].mxu0 %v6534
  %v6612 = vpop.f32.mrb[0].mxu0
  %v6613 = vadd.f32 0.0, %v6612
  %v6614 = vpop.f32.mrb[0].mxu0
  %v6615 = vpop.f32.mrb[0].mxu0
  %v6616 = vadd.f32 0.0, %v6615
  %v6617 = vpop.f32.mrb[0].mxu0
  %6618 = vmatprep.mubr.bf16.mxu0 %v6537
  %6619 = vmatmul.mubr.bf16.gmra.mrb[0].mxu0 %v6536
  %v6620 = vpop.f32.mrb[0].mxu0
  %v6621 = vadd.f32 0.0, %v6620
  %v6622 = vpop.f32.mrb[0].mxu0
  %v6623 = vpop.f32.mrb[0].mxu0
  %v6624 = vadd.f32 0.0, %v6623
  %v6625 = vpop.f32.mrb[0].mxu0
  %6626 = vdwg.mxu0
  %v6627 = vadd.f32 %v6509, %v6573
  %v6628 = vadd.f32 %v6510, %v6576
  %v6629 = vadd.f32 %v6511, %v6581
  %v6630 = vadd.f32 %v6512, %v6584
  %v6631 = vadd.f32 %v6513, %v6589
  %v6632 = vadd.f32 %v6514, %v6592
  %v6633 = vadd.f32 %v6515, %v6597
  %v6634 = vadd.f32 %v6516, %v6600
  %v6635 = vadd.f32 %v6517, %v6605
  %v6636 = vadd.f32 %v6518, %v6608
  %v6637 = vadd.f32 %v6519, %v6613
  %v6638 = vadd.f32 %v6520, %v6616
  %v6639 = vadd.f32 %v6521, %v6621
  %v6640 = vadd.f32 %v6522, %v6624
  %v6641 = vadd.f32 %v6627, %v4448
  %v6642 = vadd.f32 %v6628, %v4448
  %v6643 = vadd.f32 %v6629, %v4448
  %v6644 = vadd.f32 %v6630, %v4448
  %v6645 = vadd.f32 %v6631, %v4448
  %v6646 = vadd.f32 %v6632, %v4448
  %v6647 = vadd.f32 %v6633, %v4448
  %v6648 = vadd.f32 %v6634, %v4448
  %v6649 = vadd.f32 %v6635, %v4448
  %v6650 = vadd.f32 %v6636, %v4448
  %v6651 = vadd.f32 %v6637, %v4448
  %v6652 = vadd.f32 %v6638, %v4448
  %v6653 = vadd.f32 %v6639, %v4448
  %v6654 = vadd.f32 %v6640, %v4448
  %v6655 = vmul.f32 %v6641, 0.2
  %v6656 = vmul.f32 %v6642, 0.2
  %v6657 = vmul.f32 %v6643, 0.2
  %v6658 = vmul.f32 %v6644, 0.2
  %v6659 = vmul.f32 %v6645, 0.2
  %v6660 = vmul.f32 %v6646, 0.2
  %v6661 = vmul.f32 %v6647, 0.2
  %v6662 = vmul.f32 %v6648, 0.2
  %v6663 = vmul.f32 %v6649, 0.2
  %v6664 = vmul.f32 %v6650, 0.2
  %v6665 = vmul.f32 %v6651, 0.2
  %v6666 = vmul.f32 %v6652, 0.2
  %v6667 = vmul.f32 %v6653, 0.2
  %v6668 = vmul.f32 %v6654, 0.2
  %v6669 = vmax.f32 %v6641, %v6655
  %v6670 = vmax.f32 %v6642, %v6656
  %v6671 = vmax.f32 %v6643, %v6657
  %v6672 = vmax.f32 %v6644, %v6658
  %v6673 = vmax.f32 %v6645, %v6659
  %v6674 = vmax.f32 %v6646, %v6660
  %v6675 = vmax.f32 %v6647, %v6661
  %v6676 = vmax.f32 %v6648, %v6662
  %v6677 = vmax.f32 %v6649, %v6663
  %v6678 = vmax.f32 %v6650, %v6664
  %v6679 = vmax.f32 %v6651, %v6665
  %v6680 = vmax.f32 %v6652, %v6666
  %v6681 = vmax.f32 %v6653, %v6667
  %v6682 = vmax.f32 %v6654, %v6668
  %s6683 = scalar_lea.vmem %s5, 32
  %v6684 = vld [vmem:[%s6683] sm:$0x1]
  %v6685 = vlaneseq
  %v6686 = vshrl.u32 %v6685, 7
  %v6687 = vsub.s32 0, %v6686
  %v6688 = vrot.slane %v6684, %v6687
  %v6689 = vmul.f32 %v6669, %v6688
  %v6690 = vmul.f32 %v6670, %v6688
  %v6691 = vadd.f32 %v6197, %v6689
  %v6692 = vadd.f32 %v6198, %v6690
  %v6693 = vld [vmem:[%s6683 + $0x1] sm:$0x1]
  %v6694 = vlaneseq
  %v6695 = vshrl.u32 %v6694, 7
  %v6696 = vsub.s32 0, %v6695
  %v6697 = vrot.slane %v6693, %v6696
  %v6698 = vmul.f32 %v6671, %v6697
  %v6699 = vmul.f32 %v6672, %v6697
  %v6700 = vadd.f32 %v6691, %v6698
  %v6701 = vadd.f32 %v6692, %v6699
  %v6702 = vld [vmem:[%s6683 + $0x2] sm:$0x1]
  %v6703 = vlaneseq
  %v6704 = vshrl.u32 %v6703, 7
  %v6705 = vsub.s32 0, %v6704
  %v6706 = vrot.slane %v6702, %v6705
  %v6707 = vmul.f32 %v6673, %v6706
  %v6708 = vmul.f32 %v6674, %v6706
  %v6709 = vadd.f32 %v6700, %v6707
  %v6710 = vadd.f32 %v6701, %v6708
  %v6711 = vld [vmem:[%s6683 + $0x3] sm:$0x1]
  %v6712 = vlaneseq
  %v6713 = vshrl.u32 %v6712, 7
  %v6714 = vsub.s32 0, %v6713
  %v6715 = vrot.slane %v6711, %v6714
  %v6716 = vmul.f32 %v6675, %v6715
  %v6717 = vmul.f32 %v6676, %v6715
  %v6718 = vadd.f32 %v6709, %v6716
  %v6719 = vadd.f32 %v6710, %v6717
  %v6720 = vld [vmem:[%s6683 + $0x4] sm:$0x1]
  %v6721 = vlaneseq
  %v6722 = vshrl.u32 %v6721, 7
  %v6723 = vsub.s32 0, %v6722
  %v6724 = vrot.slane %v6720, %v6723
  %v6725 = vmul.f32 %v6677, %v6724
  %v6726 = vmul.f32 %v6678, %v6724
  %v6727 = vadd.f32 %v6718, %v6725
  %v6728 = vadd.f32 %v6719, %v6726
  %v6729 = vld [vmem:[%s6683 + $0x5] sm:$0x1]
  %v6730 = vlaneseq
  %v6731 = vshrl.u32 %v6730, 7
  %v6732 = vsub.s32 0, %v6731
  %v6733 = vrot.slane %v6729, %v6732
  %v6734 = vmul.f32 %v6679, %v6733
  %v6735 = vmul.f32 %v6680, %v6733
  %v6736 = vadd.f32 %v6727, %v6734
  %v6737 = vadd.f32 %v6728, %v6735
  %v6738 = vld [vmem:[%s6683 + $0x6] sm:$0x1]
  %v6739 = vlaneseq
  %v6740 = vshrl.u32 %v6739, 7
  %v6741 = vsub.s32 0, %v6740
  %v6742 = vrot.slane %v6738, %v6741
  %v6743 = vmul.f32 %v6681, %v6742
  %v6744 = vmul.f32 %v6682, %v6742
  %v6745 = vadd.f32 %v6736, %v6743
  %v6746 = vadd.f32 %v6737, %v6744
  %v6747 = vld [vmem:[%s59] sm:$0xff]
  %v6748 = vld [vmem:[%s59 + $0x8] sm:$0xff]
  %v6749 = vld [vmem:[%s59 + $0x10] sm:$0xff]
  %v6750 = vld [vmem:[%s59 + $0x18] sm:$0xff]
  %v6751 = vld [vmem:[%s59 + $0x20] sm:$0xff]
  %v6752 = vld [vmem:[%s59 + $0x28] sm:$0xff]
  %v6753 = vld [vmem:[%s59 + $0x30] sm:$0xff]
  %v6754 = vld [vmem:[%s59 + $0x38] sm:$0xff]
  %v6755 = vld [vmem:[%s59 + $0x40] sm:$0xff]
  %v6756 = vld [vmem:[%s59 + $0x48] sm:$0xff]
  %v6757 = vld [vmem:[%s59 + $0x50] sm:$0xff]
  %v6758 = vld [vmem:[%s59 + $0x58] sm:$0xff]
  %v6759 = vld [vmem:[%s59 + $0x60] sm:$0xff]
  %v6760 = vld [vmem:[%s59 + $0x68] sm:$0xff]
  %s6761 = scalar_lea.vmem [#allocation2], 1408
  %v6762 = vld [vmem:[%s6761] sm:$0xff]
  %v6763 = vld [vmem:[%s6761 + $0x8] sm:$0xff]
  %v6764 = vld [vmem:[%s6761 + $0x10] sm:$0xff]
  %v6765 = vld [vmem:[%s6761 + $0x18] sm:$0xff]
  %v6766 = vld [vmem:[%s6761 + $0x20] sm:$0xff]
  %v6767 = vld [vmem:[%s6761 + $0x28] sm:$0xff]
  %v6768 = vld [vmem:[%s6761 + $0x30] sm:$0xff]
  %v6769 = vld [vmem:[%s6761 + $0x38] sm:$0xff]
  %v6770 = vld [vmem:[%s6761 + $0x40] sm:$0xff]
  %v6771 = vld [vmem:[%s6761 + $0x48] sm:$0xff]
  %v6772 = vld [vmem:[%s6761 + $0x50] sm:$0xff]
  %v6773 = vld [vmem:[%s6761 + $0x58] sm:$0xff]
  %v6774 = vld [vmem:[%s6761 + $0x60] sm:$0xff]
  %v6775 = vld [vmem:[%s6761 + $0x68] sm:$0xff]
  %6776 = vmatprep.subr.bf16.mxu0 0
  %6777 = vmatpush1.bf16.msra.mxu0 %v3644
  %6778 = vmatprep.subr.bf16.mxu0 0
  %6779 = vmatpush1.bf16.msra.mxu0 %v3645
  %6780 = vmatprep.subr.bf16.mxu0 0
  %6781 = vmatpush1.bf16.msra.mxu0 %v3646
  %6782 = vmatprep.subr.bf16.mxu0 0
  %6783 = vmatpush1.bf16.msra.mxu0 %v3647
  %6784 = vmatprep.subr.bf16.mxu0 0
  %6785 = vmatpush1.bf16.msra.mxu0 %v3648
  %6786 = vmatprep.subr.bf16.mxu0 0
  %6787 = vmatpush1.bf16.msra.mxu0 %v3649
  %6788 = vmatprep.subr.bf16.mxu0 0
  %6789 = vmatpush1.bf16.msra.mxu0 %v3650
  %6790 = vmatprep.subr.bf16.mxu0 0
  %6791 = vmatpush1.bf16.msra.mxu0 %v3651
  %6792 = vmatprep.subr.bf16.mxu0 0
  %6793 = vmatpush1.bf16.msra.mxu0 %v3652
  %6794 = vmatprep.subr.bf16.mxu0 0
  %6795 = vmatpush1.bf16.msra.mxu0 %v3653
  %6796 = vmatprep.subr.bf16.mxu0 0
  %6797 = vmatpush1.bf16.msra.mxu0 %v3654
  %6798 = vmatprep.subr.bf16.mxu0 0
  %6799 = vmatpush1.bf16.msra.mxu0 %v3655
  %6800 = vmatprep.subr.bf16.mxu0 0
  %6801 = vmatpush1.bf16.msra.mxu0 %v3656
  %6802 = vmatprep.subr.bf16.mxu0 0
  %6803 = vmatpush1.bf16.msra.mxu0 %v3657
  %6804 = vmatprep.subr.bf16.mxu0 0
  %6805 = vmatpush1.bf16.msra.mxu0 %v3658
  %6806 = vmatprep.subr.bf16.mxu0 0
  %6807 = vmatpush1.bf16.msra.mxu0 %v3659
  %6808 = vmatprep.mubr.bf16.mxu0 %v6763
  %6809 = vmatmul.mubr.bf16.gmra.mrb[0].mxu0 %v6762
  %v6810 = vpop.f32.mrb[0].mxu0
  %v6811 = vadd.f32 0.0, %v6810
  %v6812 = vpop.f32.mrb[0].mxu0
  %v6813 = vpop.f32.mrb[0].mxu0
  %v6814 = vadd.f32 0.0, %v6813
  %v6815 = vpop.f32.mrb[0].mxu0
  %6816 = vmatprep.mubr.bf16.mxu0 %v6765
  %6817 = vmatmul.mubr.bf16.gmra.mrb[0].mxu0 %v6764
  %v6818 = vpop.f32.mrb[0].mxu0
  %v6819 = vadd.f32 0.0, %v6818
  %v6820 = vpop.f32.mrb[0].mxu0
  %v6821 = vpop.f32.mrb[0].mxu0
  %v6822 = vadd.f32 0.0, %v6821
  %v6823 = vpop.f32.mrb[0].mxu0
  %6824 = vmatprep.mubr.bf16.mxu0 %v6767
  %6825 = vmatmul.mubr.bf16.gmra.mrb[0].mxu0 %v6766
  %v6826 = vpop.f32.mrb[0].mxu0
  %v6827 = vadd.f32 0.0, %v6826
  %v6828 = vpop.f32.mrb[0].mxu0
  %v6829 = vpop.f32.mrb[0].mxu0
  %v6830 = vadd.f32 0.0, %v6829
  %v6831 = vpop.f32.mrb[0].mxu0
  %6832 = vmatprep.mubr.bf16.mxu0 %v6769
  %6833 = vmatmul.mubr.bf16.gmra.mrb[0].mxu0 %v6768
  %v6834 = vpop.f32.mrb[0].mxu0
  %v6835 = vadd.f32 0.0, %v6834
  %v6836 = vpop.f32.mrb[0].mxu0
  %v6837 = vpop.f32.mrb[0].mxu0
  %v6838 = vadd.f32 0.0, %v6837
  %v6839 = vpop.f32.mrb[0].mxu0
  %6840 = vmatprep.mubr.bf16.mxu0 %v6771
  %6841 = vmatmul.mubr.bf16.gmra.mrb[0].mxu0 %v6770
  %v6842 = vpop.f32.mrb[0].mxu0
  %v6843 = vadd.f32 0.0, %v6842
  %v6844 = vpop.f32.mrb[0].mxu0
  %v6845 = vpop.f32.mrb[0].mxu0
  %v6846 = vadd.f32 0.0, %v6845
  %v6847 = vpop.f32.mrb[0].mxu0
  %6848 = vmatprep.mubr.bf16.mxu0 %v6773
  %6849 = vmatmul.mubr.bf16.gmra.mrb[0].mxu0 %v6772
  %v6850 = vpop.f32.mrb[0].mxu0
  %v6851 = vadd.f32 0.0, %v6850
  %v6852 = vpop.f32.mrb[0].mxu0
  %v6853 = vpop.f32.mrb[0].mxu0
  %v6854 = vadd.f32 0.0, %v6853
  %v6855 = vpop.f32.mrb[0].mxu0
  %6856 = vmatprep.mubr.bf16.mxu0 %v6775
  %6857 = vmatmul.mubr.bf16.gmra.mrb[0].mxu0 %v6774
  %v6858 = vpop.f32.mrb[0].mxu0
  %v6859 = vadd.f32 0.0, %v6858
  %v6860 = vpop.f32.mrb[0].mxu0
  %v6861 = vpop.f32.mrb[0].mxu0
  %v6862 = vadd.f32 0.0, %v6861
  %v6863 = vpop.f32.mrb[0].mxu0
  %6864 = vdwg.mxu0
  %6865 = vmatprep.subr.bf16.mxu0 0
  %6866 = vmatpush1.bf16.msra.mxu0 %v3829
  %6867 = vmatprep.subr.bf16.mxu0 0
  %6868 = vmatpush1.bf16.msra.mxu0 %v3830
  %6869 = vmatprep.subr.bf16.mxu0 0
  %6870 = vmatpush1.bf16.msra.mxu0 %v3831
  %6871 = vmatprep.subr.bf16.mxu0 0
  %6872 = vmatpush1.bf16.msra.mxu0 %v3832
  %6873 = vmatprep.subr.bf16.mxu0 0
  %6874 = vmatpush1.bf16.msra.mxu0 %v3833
  %6875 = vmatprep.subr.bf16.mxu0 0
  %6876 = vmatpush1.bf16.msra.mxu0 %v3834
  %6877 = vmatprep.subr.bf16.mxu0 0
  %6878 = vmatpush1.bf16.msra.mxu0 %v3835
  %6879 = vmatprep.subr.bf16.mxu0 0
  %6880 = vmatpush1.bf16.msra.mxu0 %v3836
  %6881 = vmatprep.subr.bf16.mxu0 0
  %6882 = vmatpush1.bf16.msra.mxu0 %v3837
  %6883 = vmatprep.subr.bf16.mxu0 0
  %6884 = vmatpush1.bf16.msra.mxu0 %v3838
  %6885 = vmatprep.subr.bf16.mxu0 0
  %6886 = vmatpush1.bf16.msra.mxu0 %v3839
  %6887 = vmatprep.subr.bf16.mxu0 0
  %6888 = vmatpush1.bf16.msra.mxu0 %v3840
  %6889 = vmatprep.subr.bf16.mxu0 0
  %6890 = vmatpush1.bf16.msra.mxu0 %v3841
  %6891 = vmatprep.subr.bf16.mxu0 0
  %6892 = vmatpush1.bf16.msra.mxu0 %v3842
  %6893 = vmatprep.subr.bf16.mxu0 0
  %6894 = vmatpush1.bf16.msra.mxu0 %v3843
  %6895 = vmatprep.subr.bf16.mxu0 0
  %6896 = vmatpush1.bf16.msra.mxu0 %v3844
  %6897 = vmatprep.mubr.bf16.mxu0 %v6748
  %6898 = vmatmul.mubr.bf16.gmra.mrb[0].mxu0 %v6747
  %v6899 = vpop.f32.mrb[0].mxu0
  %v6900 = vadd.f32 %v6811, %v6899
  %v6901 = vpop.f32.mrb[0].mxu0
  %v6902 = vpop.f32.mrb[0].mxu0
  %v6903 = vadd.f32 %v6814, %v6902
  %v6904 = vpop.f32.mrb[0].mxu0
  %6905 = vmatprep.mubr.bf16.mxu0 %v6750
  %6906 = vmatmul.mubr.bf16.gmra.mrb[0].mxu0 %v6749
  %v6907 = vpop.f32.mrb[0].mxu0
  %v6908 = vadd.f32 %v6819, %v6907
  %v6909 = vpop.f32.mrb[0].mxu0
  %v6910 = vpop.f32.mrb[0].mxu0
  %v6911 = vadd.f32 %v6822, %v6910
  %v6912 = vpop.f32.mrb[0].mxu0
  %6913 = vmatprep.mubr.bf16.mxu0 %v6752
  %6914 = vmatmul.mubr.bf16.gmra.mrb[0].mxu0 %v6751
  %v6915 = vpop.f32.mrb[0].mxu0
  %v6916 = vadd.f32 %v6827, %v6915
  %v6917 = vpop.f32.mrb[0].mxu0
  %v6918 = vpop.f32.mrb[0].mxu0
  %v6919 = vadd.f32 %v6830, %v6918
  %v6920 = vpop.f32.mrb[0].mxu0
  %6921 = vmatprep.mubr.bf16.mxu0 %v6754
  %6922 = vmatmul.mubr.bf16.gmra.mrb[0].mxu0 %v6753
  %v6923 = vpop.f32.mrb[0].mxu0
  %v6924 = vadd.f32 %v6835, %v6923
  %v6925 = vpop.f32.mrb[0].mxu0
  %v6926 = vpop.f32.mrb[0].mxu0
  %v6927 = vadd.f32 %v6838, %v6926
  %v6928 = vpop.f32.mrb[0].mxu0
  %6929 = vmatprep.mubr.bf16.mxu0 %v6756
  %6930 = vmatmul.mubr.bf16.gmra.mrb[0].mxu0 %v6755
  %v6931 = vpop.f32.mrb[0].mxu0
  %v6932 = vadd.f32 %v6843, %v6931
  %v6933 = vpop.f32.mrb[0].mxu0
  %v6934 = vpop.f32.mrb[0].mxu0
  %v6935 = vadd.f32 %v6846, %v6934
  %v6936 = vpop.f32.mrb[0].mxu0
  %6937 = vmatprep.mubr.bf16.mxu0 %v6758
  %6938 = vmatmul.mubr.bf16.gmra.mrb[0].mxu0 %v6757
  %v6939 = vpop.f32.mrb[0].mxu0
  %v6940 = vadd.f32 %v6851, %v6939
  %v6941 = vpop.f32.mrb[0].mxu0
  %v6942 = vpop.f32.mrb[0].mxu0
  %v6943 = vadd.f32 %v6854, %v6942
  %v6944 = vpop.f32.mrb[0].mxu0
  %6945 = vmatprep.mubr.bf16.mxu0 %v6760
  %6946 = vmatmul.mubr.bf16.gmra.mrb[0].mxu0 %v6759
  %v6947 = vpop.f32.mrb[0].mxu0
  %v6948 = vadd.f32 %v6859, %v6947
  %v6949 = vpop.f32.mrb[0].mxu0
  %v6950 = vpop.f32.mrb[0].mxu0
  %v6951 = vadd.f32 %v6862, %v6950
  %v6952 = vpop.f32.mrb[0].mxu0
  %6953 = vdwg.mxu0
  %v6954 = vld [vmem:[%s2969] sm:$0xff]
  %v6955 = vld [vmem:[%s2969 + $0x8] sm:$0xff]
  %v6956 = vld [vmem:[%s2969 + $0x10] sm:$0xff]
  %v6957 = vld [vmem:[%s2969 + $0x18] sm:$0xff]
  %v6958 = vld [vmem:[%s2969 + $0x20] sm:$0xff]
  %v6959 = vld [vmem:[%s2969 + $0x28] sm:$0xff]
  %v6960 = vld [vmem:[%s2969 + $0x30] sm:$0xff]
  %v6961 = vld [vmem:[%s2969 + $0x38] sm:$0xff]
  %v6962 = vld [vmem:[%s2969 + $0x40] sm:$0xff]
  %v6963 = vld [vmem:[%s2969 + $0x48] sm:$0xff]
  %v6964 = vld [vmem:[%s2969 + $0x50] sm:$0xff]
  %v6965 = vld [vmem:[%s2969 + $0x58] sm:$0xff]
  %v6966 = vld [vmem:[%s2969 + $0x60] sm:$0xff]
  %v6967 = vld [vmem:[%s2969 + $0x68] sm:$0xff]
  %6968 = vmatprep.subr.bf16.mxu0 0
  %6969 = vmatpush1.bf16.msra.mxu0 %v4061
  %6970 = vmatprep.subr.bf16.mxu0 0
  %6971 = vmatpush1.bf16.msra.mxu0 %v4062
  %6972 = vmatprep.subr.bf16.mxu0 0
  %6973 = vmatpush1.bf16.msra.mxu0 %v4063
  %6974 = vmatprep.subr.bf16.mxu0 0
  %6975 = vmatpush1.bf16.msra.mxu0 %v4064
  %6976 = vmatprep.subr.bf16.mxu0 0
  %6977 = vmatpush1.bf16.msra.mxu0 %v4065
  %6978 = vmatprep.subr.bf16.mxu0 0
  %6979 = vmatpush1.bf16.msra.mxu0 %v4066
  %6980 = vmatprep.subr.bf16.mxu0 0
  %6981 = vmatpush1.bf16.msra.mxu0 %v4067
  %6982 = vmatprep.subr.bf16.mxu0 0
  %6983 = vmatpush1.bf16.msra.mxu0 %v4068
  %6984 = vmatprep.subr.bf16.mxu0 0
  %6985 = vmatpush1.bf16.msra.mxu0 %v4069
  %6986 = vmatprep.subr.bf16.mxu0 0
  %6987 = vmatpush1.bf16.msra.mxu0 %v4070
  %6988 = vmatprep.subr.bf16.mxu0 0
  %6989 = vmatpush1.bf16.msra.mxu0 %v4071
  %6990 = vmatprep.subr.bf16.mxu0 0
  %6991 = vmatpush1.bf16.msra.mxu0 %v4072
  %6992 = vmatprep.subr.bf16.mxu0 0
  %6993 = vmatpush1.bf16.msra.mxu0 %v4073
  %6994 = vmatprep.subr.bf16.mxu0 0
  %6995 = vmatpush1.bf16.msra.mxu0 %v4074
  %6996 = vmatprep.subr.bf16.mxu0 0
  %6997 = vmatpush1.bf16.msra.mxu0 %v4075
  %6998 = vmatprep.subr.bf16.mxu0 0
  %6999 = vmatpush1.bf16.msra.mxu0 %v4076
  %7000 = vmatprep.mubr.bf16.mxu0 %v6955
  %7001 = vmatmul.mubr.bf16.gmra.mrb[0].mxu0 %v6954
  %v7002 = vpop.f32.mrb[0].mxu0
  %v7003 = vadd.f32 0.0, %v7002
  %v7004 = vpop.f32.mrb[0].mxu0
  %v7005 = vpop.f32.mrb[0].mxu0
  %v7006 = vadd.f32 0.0, %v7005
  %v7007 = vpop.f32.mrb[0].mxu0
  %7008 = vmatprep.mubr.bf16.mxu0 %v6957
  %7009 = vmatmul.mubr.bf16.gmra.mrb[0].mxu0 %v6956
  %v7010 = vpop.f32.mrb[0].mxu0
  %v7011 = vadd.f32 0.0, %v7010
  %v7012 = vpop.f32.mrb[0].mxu0
  %v7013 = vpop.f32.mrb[0].mxu0
  %v7014 = vadd.f32 0.0, %v7013
  %v7015 = vpop.f32.mrb[0].mxu0
  %7016 = vmatprep.mubr.bf16.mxu0 %v6959
  %7017 = vmatmul.mubr.bf16.gmra.mrb[0].mxu0 %v6958
  %v7018 = vpop.f32.mrb[0].mxu0
  %v7019 = vadd.f32 0.0, %v7018
  %v7020 = vpop.f32.mrb[0].mxu0
  %v7021 = vpop.f32.mrb[0].mxu0
  %v7022 = vadd.f32 0.0, %v7021
  %v7023 = vpop.f32.mrb[0].mxu0
  %7024 = vmatprep.mubr.bf16.mxu0 %v6961
  %7025 = vmatmul.mubr.bf16.gmra.mrb[0].mxu0 %v6960
  %v7026 = vpop.f32.mrb[0].mxu0
  %v7027 = vadd.f32 0.0, %v7026
  %v7028 = vpop.f32.mrb[0].mxu0
  %v7029 = vpop.f32.mrb[0].mxu0
  %v7030 = vadd.f32 0.0, %v7029
  %v7031 = vpop.f32.mrb[0].mxu0
  %7032 = vmatprep.mubr.bf16.mxu0 %v6963
  %7033 = vmatmul.mubr.bf16.gmra.mrb[0].mxu0 %v6962
  %v7034 = vpop.f32.mrb[0].mxu0
  %v7035 = vadd.f32 0.0, %v7034
  %v7036 = vpop.f32.mrb[0].mxu0
  %v7037 = vpop.f32.mrb[0].mxu0
  %v7038 = vadd.f32 0.0, %v7037
  %v7039 = vpop.f32.mrb[0].mxu0
  %7040 = vmatprep.mubr.bf16.mxu0 %v6965
  %7041 = vmatmul.mubr.bf16.gmra.mrb[0].mxu0 %v6964
  %v7042 = vpop.f32.mrb[0].mxu0
  %v7043 = vadd.f32 0.0, %v7042
  %v7044 = vpop.f32.mrb[0].mxu0
  %v7045 = vpop.f32.mrb[0].mxu0
  %v7046 = vadd.f32 0.0, %v7045
  %v7047 = vpop.f32.mrb[0].mxu0
  %7048 = vmatprep.mubr.bf16.mxu0 %v6967
  %7049 = vmatmul.mubr.bf16.gmra.mrb[0].mxu0 %v6966
  %v7050 = vpop.f32.mrb[0].mxu0
  %v7051 = vadd.f32 0.0, %v7050
  %v7052 = vpop.f32.mrb[0].mxu0
  %v7053 = vpop.f32.mrb[0].mxu0
  %v7054 = vadd.f32 0.0, %v7053
  %v7055 = vpop.f32.mrb[0].mxu0
  %7056 = vdwg.mxu0
  %v7057 = vadd.f32 %v6900, %v7003
  %v7058 = vadd.f32 %v6903, %v7006
  %v7059 = vadd.f32 %v6908, %v7011
  %v7060 = vadd.f32 %v6911, %v7014
  %v7061 = vadd.f32 %v6916, %v7019
  %v7062 = vadd.f32 %v6919, %v7022
  %v7063 = vadd.f32 %v6924, %v7027
  %v7064 = vadd.f32 %v6927, %v7030
  %v7065 = vadd.f32 %v6932, %v7035
  %v7066 = vadd.f32 %v6935, %v7038
  %v7067 = vadd.f32 %v6940, %v7043
  %v7068 = vadd.f32 %v6943, %v7046
  %v7069 = vadd.f32 %v6948, %v7051
  %v7070 = vadd.f32 %v6951, %v7054
  %s7071 = scalar_lea.vmem [#allocation2], 1424
  %v7072 = vld [vmem:[%s7071] sm:$0xff]
  %v7073 = vld [vmem:[%s7071 + $0x8] sm:$0xff]
  %v7074 = vld [vmem:[%s7071 + $0x10] sm:$0xff]
  %v7075 = vld [vmem:[%s7071 + $0x18] sm:$0xff]
  %v7076 = vld [vmem:[%s7071 + $0x20] sm:$0xff]
  %v7077 = vld [vmem:[%s7071 + $0x28] sm:$0xff]
  %v7078 = vld [vmem:[%s7071 + $0x30] sm:$0xff]
  %v7079 = vld [vmem:[%s7071 + $0x38] sm:$0xff]
  %v7080 = vld [vmem:[%s7071 + $0x40] sm:$0xff]
  %v7081 = vld [vmem:[%s7071 + $0x48] sm:$0xff]
  %v7082 = vld [vmem:[%s7071 + $0x50] sm:$0xff]
  %v7083 = vld [vmem:[%s7071 + $0x58] sm:$0xff]
  %v7084 = vld [vmem:[%s7071 + $0x60] sm:$0xff]
  %v7085 = vld [vmem:[%s7071 + $0x68] sm:$0xff]
  %7086 = vmatprep.subr.bf16.mxu0 0
  %7087 = vmatpush1.bf16.msra.mxu0 %v4308
  %7088 = vmatprep.subr.bf16.mxu0 0
  %7089 = vmatpush1.bf16.msra.mxu0 %v4309
  %7090 = vmatprep.subr.bf16.mxu0 0
  %7091 = vmatpush1.bf16.msra.mxu0 %v4310
  %7092 = vmatprep.subr.bf16.mxu0 0
  %7093 = vmatpush1.bf16.msra.mxu0 %v4311
  %7094 = vmatprep.subr.bf16.mxu0 0
  %7095 = vmatpush1.bf16.msra.mxu0 %v4312
  %7096 = vmatprep.subr.bf16.mxu0 0
  %7097 = vmatpush1.bf16.msra.mxu0 %v4313
  %7098 = vmatprep.subr.bf16.mxu0 0
  %7099 = vmatpush1.bf16.msra.mxu0 %v4314
  %7100 = vmatprep.subr.bf16.mxu0 0
  %7101 = vmatpush1.bf16.msra.mxu0 %v4315
  %7102 = vmatprep.subr.bf16.mxu0 0
  %7103 = vmatpush1.bf16.msra.mxu0 %v4316
  %7104 = vmatprep.subr.bf16.mxu0 0
  %7105 = vmatpush1.bf16.msra.mxu0 %v4317
  %7106 = vmatprep.subr.bf16.mxu0 0
  %7107 = vmatpush1.bf16.msra.mxu0 %v4318
  %7108 = vmatprep.subr.bf16.mxu0 0
  %7109 = vmatpush1.bf16.msra.mxu0 %v4319
  %7110 = vmatprep.subr.bf16.mxu0 0
  %7111 = vmatpush1.bf16.msra.mxu0 %v4320
  %7112 = vmatprep.subr.bf16.mxu0 0
  %7113 = vmatpush1.bf16.msra.mxu0 %v4321
  %7114 = vmatprep.subr.bf16.mxu0 0
  %7115 = vmatpush1.bf16.msra.mxu0 %v4322
  %7116 = vmatprep.subr.bf16.mxu0 0
  %7117 = vmatpush1.bf16.msra.mxu0 %v4323
  %7118 = vmatprep.mubr.bf16.mxu0 %v7073
  %7119 = vmatmul.mubr.bf16.gmra.mrb[0].mxu0 %v7072
  %v7120 = vpop.f32.mrb[0].mxu0
  %v7121 = vadd.f32 0.0, %v7120
  %v7122 = vpop.f32.mrb[0].mxu0
  %v7123 = vpop.f32.mrb[0].mxu0
  %v7124 = vadd.f32 0.0, %v7123
  %v7125 = vpop.f32.mrb[0].mxu0
  %7126 = vmatprep.mubr.bf16.mxu0 %v7075
  %7127 = vmatmul.mubr.bf16.gmra.mrb[0].mxu0 %v7074
  %v7128 = vpop.f32.mrb[0].mxu0
  %v7129 = vadd.f32 0.0, %v7128
  %v7130 = vpop.f32.mrb[0].mxu0
  %v7131 = vpop.f32.mrb[0].mxu0
  %v7132 = vadd.f32 0.0, %v7131
  %v7133 = vpop.f32.mrb[0].mxu0
  %7134 = vmatprep.mubr.bf16.mxu0 %v7077
  %7135 = vmatmul.mubr.bf16.gmra.mrb[0].mxu0 %v7076
  %v7136 = vpop.f32.mrb[0].mxu0
  %v7137 = vadd.f32 0.0, %v7136
  %v7138 = vpop.f32.mrb[0].mxu0
  %v7139 = vpop.f32.mrb[0].mxu0
  %v7140 = vadd.f32 0.0, %v7139
  %v7141 = vpop.f32.mrb[0].mxu0
  %7142 = vmatprep.mubr.bf16.mxu0 %v7079
  %7143 = vmatmul.mubr.bf16.gmra.mrb[0].mxu0 %v7078
  %v7144 = vpop.f32.mrb[0].mxu0
  %v7145 = vadd.f32 0.0, %v7144
  %v7146 = vpop.f32.mrb[0].mxu0
  %v7147 = vpop.f32.mrb[0].mxu0
  %v7148 = vadd.f32 0.0, %v7147
  %v7149 = vpop.f32.mrb[0].mxu0
  %7150 = vmatprep.mubr.bf16.mxu0 %v7081
  %7151 = vmatmul.mubr.bf16.gmra.mrb[0].mxu0 %v7080
  %v7152 = vpop.f32.mrb[0].mxu0
  %v7153 = vadd.f32 0.0, %v7152
  %v7154 = vpop.f32.mrb[0].mxu0
  %v7155 = vpop.f32.mrb[0].mxu0
  %v7156 = vadd.f32 0.0, %v7155
  %v7157 = vpop.f32.mrb[0].mxu0
  %7158 = vmatprep.mubr.bf16.mxu0 %v7083
  %7159 = vmatmul.mubr.bf16.gmra.mrb[0].mxu0 %v7082
  %v7160 = vpop.f32.mrb[0].mxu0
  %v7161 = vadd.f32 0.0, %v7160
  %v7162 = vpop.f32.mrb[0].mxu0
  %v7163 = vpop.f32.mrb[0].mxu0
  %v7164 = vadd.f32 0.0, %v7163
  %v7165 = vpop.f32.mrb[0].mxu0
  %7166 = vmatprep.mubr.bf16.mxu0 %v7085
  %7167 = vmatmul.mubr.bf16.gmra.mrb[0].mxu0 %v7084
  %v7168 = vpop.f32.mrb[0].mxu0
  %v7169 = vadd.f32 0.0, %v7168
  %v7170 = vpop.f32.mrb[0].mxu0
  %v7171 = vpop.f32.mrb[0].mxu0
  %v7172 = vadd.f32 0.0, %v7171
  %v7173 = vpop.f32.mrb[0].mxu0
  %7174 = vdwg.mxu0
  %v7175 = vadd.f32 %v7057, %v7121
  %v7176 = vadd.f32 %v7058, %v7124
  %v7177 = vadd.f32 %v7059, %v7129
  %v7178 = vadd.f32 %v7060, %v7132
  %v7179 = vadd.f32 %v7061, %v7137
  %v7180 = vadd.f32 %v7062, %v7140
  %v7181 = vadd.f32 %v7063, %v7145
  %v7182 = vadd.f32 %v7064, %v7148
  %v7183 = vadd.f32 %v7065, %v7153
  %v7184 = vadd.f32 %v7066, %v7156
  %v7185 = vadd.f32 %v7067, %v7161
  %v7186 = vadd.f32 %v7068, %v7164
  %v7187 = vadd.f32 %v7069, %v7169
  %v7188 = vadd.f32 %v7070, %v7172
  %v7189 = vadd.f32 %v7175, %v4448
  %v7190 = vadd.f32 %v7176, %v4448
  %v7191 = vadd.f32 %v7177, %v4448
  %v7192 = vadd.f32 %v7178, %v4448
  %v7193 = vadd.f32 %v7179, %v4448
  %v7194 = vadd.f32 %v7180, %v4448
  %v7195 = vadd.f32 %v7181, %v4448
  %v7196 = vadd.f32 %v7182, %v4448
  %v7197 = vadd.f32 %v7183, %v4448
  %v7198 = vadd.f32 %v7184, %v4448
  %v7199 = vadd.f32 %v7185, %v4448
  %v7200 = vadd.f32 %v7186, %v4448
  %v7201 = vadd.f32 %v7187, %v4448
  %v7202 = vadd.f32 %v7188, %v4448
  %v7203 = vmul.f32 %v7189, 0.2
  %v7204 = vmul.f32 %v7190, 0.2
  %v7205 = vmul.f32 %v7191, 0.2
  %v7206 = vmul.f32 %v7192, 0.2
  %v7207 = vmul.f32 %v7193, 0.2
  %v7208 = vmul.f32 %v7194, 0.2
  %v7209 = vmul.f32 %v7195, 0.2
  %v7210 = vmul.f32 %v7196, 0.2
  %v7211 = vmul.f32 %v7197, 0.2
  %v7212 = vmul.f32 %v7198, 0.2
  %v7213 = vmul.f32 %v7199, 0.2
  %v7214 = vmul.f32 %v7200, 0.2
  %v7215 = vmul.f32 %v7201, 0.2
  %v7216 = vmul.f32 %v7202, 0.2
  %v7217 = vmax.f32 %v7189, %v7203
  %v7218 = vmax.f32 %v7190, %v7204
  %v7219 = vmax.f32 %v7191, %v7205
  %v7220 = vmax.f32 %v7192, %v7206
  %v7221 = vmax.f32 %v7193, %v7207
  %v7222 = vmax.f32 %v7194, %v7208
  %v7223 = vmax.f32 %v7195, %v7209
  %v7224 = vmax.f32 %v7196, %v7210
  %v7225 = vmax.f32 %v7197, %v7211
  %v7226 = vmax.f32 %v7198, %v7212
  %v7227 = vmax.f32 %v7199, %v7213
  %v7228 = vmax.f32 %v7200, %v7214
  %v7229 = vmax.f32 %v7201, %v7215
  %v7230 = vmax.f32 %v7202, %v7216
  %s7231 = scalar_lea.vmem %s5, 40
  %v7232 = vld [vmem:[%s7231] sm:$0x1]
  %v7233 = vlaneseq
  %v7234 = vshrl.u32 %v7233, 7
  %v7235 = vsub.s32 0, %v7234
  %v7236 = vrot.slane %v7232, %v7235
  %v7237 = vmul.f32 %v7217, %v7236
  %v7238 = vmul.f32 %v7218, %v7236
  %v7239 = vadd.f32 %v6745, %v7237
  %v7240 = vadd.f32 %v6746, %v7238
  %v7241 = vld [vmem:[%s7231 + $0x1] sm:$0x1]
  %v7242 = vlaneseq
  %v7243 = vshrl.u32 %v7242, 7
  %v7244 = vsub.s32 0, %v7243
  %v7245 = vrot.slane %v7241, %v7244
  %v7246 = vmul.f32 %v7219, %v7245
  %v7247 = vmul.f32 %v7220, %v7245
  %v7248 = vadd.f32 %v7239, %v7246
  %v7249 = vadd.f32 %v7240, %v7247
  %v7250 = vld [vmem:[%s7231 + $0x2] sm:$0x1]
  %v7251 = vlaneseq
  %v7252 = vshrl.u32 %v7251, 7
  %v7253 = vsub.s32 0, %v7252
  %v7254 = vrot.slane %v7250, %v7253
  %v7255 = vmul.f32 %v7221, %v7254
  %v7256 = vmul.f32 %v7222, %v7254
  %v7257 = vadd.f32 %v7248, %v7255
  %v7258 = vadd.f32 %v7249, %v7256
  %v7259 = vld [vmem:[%s7231 + $0x3] sm:$0x1]
  %v7260 = vlaneseq
  %v7261 = vshrl.u32 %v7260, 7
  %v7262 = vsub.s32 0, %v7261
  %v7263 = vrot.slane %v7259, %v7262
  %v7264 = vmul.f32 %v7223, %v7263
  %v7265 = vmul.f32 %v7224, %v7263
  %v7266 = vadd.f32 %v7257, %v7264
  %v7267 = vadd.f32 %v7258, %v7265
  %v7268 = vld [vmem:[%s7231 + $0x4] sm:$0x1]
  %v7269 = vlaneseq
  %v7270 = vshrl.u32 %v7269, 7
  %v7271 = vsub.s32 0, %v7270
  %v7272 = vrot.slane %v7268, %v7271
  %v7273 = vmul.f32 %v7225, %v7272
  %v7274 = vmul.f32 %v7226, %v7272
  %v7275 = vadd.f32 %v7266, %v7273
  %v7276 = vadd.f32 %v7267, %v7274
  %v7277 = vld [vmem:[%s7231 + $0x5] sm:$0x1]
  %v7278 = vlaneseq
  %v7279 = vshrl.u32 %v7278, 7
  %v7280 = vsub.s32 0, %v7279
  %v7281 = vrot.slane %v7277, %v7280
  %v7282 = vmul.f32 %v7227, %v7281
  %v7283 = vmul.f32 %v7228, %v7281
  %v7284 = vadd.f32 %v7275, %v7282
  %v7285 = vadd.f32 %v7276, %v7283
  %v7286 = vld [vmem:[%s7231 + $0x6] sm:$0x1]
  %v7287 = vlaneseq
  %v7288 = vshrl.u32 %v7287, 7
  %v7289 = vsub.s32 0, %v7288
  %v7290 = vrot.slane %v7286, %v7289
  %v7291 = vmul.f32 %v7229, %v7290
  %v7292 = vmul.f32 %v7230, %v7290
  %v7293 = vadd.f32 %v7284, %v7291
  %v7294 = vadd.f32 %v7285, %v7292
  %v7295 = vld [vmem:[%s65] sm:$0xff]
  %v7296 = vld [vmem:[%s65 + $0x8] sm:$0xff]
  %v7297 = vld [vmem:[%s65 + $0x10] sm:$0xff]
  %v7298 = vld [vmem:[%s65 + $0x18] sm:$0xff]
  %v7299 = vld [vmem:[%s65 + $0x20] sm:$0xff]
  %v7300 = vld [vmem:[%s65 + $0x28] sm:$0xff]
  %v7301 = vld [vmem:[%s65 + $0x30] sm:$0xff]
  %v7302 = vld [vmem:[%s65 + $0x38] sm:$0xff]
  %v7303 = vld [vmem:[%s65 + $0x40] sm:$0xff]
  %v7304 = vld [vmem:[%s65 + $0x48] sm:$0xff]
  %v7305 = vld [vmem:[%s65 + $0x50] sm:$0xff]
  %v7306 = vld [vmem:[%s65 + $0x58] sm:$0xff]
  %v7307 = vld [vmem:[%s65 + $0x60] sm:$0xff]
  %v7308 = vld [vmem:[%s65 + $0x68] sm:$0xff]
  %s7309 = scalar_lea.vmem [#allocation2], 1664
  %v7310 = vld [vmem:[%s7309] sm:$0xff]
  %v7311 = vld [vmem:[%s7309 + $0x8] sm:$0xff]
  %v7312 = vld [vmem:[%s7309 + $0x10] sm:$0xff]
  %v7313 = vld [vmem:[%s7309 + $0x18] sm:$0xff]
  %v7314 = vld [vmem:[%s7309 + $0x20] sm:$0xff]
  %v7315 = vld [vmem:[%s7309 + $0x28] sm:$0xff]
  %v7316 = vld [vmem:[%s7309 + $0x30] sm:$0xff]
  %v7317 = vld [vmem:[%s7309 + $0x38] sm:$0xff]
  %v7318 = vld [vmem:[%s7309 + $0x40] sm:$0xff]
  %v7319 = vld [vmem:[%s7309 + $0x48] sm:$0xff]
  %v7320 = vld [vmem:[%s7309 + $0x50] sm:$0xff]
  %v7321 = vld [vmem:[%s7309 + $0x58] sm:$0xff]
  %v7322 = vld [vmem:[%s7309 + $0x60] sm:$0xff]
  %v7323 = vld [vmem:[%s7309 + $0x68] sm:$0xff]
  %7324 = vmatprep.subr.bf16.mxu0 0
  %7325 = vmatpush1.bf16.msra.mxu0 %v3644
  %7326 = vmatprep.subr.bf16.mxu0 0
  %7327 = vmatpush1.bf16.msra.mxu0 %v3645
  %7328 = vmatprep.subr.bf16.mxu0 0
  %7329 = vmatpush1.bf16.msra.mxu0 %v3646
  %7330 = vmatprep.subr.bf16.mxu0 0
  %7331 = vmatpush1.bf16.msra.mxu0 %v3647
  %7332 = vmatprep.subr.bf16.mxu0 0
  %7333 = vmatpush1.bf16.msra.mxu0 %v3648
  %7334 = vmatprep.subr.bf16.mxu0 0
  %7335 = vmatpush1.bf16.msra.mxu0 %v3649
  %7336 = vmatprep.subr.bf16.mxu0 0
  %7337 = vmatpush1.bf16.msra.mxu0 %v3650
  %7338 = vmatprep.subr.bf16.mxu0 0
  %7339 = vmatpush1.bf16.msra.mxu0 %v3651
  %7340 = vmatprep.subr.bf16.mxu0 0
  %7341 = vmatpush1.bf16.msra.mxu0 %v3652
  %7342 = vmatprep.subr.bf16.mxu0 0
  %7343 = vmatpush1.bf16.msra.mxu0 %v3653
  %7344 = vmatprep.subr.bf16.mxu0 0
  %7345 = vmatpush1.bf16.msra.mxu0 %v3654
  %7346 = vmatprep.subr.bf16.mxu0 0
  %7347 = vmatpush1.bf16.msra.mxu0 %v3655
  %7348 = vmatprep.subr.bf16.mxu0 0
  %7349 = vmatpush1.bf16.msra.mxu0 %v3656
  %7350 = vmatprep.subr.bf16.mxu0 0
  %7351 = vmatpush1.bf16.msra.mxu0 %v3657
  %7352 = vmatprep.subr.bf16.mxu0 0
  %7353 = vmatpush1.bf16.msra.mxu0 %v3658
  %7354 = vmatprep.subr.bf16.mxu0 0
  %7355 = vmatpush1.bf16.msra.mxu0 %v3659
  %7356 = vmatprep.mubr.bf16.mxu0 %v7311
  %7357 = vmatmul.mubr.bf16.gmra.mrb[0].mxu0 %v7310
  %v7358 = vpop.f32.mrb[0].mxu0
  %v7359 = vadd.f32 0.0, %v7358
  %v7360 = vpop.f32.mrb[0].mxu0
  %v7361 = vpop.f32.mrb[0].mxu0
  %v7362 = vadd.f32 0.0, %v7361
  %v7363 = vpop.f32.mrb[0].mxu0
  %7364 = vmatprep.mubr.bf16.mxu0 %v7313
  %7365 = vmatmul.mubr.bf16.gmra.mrb[0].mxu0 %v7312
  %v7366 = vpop.f32.mrb[0].mxu0
  %v7367 = vadd.f32 0.0, %v7366
  %v7368 = vpop.f32.mrb[0].mxu0
  %v7369 = vpop.f32.mrb[0].mxu0
  %v7370 = vadd.f32 0.0, %v7369
  %v7371 = vpop.f32.mrb[0].mxu0
  %7372 = vmatprep.mubr.bf16.mxu0 %v7315
  %7373 = vmatmul.mubr.bf16.gmra.mrb[0].mxu0 %v7314
  %v7374 = vpop.f32.mrb[0].mxu0
  %v7375 = vadd.f32 0.0, %v7374
  %v7376 = vpop.f32.mrb[0].mxu0
  %v7377 = vpop.f32.mrb[0].mxu0
  %v7378 = vadd.f32 0.0, %v7377
  %v7379 = vpop.f32.mrb[0].mxu0
  %7380 = vmatprep.mubr.bf16.mxu0 %v7317
  %7381 = vmatmul.mubr.bf16.gmra.mrb[0].mxu0 %v7316
  %v7382 = vpop.f32.mrb[0].mxu0
  %v7383 = vadd.f32 0.0, %v7382
  %v7384 = vpop.f32.mrb[0].mxu0
  %v7385 = vpop.f32.mrb[0].mxu0
  %v7386 = vadd.f32 0.0, %v7385
  %v7387 = vpop.f32.mrb[0].mxu0
  %7388 = vmatprep.mubr.bf16.mxu0 %v7319
  %7389 = vmatmul.mubr.bf16.gmra.mrb[0].mxu0 %v7318
  %v7390 = vpop.f32.mrb[0].mxu0
  %v7391 = vadd.f32 0.0, %v7390
  %v7392 = vpop.f32.mrb[0].mxu0
  %v7393 = vpop.f32.mrb[0].mxu0
  %v7394 = vadd.f32 0.0, %v7393
  %v7395 = vpop.f32.mrb[0].mxu0
  %7396 = vmatprep.mubr.bf16.mxu0 %v7321
  %7397 = vmatmul.mubr.bf16.gmra.mrb[0].mxu0 %v7320
  %v7398 = vpop.f32.mrb[0].mxu0
  %v7399 = vadd.f32 0.0, %v7398
  %v7400 = vpop.f32.mrb[0].mxu0
  %v7401 = vpop.f32.mrb[0].mxu0
  %v7402 = vadd.f32 0.0, %v7401
  %v7403 = vpop.f32.mrb[0].mxu0
  %7404 = vmatprep.mubr.bf16.mxu0 %v7323
  %7405 = vmatmul.mubr.bf16.gmra.mrb[0].mxu0 %v7322
  %v7406 = vpop.f32.mrb[0].mxu0
  %v7407 = vadd.f32 0.0, %v7406
  %v7408 = vpop.f32.mrb[0].mxu0
  %v7409 = vpop.f32.mrb[0].mxu0
  %v7410 = vadd.f32 0.0, %v7409
  %v7411 = vpop.f32.mrb[0].mxu0
  %7412 = vdwg.mxu0
  %7413 = vmatprep.subr.bf16.mxu0 0
  %7414 = vmatpush1.bf16.msra.mxu0 %v3829
  %7415 = vmatprep.subr.bf16.mxu0 0
  %7416 = vmatpush1.bf16.msra.mxu0 %v3830
  %7417 = vmatprep.subr.bf16.mxu0 0
  %7418 = vmatpush1.bf16.msra.mxu0 %v3831
  %7419 = vmatprep.subr.bf16.mxu0 0
  %7420 = vmatpush1.bf16.msra.mxu0 %v3832
  %7421 = vmatprep.subr.bf16.mxu0 0
  %7422 = vmatpush1.bf16.msra.mxu0 %v3833
  %7423 = vmatprep.subr.bf16.mxu0 0
  %7424 = vmatpush1.bf16.msra.mxu0 %v3834
  %7425 = vmatprep.subr.bf16.mxu0 0
  %7426 = vmatpush1.bf16.msra.mxu0 %v3835
  %7427 = vmatprep.subr.bf16.mxu0 0
  %7428 = vmatpush1.bf16.msra.mxu0 %v3836
  %7429 = vmatprep.subr.bf16.mxu0 0
  %7430 = vmatpush1.bf16.msra.mxu0 %v3837
  %7431 = vmatprep.subr.bf16.mxu0 0
  %7432 = vmatpush1.bf16.msra.mxu0 %v3838
  %7433 = vmatprep.subr.bf16.mxu0 0
  %7434 = vmatpush1.bf16.msra.mxu0 %v3839
  %7435 = vmatprep.subr.bf16.mxu0 0
  %7436 = vmatpush1.bf16.msra.mxu0 %v3840
  %7437 = vmatprep.subr.bf16.mxu0 0
  %7438 = vmatpush1.bf16.msra.mxu0 %v3841
  %7439 = vmatprep.subr.bf16.mxu0 0
  %7440 = vmatpush1.bf16.msra.mxu0 %v3842
  %7441 = vmatprep.subr.bf16.mxu0 0
  %7442 = vmatpush1.bf16.msra.mxu0 %v3843
  %7443 = vmatprep.subr.bf16.mxu0 0
  %7444 = vmatpush1.bf16.msra.mxu0 %v3844
  %7445 = vmatprep.mubr.bf16.mxu0 %v7296
  %7446 = vmatmul.mubr.bf16.gmra.mrb[0].mxu0 %v7295
  %v7447 = vpop.f32.mrb[0].mxu0
  %v7448 = vadd.f32 %v7359, %v7447
  %v7449 = vpop.f32.mrb[0].mxu0
  %v7450 = vpop.f32.mrb[0].mxu0
  %v7451 = vadd.f32 %v7362, %v7450
  %v7452 = vpop.f32.mrb[0].mxu0
  %7453 = vmatprep.mubr.bf16.mxu0 %v7298
  %7454 = vmatmul.mubr.bf16.gmra.mrb[0].mxu0 %v7297
  %v7455 = vpop.f32.mrb[0].mxu0
  %v7456 = vadd.f32 %v7367, %v7455
  %v7457 = vpop.f32.mrb[0].mxu0
  %v7458 = vpop.f32.mrb[0].mxu0
  %v7459 = vadd.f32 %v7370, %v7458
  %v7460 = vpop.f32.mrb[0].mxu0
  %7461 = vmatprep.mubr.bf16.mxu0 %v7300
  %7462 = vmatmul.mubr.bf16.gmra.mrb[0].mxu0 %v7299
  %v7463 = vpop.f32.mrb[0].mxu0
  %v7464 = vadd.f32 %v7375, %v7463
  %v7465 = vpop.f32.mrb[0].mxu0
  %v7466 = vpop.f32.mrb[0].mxu0
  %v7467 = vadd.f32 %v7378, %v7466
  %v7468 = vpop.f32.mrb[0].mxu0
  %7469 = vmatprep.mubr.bf16.mxu0 %v7302
  %7470 = vmatmul.mubr.bf16.gmra.mrb[0].mxu0 %v7301
  %v7471 = vpop.f32.mrb[0].mxu0
  %v7472 = vadd.f32 %v7383, %v7471
  %v7473 = vpop.f32.mrb[0].mxu0
  %v7474 = vpop.f32.mrb[0].mxu0
  %v7475 = vadd.f32 %v7386, %v7474
  %v7476 = vpop.f32.mrb[0].mxu0
  %7477 = vmatprep.mubr.bf16.mxu0 %v7304
  %7478 = vmatmul.mubr.bf16.gmra.mrb[0].mxu0 %v7303
  %v7479 = vpop.f32.mrb[0].mxu0
  %v7480 = vadd.f32 %v7391, %v7479
  %v7481 = vpop.f32.mrb[0].mxu0
  %v7482 = vpop.f32.mrb[0].mxu0
  %v7483 = vadd.f32 %v7394, %v7482
  %v7484 = vpop.f32.mrb[0].mxu0
  %7485 = vmatprep.mubr.bf16.mxu0 %v7306
  %7486 = vmatmul.mubr.bf16.gmra.mrb[0].mxu0 %v7305
  %v7487 = vpop.f32.mrb[0].mxu0
  %v7488 = vadd.f32 %v7399, %v7487
  %v7489 = vpop.f32.mrb[0].mxu0
  %v7490 = vpop.f32.mrb[0].mxu0
  %v7491 = vadd.f32 %v7402, %v7490
  %v7492 = vpop.f32.mrb[0].mxu0
  %7493 = vmatprep.mubr.bf16.mxu0 %v7308
  %7494 = vmatmul.mubr.bf16.gmra.mrb[0].mxu0 %v7307
  %v7495 = vpop.f32.mrb[0].mxu0
  %v7496 = vadd.f32 %v7407, %v7495
  %v7497 = vpop.f32.mrb[0].mxu0
  %v7498 = vpop.f32.mrb[0].mxu0
  %v7499 = vadd.f32 %v7410, %v7498
  %v7500 = vpop.f32.mrb[0].mxu0
  %7501 = vdwg.mxu0
  %v7502 = vld [vmem:[%s3457] sm:$0xff]
  %v7503 = vld [vmem:[%s3457 + $0x8] sm:$0xff]
  %v7504 = vld [vmem:[%s3457 + $0x10] sm:$0xff]
  %v7505 = vld [vmem:[%s3457 + $0x18] sm:$0xff]
  %v7506 = vld [vmem:[%s3457 + $0x20] sm:$0xff]
  %v7507 = vld [vmem:[%s3457 + $0x28] sm:$0xff]
  %v7508 = vld [vmem:[%s3457 + $0x30] sm:$0xff]
  %v7509 = vld [vmem:[%s3457 + $0x38] sm:$0xff]
  %v7510 = vld [vmem:[%s3457 + $0x40] sm:$0xff]
  %v7511 = vld [vmem:[%s3457 + $0x48] sm:$0xff]
  %v7512 = vld [vmem:[%s3457 + $0x50] sm:$0xff]
  %v7513 = vld [vmem:[%s3457 + $0x58] sm:$0xff]
  %v7514 = vld [vmem:[%s3457 + $0x60] sm:$0xff]
  %v7515 = vld [vmem:[%s3457 + $0x68] sm:$0xff]
  %7516 = vmatprep.subr.bf16.mxu0 0
  %7517 = vmatpush1.bf16.msra.mxu0 %v4061
  %7518 = vmatprep.subr.bf16.mxu0 0
  %7519 = vmatpush1.bf16.msra.mxu0 %v4062
  %7520 = vmatprep.subr.bf16.mxu0 0
  %7521 = vmatpush1.bf16.msra.mxu0 %v4063
  %7522 = vmatprep.subr.bf16.mxu0 0
  %7523 = vmatpush1.bf16.msra.mxu0 %v4064
  %7524 = vmatprep.subr.bf16.mxu0 0
  %7525 = vmatpush1.bf16.msra.mxu0 %v4065
  %7526 = vmatprep.subr.bf16.mxu0 0
  %7527 = vmatpush1.bf16.msra.mxu0 %v4066
  %7528 = vmatprep.subr.bf16.mxu0 0
  %7529 = vmatpush1.bf16.msra.mxu0 %v4067
  %7530 = vmatprep.subr.bf16.mxu0 0
  %7531 = vmatpush1.bf16.msra.mxu0 %v4068
  %7532 = vmatprep.subr.bf16.mxu0 0
  %7533 = vmatpush1.bf16.msra.mxu0 %v4069
  %7534 = vmatprep.subr.bf16.mxu0 0
  %7535 = vmatpush1.bf16.msra.mxu0 %v4070
  %7536 = vmatprep.subr.bf16.mxu0 0
  %7537 = vmatpush1.bf16.msra.mxu0 %v4071
  %7538 = vmatprep.subr.bf16.mxu0 0
  %7539 = vmatpush1.bf16.msra.mxu0 %v4072
  %7540 = vmatprep.subr.bf16.mxu0 0
  %7541 = vmatpush1.bf16.msra.mxu0 %v4073
  %7542 = vmatprep.subr.bf16.mxu0 0
  %7543 = vmatpush1.bf16.msra.mxu0 %v4074
  %7544 = vmatprep.subr.bf16.mxu0 0
  %7545 = vmatpush1.bf16.msra.mxu0 %v4075
  %7546 = vmatprep.subr.bf16.mxu0 0
  %7547 = vmatpush1.bf16.msra.mxu0 %v4076
  %7548 = vmatprep.mubr.bf16.mxu0 %v7503
  %7549 = vmatmul.mubr.bf16.gmra.mrb[0].mxu0 %v7502
  %v7550 = vpop.f32.mrb[0].mxu0
  %v7551 = vadd.f32 0.0, %v7550
  %v7552 = vpop.f32.mrb[0].mxu0
  %v7553 = vpop.f32.mrb[0].mxu0
  %v7554 = vadd.f32 0.0, %v7553
  %v7555 = vpop.f32.mrb[0].mxu0
  %7556 = vmatprep.mubr.bf16.mxu0 %v7505
  %7557 = vmatmul.mubr.bf16.gmra.mrb[0].mxu0 %v7504
  %v7558 = vpop.f32.mrb[0].mxu0
  %v7559 = vadd.f32 0.0, %v7558
  %v7560 = vpop.f32.mrb[0].mxu0
  %v7561 = vpop.f32.mrb[0].mxu0
  %v7562 = vadd.f32 0.0, %v7561
  %v7563 = vpop.f32.mrb[0].mxu0
  %7564 = vmatprep.mubr.bf16.mxu0 %v7507
  %7565 = vmatmul.mubr.bf16.gmra.mrb[0].mxu0 %v7506
  %v7566 = vpop.f32.mrb[0].mxu0
  %v7567 = vadd.f32 0.0, %v7566
  %v7568 = vpop.f32.mrb[0].mxu0
  %v7569 = vpop.f32.mrb[0].mxu0
  %v7570 = vadd.f32 0.0, %v7569
  %v7571 = vpop.f32.mrb[0].mxu0
  %7572 = vmatprep.mubr.bf16.mxu0 %v7509
  %7573 = vmatmul.mubr.bf16.gmra.mrb[0].mxu0 %v7508
  %v7574 = vpop.f32.mrb[0].mxu0
  %v7575 = vadd.f32 0.0, %v7574
  %v7576 = vpop.f32.mrb[0].mxu0
  %v7577 = vpop.f32.mrb[0].mxu0
  %v7578 = vadd.f32 0.0, %v7577
  %v7579 = vpop.f32.mrb[0].mxu0
  %7580 = vmatprep.mubr.bf16.mxu0 %v7511
  %7581 = vmatmul.mubr.bf16.gmra.mrb[0].mxu0 %v7510
  %v7582 = vpop.f32.mrb[0].mxu0
  %v7583 = vadd.f32 0.0, %v7582
  %v7584 = vpop.f32.mrb[0].mxu0
  %v7585 = vpop.f32.mrb[0].mxu0
  %v7586 = vadd.f32 0.0, %v7585
  %v7587 = vpop.f32.mrb[0].mxu0
  %7588 = vmatprep.mubr.bf16.mxu0 %v7513
  %7589 = vmatmul.mubr.bf16.gmra.mrb[0].mxu0 %v7512
  %v7590 = vpop.f32.mrb[0].mxu0
  %v7591 = vadd.f32 0.0, %v7590
  %v7592 = vpop.f32.mrb[0].mxu0
  %v7593 = vpop.f32.mrb[0].mxu0
  %v7594 = vadd.f32 0.0, %v7593
  %v7595 = vpop.f32.mrb[0].mxu0
  %7596 = vmatprep.mubr.bf16.mxu0 %v7515
  %7597 = vmatmul.mubr.bf16.gmra.mrb[0].mxu0 %v7514
  %v7598 = vpop.f32.mrb[0].mxu0
  %v7599 = vadd.f32 0.0, %v7598
  %v7600 = vpop.f32.mrb[0].mxu0
  %v7601 = vpop.f32.mrb[0].mxu0
  %v7602 = vadd.f32 0.0, %v7601
  %v7603 = vpop.f32.mrb[0].mxu0
  %7604 = vdwg.mxu0
  %v7605 = vadd.f32 %v7448, %v7551
  %v7606 = vadd.f32 %v7451, %v7554
  %v7607 = vadd.f32 %v7456, %v7559
  %v7608 = vadd.f32 %v7459, %v7562
  %v7609 = vadd.f32 %v7464, %v7567
  %v7610 = vadd.f32 %v7467, %v7570
  %v7611 = vadd.f32 %v7472, %v7575
  %v7612 = vadd.f32 %v7475, %v7578
  %v7613 = vadd.f32 %v7480, %v7583
  %v7614 = vadd.f32 %v7483, %v7586
  %v7615 = vadd.f32 %v7488, %v7591
  %v7616 = vadd.f32 %v7491, %v7594
  %v7617 = vadd.f32 %v7496, %v7599
  %v7618 = vadd.f32 %v7499, %v7602
  %s7619 = scalar_lea.vmem [#allocation2], 1680
  %v7620 = vld [vmem:[%s7619] sm:$0xff]
  %v7621 = vld [vmem:[%s7619 + $0x8] sm:$0xff]
  %v7622 = vld [vmem:[%s7619 + $0x10] sm:$0xff]
  %v7623 = vld [vmem:[%s7619 + $0x18] sm:$0xff]
  %v7624 = vld [vmem:[%s7619 + $0x20] sm:$0xff]
  %v7625 = vld [vmem:[%s7619 + $0x28] sm:$0xff]
  %v7626 = vld [vmem:[%s7619 + $0x30] sm:$0xff]
  %v7627 = vld [vmem:[%s7619 + $0x38] sm:$0xff]
  %v7628 = vld [vmem:[%s7619 + $0x40] sm:$0xff]
  %v7629 = vld [vmem:[%s7619 + $0x48] sm:$0xff]
  %v7630 = vld [vmem:[%s7619 + $0x50] sm:$0xff]
  %v7631 = vld [vmem:[%s7619 + $0x58] sm:$0xff]
  %v7632 = vld [vmem:[%s7619 + $0x60] sm:$0xff]
  %v7633 = vld [vmem:[%s7619 + $0x68] sm:$0xff]
  %7634 = vmatprep.subr.bf16.mxu0 0
  %7635 = vmatpush1.bf16.msra.mxu0 %v4308
  %7636 = vmatprep.subr.bf16.mxu0 0
  %7637 = vmatpush1.bf16.msra.mxu0 %v4309
  %7638 = vmatprep.subr.bf16.mxu0 0
  %7639 = vmatpush1.bf16.msra.mxu0 %v4310
  %7640 = vmatprep.subr.bf16.mxu0 0
  %7641 = vmatpush1.bf16.msra.mxu0 %v4311
  %7642 = vmatprep.subr.bf16.mxu0 0
  %7643 = vmatpush1.bf16.msra.mxu0 %v4312
  %7644 = vmatprep.subr.bf16.mxu0 0
  %7645 = vmatpush1.bf16.msra.mxu0 %v4313
  %7646 = vmatprep.subr.bf16.mxu0 0
  %7647 = vmatpush1.bf16.msra.mxu0 %v4314
  %7648 = vmatprep.subr.bf16.mxu0 0
  %7649 = vmatpush1.bf16.msra.mxu0 %v4315
  %7650 = vmatprep.subr.bf16.mxu0 0
  %7651 = vmatpush1.bf16.msra.mxu0 %v4316
  %7652 = vmatprep.subr.bf16.mxu0 0
  %7653 = vmatpush1.bf16.msra.mxu0 %v4317
  %7654 = vmatprep.subr.bf16.mxu0 0
  %7655 = vmatpush1.bf16.msra.mxu0 %v4318
  %7656 = vmatprep.subr.bf16.mxu0 0
  %7657 = vmatpush1.bf16.msra.mxu0 %v4319
  %7658 = vmatprep.subr.bf16.mxu0 0
  %7659 = vmatpush1.bf16.msra.mxu0 %v4320
  %7660 = vmatprep.subr.bf16.mxu0 0
  %7661 = vmatpush1.bf16.msra.mxu0 %v4321
  %7662 = vmatprep.subr.bf16.mxu0 0
  %7663 = vmatpush1.bf16.msra.mxu0 %v4322
  %7664 = vmatprep.subr.bf16.mxu0 0
  %7665 = vmatpush1.bf16.msra.mxu0 %v4323
  %7666 = vmatprep.mubr.bf16.mxu0 %v7621
  %7667 = vmatmul.mubr.bf16.gmra.mrb[0].mxu0 %v7620
  %v7668 = vpop.f32.mrb[0].mxu0
  %v7669 = vadd.f32 0.0, %v7668
  %v7670 = vpop.f32.mrb[0].mxu0
  %v7671 = vpop.f32.mrb[0].mxu0
  %v7672 = vadd.f32 0.0, %v7671
  %v7673 = vpop.f32.mrb[0].mxu0
  %7674 = vmatprep.mubr.bf16.mxu0 %v7623
  %7675 = vmatmul.mubr.bf16.gmra.mrb[0].mxu0 %v7622
  %v7676 = vpop.f32.mrb[0].mxu0
  %v7677 = vadd.f32 0.0, %v7676
  %v7678 = vpop.f32.mrb[0].mxu0
  %v7679 = vpop.f32.mrb[0].mxu0
  %v7680 = vadd.f32 0.0, %v7679
  %v7681 = vpop.f32.mrb[0].mxu0
  %7682 = vmatprep.mubr.bf16.mxu0 %v7625
  %7683 = vmatmul.mubr.bf16.gmra.mrb[0].mxu0 %v7624
  %v7684 = vpop.f32.mrb[0].mxu0
  %v7685 = vadd.f32 0.0, %v7684
  %v7686 = vpop.f32.mrb[0].mxu0
  %v7687 = vpop.f32.mrb[0].mxu0
  %v7688 = vadd.f32 0.0, %v7687
  %v7689 = vpop.f32.mrb[0].mxu0
  %7690 = vmatprep.mubr.bf16.mxu0 %v7627
  %7691 = vmatmul.mubr.bf16.gmra.mrb[0].mxu0 %v7626
  %v7692 = vpop.f32.mrb[0].mxu0
  %v7693 = vadd.f32 0.0, %v7692
  %v7694 = vpop.f32.mrb[0].mxu0
  %v7695 = vpop.f32.mrb[0].mxu0
  %v7696 = vadd.f32 0.0, %v7695
  %v7697 = vpop.f32.mrb[0].mxu0
  %7698 = vmatprep.mubr.bf16.mxu0 %v7629
  %7699 = vmatmul.mubr.bf16.gmra.mrb[0].mxu0 %v7628
  %v7700 = vpop.f32.mrb[0].mxu0
  %v7701 = vadd.f32 0.0, %v7700
  %v7702 = vpop.f32.mrb[0].mxu0
  %v7703 = vpop.f32.mrb[0].mxu0
  %v7704 = vadd.f32 0.0, %v7703
  %v7705 = vpop.f32.mrb[0].mxu0
  %7706 = vmatprep.mubr.bf16.mxu0 %v7631
  %7707 = vmatmul.mubr.bf16.gmra.mrb[0].mxu0 %v7630
  %v7708 = vpop.f32.mrb[0].mxu0
  %v7709 = vadd.f32 0.0, %v7708
  %v7710 = vpop.f32.mrb[0].mxu0
  %v7711 = vpop.f32.mrb[0].mxu0
  %v7712 = vadd.f32 0.0, %v7711
  %v7713 = vpop.f32.mrb[0].mxu0
  %7714 = vmatprep.mubr.bf16.mxu0 %v7633
  %7715 = vmatmul.mubr.bf16.gmra.mrb[0].mxu0 %v7632
  %v7716 = vpop.f32.mrb[0].mxu0
  %v7717 = vadd.f32 0.0, %v7716
  %v7718 = vpop.f32.mrb[0].mxu0
  %v7719 = vpop.f32.mrb[0].mxu0
  %v7720 = vadd.f32 0.0, %v7719
  %v7721 = vpop.f32.mrb[0].mxu0
  %7722 = vdwg.mxu0
  %v7723 = vadd.f32 %v7605, %v7669
  %v7724 = vadd.f32 %v7606, %v7672
  %v7725 = vadd.f32 %v7607, %v7677
  %v7726 = vadd.f32 %v7608, %v7680
  %v7727 = vadd.f32 %v7609, %v7685
  %v7728 = vadd.f32 %v7610, %v7688
  %v7729 = vadd.f32 %v7611, %v7693
  %v7730 = vadd.f32 %v7612, %v7696
  %v7731 = vadd.f32 %v7613, %v7701
  %v7732 = vadd.f32 %v7614, %v7704
  %v7733 = vadd.f32 %v7615, %v7709
  %v7734 = vadd.f32 %v7616, %v7712
  %v7735 = vadd.f32 %v7617, %v7717
  %v7736 = vadd.f32 %v7618, %v7720
  %v7737 = vadd.f32 %v7723, %v4448
  %v7738 = vadd.f32 %v7724, %v4448
  %v7739 = vadd.f32 %v7725, %v4448
  %v7740 = vadd.f32 %v7726, %v4448
  %v7741 = vadd.f32 %v7727, %v4448
  %v7742 = vadd.f32 %v7728, %v4448
  %v7743 = vadd.f32 %v7729, %v4448
  %v7744 = vadd.f32 %v7730, %v4448
  %v7745 = vadd.f32 %v7731, %v4448
  %v7746 = vadd.f32 %v7732, %v4448
  %v7747 = vadd.f32 %v7733, %v4448
  %v7748 = vadd.f32 %v7734, %v4448
  %v7749 = vadd.f32 %v7735, %v4448
  %v7750 = vadd.f32 %v7736, %v4448
  %v7751 = vmul.f32 %v7737, 0.2
  %v7752 = vmul.f32 %v7738, 0.2
  %v7753 = vmul.f32 %v7739, 0.2
  %v7754 = vmul.f32 %v7740, 0.2
  %v7755 = vmul.f32 %v7741, 0.2
  %v7756 = vmul.f32 %v7742, 0.2
  %v7757 = vmul.f32 %v7743, 0.2
  %v7758 = vmul.f32 %v7744, 0.2
  %v7759 = vmul.f32 %v7745, 0.2
  %v7760 = vmul.f32 %v7746, 0.2
  %v7761 = vmul.f32 %v7747, 0.2
  %v7762 = vmul.f32 %v7748, 0.2
  %v7763 = vmul.f32 %v7749, 0.2
  %v7764 = vmul.f32 %v7750, 0.2
  %v7765 = vmax.f32 %v7737, %v7751
  %v7766 = vmax.f32 %v7738, %v7752
  %v7767 = vmax.f32 %v7739, %v7753
  %v7768 = vmax.f32 %v7740, %v7754
  %v7769 = vmax.f32 %v7741, %v7755
  %v7770 = vmax.f32 %v7742, %v7756
  %v7771 = vmax.f32 %v7743, %v7757
  %v7772 = vmax.f32 %v7744, %v7758
  %v7773 = vmax.f32 %v7745, %v7759
  %v7774 = vmax.f32 %v7746, %v7760
  %v7775 = vmax.f32 %v7747, %v7761
  %v7776 = vmax.f32 %v7748, %v7762
  %v7777 = vmax.f32 %v7749, %v7763
  %v7778 = vmax.f32 %v7750, %v7764
  %s7779 = scalar_lea.vmem %s5, 48
  %v7780 = vld [vmem:[%s7779] sm:$0x1]
  %v7781 = vlaneseq
  %v7782 = vshrl.u32 %v7781, 7
  %v7783 = vsub.s32 0, %v7782
  %v7784 = vrot.slane %v7780, %v7783
  %v7785 = vmul.f32 %v7765, %v7784
  %v7786 = vmul.f32 %v7766, %v7784
  %v7787 = vadd.f32 %v7293, %v7785
  %v7788 = vadd.f32 %v7294, %v7786
  %v7789 = vld [vmem:[%s7779 + $0x1] sm:$0x1]
  %v7790 = vlaneseq
  %v7791 = vshrl.u32 %v7790, 7
  %v7792 = vsub.s32 0, %v7791
  %v7793 = vrot.slane %v7789, %v7792
  %v7794 = vmul.f32 %v7767, %v7793
  %v7795 = vmul.f32 %v7768, %v7793
  %v7796 = vadd.f32 %v7787, %v7794
  %v7797 = vadd.f32 %v7788, %v7795
  %v7798 = vld [vmem:[%s7779 + $0x2] sm:$0x1]
  %v7799 = vlaneseq
  %v7800 = vshrl.u32 %v7799, 7
  %v7801 = vsub.s32 0, %v7800
  %v7802 = vrot.slane %v7798, %v7801
  %v7803 = vmul.f32 %v7769, %v7802
  %v7804 = vmul.f32 %v7770, %v7802
  %v7805 = vadd.f32 %v7796, %v7803
  %v7806 = vadd.f32 %v7797, %v7804
  %v7807 = vld [vmem:[%s7779 + $0x3] sm:$0x1]
  %v7808 = vlaneseq
  %v7809 = vshrl.u32 %v7808, 7
  %v7810 = vsub.s32 0, %v7809
  %v7811 = vrot.slane %v7807, %v7810
  %v7812 = vmul.f32 %v7771, %v7811
  %v7813 = vmul.f32 %v7772, %v7811
  %v7814 = vadd.f32 %v7805, %v7812
  %v7815 = vadd.f32 %v7806, %v7813
  %v7816 = vld [vmem:[%s7779 + $0x4] sm:$0x1]
  %v7817 = vlaneseq
  %v7818 = vshrl.u32 %v7817, 7
  %v7819 = vsub.s32 0, %v7818
  %v7820 = vrot.slane %v7816, %v7819
  %v7821 = vmul.f32 %v7773, %v7820
  %v7822 = vmul.f32 %v7774, %v7820
  %v7823 = vadd.f32 %v7814, %v7821
  %v7824 = vadd.f32 %v7815, %v7822
  %v7825 = vld [vmem:[%s7779 + $0x5] sm:$0x1]
  %v7826 = vlaneseq
  %v7827 = vshrl.u32 %v7826, 7
  %v7828 = vsub.s32 0, %v7827
  %v7829 = vrot.slane %v7825, %v7828
  %v7830 = vmul.f32 %v7775, %v7829
  %v7831 = vmul.f32 %v7776, %v7829
  %v7832 = vadd.f32 %v7823, %v7830
  %v7833 = vadd.f32 %v7824, %v7831
  %v7834 = vld [vmem:[%s7779 + $0x6] sm:$0x1]
  %v7835 = vlaneseq
  %v7836 = vshrl.u32 %v7835, 7
  %v7837 = vsub.s32 0, %v7836
  %v7838 = vrot.slane %v7834, %v7837
  %v7839 = vmul.f32 %v7777, %v7838
  %v7840 = vmul.f32 %v7778, %v7838
  %v7841 = vadd.f32 %v7832, %v7839
  %v7842 = vadd.f32 %v7833, %v7840
  %7843 = vadd.xlane.f32.xlu0 %v7841
  %v7844 = vpop.xlane.xlu0 %7843
  %7845 = vadd.xlane.f32.xlu0 %v7842
  %v7846 = vpop.xlane.xlu0 %7845
  %v7847 = vld [vmem:[#allocation3] sm:$0x1]
  %v7849 = vlaneseq
  %v7850 = vshrl.u32 %v7849, 7
  %v7851 = vsub.s32 0, %v7850
  %v7852 = vrot.slane %v7847, %v7851
  %v7854 = vadd.f32 %v7844, %v7852
  %v7855 = vadd.f32 %v7846, %v7852
  %vm7856 = vcmask 7168
  %7857 = vst.msk [vmem:[%s7] sm:$0xff] %vm7856, %v7854
  %7858 = vst.msk [vmem:[%s7 + $0x8] sm:$0xff] %vm7856, %v7855
  // Predicated region
  $region30: #{critic_forward.1} parent=0 // pred_check
    _
  $region31: #{critic_forward.1} parent=0 // pred_check_branch
    %7860 = sbr.rel (0) target = $region33
  $region32: #{critic_forward.1} parent=0 // pred_region
    _
  $region33: #{critic_forward.1} parent=0 // pred_fallthru
    _
  // Predicated region
  $region34: #{critic_forward.1} parent=0 // pred_check
    _
  $region35: #{critic_forward.1} parent=0 // pred_check_branch
    %7862 = sbr.rel (0) target = $region37
  $region36: #{critic_forward.1} parent=0 // pred_region
    _
  $region37: #{critic_forward.1} parent=0 // pred_fallthru
    _

</llo_original>
